<compile_context>
chip_gen: v7x
topology: tpu7x:2x2x1
jax: 0.10.0
libtpu: 0.0.40
codegen_flags: <defaults>
</compile_context>

<pallas_src>
import math

import jax
import jax.numpy as jnp
from jax.experimental import pallas as pl
from jax.experimental.pallas import tpu as pltpu

D_MODEL = 256
D_FF = 512
N_HEADS = 8
HEAD_DIM = D_MODEL // N_HEADS
LN_EPS = 1e-5


def _layernorm(x, gamma, beta):
    mu = jnp.mean(x, axis=-1, keepdims=True)
    var = jnp.mean(jnp.square(x - mu), axis=-1, keepdims=True)
    return (x - mu) * jax.lax.rsqrt(var + LN_EPS) * gamma + beta


def transformer_block_kernel(x_ref, wqkv_ref, bqkv_ref, wo_ref, bo_ref,
                             g1_ref, be1_ref, w1_ref, b1_ref,
                             w2_ref, b2_ref, g2_ref, be2_ref,
                             o_ref, attn_ref):
    S, Bb, D = x_ref.shape
    n_rows = S * Bb

    # Flatten the (S, Bb, D) block into an (S*Bb, D) row slab (rows are s-major) so
    # every projection / FFN matmul feeds S*Bb rows to the MXU instead of S.
    x = x_ref[...].reshape(n_rows, D)

    # Fused QKV projection: bf16 operands, f32 accumulation. 1/sqrt(head_dim) is
    # folded into the Q columns of wqkv / bqkv at pack time (no per-step scaling).
    qkv = jnp.dot(x.astype(jnp.bfloat16), wqkv_ref[...],
                  preferred_element_type=jnp.float32) + bqkv_ref[...]
    qkv3 = qkv.reshape(S, Bb, 3 * D)

    row = jax.lax.broadcasted_iota(jnp.int32, (S, S), 0)
    col = jax.lax.broadcasted_iota(jnp.int32, (S, S), 1)
    causal = col <= row

    contract_last = (((1,), (1,)), ((), ()))   # q @ k^T without materializing k^T

    # Scaled dot-product attention per (head, batch element). Head outputs are
    # written straight into a VMEM scratch slab (no jnp.concatenate, no .T, no 8
    # simultaneously-live head outputs).
    # TODO(synk): for long sequences (S >~ 1k) switch to a KV-blocked online-softmax
    # (flash-attention style) loop instead of materializing (S, S) scores per head.
    for h in range(N_HEADS):
        q_lo = h * HEAD_DIM
        k_lo = D + h * HEAD_DIM
        v_lo = 2 * D + h * HEAD_DIM
        for b in range(Bb):
            qh = qkv3[:, b, q_lo:q_lo + HEAD_DIM]          # (S, hd), pre-scaled
            kh = qkv3[:, b, k_lo:k_lo + HEAD_DIM]
            vh = qkv3[:, b, v_lo:v_lo + HEAD_DIM]
            s = jax.lax.dot_general(qh, kh, contract_last,
                                    preferred_element_type=jnp.float32)   # (S, S)
            s = jnp.where(causal, s, -jnp.inf)             # diagonal always unmasked
            m = jnp.max(s, axis=-1, keepdims=True)
            p = jnp.exp(s - m)                             # unnormalized probs
            denom = jnp.sum(p, axis=-1, keepdims=True)
            oh = jnp.dot(p, vh, preferred_element_type=jnp.float32)
            # Deferred softmax normalization: one EUP reciprocal per row instead of
            # dividing the whole (S, S) probability matrix on the VPU.
            oh = oh * pl.reciprocal(denom, approx=True)
            attn_ref[:, b, q_lo:q_lo + HEAD_DIM] = oh
    # TODO(synk): attention/FFN dropout omitted (identity in eval mode).

    attn = attn_ref[...].reshape(n_rows, D)

    # Output projection (bf16 MXU, f32 accumulate), single K=256 matmul.
    attn = jnp.dot(attn.astype(jnp.bfloat16), wo_ref[...],
                   preferred_element_type=jnp.float32) + bo_ref[...]

    # Residual + LayerNorm 1 (f32 elementwise math).
    y = _layernorm(x + attn, g1_ref[...], be1_ref[...])

    # Feed-forward: Linear -> ReLU -> Linear (bf16 matmuls, f32 accumulate).
    h1 = jnp.maximum(
        jnp.dot(y.astype(jnp.bfloat16), w1_ref[...],
                preferred_element_type=jnp.float32) + b1_ref[...], 0.0)
    h2 = jnp.dot(h1.astype(jnp.bfloat16), w2_ref[...],
                 preferred_element_type=jnp.float32) + b2_ref[...]

    # Residual + LayerNorm 2.
    z = _layernorm(y + h2, g2_ref[...], be2_ref[...])
    o_ref[...] = z.reshape(S, Bb, D).astype(o_ref.dtype)


def _pick_batch_block(batch, seq, max_rows=1024):
    """Batch-block size. Candidates keep the second-minor block dim TPU-legal
    (equal to the full batch dim, or a multiple of 8); pick the largest whose
    (seq*bb)-row slab stays modest in VMEM, so large batches still keep several
    grid steps for pipelining / megacore."""
    cands = [d for d in range(1, batch + 1)
             if batch % d == 0 and (d == batch or d % 8 == 0)]
    fitting = [d for d in cands if seq * d <= max_rows]
    return max(fitting) if fitting else min(cands)


def transformer_block(x_sbd, kparams):
    """x_sbd: (seq, batch, d_model) float32 — seq-first, matching PyTorch MHA.
    The kernel consumes this layout directly (no wrapper-level transposes)."""
    S, B, D = x_sbd.shape
    Bb = _pick_batch_block(B, S)
    (wqkv, bqkv, wo, bo, g1, be1, w1, b1, w2, b2, g2, be2) = kparams

    def full(a):
        nd = a.ndim
        return pl.BlockSpec(a.shape, lambda i, nd=nd: (0,) * nd)

    return pl.pallas_call(
        transformer_block_kernel,
        out_shape=jax.ShapeDtypeStruct((S, B, D), jnp.float32),
        grid=(B // Bb,),
        in_specs=[
            pl.BlockSpec((S, Bb, D), lambda i: (0, i, 0)),
            full(wqkv), full(bqkv), full(wo), full(bo),
            full(g1), full(be1), full(w1), full(b1),
            full(w2), full(b2), full(g2), full(be2),
        ],
        out_specs=pl.BlockSpec((S, Bb, D), lambda i: (0, i, 0)),
        scratch_shapes=[pltpu.VMEM((S, Bb, D), jnp.float32)],
        compiler_params=pltpu.CompilerParams(
            dimension_semantics=("parallel",),
            vmem_limit_bytes=32 * 1024 * 1024),
    )(x_sbd, wqkv, bqkv, wo, bo, g1, be1, w1, b1, w2, b2, g2, be2)


def init_params(key):
    """Logical parameters (f32), already transposed to (in, out) so both kernel and
    reference compute x @ W; biases / LayerNorm params stored as (1, out)."""
    ks = jax.random.split(key, 8)
    std = 0.05
    wqkv = jax.random.normal(ks[0], (D_MODEL, 3 * D_MODEL), jnp.float32) * std  # in_proj_weight.T
    bqkv = jax.random.normal(ks[1], (1, 3 * D_MODEL), jnp.float32) * std        # in_proj_bias
    wo = jax.random.normal(ks[2], (D_MODEL, D_MODEL), jnp.float32) * std        # out_proj.weight.T
    bo = jax.random.normal(ks[3], (1, D_MODEL), jnp.float32) * std
    g1 = jnp.ones((1, D_MODEL), jnp.float32)
    be1 = jnp.zeros((1, D_MODEL), jnp.float32)
    w1 = jax.random.normal(ks[4], (D_MODEL, D_FF), jnp.float32) * std           # ff[0].weight.T
    b1 = jax.random.normal(ks[5], (1, D_FF), jnp.float32) * std
    w2 = jax.random.normal(ks[6], (D_FF, D_MODEL), jnp.float32) * std           # ff[2].weight.T
    b2 = jax.random.normal(ks[7], (1, D_MODEL), jnp.float32) * std
    g2 = jnp.ones((1, D_MODEL), jnp.float32)
    be2 = jnp.zeros((1, D_MODEL), jnp.float32)
    return (wqkv, bqkv, wo, bo, g1, be1, w1, b1, w2, b2, g2, be2)


def pack_params(params):
    """One-time transform to kernel format: fold 1/sqrt(head_dim) into the Q columns
    of the fused QKV projection and cast matmul weights to bf16 (biases and
    LayerNorm params stay f32)."""
    wqkv, bqkv, wo, bo, g1, be1, w1, b1, w2, b2, g2, be2 = params
    scale = 1.0 / math.sqrt(HEAD_DIM)
    col_scale = jnp.concatenate(
        [jnp.full((D_MODEL,), scale, jnp.float32),
         jnp.ones((2 * D_MODEL,), jnp.float32)])
    wqkv_k = (wqkv * col_scale[None, :]).astype(jnp.bfloat16)
    bqkv_k = bqkv * col_scale[None, :]
    return (wqkv_k, bqkv_k, wo.astype(jnp.bfloat16), bo, g1, be1,
            w1.astype(jnp.bfloat16), b1, w2.astype(jnp.bfloat16), b2, g2, be2)


def reference(x_sbd, params):
    """Pure-JAX reference mirroring PyTorch nn.MultiheadAttention (eval mode)."""
    wqkv, bqkv, wo, bo, g1, be1, w1, b1, w2, b2, g2, be2 = params
    S, B, D = x_sbd.shape
    qkv = jnp.einsum("sbd,df->sbf", x_sbd, wqkv) + bqkv[0]
    q, k, v = jnp.split(qkv, 3, axis=-1)

    def split_heads(t):
        return t.reshape(S, B, N_HEADS, HEAD_DIM).transpose(1, 2, 0, 3)  # (B,H,S,hd)

    qh, kh, vh = map(split_heads, (q, k, v))
    scores = jnp.einsum("bhqd,bhkd->bhqk", qh, kh) / math.sqrt(HEAD_DIM)
    mask = jnp.triu(jnp.full((S, S), -jnp.inf), k=1)
    scores = scores + mask
    p = jax.nn.softmax(scores, axis=-1)
    o = jnp.einsum("bhqk,bhkd->bhqd", p, vh).transpose(2, 0, 1, 3).reshape(S, B, D)
    attn = jnp.einsum("sbd,df->sbf", o, wo) + bo[0]

    def ln(x, g, b):
        mu = x.mean(-1, keepdims=True)
        var = ((x - mu) ** 2).mean(-1, keepdims=True)
        return (x - mu) / jnp.sqrt(var + LN_EPS) * g[0] + b[0]

    y = ln(x_sbd + attn, g1, be1)
    h = jax.nn.relu(jnp.einsum("sbd,df->sbf", y, w1) + b1[0])
    ff = jnp.einsum("sbf,fd->sbd", h, w2) + b2[0]
    return ln(y + ff, g2, be2)


if __name__ == "__main__":
    key = jax.random.PRNGKey(0)
    kx, kp = jax.random.split(key)
    S, B = 8, 2
    x = jax.random.normal(kx, (S, B, D_MODEL), jnp.float32)
    params = init_params(kp)
    kparams = pack_params(params)

    out = jax.jit(transformer_block)(x, kparams)
    out = jax.block_until_ready(out)

    assert out.shape == (S, B, D_MODEL)
    assert bool(jnp.isfinite(out).all())
    ref = reference(x, params)
    err = float(jnp.max(jnp.abs(out - ref)))
    assert err < 5e-2, f"max abs err {err}"
    print("KERNEL_OK")
</pallas_src>

<mosaic_0001>
module attributes {stable_mosaic.version = 11 : i64} {
  func.func @transformer_block_kernel(%arg0: i32, %arg1: memref<8x2x256xf32, #tpu.memory_space<vmem>>, %arg2: memref<256x768xbf16, #tpu.memory_space<vmem>>, %arg3: memref<1x768xf32, #tpu.memory_space<vmem>>, %arg4: memref<256x256xbf16, #tpu.memory_space<vmem>>, %arg5: memref<1x256xf32, #tpu.memory_space<vmem>>, %arg6: memref<1x256xf32, #tpu.memory_space<vmem>>, %arg7: memref<1x256xf32, #tpu.memory_space<vmem>>, %arg8: memref<256x512xbf16, #tpu.memory_space<vmem>>, %arg9: memref<1x512xf32, #tpu.memory_space<vmem>>, %arg10: memref<512x256xbf16, #tpu.memory_space<vmem>>, %arg11: memref<1x256xf32, #tpu.memory_space<vmem>>, %arg12: memref<1x256xf32, #tpu.memory_space<vmem>>, %arg13: memref<1x256xf32, #tpu.memory_space<vmem>>, %arg14: memref<8x2x256xf32, #tpu.memory_space<vmem>>, %arg15: memref<8x2x256xf32, #tpu.memory_space<vmem>>) attributes {dimension_semantics = [#tpu.dimension_semantics<parallel>], iteration_bounds = array<i64: 1>, scalar_prefetch = 0 : i64, scratch_operands = 1 : i64, tpu.core_type = #tpu.core_type<tc>, window_params = [{transform_indices = @transform_0, window_bounds = array<i64: 8, 2, 256>}, {pipeline_mode = #tpu.pipeline_mode<synchronous>, transform_indices = @transform_1, window_bounds = array<i64: 256, 768>}, {pipeline_mode = #tpu.pipeline_mode<synchronous>, transform_indices = @transform_2, window_bounds = array<i64: 1, 768>}, {pipeline_mode = #tpu.pipeline_mode<synchronous>, transform_indices = @transform_3, window_bounds = array<i64: 256, 256>}, {pipeline_mode = #tpu.pipeline_mode<synchronous>, transform_indices = @transform_4, window_bounds = array<i64: 1, 256>}, {pipeline_mode = #tpu.pipeline_mode<synchronous>, transform_indices = @transform_5, window_bounds = array<i64: 1, 256>}, {pipeline_mode = #tpu.pipeline_mode<synchronous>, transform_indices = @transform_6, window_bounds = array<i64: 1, 256>}, {pipeline_mode = #tpu.pipeline_mode<synchronous>, transform_indices = @transform_7, window_bounds = array<i64: 256, 512>}, {pipeline_mode = #tpu.pipeline_mode<synchronous>, transform_indices = @transform_8, window_bounds = array<i64: 1, 512>}, {pipeline_mode = #tpu.pipeline_mode<synchronous>, transform_indices = @transform_9, window_bounds = array<i64: 512, 256>}, {pipeline_mode = #tpu.pipeline_mode<synchronous>, transform_indices = @transform_10, window_bounds = array<i64: 1, 256>}, {pipeline_mode = #tpu.pipeline_mode<synchronous>, transform_indices = @transform_11, window_bounds = array<i64: 1, 256>}, {pipeline_mode = #tpu.pipeline_mode<synchronous>, transform_indices = @transform_12, window_bounds = array<i64: 1, 256>}, {transform_indices = @transform_13, window_bounds = array<i64: 8, 2, 256>}]} {
    %c0 = arith.constant 0 : index
    %c0_0 = arith.constant 0 : index
    %c0_1 = arith.constant 0 : index
    %0 = vector.load %arg1[%c0, %c0_0, %c0_1] : memref<8x2x256xf32, #tpu.memory_space<vmem>>, vector<8x2x256xf32>
    %1 = vector.shape_cast %0 : vector<8x2x256xf32> to vector<16x256xf32>
    %2 = arith.truncf %1 : vector<16x256xf32> to vector<16x256xbf16>
    %c0_2 = arith.constant 0 : index
    %c0_3 = arith.constant 0 : index
    %3 = vector.load %arg2[%c0_2, %c0_3] : memref<256x768xbf16, #tpu.memory_space<vmem>>, vector<256x768xbf16>
    %cst = arith.constant dense<0.000000e+00> : vector<16x768xf32>
    %4 = tpu.matmul %2, %3, %cst {dimension_numbers = #tpu.dot_dimension_numbers<[1], [0], [0], [1], [0, 0, 1, 1], [], []>} : vector<16x256xbf16>, vector<256x768xbf16>, vector<16x768xf32> -> vector<16x768xf32>
    %c0_4 = arith.constant 0 : index
    %c0_5 = arith.constant 0 : index
    %5 = vector.load %arg3[%c0_4, %c0_5] : memref<1x768xf32, #tpu.memory_space<vmem>>, vector<1x768xf32>
    %6 = vector.broadcast %5 : vector<1x768xf32> to vector<16x768xf32>
    %7 = arith.addf %4, %6 : vector<16x768xf32>
    %8 = vector.shape_cast %7 : vector<16x768xf32> to vector<8x2x768xf32>
    %9 = tpu.iota {dimensions = array<i32: 0>} : vector<8x8xi32>
    %10 = tpu.iota {dimensions = array<i32: 1>} : vector<8x8xi32>
    %11 = arith.cmpi sle, %10, %9 : vector<8x8xi32>
    %12 = vector.extract_strided_slice %8 {offsets = [0, 0, 0], sizes = [8, 1, 32], strides = [1, 1, 1]} : vector<8x2x768xf32> to vector<8x1x32xf32>
    %13 = vector.shape_cast %12 : vector<8x1x32xf32> to vector<8x32xf32>
    %14 = vector.extract_strided_slice %8 {offsets = [0, 0, 256], sizes = [8, 1, 32], strides = [1, 1, 1]} : vector<8x2x768xf32> to vector<8x1x32xf32>
    %15 = vector.shape_cast %14 : vector<8x1x32xf32> to vector<8x32xf32>
    %16 = vector.extract_strided_slice %8 {offsets = [0, 0, 512], sizes = [8, 1, 32], strides = [1, 1, 1]} : vector<8x2x768xf32> to vector<8x1x32xf32>
    %17 = vector.shape_cast %16 : vector<8x1x32xf32> to vector<8x32xf32>
    %cst_6 = arith.constant dense<0.000000e+00> : vector<8x8xf32>
    %18 = tpu.matmul %13, %15, %cst_6 {dimension_numbers = #tpu.dot_dimension_numbers<[1], [1], [0], [0], [0, 0, 1, 0], [], []>} : vector<8x32xf32>, vector<8x32xf32>, vector<8x8xf32> -> vector<8x8xf32>
    %cst_7 = arith.constant 0xFF800000 : f32
    %19 = vector.broadcast %cst_7 : f32 to vector<8x8xf32>
    %20 = arith.select %11, %18, %19 : vector<8x8xi1>, vector<8x8xf32>
    %cst_8 = arith.constant dense<0xFF800000> : vector<8xf32>
    %21 = vector.multi_reduction <maximumf>, %20, %cst_8 [1] : vector<8x8xf32> to vector<8xf32>
    %22 = vector.shape_cast %21 : vector<8xf32> to vector<8x1xf32>
    %23 = vector.broadcast %22 : vector<8x1xf32> to vector<8x8xf32>
    %24 = arith.subf %20, %23 : vector<8x8xf32>
    %25 = math.exp %24 : vector<8x8xf32>
    %cst_9 = arith.constant dense<0.000000e+00> : vector<8xf32>
    %26 = vector.multi_reduction <add>, %25, %cst_9 [1] : vector<8x8xf32> to vector<8xf32>
    %27 = vector.shape_cast %26 : vector<8xf32> to vector<8x1xf32>
    %cst_10 = arith.constant dense<0.000000e+00> : vector<8x32xf32>
    %28 = tpu.matmul %25, %17, %cst_10 {dimension_numbers = #tpu.dot_dimension_numbers<[1], [0], [0], [1], [0, 0, 1, 1], [], []>} : vector<8x8xf32>, vector<8x32xf32>, vector<8x32xf32> -> vector<8x32xf32>
    %29 = tpu.reciprocal %27 {approx = true} : vector<8x1xf32> -> vector<8x1xf32>
    %30 = vector.broadcast %29 : vector<8x1xf32> to vector<8x32xf32>
    %31 = arith.mulf %28, %30 : vector<8x32xf32>
    %c0_11 = arith.constant 0 : index
    %c0_12 = arith.constant 0 : index
    %c0_13 = arith.constant 0 : index
    %32 = vector.load %arg15[%c0_11, %c0_12, %c0_13] : memref<8x2x256xf32, #tpu.memory_space<vmem>>, vector<8x1x32xf32>
    %33 = vector.shape_cast %32 : vector<8x1x32xf32> to vector<8x32xf32>
    %34 = vector.shape_cast %31 : vector<8x32xf32> to vector<8x1x32xf32>
    tpu.vector_store %arg15[%c0_11, %c0_12, %c0_13], %34 {strides = array<i32>} : memref<8x2x256xf32, #tpu.memory_space<vmem>>, vector<8x1x32xf32>,
    %35 = vector.extract_strided_slice %8 {offsets = [0, 1, 0], sizes = [8, 1, 32], strides = [1, 1, 1]} : vector<8x2x768xf32> to vector<8x1x32xf32>
    %36 = vector.shape_cast %35 : vector<8x1x32xf32> to vector<8x32xf32>
    %37 = vector.extract_strided_slice %8 {offsets = [0, 1, 256], sizes = [8, 1, 32], strides = [1, 1, 1]} : vector<8x2x768xf32> to vector<8x1x32xf32>
    %38 = vector.shape_cast %37 : vector<8x1x32xf32> to vector<8x32xf32>
    %39 = vector.extract_strided_slice %8 {offsets = [0, 1, 512], sizes = [8, 1, 32], strides = [1, 1, 1]} : vector<8x2x768xf32> to vector<8x1x32xf32>
    %40 = vector.shape_cast %39 : vector<8x1x32xf32> to vector<8x32xf32>
    %cst_14 = arith.constant dense<0.000000e+00> : vector<8x8xf32>
    %41 = tpu.matmul %36, %38, %cst_14 {dimension_numbers = #tpu.dot_dimension_numbers<[1], [1], [0], [0], [0, 0, 1, 0], [], []>} : vector<8x32xf32>, vector<8x32xf32>, vector<8x8xf32> -> vector<8x8xf32>
    %cst_15 = arith.constant 0xFF800000 : f32
    %42 = vector.broadcast %cst_15 : f32 to vector<8x8xf32>
    %43 = arith.select %11, %41, %42 : vector<8x8xi1>, vector<8x8xf32>
    %cst_16 = arith.constant dense<0xFF800000> : vector<8xf32>
    %44 = vector.multi_reduction <maximumf>, %43, %cst_16 [1] : vector<8x8xf32> to vector<8xf32>
    %45 = vector.shape_cast %44 : vector<8xf32> to vector<8x1xf32>
    %46 = vector.broadcast %45 : vector<8x1xf32> to vector<8x8xf32>
    %47 = arith.subf %43, %46 : vector<8x8xf32>
    %48 = math.exp %47 : vector<8x8xf32>
    %cst_17 = arith.constant dense<0.000000e+00> : vector<8xf32>
    %49 = vector.multi_reduction <add>, %48, %cst_17 [1] : vector<8x8xf32> to vector<8xf32>
    %50 = vector.shape_cast %49 : vector<8xf32> to vector<8x1xf32>
    %cst_18 = arith.constant dense<0.000000e+00> : vector<8x32xf32>
    %51 = tpu.matmul %48, %40, %cst_18 {dimension_numbers = #tpu.dot_dimension_numbers<[1], [0], [0], [1], [0, 0, 1, 1], [], []>} : vector<8x8xf32>, vector<8x32xf32>, vector<8x32xf32> -> vector<8x32xf32>
    %52 = tpu.reciprocal %50 {approx = true} : vector<8x1xf32> -> vector<8x1xf32>
    %53 = vector.broadcast %52 : vector<8x1xf32> to vector<8x32xf32>
    %54 = arith.mulf %51, %53 : vector<8x32xf32>
    %c0_19 = arith.constant 0 : index
    %c1 = arith.constant 1 : index
    %c0_20 = arith.constant 0 : index
    %55 = vector.load %arg15[%c0_19, %c1, %c0_20] : memref<8x2x256xf32, #tpu.memory_space<vmem>>, vector<8x1x32xf32>
    %56 = vector.shape_cast %55 : vector<8x1x32xf32> to vector<8x32xf32>
    %57 = vector.shape_cast %54 : vector<8x32xf32> to vector<8x1x32xf32>
    tpu.vector_store %arg15[%c0_19, %c1, %c0_20], %57 {strides = array<i32>} : memref<8x2x256xf32, #tpu.memory_space<vmem>>, vector<8x1x32xf32>,
    %58 = vector.extract_strided_slice %8 {offsets = [0, 0, 32], sizes = [8, 1, 32], strides = [1, 1, 1]} : vector<8x2x768xf32> to vector<8x1x32xf32>
    %59 = vector.shape_cast %58 : vector<8x1x32xf32> to vector<8x32xf32>
    %60 = vector.extract_strided_slice %8 {offsets = [0, 0, 288], sizes = [8, 1, 32], strides = [1, 1, 1]} : vector<8x2x768xf32> to vector<8x1x32xf32>
    %61 = vector.shape_cast %60 : vector<8x1x32xf32> to vector<8x32xf32>
    %62 = vector.extract_strided_slice %8 {offsets = [0, 0, 544], sizes = [8, 1, 32], strides = [1, 1, 1]} : vector<8x2x768xf32> to vector<8x1x32xf32>
    %63 = vector.shape_cast %62 : vector<8x1x32xf32> to vector<8x32xf32>
    %cst_21 = arith.constant dense<0.000000e+00> : vector<8x8xf32>
    %64 = tpu.matmul %59, %61, %cst_21 {dimension_numbers = #tpu.dot_dimension_numbers<[1], [1], [0], [0], [0, 0, 1, 0], [], []>} : vector<8x32xf32>, vector<8x32xf32>, vector<8x8xf32> -> vector<8x8xf32>
    %cst_22 = arith.constant 0xFF800000 : f32
    %65 = vector.broadcast %cst_22 : f32 to vector<8x8xf32>
    %66 = arith.select %11, %64, %65 : vector<8x8xi1>, vector<8x8xf32>
    %cst_23 = arith.constant dense<0xFF800000> : vector<8xf32>
    %67 = vector.multi_reduction <maximumf>, %66, %cst_23 [1] : vector<8x8xf32> to vector<8xf32>
    %68 = vector.shape_cast %67 : vector<8xf32> to vector<8x1xf32>
    %69 = vector.broadcast %68 : vector<8x1xf32> to vector<8x8xf32>
    %70 = arith.subf %66, %69 : vector<8x8xf32>
    %71 = math.exp %70 : vector<8x8xf32>
    %cst_24 = arith.constant dense<0.000000e+00> : vector<8xf32>
    %72 = vector.multi_reduction <add>, %71, %cst_24 [1] : vector<8x8xf32> to vector<8xf32>
    %73 = vector.shape_cast %72 : vector<8xf32> to vector<8x1xf32>
    %cst_25 = arith.constant dense<0.000000e+00> : vector<8x32xf32>
    %74 = tpu.matmul %71, %63, %cst_25 {dimension_numbers = #tpu.dot_dimension_numbers<[1], [0], [0], [1], [0, 0, 1, 1], [], []>} : vector<8x8xf32>, vector<8x32xf32>, vector<8x32xf32> -> vector<8x32xf32>
    %75 = tpu.reciprocal %73 {approx = true} : vector<8x1xf32> -> vector<8x1xf32>
    %76 = vector.broadcast %75 : vector<8x1xf32> to vector<8x32xf32>
    %77 = arith.mulf %74, %76 : vector<8x32xf32>
    %c0_26 = arith.constant 0 : index
    %c0_27 = arith.constant 0 : index
    %c32 = arith.constant 32 : index
    %78 = vector.load %arg15[%c0_26, %c0_27, %c32] : memref<8x2x256xf32, #tpu.memory_space<vmem>>, vector<8x1x32xf32>
    %79 = vector.shape_cast %78 : vector<8x1x32xf32> to vector<8x32xf32>
    %80 = vector.shape_cast %77 : vector<8x32xf32> to vector<8x1x32xf32>
    tpu.vector_store %arg15[%c0_26, %c0_27, %c32], %80 {strides = array<i32>} : memref<8x2x256xf32, #tpu.memory_space<vmem>>, vector<8x1x32xf32>,
    %81 = vector.extract_strided_slice %8 {offsets = [0, 1, 32], sizes = [8, 1, 32], strides = [1, 1, 1]} : vector<8x2x768xf32> to vector<8x1x32xf32>
    %82 = vector.shape_cast %81 : vector<8x1x32xf32> to vector<8x32xf32>
    %83 = vector.extract_strided_slice %8 {offsets = [0, 1, 288], sizes = [8, 1, 32], strides = [1, 1, 1]} : vector<8x2x768xf32> to vector<8x1x32xf32>
    %84 = vector.shape_cast %83 : vector<8x1x32xf32> to vector<8x32xf32>
    %85 = vector.extract_strided_slice %8 {offsets = [0, 1, 544], sizes = [8, 1, 32], strides = [1, 1, 1]} : vector<8x2x768xf32> to vector<8x1x32xf32>
    %86 = vector.shape_cast %85 : vector<8x1x32xf32> to vector<8x32xf32>
    %cst_28 = arith.constant dense<0.000000e+00> : vector<8x8xf32>
    %87 = tpu.matmul %82, %84, %cst_28 {dimension_numbers = #tpu.dot_dimension_numbers<[1], [1], [0], [0], [0, 0, 1, 0], [], []>} : vector<8x32xf32>, vector<8x32xf32>, vector<8x8xf32> -> vector<8x8xf32>
    %cst_29 = arith.constant 0xFF800000 : f32
    %88 = vector.broadcast %cst_29 : f32 to vector<8x8xf32>
    %89 = arith.select %11, %87, %88 : vector<8x8xi1>, vector<8x8xf32>
    %cst_30 = arith.constant dense<0xFF800000> : vector<8xf32>
    %90 = vector.multi_reduction <maximumf>, %89, %cst_30 [1] : vector<8x8xf32> to vector<8xf32>
    %91 = vector.shape_cast %90 : vector<8xf32> to vector<8x1xf32>
    %92 = vector.broadcast %91 : vector<8x1xf32> to vector<8x8xf32>
    %93 = arith.subf %89, %92 : vector<8x8xf32>
    %94 = math.exp %93 : vector<8x8xf32>
    %cst_31 = arith.constant dense<0.000000e+00> : vector<8xf32>
    %95 = vector.multi_reduction <add>, %94, %cst_31 [1] : vector<8x8xf32> to vector<8xf32>
    %96 = vector.shape_cast %95 : vector<8xf32> to vector<8x1xf32>
    %cst_32 = arith.constant dense<0.000000e+00> : vector<8x32xf32>
    %97 = tpu.matmul %94, %86, %cst_32 {dimension_numbers = #tpu.dot_dimension_numbers<[1], [0], [0], [1], [0, 0, 1, 1], [], []>} : vector<8x8xf32>, vector<8x32xf32>, vector<8x32xf32> -> vector<8x32xf32>
    %98 = tpu.reciprocal %96 {approx = true} : vector<8x1xf32> -> vector<8x1xf32>
    %99 = vector.broadcast %98 : vector<8x1xf32> to vector<8x32xf32>
    %100 = arith.mulf %97, %99 : vector<8x32xf32>
    %c0_33 = arith.constant 0 : index
    %c1_34 = arith.constant 1 : index
    %c32_35 = arith.constant 32 : index
    %101 = vector.load %arg15[%c0_33, %c1_34, %c32_35] : memref<8x2x256xf32, #tpu.memory_space<vmem>>, vector<8x1x32xf32>
    %102 = vector.shape_cast %101 : vector<8x1x32xf32> to vector<8x32xf32>
    %103 = vector.shape_cast %100 : vector<8x32xf32> to vector<8x1x32xf32>
    tpu.vector_store %arg15[%c0_33, %c1_34, %c32_35], %103 {strides = array<i32>} : memref<8x2x256xf32, #tpu.memory_space<vmem>>, vector<8x1x32xf32>,
    %104 = vector.extract_strided_slice %8 {offsets = [0, 0, 64], sizes = [8, 1, 32], strides = [1, 1, 1]} : vector<8x2x768xf32> to vector<8x1x32xf32>
    %105 = vector.shape_cast %104 : vector<8x1x32xf32> to vector<8x32xf32>
    %106 = vector.extract_strided_slice %8 {offsets = [0, 0, 320], sizes = [8, 1, 32], strides = [1, 1, 1]} : vector<8x2x768xf32> to vector<8x1x32xf32>
    %107 = vector.shape_cast %106 : vector<8x1x32xf32> to vector<8x32xf32>
    %108 = vector.extract_strided_slice %8 {offsets = [0, 0, 576], sizes = [8, 1, 32], strides = [1, 1, 1]} : vector<8x2x768xf32> to vector<8x1x32xf32>
    %109 = vector.shape_cast %108 : vector<8x1x32xf32> to vector<8x32xf32>
    %cst_36 = arith.constant dense<0.000000e+00> : vector<8x8xf32>
    %110 = tpu.matmul %105, %107, %cst_36 {dimension_numbers = #tpu.dot_dimension_numbers<[1], [1], [0], [0], [0, 0, 1, 0], [], []>} : vector<8x32xf32>, vector<8x32xf32>, vector<8x8xf32> -> vector<8x8xf32>
    %cst_37 = arith.constant 0xFF800000 : f32
    %111 = vector.broadcast %cst_37 : f32 to vector<8x8xf32>
    %112 = arith.select %11, %110, %111 : vector<8x8xi1>, vector<8x8xf32>
    %cst_38 = arith.constant dense<0xFF800000> : vector<8xf32>
    %113 = vector.multi_reduction <maximumf>, %112, %cst_38 [1] : vector<8x8xf32> to vector<8xf32>
    %114 = vector.shape_cast %113 : vector<8xf32> to vector<8x1xf32>
    %115 = vector.broadcast %114 : vector<8x1xf32> to vector<8x8xf32>
    %116 = arith.subf %112, %115 : vector<8x8xf32>
    %117 = math.exp %116 : vector<8x8xf32>
    %cst_39 = arith.constant dense<0.000000e+00> : vector<8xf32>
    %118 = vector.multi_reduction <add>, %117, %cst_39 [1] : vector<8x8xf32> to vector<8xf32>
    %119 = vector.shape_cast %118 : vector<8xf32> to vector<8x1xf32>
    %cst_40 = arith.constant dense<0.000000e+00> : vector<8x32xf32>
    %120 = tpu.matmul %117, %109, %cst_40 {dimension_numbers = #tpu.dot_dimension_numbers<[1], [0], [0], [1], [0, 0, 1, 1], [], []>} : vector<8x8xf32>, vector<8x32xf32>, vector<8x32xf32> -> vector<8x32xf32>
    %121 = tpu.reciprocal %119 {approx = true} : vector<8x1xf32> -> vector<8x1xf32>
    %122 = vector.broadcast %121 : vector<8x1xf32> to vector<8x32xf32>
    %123 = arith.mulf %120, %122 : vector<8x32xf32>
    %c0_41 = arith.constant 0 : index
    %c0_42 = arith.constant 0 : index
    %c64 = arith.constant 64 : index
    %124 = vector.load %arg15[%c0_41, %c0_42, %c64] : memref<8x2x256xf32, #tpu.memory_space<vmem>>, vector<8x1x32xf32>
    %125 = vector.shape_cast %124 : vector<8x1x32xf32> to vector<8x32xf32>
    %126 = vector.shape_cast %123 : vector<8x32xf32> to vector<8x1x32xf32>
    tpu.vector_store %arg15[%c0_41, %c0_42, %c64], %126 {strides = array<i32>} : memref<8x2x256xf32, #tpu.memory_space<vmem>>, vector<8x1x32xf32>,
    %127 = vector.extract_strided_slice %8 {offsets = [0, 1, 64], sizes = [8, 1, 32], strides = [1, 1, 1]} : vector<8x2x768xf32> to vector<8x1x32xf32>
    %128 = vector.shape_cast %127 : vector<8x1x32xf32> to vector<8x32xf32>
    %129 = vector.extract_strided_slice %8 {offsets = [0, 1, 320], sizes = [8, 1, 32], strides = [1, 1, 1]} : vector<8x2x768xf32> to vector<8x1x32xf32>
    %130 = vector.shape_cast %129 : vector<8x1x32xf32> to vector<8x32xf32>
    %131 = vector.extract_strided_slice %8 {offsets = [0, 1, 576], sizes = [8, 1, 32], strides = [1, 1, 1]} : vector<8x2x768xf32> to vector<8x1x32xf32>
    %132 = vector.shape_cast %131 : vector<8x1x32xf32> to vector<8x32xf32>
    %cst_43 = arith.constant dense<0.000000e+00> : vector<8x8xf32>
    %133 = tpu.matmul %128, %130, %cst_43 {dimension_numbers = #tpu.dot_dimension_numbers<[1], [1], [0], [0], [0, 0, 1, 0], [], []>} : vector<8x32xf32>, vector<8x32xf32>, vector<8x8xf32> -> vector<8x8xf32>
    %cst_44 = arith.constant 0xFF800000 : f32
    %134 = vector.broadcast %cst_44 : f32 to vector<8x8xf32>
    %135 = arith.select %11, %133, %134 : vector<8x8xi1>, vector<8x8xf32>
    %cst_45 = arith.constant dense<0xFF800000> : vector<8xf32>
    %136 = vector.multi_reduction <maximumf>, %135, %cst_45 [1] : vector<8x8xf32> to vector<8xf32>
    %137 = vector.shape_cast %136 : vector<8xf32> to vector<8x1xf32>
    %138 = vector.broadcast %137 : vector<8x1xf32> to vector<8x8xf32>
    %139 = arith.subf %135, %138 : vector<8x8xf32>
    %140 = math.exp %139 : vector<8x8xf32>
    %cst_46 = arith.constant dense<0.000000e+00> : vector<8xf32>
    %141 = vector.multi_reduction <add>, %140, %cst_46 [1] : vector<8x8xf32> to vector<8xf32>
    %142 = vector.shape_cast %141 : vector<8xf32> to vector<8x1xf32>
    %cst_47 = arith.constant dense<0.000000e+00> : vector<8x32xf32>
    %143 = tpu.matmul %140, %132, %cst_47 {dimension_numbers = #tpu.dot_dimension_numbers<[1], [0], [0], [1], [0, 0, 1, 1], [], []>} : vector<8x8xf32>, vector<8x32xf32>, vector<8x32xf32> -> vector<8x32xf32>
    %144 = tpu.reciprocal %142 {approx = true} : vector<8x1xf32> -> vector<8x1xf32>
    %145 = vector.broadcast %144 : vector<8x1xf32> to vector<8x32xf32>
    %146 = arith.mulf %143, %145 : vector<8x32xf32>
    %c0_48 = arith.constant 0 : index
    %c1_49 = arith.constant 1 : index
    %c64_50 = arith.constant 64 : index
    %147 = vector.load %arg15[%c0_48, %c1_49, %c64_50] : memref<8x2x256xf32, #tpu.memory_space<vmem>>, vector<8x1x32xf32>
    %148 = vector.shape_cast %147 : vector<8x1x32xf32> to vector<8x32xf32>
    %149 = vector.shape_cast %146 : vector<8x32xf32> to vector<8x1x32xf32>
    tpu.vector_store %arg15[%c0_48, %c1_49, %c64_50], %149 {strides = array<i32>} : memref<8x2x256xf32, #tpu.memory_space<vmem>>, vector<8x1x32xf32>,
    %150 = vector.extract_strided_slice %8 {offsets = [0, 0, 96], sizes = [8, 1, 32], strides = [1, 1, 1]} : vector<8x2x768xf32> to vector<8x1x32xf32>
    %151 = vector.shape_cast %150 : vector<8x1x32xf32> to vector<8x32xf32>
    %152 = vector.extract_strided_slice %8 {offsets = [0, 0, 352], sizes = [8, 1, 32], strides = [1, 1, 1]} : vector<8x2x768xf32> to vector<8x1x32xf32>
    %153 = vector.shape_cast %152 : vector<8x1x32xf32> to vector<8x32xf32>
    %154 = vector.extract_strided_slice %8 {offsets = [0, 0, 608], sizes = [8, 1, 32], strides = [1, 1, 1]} : vector<8x2x768xf32> to vector<8x1x32xf32>
    %155 = vector.shape_cast %154 : vector<8x1x32xf32> to vector<8x32xf32>
    %cst_51 = arith.constant dense<0.000000e+00> : vector<8x8xf32>
    %156 = tpu.matmul %151, %153, %cst_51 {dimension_numbers = #tpu.dot_dimension_numbers<[1], [1], [0], [0], [0, 0, 1, 0], [], []>} : vector<8x32xf32>, vector<8x32xf32>, vector<8x8xf32> -> vector<8x8xf32>
    %cst_52 = arith.constant 0xFF800000 : f32
    %157 = vector.broadcast %cst_52 : f32 to vector<8x8xf32>
    %158 = arith.select %11, %156, %157 : vector<8x8xi1>, vector<8x8xf32>
    %cst_53 = arith.constant dense<0xFF800000> : vector<8xf32>
    %159 = vector.multi_reduction <maximumf>, %158, %cst_53 [1] : vector<8x8xf32> to vector<8xf32>
    %160 = vector.shape_cast %159 : vector<8xf32> to vector<8x1xf32>
    %161 = vector.broadcast %160 : vector<8x1xf32> to vector<8x8xf32>
    %162 = arith.subf %158, %161 : vector<8x8xf32>
    %163 = math.exp %162 : vector<8x8xf32>
    %cst_54 = arith.constant dense<0.000000e+00> : vector<8xf32>
    %164 = vector.multi_reduction <add>, %163, %cst_54 [1] : vector<8x8xf32> to vector<8xf32>
    %165 = vector.shape_cast %164 : vector<8xf32> to vector<8x1xf32>
    %cst_55 = arith.constant dense<0.000000e+00> : vector<8x32xf32>
    %166 = tpu.matmul %163, %155, %cst_55 {dimension_numbers = #tpu.dot_dimension_numbers<[1], [0], [0], [1], [0, 0, 1, 1], [], []>} : vector<8x8xf32>, vector<8x32xf32>, vector<8x32xf32> -> vector<8x32xf32>
    %167 = tpu.reciprocal %165 {approx = true} : vector<8x1xf32> -> vector<8x1xf32>
    %168 = vector.broadcast %167 : vector<8x1xf32> to vector<8x32xf32>
    %169 = arith.mulf %166, %168 : vector<8x32xf32>
    %c0_56 = arith.constant 0 : index
    %c0_57 = arith.constant 0 : index
    %c96 = arith.constant 96 : index
    %170 = vector.load %arg15[%c0_56, %c0_57, %c96] : memref<8x2x256xf32, #tpu.memory_space<vmem>>, vector<8x1x32xf32>
    %171 = vector.shape_cast %170 : vector<8x1x32xf32> to vector<8x32xf32>
    %172 = vector.shape_cast %169 : vector<8x32xf32> to vector<8x1x32xf32>
    tpu.vector_store %arg15[%c0_56, %c0_57, %c96], %172 {strides = array<i32>} : memref<8x2x256xf32, #tpu.memory_space<vmem>>, vector<8x1x32xf32>,
    %173 = vector.extract_strided_slice %8 {offsets = [0, 1, 96], sizes = [8, 1, 32], strides = [1, 1, 1]} : vector<8x2x768xf32> to vector<8x1x32xf32>
    %174 = vector.shape_cast %173 : vector<8x1x32xf32> to vector<8x32xf32>
    %175 = vector.extract_strided_slice %8 {offsets = [0, 1, 352], sizes = [8, 1, 32], strides = [1, 1, 1]} : vector<8x2x768xf32> to vector<8x1x32xf32>
    %176 = vector.shape_cast %175 : vector<8x1x32xf32> to vector<8x32xf32>
    %177 = vector.extract_strided_slice %8 {offsets = [0, 1, 608], sizes = [8, 1, 32], strides = [1, 1, 1]} : vector<8x2x768xf32> to vector<8x1x32xf32>
    %178 = vector.shape_cast %177 : vector<8x1x32xf32> to vector<8x32xf32>
    %cst_58 = arith.constant dense<0.000000e+00> : vector<8x8xf32>
    %179 = tpu.matmul %174, %176, %cst_58 {dimension_numbers = #tpu.dot_dimension_numbers<[1], [1], [0], [0], [0, 0, 1, 0], [], []>} : vector<8x32xf32>, vector<8x32xf32>, vector<8x8xf32> -> vector<8x8xf32>
    %cst_59 = arith.constant 0xFF800000 : f32
    %180 = vector.broadcast %cst_59 : f32 to vector<8x8xf32>
    %181 = arith.select %11, %179, %180 : vector<8x8xi1>, vector<8x8xf32>
    %cst_60 = arith.constant dense<0xFF800000> : vector<8xf32>
    %182 = vector.multi_reduction <maximumf>, %181, %cst_60 [1] : vector<8x8xf32> to vector<8xf32>
    %183 = vector.shape_cast %182 : vector<8xf32> to vector<8x1xf32>
    %184 = vector.broadcast %183 : vector<8x1xf32> to vector<8x8xf32>
    %185 = arith.subf %181, %184 : vector<8x8xf32>
    %186 = math.exp %185 : vector<8x8xf32>
    %cst_61 = arith.constant dense<0.000000e+00> : vector<8xf32>
    %187 = vector.multi_reduction <add>, %186, %cst_61 [1] : vector<8x8xf32> to vector<8xf32>
    %188 = vector.shape_cast %187 : vector<8xf32> to vector<8x1xf32>
    %cst_62 = arith.constant dense<0.000000e+00> : vector<8x32xf32>
    %189 = tpu.matmul %186, %178, %cst_62 {dimension_numbers = #tpu.dot_dimension_numbers<[1], [0], [0], [1], [0, 0, 1, 1], [], []>} : vector<8x8xf32>, vector<8x32xf32>, vector<8x32xf32> -> vector<8x32xf32>
    %190 = tpu.reciprocal %188 {approx = true} : vector<8x1xf32> -> vector<8x1xf32>
    %191 = vector.broadcast %190 : vector<8x1xf32> to vector<8x32xf32>
    %192 = arith.mulf %189, %191 : vector<8x32xf32>
    %c0_63 = arith.constant 0 : index
    %c1_64 = arith.constant 1 : index
    %c96_65 = arith.constant 96 : index
    %193 = vector.load %arg15[%c0_63, %c1_64, %c96_65] : memref<8x2x256xf32, #tpu.memory_space<vmem>>, vector<8x1x32xf32>
    %194 = vector.shape_cast %193 : vector<8x1x32xf32> to vector<8x32xf32>
    %195 = vector.shape_cast %192 : vector<8x32xf32> to vector<8x1x32xf32>
    tpu.vector_store %arg15[%c0_63, %c1_64, %c96_65], %195 {strides = array<i32>} : memref<8x2x256xf32, #tpu.memory_space<vmem>>, vector<8x1x32xf32>,
    %196 = vector.extract_strided_slice %8 {offsets = [0, 0, 128], sizes = [8, 1, 32], strides = [1, 1, 1]} : vector<8x2x768xf32> to vector<8x1x32xf32>
    %197 = vector.shape_cast %196 : vector<8x1x32xf32> to vector<8x32xf32>
    %198 = vector.extract_strided_slice %8 {offsets = [0, 0, 384], sizes = [8, 1, 32], strides = [1, 1, 1]} : vector<8x2x768xf32> to vector<8x1x32xf32>
    %199 = vector.shape_cast %198 : vector<8x1x32xf32> to vector<8x32xf32>
    %200 = vector.extract_strided_slice %8 {offsets = [0, 0, 640], sizes = [8, 1, 32], strides = [1, 1, 1]} : vector<8x2x768xf32> to vector<8x1x32xf32>
    %201 = vector.shape_cast %200 : vector<8x1x32xf32> to vector<8x32xf32>
    %cst_66 = arith.constant dense<0.000000e+00> : vector<8x8xf32>
    %202 = tpu.matmul %197, %199, %cst_66 {dimension_numbers = #tpu.dot_dimension_numbers<[1], [1], [0], [0], [0, 0, 1, 0], [], []>} : vector<8x32xf32>, vector<8x32xf32>, vector<8x8xf32> -> vector<8x8xf32>
    %cst_67 = arith.constant 0xFF800000 : f32
    %203 = vector.broadcast %cst_67 : f32 to vector<8x8xf32>
    %204 = arith.select %11, %202, %203 : vector<8x8xi1>, vector<8x8xf32>
    %cst_68 = arith.constant dense<0xFF800000> : vector<8xf32>
    %205 = vector.multi_reduction <maximumf>, %204, %cst_68 [1] : vector<8x8xf32> to vector<8xf32>
    %206 = vector.shape_cast %205 : vector<8xf32> to vector<8x1xf32>
    %207 = vector.broadcast %206 : vector<8x1xf32> to vector<8x8xf32>
    %208 = arith.subf %204, %207 : vector<8x8xf32>
    %209 = math.exp %208 : vector<8x8xf32>
    %cst_69 = arith.constant dense<0.000000e+00> : vector<8xf32>
    %210 = vector.multi_reduction <add>, %209, %cst_69 [1] : vector<8x8xf32> to vector<8xf32>
    %211 = vector.shape_cast %210 : vector<8xf32> to vector<8x1xf32>
    %cst_70 = arith.constant dense<0.000000e+00> : vector<8x32xf32>
    %212 = tpu.matmul %209, %201, %cst_70 {dimension_numbers = #tpu.dot_dimension_numbers<[1], [0], [0], [1], [0, 0, 1, 1], [], []>} : vector<8x8xf32>, vector<8x32xf32>, vector<8x32xf32> -> vector<8x32xf32>
    %213 = tpu.reciprocal %211 {approx = true} : vector<8x1xf32> -> vector<8x1xf32>
    %214 = vector.broadcast %213 : vector<8x1xf32> to vector<8x32xf32>
    %215 = arith.mulf %212, %214 : vector<8x32xf32>
    %c0_71 = arith.constant 0 : index
    %c0_72 = arith.constant 0 : index
    %c128 = arith.constant 128 : index
    %216 = vector.load %arg15[%c0_71, %c0_72, %c128] : memref<8x2x256xf32, #tpu.memory_space<vmem>>, vector<8x1x32xf32>
    %217 = vector.shape_cast %216 : vector<8x1x32xf32> to vector<8x32xf32>
    %218 = vector.shape_cast %215 : vector<8x32xf32> to vector<8x1x32xf32>
    tpu.vector_store %arg15[%c0_71, %c0_72, %c128], %218 {strides = array<i32>} : memref<8x2x256xf32, #tpu.memory_space<vmem>>, vector<8x1x32xf32>,
    %219 = vector.extract_strided_slice %8 {offsets = [0, 1, 128], sizes = [8, 1, 32], strides = [1, 1, 1]} : vector<8x2x768xf32> to vector<8x1x32xf32>
    %220 = vector.shape_cast %219 : vector<8x1x32xf32> to vector<8x32xf32>
    %221 = vector.extract_strided_slice %8 {offsets = [0, 1, 384], sizes = [8, 1, 32], strides = [1, 1, 1]} : vector<8x2x768xf32> to vector<8x1x32xf32>
    %222 = vector.shape_cast %221 : vector<8x1x32xf32> to vector<8x32xf32>
    %223 = vector.extract_strided_slice %8 {offsets = [0, 1, 640], sizes = [8, 1, 32], strides = [1, 1, 1]} : vector<8x2x768xf32> to vector<8x1x32xf32>
    %224 = vector.shape_cast %223 : vector<8x1x32xf32> to vector<8x32xf32>
    %cst_73 = arith.constant dense<0.000000e+00> : vector<8x8xf32>
    %225 = tpu.matmul %220, %222, %cst_73 {dimension_numbers = #tpu.dot_dimension_numbers<[1], [1], [0], [0], [0, 0, 1, 0], [], []>} : vector<8x32xf32>, vector<8x32xf32>, vector<8x8xf32> -> vector<8x8xf32>
    %cst_74 = arith.constant 0xFF800000 : f32
    %226 = vector.broadcast %cst_74 : f32 to vector<8x8xf32>
    %227 = arith.select %11, %225, %226 : vector<8x8xi1>, vector<8x8xf32>
    %cst_75 = arith.constant dense<0xFF800000> : vector<8xf32>
    %228 = vector.multi_reduction <maximumf>, %227, %cst_75 [1] : vector<8x8xf32> to vector<8xf32>
    %229 = vector.shape_cast %228 : vector<8xf32> to vector<8x1xf32>
    %230 = vector.broadcast %229 : vector<8x1xf32> to vector<8x8xf32>
    %231 = arith.subf %227, %230 : vector<8x8xf32>
    %232 = math.exp %231 : vector<8x8xf32>
    %cst_76 = arith.constant dense<0.000000e+00> : vector<8xf32>
    %233 = vector.multi_reduction <add>, %232, %cst_76 [1] : vector<8x8xf32> to vector<8xf32>
    %234 = vector.shape_cast %233 : vector<8xf32> to vector<8x1xf32>
    %cst_77 = arith.constant dense<0.000000e+00> : vector<8x32xf32>
    %235 = tpu.matmul %232, %224, %cst_77 {dimension_numbers = #tpu.dot_dimension_numbers<[1], [0], [0], [1], [0, 0, 1, 1], [], []>} : vector<8x8xf32>, vector<8x32xf32>, vector<8x32xf32> -> vector<8x32xf32>
    %236 = tpu.reciprocal %234 {approx = true} : vector<8x1xf32> -> vector<8x1xf32>
    %237 = vector.broadcast %236 : vector<8x1xf32> to vector<8x32xf32>
    %238 = arith.mulf %235, %237 : vector<8x32xf32>
    %c0_78 = arith.constant 0 : index
    %c1_79 = arith.constant 1 : index
    %c128_80 = arith.constant 128 : index
    %239 = vector.load %arg15[%c0_78, %c1_79, %c128_80] : memref<8x2x256xf32, #tpu.memory_space<vmem>>, vector<8x1x32xf32>
    %240 = vector.shape_cast %239 : vector<8x1x32xf32> to vector<8x32xf32>
    %241 = vector.shape_cast %238 : vector<8x32xf32> to vector<8x1x32xf32>
    tpu.vector_store %arg15[%c0_78, %c1_79, %c128_80], %241 {strides = array<i32>} : memref<8x2x256xf32, #tpu.memory_space<vmem>>, vector<8x1x32xf32>,
    %242 = vector.extract_strided_slice %8 {offsets = [0, 0, 160], sizes = [8, 1, 32], strides = [1, 1, 1]} : vector<8x2x768xf32> to vector<8x1x32xf32>
    %243 = vector.shape_cast %242 : vector<8x1x32xf32> to vector<8x32xf32>
    %244 = vector.extract_strided_slice %8 {offsets = [0, 0, 416], sizes = [8, 1, 32], strides = [1, 1, 1]} : vector<8x2x768xf32> to vector<8x1x32xf32>
    %245 = vector.shape_cast %244 : vector<8x1x32xf32> to vector<8x32xf32>
    %246 = vector.extract_strided_slice %8 {offsets = [0, 0, 672], sizes = [8, 1, 32], strides = [1, 1, 1]} : vector<8x2x768xf32> to vector<8x1x32xf32>
    %247 = vector.shape_cast %246 : vector<8x1x32xf32> to vector<8x32xf32>
    %cst_81 = arith.constant dense<0.000000e+00> : vector<8x8xf32>
    %248 = tpu.matmul %243, %245, %cst_81 {dimension_numbers = #tpu.dot_dimension_numbers<[1], [1], [0], [0], [0, 0, 1, 0], [], []>} : vector<8x32xf32>, vector<8x32xf32>, vector<8x8xf32> -> vector<8x8xf32>
    %cst_82 = arith.constant 0xFF800000 : f32
    %249 = vector.broadcast %cst_82 : f32 to vector<8x8xf32>
    %250 = arith.select %11, %248, %249 : vector<8x8xi1>, vector<8x8xf32>
    %cst_83 = arith.constant dense<0xFF800000> : vector<8xf32>
    %251 = vector.multi_reduction <maximumf>, %250, %cst_83 [1] : vector<8x8xf32> to vector<8xf32>
    %252 = vector.shape_cast %251 : vector<8xf32> to vector<8x1xf32>
    %253 = vector.broadcast %252 : vector<8x1xf32> to vector<8x8xf32>
    %254 = arith.subf %250, %253 : vector<8x8xf32>
    %255 = math.exp %254 : vector<8x8xf32>
    %cst_84 = arith.constant dense<0.000000e+00> : vector<8xf32>
    %256 = vector.multi_reduction <add>, %255, %cst_84 [1] : vector<8x8xf32> to vector<8xf32>
    %257 = vector.shape_cast %256 : vector<8xf32> to vector<8x1xf32>
    %cst_85 = arith.constant dense<0.000000e+00> : vector<8x32xf32>
    %258 = tpu.matmul %255, %247, %cst_85 {dimension_numbers = #tpu.dot_dimension_numbers<[1], [0], [0], [1], [0, 0, 1, 1], [], []>} : vector<8x8xf32>, vector<8x32xf32>, vector<8x32xf32> -> vector<8x32xf32>
    %259 = tpu.reciprocal %257 {approx = true} : vector<8x1xf32> -> vector<8x1xf32>
    %260 = vector.broadcast %259 : vector<8x1xf32> to vector<8x32xf32>
    %261 = arith.mulf %258, %260 : vector<8x32xf32>
    %c0_86 = arith.constant 0 : index
    %c0_87 = arith.constant 0 : index
    %c160 = arith.constant 160 : index
    %262 = vector.load %arg15[%c0_86, %c0_87, %c160] : memref<8x2x256xf32, #tpu.memory_space<vmem>>, vector<8x1x32xf32>
    %263 = vector.shape_cast %262 : vector<8x1x32xf32> to vector<8x32xf32>
    %264 = vector.shape_cast %261 : vector<8x32xf32> to vector<8x1x32xf32>
    tpu.vector_store %arg15[%c0_86, %c0_87, %c160], %264 {strides = array<i32>} : memref<8x2x256xf32, #tpu.memory_space<vmem>>, vector<8x1x32xf32>,
    %265 = vector.extract_strided_slice %8 {offsets = [0, 1, 160], sizes = [8, 1, 32], strides = [1, 1, 1]} : vector<8x2x768xf32> to vector<8x1x32xf32>
    %266 = vector.shape_cast %265 : vector<8x1x32xf32> to vector<8x32xf32>
    %267 = vector.extract_strided_slice %8 {offsets = [0, 1, 416], sizes = [8, 1, 32], strides = [1, 1, 1]} : vector<8x2x768xf32> to vector<8x1x32xf32>
    %268 = vector.shape_cast %267 : vector<8x1x32xf32> to vector<8x32xf32>
    %269 = vector.extract_strided_slice %8 {offsets = [0, 1, 672], sizes = [8, 1, 32], strides = [1, 1, 1]} : vector<8x2x768xf32> to vector<8x1x32xf32>
    %270 = vector.shape_cast %269 : vector<8x1x32xf32> to vector<8x32xf32>
    %cst_88 = arith.constant dense<0.000000e+00> : vector<8x8xf32>
    %271 = tpu.matmul %266, %268, %cst_88 {dimension_numbers = #tpu.dot_dimension_numbers<[1], [1], [0], [0], [0, 0, 1, 0], [], []>} : vector<8x32xf32>, vector<8x32xf32>, vector<8x8xf32> -> vector<8x8xf32>
    %cst_89 = arith.constant 0xFF800000 : f32
    %272 = vector.broadcast %cst_89 : f32 to vector<8x8xf32>
    %273 = arith.select %11, %271, %272 : vector<8x8xi1>, vector<8x8xf32>
    %cst_90 = arith.constant dense<0xFF800000> : vector<8xf32>
    %274 = vector.multi_reduction <maximumf>, %273, %cst_90 [1] : vector<8x8xf32> to vector<8xf32>
    %275 = vector.shape_cast %274 : vector<8xf32> to vector<8x1xf32>
    %276 = vector.broadcast %275 : vector<8x1xf32> to vector<8x8xf32>
    %277 = arith.subf %273, %276 : vector<8x8xf32>
    %278 = math.exp %277 : vector<8x8xf32>
    %cst_91 = arith.constant dense<0.000000e+00> : vector<8xf32>
    %279 = vector.multi_reduction <add>, %278, %cst_91 [1] : vector<8x8xf32> to vector<8xf32>
    %280 = vector.shape_cast %279 : vector<8xf32> to vector<8x1xf32>
    %cst_92 = arith.constant dense<0.000000e+00> : vector<8x32xf32>
    %281 = tpu.matmul %278, %270, %cst_92 {dimension_numbers = #tpu.dot_dimension_numbers<[1], [0], [0], [1], [0, 0, 1, 1], [], []>} : vector<8x8xf32>, vector<8x32xf32>, vector<8x32xf32> -> vector<8x32xf32>
    %282 = tpu.reciprocal %280 {approx = true} : vector<8x1xf32> -> vector<8x1xf32>
    %283 = vector.broadcast %282 : vector<8x1xf32> to vector<8x32xf32>
    %284 = arith.mulf %281, %283 : vector<8x32xf32>
    %c0_93 = arith.constant 0 : index
    %c1_94 = arith.constant 1 : index
    %c160_95 = arith.constant 160 : index
    %285 = vector.load %arg15[%c0_93, %c1_94, %c160_95] : memref<8x2x256xf32, #tpu.memory_space<vmem>>, vector<8x1x32xf32>
    %286 = vector.shape_cast %285 : vector<8x1x32xf32> to vector<8x32xf32>
    %287 = vector.shape_cast %284 : vector<8x32xf32> to vector<8x1x32xf32>
    tpu.vector_store %arg15[%c0_93, %c1_94, %c160_95], %287 {strides = array<i32>} : memref<8x2x256xf32, #tpu.memory_space<vmem>>, vector<8x1x32xf32>,
    %288 = vector.extract_strided_slice %8 {offsets = [0, 0, 192], sizes = [8, 1, 32], strides = [1, 1, 1]} : vector<8x2x768xf32> to vector<8x1x32xf32>
    %289 = vector.shape_cast %288 : vector<8x1x32xf32> to vector<8x32xf32>
    %290 = vector.extract_strided_slice %8 {offsets = [0, 0, 448], sizes = [8, 1, 32], strides = [1, 1, 1]} : vector<8x2x768xf32> to vector<8x1x32xf32>
    %291 = vector.shape_cast %290 : vector<8x1x32xf32> to vector<8x32xf32>
    %292 = vector.extract_strided_slice %8 {offsets = [0, 0, 704], sizes = [8, 1, 32], strides = [1, 1, 1]} : vector<8x2x768xf32> to vector<8x1x32xf32>
    %293 = vector.shape_cast %292 : vector<8x1x32xf32> to vector<8x32xf32>
    %cst_96 = arith.constant dense<0.000000e+00> : vector<8x8xf32>
    %294 = tpu.matmul %289, %291, %cst_96 {dimension_numbers = #tpu.dot_dimension_numbers<[1], [1], [0], [0], [0, 0, 1, 0], [], []>} : vector<8x32xf32>, vector<8x32xf32>, vector<8x8xf32> -> vector<8x8xf32>
    %cst_97 = arith.constant 0xFF800000 : f32
    %295 = vector.broadcast %cst_97 : f32 to vector<8x8xf32>
    %296 = arith.select %11, %294, %295 : vector<8x8xi1>, vector<8x8xf32>
    %cst_98 = arith.constant dense<0xFF800000> : vector<8xf32>
    %297 = vector.multi_reduction <maximumf>, %296, %cst_98 [1] : vector<8x8xf32> to vector<8xf32>
    %298 = vector.shape_cast %297 : vector<8xf32> to vector<8x1xf32>
    %299 = vector.broadcast %298 : vector<8x1xf32> to vector<8x8xf32>
    %300 = arith.subf %296, %299 : vector<8x8xf32>
    %301 = math.exp %300 : vector<8x8xf32>
    %cst_99 = arith.constant dense<0.000000e+00> : vector<8xf32>
    %302 = vector.multi_reduction <add>, %301, %cst_99 [1] : vector<8x8xf32> to vector<8xf32>
    %303 = vector.shape_cast %302 : vector<8xf32> to vector<8x1xf32>
    %cst_100 = arith.constant dense<0.000000e+00> : vector<8x32xf32>
    %304 = tpu.matmul %301, %293, %cst_100 {dimension_numbers = #tpu.dot_dimension_numbers<[1], [0], [0], [1], [0, 0, 1, 1], [], []>} : vector<8x8xf32>, vector<8x32xf32>, vector<8x32xf32> -> vector<8x32xf32>
    %305 = tpu.reciprocal %303 {approx = true} : vector<8x1xf32> -> vector<8x1xf32>
    %306 = vector.broadcast %305 : vector<8x1xf32> to vector<8x32xf32>
    %307 = arith.mulf %304, %306 : vector<8x32xf32>
    %c0_101 = arith.constant 0 : index
    %c0_102 = arith.constant 0 : index
    %c192 = arith.constant 192 : index
    %308 = vector.load %arg15[%c0_101, %c0_102, %c192] : memref<8x2x256xf32, #tpu.memory_space<vmem>>, vector<8x1x32xf32>
    %309 = vector.shape_cast %308 : vector<8x1x32xf32> to vector<8x32xf32>
    %310 = vector.shape_cast %307 : vector<8x32xf32> to vector<8x1x32xf32>
    tpu.vector_store %arg15[%c0_101, %c0_102, %c192], %310 {strides = array<i32>} : memref<8x2x256xf32, #tpu.memory_space<vmem>>, vector<8x1x32xf32>,
    %311 = vector.extract_strided_slice %8 {offsets = [0, 1, 192], sizes = [8, 1, 32], strides = [1, 1, 1]} : vector<8x2x768xf32> to vector<8x1x32xf32>
    %312 = vector.shape_cast %311 : vector<8x1x32xf32> to vector<8x32xf32>
    %313 = vector.extract_strided_slice %8 {offsets = [0, 1, 448], sizes = [8, 1, 32], strides = [1, 1, 1]} : vector<8x2x768xf32> to vector<8x1x32xf32>
    %314 = vector.shape_cast %313 : vector<8x1x32xf32> to vector<8x32xf32>
    %315 = vector.extract_strided_slice %8 {offsets = [0, 1, 704], sizes = [8, 1, 32], strides = [1, 1, 1]} : vector<8x2x768xf32> to vector<8x1x32xf32>
    %316 = vector.shape_cast %315 : vector<8x1x32xf32> to vector<8x32xf32>
    %cst_103 = arith.constant dense<0.000000e+00> : vector<8x8xf32>
    %317 = tpu.matmul %312, %314, %cst_103 {dimension_numbers = #tpu.dot_dimension_numbers<[1], [1], [0], [0], [0, 0, 1, 0], [], []>} : vector<8x32xf32>, vector<8x32xf32>, vector<8x8xf32> -> vector<8x8xf32>
    %cst_104 = arith.constant 0xFF800000 : f32
    %318 = vector.broadcast %cst_104 : f32 to vector<8x8xf32>
    %319 = arith.select %11, %317, %318 : vector<8x8xi1>, vector<8x8xf32>
    %cst_105 = arith.constant dense<0xFF800000> : vector<8xf32>
    %320 = vector.multi_reduction <maximumf>, %319, %cst_105 [1] : vector<8x8xf32> to vector<8xf32>
    %321 = vector.shape_cast %320 : vector<8xf32> to vector<8x1xf32>
    %322 = vector.broadcast %321 : vector<8x1xf32> to vector<8x8xf32>
    %323 = arith.subf %319, %322 : vector<8x8xf32>
    %324 = math.exp %323 : vector<8x8xf32>
    %cst_106 = arith.constant dense<0.000000e+00> : vector<8xf32>
    %325 = vector.multi_reduction <add>, %324, %cst_106 [1] : vector<8x8xf32> to vector<8xf32>
    %326 = vector.shape_cast %325 : vector<8xf32> to vector<8x1xf32>
    %cst_107 = arith.constant dense<0.000000e+00> : vector<8x32xf32>
    %327 = tpu.matmul %324, %316, %cst_107 {dimension_numbers = #tpu.dot_dimension_numbers<[1], [0], [0], [1], [0, 0, 1, 1], [], []>} : vector<8x8xf32>, vector<8x32xf32>, vector<8x32xf32> -> vector<8x32xf32>
    %328 = tpu.reciprocal %326 {approx = true} : vector<8x1xf32> -> vector<8x1xf32>
    %329 = vector.broadcast %328 : vector<8x1xf32> to vector<8x32xf32>
    %330 = arith.mulf %327, %329 : vector<8x32xf32>
    %c0_108 = arith.constant 0 : index
    %c1_109 = arith.constant 1 : index
    %c192_110 = arith.constant 192 : index
    %331 = vector.load %arg15[%c0_108, %c1_109, %c192_110] : memref<8x2x256xf32, #tpu.memory_space<vmem>>, vector<8x1x32xf32>
    %332 = vector.shape_cast %331 : vector<8x1x32xf32> to vector<8x32xf32>
    %333 = vector.shape_cast %330 : vector<8x32xf32> to vector<8x1x32xf32>
    tpu.vector_store %arg15[%c0_108, %c1_109, %c192_110], %333 {strides = array<i32>} : memref<8x2x256xf32, #tpu.memory_space<vmem>>, vector<8x1x32xf32>,
    %334 = vector.extract_strided_slice %8 {offsets = [0, 0, 224], sizes = [8, 1, 32], strides = [1, 1, 1]} : vector<8x2x768xf32> to vector<8x1x32xf32>
    %335 = vector.shape_cast %334 : vector<8x1x32xf32> to vector<8x32xf32>
    %336 = vector.extract_strided_slice %8 {offsets = [0, 0, 480], sizes = [8, 1, 32], strides = [1, 1, 1]} : vector<8x2x768xf32> to vector<8x1x32xf32>
    %337 = vector.shape_cast %336 : vector<8x1x32xf32> to vector<8x32xf32>
    %338 = vector.extract_strided_slice %8 {offsets = [0, 0, 736], sizes = [8, 1, 32], strides = [1, 1, 1]} : vector<8x2x768xf32> to vector<8x1x32xf32>
    %339 = vector.shape_cast %338 : vector<8x1x32xf32> to vector<8x32xf32>
    %cst_111 = arith.constant dense<0.000000e+00> : vector<8x8xf32>
    %340 = tpu.matmul %335, %337, %cst_111 {dimension_numbers = #tpu.dot_dimension_numbers<[1], [1], [0], [0], [0, 0, 1, 0], [], []>} : vector<8x32xf32>, vector<8x32xf32>, vector<8x8xf32> -> vector<8x8xf32>
    %cst_112 = arith.constant 0xFF800000 : f32
    %341 = vector.broadcast %cst_112 : f32 to vector<8x8xf32>
    %342 = arith.select %11, %340, %341 : vector<8x8xi1>, vector<8x8xf32>
    %cst_113 = arith.constant dense<0xFF800000> : vector<8xf32>
    %343 = vector.multi_reduction <maximumf>, %342, %cst_113 [1] : vector<8x8xf32> to vector<8xf32>
    %344 = vector.shape_cast %343 : vector<8xf32> to vector<8x1xf32>
    %345 = vector.broadcast %344 : vector<8x1xf32> to vector<8x8xf32>
    %346 = arith.subf %342, %345 : vector<8x8xf32>
    %347 = math.exp %346 : vector<8x8xf32>
    %cst_114 = arith.constant dense<0.000000e+00> : vector<8xf32>
    %348 = vector.multi_reduction <add>, %347, %cst_114 [1] : vector<8x8xf32> to vector<8xf32>
    %349 = vector.shape_cast %348 : vector<8xf32> to vector<8x1xf32>
    %cst_115 = arith.constant dense<0.000000e+00> : vector<8x32xf32>
    %350 = tpu.matmul %347, %339, %cst_115 {dimension_numbers = #tpu.dot_dimension_numbers<[1], [0], [0], [1], [0, 0, 1, 1], [], []>} : vector<8x8xf32>, vector<8x32xf32>, vector<8x32xf32> -> vector<8x32xf32>
    %351 = tpu.reciprocal %349 {approx = true} : vector<8x1xf32> -> vector<8x1xf32>
    %352 = vector.broadcast %351 : vector<8x1xf32> to vector<8x32xf32>
    %353 = arith.mulf %350, %352 : vector<8x32xf32>
    %c0_116 = arith.constant 0 : index
    %c0_117 = arith.constant 0 : index
    %c224 = arith.constant 224 : index
    %354 = vector.load %arg15[%c0_116, %c0_117, %c224] : memref<8x2x256xf32, #tpu.memory_space<vmem>>, vector<8x1x32xf32>
    %355 = vector.shape_cast %354 : vector<8x1x32xf32> to vector<8x32xf32>
    %356 = vector.shape_cast %353 : vector<8x32xf32> to vector<8x1x32xf32>
    tpu.vector_store %arg15[%c0_116, %c0_117, %c224], %356 {strides = array<i32>} : memref<8x2x256xf32, #tpu.memory_space<vmem>>, vector<8x1x32xf32>,
    %357 = vector.extract_strided_slice %8 {offsets = [0, 1, 224], sizes = [8, 1, 32], strides = [1, 1, 1]} : vector<8x2x768xf32> to vector<8x1x32xf32>
    %358 = vector.shape_cast %357 : vector<8x1x32xf32> to vector<8x32xf32>
    %359 = vector.extract_strided_slice %8 {offsets = [0, 1, 480], sizes = [8, 1, 32], strides = [1, 1, 1]} : vector<8x2x768xf32> to vector<8x1x32xf32>
    %360 = vector.shape_cast %359 : vector<8x1x32xf32> to vector<8x32xf32>
    %361 = vector.extract_strided_slice %8 {offsets = [0, 1, 736], sizes = [8, 1, 32], strides = [1, 1, 1]} : vector<8x2x768xf32> to vector<8x1x32xf32>
    %362 = vector.shape_cast %361 : vector<8x1x32xf32> to vector<8x32xf32>
    %cst_118 = arith.constant dense<0.000000e+00> : vector<8x8xf32>
    %363 = tpu.matmul %358, %360, %cst_118 {dimension_numbers = #tpu.dot_dimension_numbers<[1], [1], [0], [0], [0, 0, 1, 0], [], []>} : vector<8x32xf32>, vector<8x32xf32>, vector<8x8xf32> -> vector<8x8xf32>
    %cst_119 = arith.constant 0xFF800000 : f32
    %364 = vector.broadcast %cst_119 : f32 to vector<8x8xf32>
    %365 = arith.select %11, %363, %364 : vector<8x8xi1>, vector<8x8xf32>
    %cst_120 = arith.constant dense<0xFF800000> : vector<8xf32>
    %366 = vector.multi_reduction <maximumf>, %365, %cst_120 [1] : vector<8x8xf32> to vector<8xf32>
    %367 = vector.shape_cast %366 : vector<8xf32> to vector<8x1xf32>
    %368 = vector.broadcast %367 : vector<8x1xf32> to vector<8x8xf32>
    %369 = arith.subf %365, %368 : vector<8x8xf32>
    %370 = math.exp %369 : vector<8x8xf32>
    %cst_121 = arith.constant dense<0.000000e+00> : vector<8xf32>
    %371 = vector.multi_reduction <add>, %370, %cst_121 [1] : vector<8x8xf32> to vector<8xf32>
    %372 = vector.shape_cast %371 : vector<8xf32> to vector<8x1xf32>
    %cst_122 = arith.constant dense<0.000000e+00> : vector<8x32xf32>
    %373 = tpu.matmul %370, %362, %cst_122 {dimension_numbers = #tpu.dot_dimension_numbers<[1], [0], [0], [1], [0, 0, 1, 1], [], []>} : vector<8x8xf32>, vector<8x32xf32>, vector<8x32xf32> -> vector<8x32xf32>
    %374 = tpu.reciprocal %372 {approx = true} : vector<8x1xf32> -> vector<8x1xf32>
    %375 = vector.broadcast %374 : vector<8x1xf32> to vector<8x32xf32>
    %376 = arith.mulf %373, %375 : vector<8x32xf32>
    %c0_123 = arith.constant 0 : index
    %c1_124 = arith.constant 1 : index
    %c224_125 = arith.constant 224 : index
    %377 = vector.load %arg15[%c0_123, %c1_124, %c224_125] : memref<8x2x256xf32, #tpu.memory_space<vmem>>, vector<8x1x32xf32>
    %378 = vector.shape_cast %377 : vector<8x1x32xf32> to vector<8x32xf32>
    %379 = vector.shape_cast %376 : vector<8x32xf32> to vector<8x1x32xf32>
    tpu.vector_store %arg15[%c0_123, %c1_124, %c224_125], %379 {strides = array<i32>} : memref<8x2x256xf32, #tpu.memory_space<vmem>>, vector<8x1x32xf32>,
    %c0_126 = arith.constant 0 : index
    %c0_127 = arith.constant 0 : index
    %c0_128 = arith.constant 0 : index
    %380 = vector.load %arg15[%c0_126, %c0_127, %c0_128] : memref<8x2x256xf32, #tpu.memory_space<vmem>>, vector<8x2x256xf32>
    %381 = vector.shape_cast %380 : vector<8x2x256xf32> to vector<16x256xf32>
    %382 = arith.truncf %381 : vector<16x256xf32> to vector<16x256xbf16>
    %c0_129 = arith.constant 0 : index
    %c0_130 = arith.constant 0 : index
    %383 = vector.load %arg4[%c0_129, %c0_130] : memref<256x256xbf16, #tpu.memory_space<vmem>>, vector<256x256xbf16>
    %cst_131 = arith.constant dense<0.000000e+00> : vector<16x256xf32>
    %384 = tpu.matmul %382, %383, %cst_131 {dimension_numbers = #tpu.dot_dimension_numbers<[1], [0], [0], [1], [0, 0, 1, 1], [], []>} : vector<16x256xbf16>, vector<256x256xbf16>, vector<16x256xf32> -> vector<16x256xf32>
    %c0_132 = arith.constant 0 : index
    %c0_133 = arith.constant 0 : index
    %385 = vector.load %arg5[%c0_132, %c0_133] : memref<1x256xf32, #tpu.memory_space<vmem>>, vector<1x256xf32>
    %386 = vector.broadcast %385 : vector<1x256xf32> to vector<16x256xf32>
    %387 = arith.addf %384, %386 : vector<16x256xf32>
    %388 = arith.addf %1, %387 : vector<16x256xf32>
    %c0_134 = arith.constant 0 : index
    %c0_135 = arith.constant 0 : index
    %389 = vector.load %arg6[%c0_134, %c0_135] : memref<1x256xf32, #tpu.memory_space<vmem>>, vector<1x256xf32>
    %c0_136 = arith.constant 0 : index
    %c0_137 = arith.constant 0 : index
    %390 = vector.load %arg7[%c0_136, %c0_137] : memref<1x256xf32, #tpu.memory_space<vmem>>, vector<1x256xf32>
    %cst_138 = arith.constant dense<0.000000e+00> : vector<16xf32>
    %391 = vector.multi_reduction <add>, %388, %cst_138 [1] : vector<16x256xf32> to vector<16xf32>
    %392 = vector.shape_cast %391 : vector<16xf32> to vector<16x1xf32>
    %cst_139 = arith.constant 2.560000e+02 : f32
    %393 = vector.broadcast %cst_139 : f32 to vector<16x1xf32>
    %394 = arith.divf %392, %393 : vector<16x1xf32>
    %395 = vector.broadcast %394 : vector<16x1xf32> to vector<16x256xf32>
    %396 = arith.subf %388, %395 : vector<16x256xf32>
    %397 = arith.mulf %396, %396 : vector<16x256xf32>
    %cst_140 = arith.constant dense<0.000000e+00> : vector<16xf32>
    %398 = vector.multi_reduction <add>, %397, %cst_140 [1] : vector<16x256xf32> to vector<16xf32>
    %399 = vector.shape_cast %398 : vector<16xf32> to vector<16x1xf32>
    %cst_141 = arith.constant 2.560000e+02 : f32
    %400 = vector.broadcast %cst_141 : f32 to vector<16x1xf32>
    %401 = arith.divf %399, %400 : vector<16x1xf32>
    %402 = vector.broadcast %394 : vector<16x1xf32> to vector<16x256xf32>
    %403 = arith.subf %388, %402 : vector<16x256xf32>
    %cst_142 = arith.constant 9.99999974E-6 : f32
    %404 = vector.broadcast %cst_142 : f32 to vector<16x1xf32>
    %405 = arith.addf %401, %404 : vector<16x1xf32>
    %406 = math.rsqrt %405 : vector<16x1xf32>
    %407 = vector.broadcast %406 : vector<16x1xf32> to vector<16x256xf32>
    %408 = arith.mulf %403, %407 : vector<16x256xf32>
    %409 = vector.broadcast %389 : vector<1x256xf32> to vector<16x256xf32>
    %410 = arith.mulf %408, %409 : vector<16x256xf32>
    %411 = vector.broadcast %390 : vector<1x256xf32> to vector<16x256xf32>
    %412 = arith.addf %410, %411 : vector<16x256xf32>
    %413 = arith.truncf %412 : vector<16x256xf32> to vector<16x256xbf16>
    %c0_143 = arith.constant 0 : index
    %c0_144 = arith.constant 0 : index
    %414 = vector.load %arg8[%c0_143, %c0_144] : memref<256x512xbf16, #tpu.memory_space<vmem>>, vector<256x512xbf16>
    %cst_145 = arith.constant dense<0.000000e+00> : vector<16x512xf32>
    %415 = tpu.matmul %413, %414, %cst_145 {dimension_numbers = #tpu.dot_dimension_numbers<[1], [0], [0], [1], [0, 0, 1, 1], [], []>} : vector<16x256xbf16>, vector<256x512xbf16>, vector<16x512xf32> -> vector<16x512xf32>
    %c0_146 = arith.constant 0 : index
    %c0_147 = arith.constant 0 : index
    %416 = vector.load %arg9[%c0_146, %c0_147] : memref<1x512xf32, #tpu.memory_space<vmem>>, vector<1x512xf32>
    %417 = vector.broadcast %416 : vector<1x512xf32> to vector<16x512xf32>
    %418 = arith.addf %415, %417 : vector<16x512xf32>
    %cst_148 = arith.constant 0.000000e+00 : f32
    %419 = vector.broadcast %cst_148 : f32 to vector<16x512xf32>
    %420 = arith.maximumf %418, %419 : vector<16x512xf32>
    %421 = arith.truncf %420 : vector<16x512xf32> to vector<16x512xbf16>
    %c0_149 = arith.constant 0 : index
    %c0_150 = arith.constant 0 : index
    %422 = vector.load %arg10[%c0_149, %c0_150] : memref<512x256xbf16, #tpu.memory_space<vmem>>, vector<512x256xbf16>
    %cst_151 = arith.constant dense<0.000000e+00> : vector<16x256xf32>
    %423 = tpu.matmul %421, %422, %cst_151 {dimension_numbers = #tpu.dot_dimension_numbers<[1], [0], [0], [1], [0, 0, 1, 1], [], []>} : vector<16x512xbf16>, vector<512x256xbf16>, vector<16x256xf32> -> vector<16x256xf32>
    %c0_152 = arith.constant 0 : index
    %c0_153 = arith.constant 0 : index
    %424 = vector.load %arg11[%c0_152, %c0_153] : memref<1x256xf32, #tpu.memory_space<vmem>>, vector<1x256xf32>
    %425 = vector.broadcast %424 : vector<1x256xf32> to vector<16x256xf32>
    %426 = arith.addf %423, %425 : vector<16x256xf32>
    %427 = arith.addf %412, %426 : vector<16x256xf32>
    %c0_154 = arith.constant 0 : index
    %c0_155 = arith.constant 0 : index
    %428 = vector.load %arg12[%c0_154, %c0_155] : memref<1x256xf32, #tpu.memory_space<vmem>>, vector<1x256xf32>
    %c0_156 = arith.constant 0 : index
    %c0_157 = arith.constant 0 : index
    %429 = vector.load %arg13[%c0_156, %c0_157] : memref<1x256xf32, #tpu.memory_space<vmem>>, vector<1x256xf32>
    %cst_158 = arith.constant dense<0.000000e+00> : vector<16xf32>
    %430 = vector.multi_reduction <add>, %427, %cst_158 [1] : vector<16x256xf32> to vector<16xf32>
    %431 = vector.shape_cast %430 : vector<16xf32> to vector<16x1xf32>
    %cst_159 = arith.constant 2.560000e+02 : f32
    %432 = vector.broadcast %cst_159 : f32 to vector<16x1xf32>
    %433 = arith.divf %431, %432 : vector<16x1xf32>
    %434 = vector.broadcast %433 : vector<16x1xf32> to vector<16x256xf32>
    %435 = arith.subf %427, %434 : vector<16x256xf32>
    %436 = arith.mulf %435, %435 : vector<16x256xf32>
    %cst_160 = arith.constant dense<0.000000e+00> : vector<16xf32>
    %437 = vector.multi_reduction <add>, %436, %cst_160 [1] : vector<16x256xf32> to vector<16xf32>
    %438 = vector.shape_cast %437 : vector<16xf32> to vector<16x1xf32>
    %cst_161 = arith.constant 2.560000e+02 : f32
    %439 = vector.broadcast %cst_161 : f32 to vector<16x1xf32>
    %440 = arith.divf %438, %439 : vector<16x1xf32>
    %441 = vector.broadcast %433 : vector<16x1xf32> to vector<16x256xf32>
    %442 = arith.subf %427, %441 : vector<16x256xf32>
    %cst_162 = arith.constant 9.99999974E-6 : f32
    %443 = vector.broadcast %cst_162 : f32 to vector<16x1xf32>
    %444 = arith.addf %440, %443 : vector<16x1xf32>
    %445 = math.rsqrt %444 : vector<16x1xf32>
    %446 = vector.broadcast %445 : vector<16x1xf32> to vector<16x256xf32>
    %447 = arith.mulf %442, %446 : vector<16x256xf32>
    %448 = vector.broadcast %428 : vector<1x256xf32> to vector<16x256xf32>
    %449 = arith.mulf %447, %448 : vector<16x256xf32>
    %450 = vector.broadcast %429 : vector<1x256xf32> to vector<16x256xf32>
    %451 = arith.addf %449, %450 : vector<16x256xf32>
    %452 = vector.shape_cast %451 : vector<16x256xf32> to vector<8x2x256xf32>
    %c0_163 = arith.constant 0 : index
    %c0_164 = arith.constant 0 : index
    %c0_165 = arith.constant 0 : index
    %453 = vector.load %arg14[%c0_163, %c0_164, %c0_165] : memref<8x2x256xf32, #tpu.memory_space<vmem>>, vector<8x2x256xf32>
    tpu.vector_store %arg14[%c0_163, %c0_164, %c0_165], %452 {strides = array<i32>} : memref<8x2x256xf32, #tpu.memory_space<vmem>>, vector<8x2x256xf32>,
    return
  }
  func.func @transform_0(%arg0: i32) -> (i32, i32, i32) {
    %c0_i32 = arith.constant 0 : i32
    %c0_i32_0 = arith.constant 0 : i32
    %c0_i32_1 = arith.constant 0 : i32
    return %c0_i32, %arg0, %c0_i32_0 : i32, i32, i32
  }
  func.func @transform_1(%arg0: i32) -> (i32, i32) {
    %c0_i32 = arith.constant 0 : i32
    %c0_i32_0 = arith.constant 0 : i32
    %c0_i32_1 = arith.constant 0 : i32
    return %c0_i32, %c0_i32_0 : i32, i32
  }
  func.func @transform_2(%arg0: i32) -> (i32, i32) {
    %c0_i32 = arith.constant 0 : i32
    %c0_i32_0 = arith.constant 0 : i32
    %c0_i32_1 = arith.constant 0 : i32
    return %c0_i32, %c0_i32_0 : i32, i32
  }
  func.func @transform_3(%arg0: i32) -> (i32, i32) {
    %c0_i32 = arith.constant 0 : i32
    %c0_i32_0 = arith.constant 0 : i32
    %c0_i32_1 = arith.constant 0 : i32
    return %c0_i32, %c0_i32_0 : i32, i32
  }
  func.func @transform_4(%arg0: i32) -> (i32, i32) {
    %c0_i32 = arith.constant 0 : i32
    %c0_i32_0 = arith.constant 0 : i32
    %c0_i32_1 = arith.constant 0 : i32
    return %c0_i32, %c0_i32_0 : i32, i32
  }
  func.func @transform_5(%arg0: i32) -> (i32, i32) {
    %c0_i32 = arith.constant 0 : i32
    %c0_i32_0 = arith.constant 0 : i32
    %c0_i32_1 = arith.constant 0 : i32
    return %c0_i32, %c0_i32_0 : i32, i32
  }
  func.func @transform_6(%arg0: i32) -> (i32, i32) {
    %c0_i32 = arith.constant 0 : i32
    %c0_i32_0 = arith.constant 0 : i32
    %c0_i32_1 = arith.constant 0 : i32
    return %c0_i32, %c0_i32_0 : i32, i32
  }
  func.func @transform_7(%arg0: i32) -> (i32, i32) {
    %c0_i32 = arith.constant 0 : i32
    %c0_i32_0 = arith.constant 0 : i32
    %c0_i32_1 = arith.constant 0 : i32
    return %c0_i32, %c0_i32_0 : i32, i32
  }
  func.func @transform_8(%arg0: i32) -> (i32, i32) {
    %c0_i32 = arith.constant 0 : i32
    %c0_i32_0 = arith.constant 0 : i32
    %c0_i32_1 = arith.constant 0 : i32
    return %c0_i32, %c0_i32_0 : i32, i32
  }
  func.func @transform_9(%arg0: i32) -> (i32, i32) {
    %c0_i32 = arith.constant 0 : i32
    %c0_i32_0 = arith.constant 0 : i32
    %c0_i32_1 = arith.constant 0 : i32
    return %c0_i32, %c0_i32_0 : i32, i32
  }
  func.func @transform_10(%arg0: i32) -> (i32, i32) {
    %c0_i32 = arith.constant 0 : i32
    %c0_i32_0 = arith.constant 0 : i32
    %c0_i32_1 = arith.constant 0 : i32
    return %c0_i32, %c0_i32_0 : i32, i32
  }
  func.func @transform_11(%arg0: i32) -> (i32, i32) {
    %c0_i32 = arith.constant 0 : i32
    %c0_i32_0 = arith.constant 0 : i32
    %c0_i32_1 = arith.constant 0 : i32
    return %c0_i32, %c0_i32_0 : i32, i32
  }
  func.func @transform_12(%arg0: i32) -> (i32, i32) {
    %c0_i32 = arith.constant 0 : i32
    %c0_i32_0 = arith.constant 0 : i32
    %c0_i32_1 = arith.constant 0 : i32
    return %c0_i32, %c0_i32_0 : i32, i32
  }
  func.func @transform_13(%arg0: i32) -> (i32, i32, i32) {
    %c0_i32 = arith.constant 0 : i32
    %c0_i32_0 = arith.constant 0 : i32
    %c0_i32_1 = arith.constant 0 : i32
    return %c0_i32, %arg0, %c0_i32_0 : i32, i32, i32
  }
}

</mosaic_0001>

<llo_original>
// kernel: transformer_block.1
$region0: #{transformer_block.1}
  #allocation0 [shape = 'u32[]', space=smem, size = 0x4, offset = 0x4, fixed_abs, tag = 'smem constant byte address 0x4 - core index']
  #allocation1 [shape = 'u32[144,128]{1,0:T(1,128)}', space=vmem, size = 0x12000, scoped, tag = 'internal scratch']
  #allocation2 [shape = 'f32[8,2,256]{2,1,0:T(2,128)}', space=vmem, size = 0x4000, scoped, tag = 'scratch operand']
  %s0 = inlined_call_operand.hbm [shape: f32[8,2,256], index: 0, kind: input, shape index: {}]
  %s1 = inlined_call_operand.hbm [shape: bf16[256,768], index: 1, kind: input, shape index: {}]
  %s2 = inlined_call_operand.vmem [shape: f32[1,768], index: 2, kind: input, shape index: {}]
  %s3 = inlined_call_operand.hbm [shape: bf16[256,256], index: 3, kind: input, shape index: {}]
  %s4 = inlined_call_operand.vmem [shape: f32[1,256], index: 4, kind: input, shape index: {}]
  %s5 = inlined_call_operand.vmem [shape: f32[1,256], index: 5, kind: input, shape index: {}]
  %s6 = inlined_call_operand.vmem [shape: f32[1,256], index: 6, kind: input, shape index: {}]
  %s7 = inlined_call_operand.hbm [shape: bf16[256,512], index: 7, kind: input, shape index: {}]
  %s8 = inlined_call_operand.vmem [shape: f32[1,512], index: 8, kind: input, shape index: {}]
  %s9 = inlined_call_operand.hbm [shape: bf16[512,256], index: 9, kind: input, shape index: {}]
  %s10 = inlined_call_operand.vmem [shape: f32[1,256], index: 10, kind: input, shape index: {}]
  %s11 = inlined_call_operand.vmem [shape: f32[1,256], index: 11, kind: input, shape index: {}]
  %s12 = inlined_call_operand.vmem [shape: f32[1,256], index: 12, kind: input, shape index: {}]
  %s13 = inlined_call_operand.hbm [shape: f32[8,2,256], index: 13, kind: output, shape index: {}]
  %s14 = sld [smem:[#allocation0]]
  $region82: #{transformer_block.1} parent=0
    _
  %s16 = ssub.s32 1, %s14
  %s17 = scalar_select 0, %s16, %s14
  $region1: #{transformer_block.1} parent=0
    #allocation3 [shape = 'u8[16384]{0}', space=vmem, size = 0x4000, scoped, tag = 'input window, operand 0, single buffered']
    #allocation4 [shape = 's32[1]{0}', space=sflag, size = 0x4, scoped, tag = 'scoped memory for transformer_block.1']
    #allocation5 [shape = 's32[1]{0}', space=sflag, size = 0x4, scoped, tag = 'scoped memory for transformer_block.1']
    #allocation6 [shape = 'u8[393216]{0}', space=vmem, size = 0x60000, scoped, tag = 'input window, operand 1, single buffered']
    #allocation7 [shape = 's32[1]{0}', space=sflag, size = 0x4, scoped, tag = 'scoped memory for transformer_block.1']
    #allocation8 [shape = 'u8[131072]{0}', space=vmem, size = 0x20000, scoped, tag = 'input window, operand 3, single buffered']
    #allocation9 [shape = 'u8[262144]{0}', space=vmem, size = 0x40000, scoped, tag = 'input window, operand 7, single buffered']
    #allocation10 [shape = 's32[1]{0}', space=sflag, size = 0x4, scoped, tag = 'scoped memory for transformer_block.1']
    #allocation11 [shape = 'u8[262144]{0}', space=vmem, size = 0x40000, scoped, tag = 'input window, operand 9, single buffered']
    #allocation12 [shape = 'u8[16384]{0}', space=vmem, size = 0x4000, scoped, tag = 'output window, operand 0, single buffered']
    %18 = vsyncpa [#allocation4], 0
    %19 = vsyncpa [#allocation7], 0
    %20 = vsyncpa [#allocation10], 0
    %21 = vsyncpa [#allocation5], 0
    // Predicated region
    $region2: #{transformer_block.1} parent=1 // pred_check
      _
    $region3: #{transformer_block.1} parent=1 // pred_check_branch
      %23 = sbr.rel (0) target = $region5
    $region4: #{transformer_block.1} parent=1 // pred_region
      %s25 = ssub.s32 512, 512
      %26 = vsyncadd [#allocation4], %s25
      %s27 = sshll.u32 [#allocation3], 4
      %s28 = int_to_ptr.vmem [resolvable:$true] %s27
      %33 = dma.hbm_to_vmem [thread:$0]  %s0, 512, %s28, [#allocation4], 64, 64, 4
    $region5: #{transformer_block.1} parent=1 // pred_fallthru
      _
    // Predicated region
    $region6: #{transformer_block.1} parent=1 // pred_check
      _
    $region7: #{transformer_block.1} parent=1 // pred_check_branch
      %35 = sbr.rel (0) target = $region9
    $region8: #{transformer_block.1} parent=1 // pred_region
      %s37 = ssub.s32 12288, 12288
      %38 = vsyncadd [#allocation7], %s37
      %s39 = sshll.u32 [#allocation6], 4
      %s40 = int_to_ptr.vmem [resolvable:$true] %s39
      %45 = dma.hbm_to_vmem [thread:$0]  %s1, 12288, %s40, [#allocation7], 384, 384, 24
    $region9: #{transformer_block.1} parent=1 // pred_fallthru
      _
    // Predicated region
    $region10: #{transformer_block.1} parent=1 // pred_check
      _
    $region11: #{transformer_block.1} parent=1 // pred_check_branch
      %47 = sbr.rel (0) target = $region13
    $region12: #{transformer_block.1} parent=1 // pred_region
      _
    $region13: #{transformer_block.1} parent=1 // pred_fallthru
      _
    // Predicated region
    $region14: #{transformer_block.1} parent=1 // pred_check
      _
    $region15: #{transformer_block.1} parent=1 // pred_check_branch
      %49 = sbr.rel (0) target = $region17
    $region16: #{transformer_block.1} parent=1 // pred_region
      %s51 = ssub.s32 4096, 4096
      %52 = vsyncadd [#allocation7], %s51
      %s53 = sshll.u32 [#allocation8], 4
      %s54 = int_to_ptr.vmem [resolvable:$true] %s53
      %59 = dma.hbm_to_vmem [thread:$0]  %s3, 4096, %s54, [#allocation7], 128, 128, 8
    $region17: #{transformer_block.1} parent=1 // pred_fallthru
      _
    // Predicated region
    $region18: #{transformer_block.1} parent=1 // pred_check
      _
    $region19: #{transformer_block.1} parent=1 // pred_check_branch
      %61 = sbr.rel (0) target = $region21
    $region20: #{transformer_block.1} parent=1 // pred_region
      _
    $region21: #{transformer_block.1} parent=1 // pred_fallthru
      _
    // Predicated region
    $region22: #{transformer_block.1} parent=1 // pred_check
      _
    $region23: #{transformer_block.1} parent=1 // pred_check_branch
      %63 = sbr.rel (0) target = $region25
    $region24: #{transformer_block.1} parent=1 // pred_region
      _
    $region25: #{transformer_block.1} parent=1 // pred_fallthru
      _
    // Predicated region
    $region26: #{transformer_block.1} parent=1 // pred_check
      _
    $region27: #{transformer_block.1} parent=1 // pred_check_branch
      %65 = sbr.rel (0) target = $region29
    $region28: #{transformer_block.1} parent=1 // pred_region
      _
    $region29: #{transformer_block.1} parent=1 // pred_fallthru
      _
    // Predicated region
    $region30: #{transformer_block.1} parent=1 // pred_check
      _
    $region31: #{transformer_block.1} parent=1 // pred_check_branch
      %67 = sbr.rel (0) target = $region33
    $region32: #{transformer_block.1} parent=1 // pred_region
      %s69 = ssub.s32 8192, 8192
      %70 = vsyncadd [#allocation10], %s69
      %s71 = sshll.u32 [#allocation9], 4
      %s72 = int_to_ptr.vmem [resolvable:$true] %s71
      %77 = dma.hbm_to_vmem [thread:$0]  %s7, 8192, %s72, [#allocation10], 256, 256, 16
    $region33: #{transformer_block.1} parent=1 // pred_fallthru
      _
    // Predicated region
    $region34: #{transformer_block.1} parent=1 // pred_check
      _
    $region35: #{transformer_block.1} parent=1 // pred_check_branch
      %79 = sbr.rel (0) target = $region37
    $region36: #{transformer_block.1} parent=1 // pred_region
      _
    $region37: #{transformer_block.1} parent=1 // pred_fallthru
      _
    // Predicated region
    $region38: #{transformer_block.1} parent=1 // pred_check
      _
    $region39: #{transformer_block.1} parent=1 // pred_check_branch
      %81 = sbr.rel (0) target = $region41
    $region40: #{transformer_block.1} parent=1 // pred_region
      %s83 = ssub.s32 8192, 8192
      %84 = vsyncadd [#allocation10], %s83
      %s85 = sshll.u32 [#allocation11], 4
      %s86 = int_to_ptr.vmem [resolvable:$true] %s85
      %91 = dma.hbm_to_vmem [thread:$0]  %s9, 8192, %s86, [#allocation10], 128, 128, 8
    $region41: #{transformer_block.1} parent=1 // pred_fallthru
      _
    // Predicated region
    $region42: #{transformer_block.1} parent=1 // pred_check
      _
    $region43: #{transformer_block.1} parent=1 // pred_check_branch
      %93 = sbr.rel (0) target = $region45
    $region44: #{transformer_block.1} parent=1 // pred_region
      _
    $region45: #{transformer_block.1} parent=1 // pred_fallthru
      _
    // Predicated region
    $region46: #{transformer_block.1} parent=1 // pred_check
      _
    $region47: #{transformer_block.1} parent=1 // pred_check_branch
      %95 = sbr.rel (0) target = $region49
    $region48: #{transformer_block.1} parent=1 // pred_region
      _
    $region49: #{transformer_block.1} parent=1 // pred_fallthru
      _
    // Predicated region
    $region50: #{transformer_block.1} parent=1 // pred_check
      _
    $region51: #{transformer_block.1} parent=1 // pred_check_branch
      %97 = sbr.rel (0) target = $region53
    $region52: #{transformer_block.1} parent=1 // pred_region
      _
    $region53: #{transformer_block.1} parent=1 // pred_fallthru
      _
    // Predicated region
    $region54: #{transformer_block.1} parent=1 // pred_check
      _
    $region55: #{transformer_block.1} parent=1 // pred_check_branch
      %99 = sbr.rel (0) target = $region57
    $region56: #{transformer_block.1} parent=1 // pred_region
      %100 = dma.done [#allocation4], 512
    $region57: #{transformer_block.1} parent=1 // pred_fallthru
      _
    // Predicated region
    $region58: #{transformer_block.1} parent=1 // pred_check
      _
    $region59: #{transformer_block.1} parent=1 // pred_check_branch
      %102 = sbr.rel (0) target = $region61
    $region60: #{transformer_block.1} parent=1 // pred_region
      %103 = dma.done [#allocation7], 12288
    $region61: #{transformer_block.1} parent=1 // pred_fallthru
      _
    // Predicated region
    $region62: #{transformer_block.1} parent=1 // pred_check
      _
    $region63: #{transformer_block.1} parent=1 // pred_check_branch
      %105 = sbr.rel (0) target = $region65
    $region64: #{transformer_block.1} parent=1 // pred_region
      %106 = dma.done [#allocation7], 4096
    $region65: #{transformer_block.1} parent=1 // pred_fallthru
      _
    // Predicated region
    $region66: #{transformer_block.1} parent=1 // pred_check
      _
    $region67: #{transformer_block.1} parent=1 // pred_check_branch
      %108 = sbr.rel (0) target = $region69
    $region68: #{transformer_block.1} parent=1 // pred_region
      %109 = dma.done [#allocation10], 8192
    $region69: #{transformer_block.1} parent=1 // pred_fallthru
      _
    // Predicated region
    $region70: #{transformer_block.1} parent=1 // pred_check
      _
    $region71: #{transformer_block.1} parent=1 // pred_check_branch
      %111 = sbr.rel (0) target = $region73
    $region72: #{transformer_block.1} parent=1 // pred_region
      %112 = dma.done [#allocation10], 8192
    $region73: #{transformer_block.1} parent=1 // pred_fallthru
      _
    %v113 = vld [vmem:[#allocation3] sm:$0xf]
    %v114 = vld [vmem:[#allocation3 + $0x4] sm:$0xf]
    %v115 = vld [vmem:[#allocation3 + $0x8] sm:$0xf]
    %v116 = vld [vmem:[#allocation3 + $0xc] sm:$0xf]
    %v117 = vld [vmem:[#allocation3 + $0x10] sm:$0xf]
    %v118 = vld [vmem:[#allocation3 + $0x14] sm:$0xf]
    %v119 = vld [vmem:[#allocation3 + $0x18] sm:$0xf]
    %v120 = vld [vmem:[#allocation3 + $0x1c] sm:$0xf]
    %v129 = vcombine.low %v113, %v114
    %v130 = vcombine.low %v115, %v116
    %v132 = vunpack.c.l.s4 1983009808
    %v133 = vunpack.c.0.s8 %v132
    %v134 = vlaneseq
    %v135 = vshrl.u32 %v134, 7
    %v136 = vsub.s32 %v133, %v135
    %v137 = vrot.slane %v129, %v136
    %v139 = vunpack.c.l.s4 1983009808
    %v140 = vunpack.c.0.s8 %v139
    %v141 = vlaneseq
    %v142 = vshrl.u32 %v141, 7
    %v143 = vsub.s32 %v140, %v142
    %v144 = vrot.slane %v130, %v143
    %v145 = vcombine.low %v137, %v144
    %v146 = vcombine.high %v137, %v144
    %v147 = vcombine.low %v117, %v118
    %v148 = vcombine.low %v119, %v120
    %v150 = vunpack.c.l.s4 1983009808
    %v151 = vunpack.c.0.s8 %v150
    %v152 = vlaneseq
    %v153 = vshrl.u32 %v152, 7
    %v154 = vsub.s32 %v151, %v153
    %v155 = vrot.slane %v147, %v154
    %v157 = vunpack.c.l.s4 1983009808
    %v158 = vunpack.c.0.s8 %v157
    %v159 = vlaneseq
    %v160 = vshrl.u32 %v159, 7
    %v161 = vsub.s32 %v158, %v160
    %v162 = vrot.slane %v148, %v161
    %v163 = vcombine.low %v155, %v162
    %v164 = vcombine.high %v155, %v162
    %v169 = vpack.c.bf16 %v163, %v145
    %v170 = vpack.c.bf16 %v164, %v146
    %v171 = vld [vmem:[#allocation6] sm:$0xff]
    %v172 = vld [vmem:[#allocation6 + $0x8] sm:$0xff]
    %v173 = vld [vmem:[#allocation6 + $0x10] sm:$0xff]
    %v174 = vld [vmem:[#allocation6 + $0x18] sm:$0xff]
    %v175 = vld [vmem:[#allocation6 + $0x20] sm:$0xff]
    %v176 = vld [vmem:[#allocation6 + $0x28] sm:$0xff]
    %v177 = vld [vmem:[#allocation6 + $0x30] sm:$0xff]
    %v178 = vld [vmem:[#allocation6 + $0x38] sm:$0xff]
    %v179 = vld [vmem:[#allocation6 + $0x40] sm:$0xff]
    %v180 = vld [vmem:[#allocation6 + $0x48] sm:$0xff]
    %v181 = vld [vmem:[#allocation6 + $0x50] sm:$0xff]
    %v182 = vld [vmem:[#allocation6 + $0x58] sm:$0xff]
    %v183 = vld [vmem:[#allocation6 + $0x60] sm:$0xff]
    %v184 = vld [vmem:[#allocation6 + $0x68] sm:$0xff]
    %v185 = vld [vmem:[#allocation6 + $0x70] sm:$0xff]
    %v186 = vld [vmem:[#allocation6 + $0x78] sm:$0xff]
    %v187 = vld [vmem:[#allocation6 + $0x80] sm:$0xff]
    %v188 = vld [vmem:[#allocation6 + $0x88] sm:$0xff]
    %v189 = vld [vmem:[#allocation6 + $0x90] sm:$0xff]
    %v190 = vld [vmem:[#allocation6 + $0x98] sm:$0xff]
    %v191 = vld [vmem:[#allocation6 + $0xa0] sm:$0xff]
    %v192 = vld [vmem:[#allocation6 + $0xa8] sm:$0xff]
    %v193 = vld [vmem:[#allocation6 + $0xb0] sm:$0xff]
    %v194 = vld [vmem:[#allocation6 + $0xb8] sm:$0xff]
    %v195 = vld [vmem:[#allocation6 + $0xc0] sm:$0xff]
    %v196 = vld [vmem:[#allocation6 + $0xc8] sm:$0xff]
    %v197 = vld [vmem:[#allocation6 + $0xd0] sm:$0xff]
    %v198 = vld [vmem:[#allocation6 + $0xd8] sm:$0xff]
    %v199 = vld [vmem:[#allocation6 + $0xe0] sm:$0xff]
    %v200 = vld [vmem:[#allocation6 + $0xe8] sm:$0xff]
    %v201 = vld [vmem:[#allocation6 + $0xf0] sm:$0xff]
    %v202 = vld [vmem:[#allocation6 + $0xf8] sm:$0xff]
    %v203 = vld [vmem:[#allocation6 + $0x100] sm:$0xff]
    %v204 = vld [vmem:[#allocation6 + $0x108] sm:$0xff]
    %v205 = vld [vmem:[#allocation6 + $0x110] sm:$0xff]
    %v206 = vld [vmem:[#allocation6 + $0x118] sm:$0xff]
    %v207 = vld [vmem:[#allocation6 + $0x120] sm:$0xff]
    %v208 = vld [vmem:[#allocation6 + $0x128] sm:$0xff]
    %v209 = vld [vmem:[#allocation6 + $0x130] sm:$0xff]
    %v210 = vld [vmem:[#allocation6 + $0x138] sm:$0xff]
    %v211 = vld [vmem:[#allocation6 + $0x140] sm:$0xff]
    %v212 = vld [vmem:[#allocation6 + $0x148] sm:$0xff]
    %v213 = vld [vmem:[#allocation6 + $0x150] sm:$0xff]
    %v214 = vld [vmem:[#allocation6 + $0x158] sm:$0xff]
    %v215 = vld [vmem:[#allocation6 + $0x160] sm:$0xff]
    %v216 = vld [vmem:[#allocation6 + $0x168] sm:$0xff]
    %v217 = vld [vmem:[#allocation6 + $0x170] sm:$0xff]
    %v218 = vld [vmem:[#allocation6 + $0x178] sm:$0xff]
    %v219 = vld [vmem:[#allocation6 + $0x180] sm:$0xff]
    %v220 = vld [vmem:[#allocation6 + $0x188] sm:$0xff]
    %v221 = vld [vmem:[#allocation6 + $0x190] sm:$0xff]
    %v222 = vld [vmem:[#allocation6 + $0x198] sm:$0xff]
    %v223 = vld [vmem:[#allocation6 + $0x1a0] sm:$0xff]
    %v224 = vld [vmem:[#allocation6 + $0x1a8] sm:$0xff]
    %v225 = vld [vmem:[#allocation6 + $0x1b0] sm:$0xff]
    %v226 = vld [vmem:[#allocation6 + $0x1b8] sm:$0xff]
    %v227 = vld [vmem:[#allocation6 + $0x1c0] sm:$0xff]
    %v228 = vld [vmem:[#allocation6 + $0x1c8] sm:$0xff]
    %v229 = vld [vmem:[#allocation6 + $0x1d0] sm:$0xff]
    %v230 = vld [vmem:[#allocation6 + $0x1d8] sm:$0xff]
    %v231 = vld [vmem:[#allocation6 + $0x1e0] sm:$0xff]
    %v232 = vld [vmem:[#allocation6 + $0x1e8] sm:$0xff]
    %v233 = vld [vmem:[#allocation6 + $0x1f0] sm:$0xff]
    %v234 = vld [vmem:[#allocation6 + $0x1f8] sm:$0xff]
    %v235 = vld [vmem:[#allocation6 + $0x200] sm:$0xff]
    %v236 = vld [vmem:[#allocation6 + $0x208] sm:$0xff]
    %v237 = vld [vmem:[#allocation6 + $0x210] sm:$0xff]
    %v238 = vld [vmem:[#allocation6 + $0x218] sm:$0xff]
    %v239 = vld [vmem:[#allocation6 + $0x220] sm:$0xff]
    %v240 = vld [vmem:[#allocation6 + $0x228] sm:$0xff]
    %v241 = vld [vmem:[#allocation6 + $0x230] sm:$0xff]
    %v242 = vld [vmem:[#allocation6 + $0x238] sm:$0xff]
    %v243 = vld [vmem:[#allocation6 + $0x240] sm:$0xff]
    %v244 = vld [vmem:[#allocation6 + $0x248] sm:$0xff]
    %v245 = vld [vmem:[#allocation6 + $0x250] sm:$0xff]
    %v246 = vld [vmem:[#allocation6 + $0x258] sm:$0xff]
    %v247 = vld [vmem:[#allocation6 + $0x260] sm:$0xff]
    %v248 = vld [vmem:[#allocation6 + $0x268] sm:$0xff]
    %v249 = vld [vmem:[#allocation6 + $0x270] sm:$0xff]
    %v250 = vld [vmem:[#allocation6 + $0x278] sm:$0xff]
    %v251 = vld [vmem:[#allocation6 + $0x280] sm:$0xff]
    %v252 = vld [vmem:[#allocation6 + $0x288] sm:$0xff]
    %v253 = vld [vmem:[#allocation6 + $0x290] sm:$0xff]
    %v254 = vld [vmem:[#allocation6 + $0x298] sm:$0xff]
    %v255 = vld [vmem:[#allocation6 + $0x2a0] sm:$0xff]
    %v256 = vld [vmem:[#allocation6 + $0x2a8] sm:$0xff]
    %v257 = vld [vmem:[#allocation6 + $0x2b0] sm:$0xff]
    %v258 = vld [vmem:[#allocation6 + $0x2b8] sm:$0xff]
    %v259 = vld [vmem:[#allocation6 + $0x2c0] sm:$0xff]
    %v260 = vld [vmem:[#allocation6 + $0x2c8] sm:$0xff]
    %v261 = vld [vmem:[#allocation6 + $0x2d0] sm:$0xff]
    %v262 = vld [vmem:[#allocation6 + $0x2d8] sm:$0xff]
    %v263 = vld [vmem:[#allocation6 + $0x2e0] sm:$0xff]
    %v264 = vld [vmem:[#allocation6 + $0x2e8] sm:$0xff]
    %v265 = vld [vmem:[#allocation6 + $0x2f0] sm:$0xff]
    %v266 = vld [vmem:[#allocation6 + $0x2f8] sm:$0xff]
    %v267 = vld [vmem:[%s2] sm:$0x3f]
    %v269 = vlaneseq
    %v270 = vshrl.u32 %v269, 7
    %v271 = vsub.s32 0, %v270
    %v272 = vrot.slane %v267, %v271
    %v273 = vlaneseq
    %v274 = vshrl.u32 %v273, 7
    %v275 = vsub.s32 1, %v274
    %v276 = vrot.slane %v267, %v275
    %v277 = vlaneseq
    %v278 = vshrl.u32 %v277, 7
    %v279 = vsub.s32 2, %v278
    %v280 = vrot.slane %v267, %v279
    %v281 = vlaneseq
    %v282 = vshrl.u32 %v281, 7
    %v283 = vsub.s32 3, %v282
    %v284 = vrot.slane %v267, %v283
    %v285 = vlaneseq
    %v286 = vshrl.u32 %v285, 7
    %v287 = vsub.s32 4, %v286
    %v288 = vrot.slane %v267, %v287
    %v289 = vlaneseq
    %v290 = vshrl.u32 %v289, 7
    %v291 = vsub.s32 5, %v290
    %v292 = vrot.slane %v267, %v291
    %v395 = vunpack.c.l.b16 %v171
    %v396 = vunpack.c.h.b16 %v171
    %v397 = vunpack.c.l.b16 %v172
    %v398 = vunpack.c.h.b16 %v172
    %v399 = vunpack.c.l.b16 %v173
    %v400 = vunpack.c.h.b16 %v173
    %v401 = vunpack.c.l.b16 %v174
    %v402 = vunpack.c.h.b16 %v174
    %v403 = vunpack.c.l.b16 %v175
    %v404 = vunpack.c.h.b16 %v175
    %v405 = vunpack.c.l.b16 %v176
    %v406 = vunpack.c.h.b16 %v176
    %v407 = vunpack.c.l.b16 %v177
    %v408 = vunpack.c.h.b16 %v177
    %v409 = vunpack.c.l.b16 %v178
    %v410 = vunpack.c.h.b16 %v178
    %v411 = vunpack.c.l.b16 %v179
    %v412 = vunpack.c.h.b16 %v179
    %v413 = vunpack.c.l.b16 %v180
    %v414 = vunpack.c.h.b16 %v180
    %v415 = vunpack.c.l.b16 %v181
    %v416 = vunpack.c.h.b16 %v181
    %v417 = vunpack.c.l.b16 %v182
    %v418 = vunpack.c.h.b16 %v182
    %v419 = vunpack.c.l.b16 %v183
    %v420 = vunpack.c.h.b16 %v183
    %v421 = vunpack.c.l.b16 %v184
    %v422 = vunpack.c.h.b16 %v184
    %v423 = vunpack.c.l.b16 %v185
    %v424 = vunpack.c.h.b16 %v185
    %v425 = vunpack.c.l.b16 %v186
    %v426 = vunpack.c.h.b16 %v186
    %v427 = vunpack.c.l.b16 %v187
    %v428 = vunpack.c.h.b16 %v187
    %v429 = vunpack.c.l.b16 %v188
    %v430 = vunpack.c.h.b16 %v188
    %v431 = vunpack.c.l.b16 %v189
    %v432 = vunpack.c.h.b16 %v189
    %v433 = vunpack.c.l.b16 %v190
    %v434 = vunpack.c.h.b16 %v190
    %v435 = vunpack.c.l.b16 %v191
    %v436 = vunpack.c.h.b16 %v191
    %v437 = vunpack.c.l.b16 %v192
    %v438 = vunpack.c.h.b16 %v192
    %v439 = vunpack.c.l.b16 %v193
    %v440 = vunpack.c.h.b16 %v193
    %v441 = vunpack.c.l.b16 %v194
    %v442 = vunpack.c.h.b16 %v194
    %v443 = vunpack.c.l.b16 %v195
    %v444 = vunpack.c.h.b16 %v195
    %v445 = vunpack.c.l.b16 %v196
    %v446 = vunpack.c.h.b16 %v196
    %v447 = vunpack.c.l.b16 %v197
    %v448 = vunpack.c.h.b16 %v197
    %v449 = vunpack.c.l.b16 %v198
    %v450 = vunpack.c.h.b16 %v198
    %v451 = vunpack.c.l.b16 %v199
    %v452 = vunpack.c.h.b16 %v199
    %v453 = vunpack.c.l.b16 %v200
    %v454 = vunpack.c.h.b16 %v200
    %v455 = vunpack.c.l.b16 %v201
    %v456 = vunpack.c.h.b16 %v201
    %v457 = vunpack.c.l.b16 %v202
    %v458 = vunpack.c.h.b16 %v202
    %v459 = vunpack.c.l.b16 %v203
    %v460 = vunpack.c.h.b16 %v203
    %v461 = vunpack.c.l.b16 %v204
    %v462 = vunpack.c.h.b16 %v204
    %v463 = vunpack.c.l.b16 %v205
    %v464 = vunpack.c.h.b16 %v205
    %v465 = vunpack.c.l.b16 %v206
    %v466 = vunpack.c.h.b16 %v206
    %v467 = vunpack.c.l.b16 %v207
    %v468 = vunpack.c.h.b16 %v207
    %v469 = vunpack.c.l.b16 %v208
    %v470 = vunpack.c.h.b16 %v208
    %v471 = vunpack.c.l.b16 %v209
    %v472 = vunpack.c.h.b16 %v209
    %v473 = vunpack.c.l.b16 %v210
    %v474 = vunpack.c.h.b16 %v210
    %v475 = vunpack.c.l.b16 %v211
    %v476 = vunpack.c.h.b16 %v211
    %v477 = vunpack.c.l.b16 %v212
    %v478 = vunpack.c.h.b16 %v212
    %v479 = vunpack.c.l.b16 %v213
    %v480 = vunpack.c.h.b16 %v213
    %v481 = vunpack.c.l.b16 %v214
    %v482 = vunpack.c.h.b16 %v214
    %v483 = vunpack.c.l.b16 %v215
    %v484 = vunpack.c.h.b16 %v215
    %v485 = vunpack.c.l.b16 %v216
    %v486 = vunpack.c.h.b16 %v216
    %v487 = vunpack.c.l.b16 %v217
    %v488 = vunpack.c.h.b16 %v217
    %v489 = vunpack.c.l.b16 %v218
    %v490 = vunpack.c.h.b16 %v218
    %v491 = vunpack.c.l.b16 %v219
    %v492 = vunpack.c.h.b16 %v219
    %v493 = vunpack.c.l.b16 %v220
    %v494 = vunpack.c.h.b16 %v220
    %v495 = vunpack.c.l.b16 %v221
    %v496 = vunpack.c.h.b16 %v221
    %v497 = vunpack.c.l.b16 %v222
    %v498 = vunpack.c.h.b16 %v222
    %v499 = vunpack.c.l.b16 %v223
    %v500 = vunpack.c.h.b16 %v223
    %v501 = vunpack.c.l.b16 %v224
    %v502 = vunpack.c.h.b16 %v224
    %v503 = vunpack.c.l.b16 %v225
    %v504 = vunpack.c.h.b16 %v225
    %v505 = vunpack.c.l.b16 %v226
    %v506 = vunpack.c.h.b16 %v226
    %v507 = vunpack.c.l.b16 %v227
    %v508 = vunpack.c.h.b16 %v227
    %v509 = vunpack.c.l.b16 %v228
    %v510 = vunpack.c.h.b16 %v228
    %v511 = vunpack.c.l.b16 %v229
    %v512 = vunpack.c.h.b16 %v229
    %v513 = vunpack.c.l.b16 %v230
    %v514 = vunpack.c.h.b16 %v230
    %v515 = vunpack.c.l.b16 %v231
    %v516 = vunpack.c.h.b16 %v231
    %v517 = vunpack.c.l.b16 %v232
    %v518 = vunpack.c.h.b16 %v232
    %v519 = vunpack.c.l.b16 %v233
    %v520 = vunpack.c.h.b16 %v233
    %v521 = vunpack.c.l.b16 %v234
    %v522 = vunpack.c.h.b16 %v234
    %v523 = vunpack.c.l.b16 %v235
    %v524 = vunpack.c.h.b16 %v235
    %v525 = vunpack.c.l.b16 %v236
    %v526 = vunpack.c.h.b16 %v236
    %v527 = vunpack.c.l.b16 %v237
    %v528 = vunpack.c.h.b16 %v237
    %v529 = vunpack.c.l.b16 %v238
    %v530 = vunpack.c.h.b16 %v238
    %v531 = vunpack.c.l.b16 %v239
    %v532 = vunpack.c.h.b16 %v239
    %v533 = vunpack.c.l.b16 %v240
    %v534 = vunpack.c.h.b16 %v240
    %v535 = vunpack.c.l.b16 %v241
    %v536 = vunpack.c.h.b16 %v241
    %v537 = vunpack.c.l.b16 %v242
    %v538 = vunpack.c.h.b16 %v242
    %v539 = vunpack.c.l.b16 %v243
    %v540 = vunpack.c.h.b16 %v243
    %v541 = vunpack.c.l.b16 %v244
    %v542 = vunpack.c.h.b16 %v244
    %v543 = vunpack.c.l.b16 %v245
    %v544 = vunpack.c.h.b16 %v245
    %v545 = vunpack.c.l.b16 %v246
    %v546 = vunpack.c.h.b16 %v246
    %v547 = vunpack.c.l.b16 %v247
    %v548 = vunpack.c.h.b16 %v247
    %v549 = vunpack.c.l.b16 %v248
    %v550 = vunpack.c.h.b16 %v248
    %v551 = vunpack.c.l.b16 %v249
    %v552 = vunpack.c.h.b16 %v249
    %v553 = vunpack.c.l.b16 %v250
    %v554 = vunpack.c.h.b16 %v250
    %v555 = vunpack.c.l.b16 %v251
    %v556 = vunpack.c.h.b16 %v251
    %v557 = vunpack.c.l.b16 %v252
    %v558 = vunpack.c.h.b16 %v252
    %v559 = vunpack.c.l.b16 %v253
    %v560 = vunpack.c.h.b16 %v253
    %v561 = vunpack.c.l.b16 %v254
    %v562 = vunpack.c.h.b16 %v254
    %v563 = vunpack.c.l.b16 %v255
    %v564 = vunpack.c.h.b16 %v255
    %v565 = vunpack.c.l.b16 %v256
    %v566 = vunpack.c.h.b16 %v256
    %v567 = vunpack.c.l.b16 %v257
    %v568 = vunpack.c.h.b16 %v257
    %v569 = vunpack.c.l.b16 %v258
    %v570 = vunpack.c.h.b16 %v258
    %v571 = vunpack.c.l.b16 %v259
    %v572 = vunpack.c.h.b16 %v259
    %v573 = vunpack.c.l.b16 %v260
    %v574 = vunpack.c.h.b16 %v260
    %v575 = vunpack.c.l.b16 %v261
    %v576 = vunpack.c.h.b16 %v261
    %v577 = vunpack.c.l.b16 %v262
    %v578 = vunpack.c.h.b16 %v262
    %v579 = vunpack.c.l.b16 %v263
    %v580 = vunpack.c.h.b16 %v263
    %v581 = vunpack.c.l.b16 %v264
    %v582 = vunpack.c.h.b16 %v264
    %v583 = vunpack.c.l.b16 %v265
    %v584 = vunpack.c.h.b16 %v265
    %v585 = vunpack.c.l.b16 %v266
    %v586 = vunpack.c.h.b16 %v266
    %v587 = vpack.c.b16 %v401, %v395
    %v588 = vpack.c.b16 %v402, %v396
    %v589 = vpack.c.b16 %v403, %v397
    %v590 = vpack.c.b16 %v404, %v398
    %v591 = vpack.c.b16 %v405, %v399
    %v592 = vpack.c.b16 %v406, %v400
    %v593 = vpack.c.b16 %v413, %v407
    %v594 = vpack.c.b16 %v414, %v408
    %v595 = vpack.c.b16 %v415, %v409
    %v596 = vpack.c.b16 %v416, %v410
    %v597 = vpack.c.b16 %v417, %v411
    %v598 = vpack.c.b16 %v418, %v412
    %v599 = vpack.c.b16 %v425, %v419
    %v600 = vpack.c.b16 %v426, %v420
    %v601 = vpack.c.b16 %v427, %v421
    %v602 = vpack.c.b16 %v428, %v422
    %v603 = vpack.c.b16 %v429, %v423
    %v604 = vpack.c.b16 %v430, %v424
    %v605 = vpack.c.b16 %v437, %v431
    %v606 = vpack.c.b16 %v438, %v432
    %v607 = vpack.c.b16 %v439, %v433
    %v608 = vpack.c.b16 %v440, %v434
    %v609 = vpack.c.b16 %v441, %v435
    %v610 = vpack.c.b16 %v442, %v436
    %v611 = vpack.c.b16 %v449, %v443
    %v612 = vpack.c.b16 %v450, %v444
    %v613 = vpack.c.b16 %v451, %v445
    %v614 = vpack.c.b16 %v452, %v446
    %v615 = vpack.c.b16 %v453, %v447
    %v616 = vpack.c.b16 %v454, %v448
    %v617 = vpack.c.b16 %v461, %v455
    %v618 = vpack.c.b16 %v462, %v456
    %v619 = vpack.c.b16 %v463, %v457
    %v620 = vpack.c.b16 %v464, %v458
    %v621 = vpack.c.b16 %v465, %v459
    %v622 = vpack.c.b16 %v466, %v460
    %v623 = vpack.c.b16 %v473, %v467
    %v624 = vpack.c.b16 %v474, %v468
    %v625 = vpack.c.b16 %v475, %v469
    %v626 = vpack.c.b16 %v476, %v470
    %v627 = vpack.c.b16 %v477, %v471
    %v628 = vpack.c.b16 %v478, %v472
    %v629 = vpack.c.b16 %v485, %v479
    %v630 = vpack.c.b16 %v486, %v480
    %v631 = vpack.c.b16 %v487, %v481
    %v632 = vpack.c.b16 %v488, %v482
    %v633 = vpack.c.b16 %v489, %v483
    %v634 = vpack.c.b16 %v490, %v484
    %v635 = vpack.c.b16 %v497, %v491
    %v636 = vpack.c.b16 %v498, %v492
    %v637 = vpack.c.b16 %v499, %v493
    %v638 = vpack.c.b16 %v500, %v494
    %v639 = vpack.c.b16 %v501, %v495
    %v640 = vpack.c.b16 %v502, %v496
    %v641 = vpack.c.b16 %v509, %v503
    %v642 = vpack.c.b16 %v510, %v504
    %v643 = vpack.c.b16 %v511, %v505
    %v644 = vpack.c.b16 %v512, %v506
    %v645 = vpack.c.b16 %v513, %v507
    %v646 = vpack.c.b16 %v514, %v508
    %v647 = vpack.c.b16 %v521, %v515
    %v648 = vpack.c.b16 %v522, %v516
    %v649 = vpack.c.b16 %v523, %v517
    %v650 = vpack.c.b16 %v524, %v518
    %v651 = vpack.c.b16 %v525, %v519
    %v652 = vpack.c.b16 %v526, %v520
    %v653 = vpack.c.b16 %v533, %v527
    %v654 = vpack.c.b16 %v534, %v528
    %v655 = vpack.c.b16 %v535, %v529
    %v656 = vpack.c.b16 %v536, %v530
    %v657 = vpack.c.b16 %v537, %v531
    %v658 = vpack.c.b16 %v538, %v532
    %v659 = vpack.c.b16 %v545, %v539
    %v660 = vpack.c.b16 %v546, %v540
    %v661 = vpack.c.b16 %v547, %v541
    %v662 = vpack.c.b16 %v548, %v542
    %v663 = vpack.c.b16 %v549, %v543
    %v664 = vpack.c.b16 %v550, %v544
    %v665 = vpack.c.b16 %v557, %v551
    %v666 = vpack.c.b16 %v558, %v552
    %v667 = vpack.c.b16 %v559, %v553
    %v668 = vpack.c.b16 %v560, %v554
    %v669 = vpack.c.b16 %v561, %v555
    %v670 = vpack.c.b16 %v562, %v556
    %v671 = vpack.c.b16 %v569, %v563
    %v672 = vpack.c.b16 %v570, %v564
    %v673 = vpack.c.b16 %v571, %v565
    %v674 = vpack.c.b16 %v572, %v566
    %v675 = vpack.c.b16 %v573, %v567
    %v676 = vpack.c.b16 %v574, %v568
    %v677 = vpack.c.b16 %v581, %v575
    %v678 = vpack.c.b16 %v582, %v576
    %v679 = vpack.c.b16 %v583, %v577
    %v680 = vpack.c.b16 %v584, %v578
    %v681 = vpack.c.b16 %v585, %v579
    %v682 = vpack.c.b16 %v586, %v580
    %779 = vmatprep.subr.bf16.mxu0 %v588
    %780 = vmatpush1.bf16.msra.mxu0 %v587
    %781 = vmatprep.subr.bf16.mxu0 %v594
    %782 = vmatpush1.bf16.msra.mxu0 %v593
    %783 = vmatprep.subr.bf16.mxu0 %v600
    %784 = vmatpush1.bf16.msra.mxu0 %v599
    %785 = vmatprep.subr.bf16.mxu0 %v606
    %786 = vmatpush1.bf16.msra.mxu0 %v605
    %787 = vmatprep.subr.bf16.mxu0 %v612
    %788 = vmatpush1.bf16.msra.mxu0 %v611
    %789 = vmatprep.subr.bf16.mxu0 %v618
    %790 = vmatpush1.bf16.msra.mxu0 %v617
    %791 = vmatprep.subr.bf16.mxu0 %v624
    %792 = vmatpush1.bf16.msra.mxu0 %v623
    %793 = vmatprep.subr.bf16.mxu0 %v630
    %794 = vmatpush1.bf16.msra.mxu0 %v629
    %795 = vmatprep.subr.bf16.mxu0 %v636
    %796 = vmatpush1.bf16.msra.mxu0 %v635
    %797 = vmatprep.subr.bf16.mxu0 %v642
    %798 = vmatpush1.bf16.msra.mxu0 %v641
    %799 = vmatprep.subr.bf16.mxu0 %v648
    %800 = vmatpush1.bf16.msra.mxu0 %v647
    %801 = vmatprep.subr.bf16.mxu0 %v654
    %802 = vmatpush1.bf16.msra.mxu0 %v653
    %803 = vmatprep.subr.bf16.mxu0 %v660
    %804 = vmatpush1.bf16.msra.mxu0 %v659
    %805 = vmatprep.subr.bf16.mxu0 %v666
    %806 = vmatpush1.bf16.msra.mxu0 %v665
    %807 = vmatprep.subr.bf16.mxu0 %v672
    %808 = vmatpush1.bf16.msra.mxu0 %v671
    %809 = vmatprep.subr.bf16.mxu0 %v678
    %810 = vmatpush1.bf16.msra.mxu0 %v677
    %811 = vmatprep.mubr.bf16.mxu0 %v170
    %812 = vmatmul.mubr.bf16.gmra.mrb[0].mxu0 %v169
    %v813 = vpop.f32.mrb[0].mxu0
    %v814 = vadd.f32 %v272, %v813
    %v815 = vpop.f32.mrb[0].mxu0
    %v816 = vadd.f32 %v276, %v815
    %v817 = vpop.f32.mrb[0].mxu0
    %v818 = vadd.f32 %v272, %v817
    %v819 = vpop.f32.mrb[0].mxu0
    %v820 = vadd.f32 %v276, %v819
    %821 = vdwg.mxu0
    %822 = vmatprep.subr.bf16.mxu0 %v590
    %823 = vmatpush1.bf16.msra.mxu0 %v589
    %824 = vmatprep.subr.bf16.mxu0 %v596
    %825 = vmatpush1.bf16.msra.mxu0 %v595
    %826 = vmatprep.subr.bf16.mxu0 %v602
    %827 = vmatpush1.bf16.msra.mxu0 %v601
    %828 = vmatprep.subr.bf16.mxu0 %v608
    %829 = vmatpush1.bf16.msra.mxu0 %v607
    %830 = vmatprep.subr.bf16.mxu0 %v614
    %831 = vmatpush1.bf16.msra.mxu0 %v613
    %832 = vmatprep.subr.bf16.mxu0 %v620
    %833 = vmatpush1.bf16.msra.mxu0 %v619
    %834 = vmatprep.subr.bf16.mxu0 %v626
    %835 = vmatpush1.bf16.msra.mxu0 %v625
    %836 = vmatprep.subr.bf16.mxu0 %v632
    %837 = vmatpush1.bf16.msra.mxu0 %v631
    %838 = vmatprep.subr.bf16.mxu0 %v638
    %839 = vmatpush1.bf16.msra.mxu0 %v637
    %840 = vmatprep.subr.bf16.mxu0 %v644
    %841 = vmatpush1.bf16.msra.mxu0 %v643
    %842 = vmatprep.subr.bf16.mxu0 %v650
    %843 = vmatpush1.bf16.msra.mxu0 %v649
    %844 = vmatprep.subr.bf16.mxu0 %v656
    %845 = vmatpush1.bf16.msra.mxu0 %v655
    %846 = vmatprep.subr.bf16.mxu0 %v662
    %847 = vmatpush1.bf16.msra.mxu0 %v661
    %848 = vmatprep.subr.bf16.mxu0 %v668
    %849 = vmatpush1.bf16.msra.mxu0 %v667
    %850 = vmatprep.subr.bf16.mxu0 %v674
    %851 = vmatpush1.bf16.msra.mxu0 %v673
    %852 = vmatprep.subr.bf16.mxu0 %v680
    %853 = vmatpush1.bf16.msra.mxu0 %v679
    %854 = vmatprep.mubr.bf16.mxu0 %v170
    %855 = vmatmul.mubr.bf16.gmra.mrb[0].mxu0 %v169
    %v856 = vpop.f32.mrb[0].mxu0
    %v857 = vadd.f32 %v280, %v856
    %v858 = vpop.f32.mrb[0].mxu0
    %v859 = vadd.f32 %v284, %v858
    %v860 = vpop.f32.mrb[0].mxu0
    %v861 = vadd.f32 %v280, %v860
    %v862 = vpop.f32.mrb[0].mxu0
    %v863 = vadd.f32 %v284, %v862
    %864 = vdwg.mxu0
    %865 = vmatprep.subr.bf16.mxu0 %v592
    %866 = vmatpush1.bf16.msra.mxu0 %v591
    %867 = vmatprep.subr.bf16.mxu0 %v598
    %868 = vmatpush1.bf16.msra.mxu0 %v597
    %869 = vmatprep.subr.bf16.mxu0 %v604
    %870 = vmatpush1.bf16.msra.mxu0 %v603
    %871 = vmatprep.subr.bf16.mxu0 %v610
    %872 = vmatpush1.bf16.msra.mxu0 %v609
    %873 = vmatprep.subr.bf16.mxu0 %v616
    %874 = vmatpush1.bf16.msra.mxu0 %v615
    %875 = vmatprep.subr.bf16.mxu0 %v622
    %876 = vmatpush1.bf16.msra.mxu0 %v621
    %877 = vmatprep.subr.bf16.mxu0 %v628
    %878 = vmatpush1.bf16.msra.mxu0 %v627
    %879 = vmatprep.subr.bf16.mxu0 %v634
    %880 = vmatpush1.bf16.msra.mxu0 %v633
    %881 = vmatprep.subr.bf16.mxu0 %v640
    %882 = vmatpush1.bf16.msra.mxu0 %v639
    %883 = vmatprep.subr.bf16.mxu0 %v646
    %884 = vmatpush1.bf16.msra.mxu0 %v645
    %885 = vmatprep.subr.bf16.mxu0 %v652
    %886 = vmatpush1.bf16.msra.mxu0 %v651
    %887 = vmatprep.subr.bf16.mxu0 %v658
    %888 = vmatpush1.bf16.msra.mxu0 %v657
    %889 = vmatprep.subr.bf16.mxu0 %v664
    %890 = vmatpush1.bf16.msra.mxu0 %v663
    %891 = vmatprep.subr.bf16.mxu0 %v670
    %892 = vmatpush1.bf16.msra.mxu0 %v669
    %893 = vmatprep.subr.bf16.mxu0 %v676
    %894 = vmatpush1.bf16.msra.mxu0 %v675
    %895 = vmatprep.subr.bf16.mxu0 %v682
    %896 = vmatpush1.bf16.msra.mxu0 %v681
    %897 = vmatprep.mubr.bf16.mxu0 %v170
    %898 = vmatmul.mubr.bf16.gmra.mrb[0].mxu0 %v169
    %v899 = vpop.f32.mrb[0].mxu0
    %v900 = vadd.f32 %v288, %v899
    %v901 = vpop.f32.mrb[0].mxu0
    %v902 = vadd.f32 %v292, %v901
    %v903 = vpop.f32.mrb[0].mxu0
    %v904 = vadd.f32 %v288, %v903
    %v905 = vpop.f32.mrb[0].mxu0
    %v906 = vadd.f32 %v292, %v905
    %907 = vdwg.mxu0
    %v920 = vcombine.low %v814, %v816
    %v921 = vcombine.high %v814, %v816
    %v922 = vcombine.low %v857, %v859
    %v923 = vcombine.high %v857, %v859
    %v925 = vunpack.c.l.s4 1983009808
    %v926 = vunpack.c.0.s8 %v925
    %v927 = vlaneseq
    %v928 = vshrl.u32 %v927, 7
    %v929 = vsub.s32 %v926, %v928
    %v930 = vrot.slane %v920, %v929
    %v932 = vunpack.c.l.s4 1983009808
    %v933 = vunpack.c.0.s8 %v932
    %v934 = vlaneseq
    %v935 = vshrl.u32 %v934, 7
    %v936 = vsub.s32 %v933, %v935
    %v937 = vrot.slane %v921, %v936
    %v939 = vunpack.c.l.s4 1983009808
    %v940 = vunpack.c.0.s8 %v939
    %v941 = vlaneseq
    %v942 = vshrl.u32 %v941, 7
    %v943 = vsub.s32 %v940, %v942
    %v944 = vrot.slane %v922, %v943
    %v946 = vunpack.c.l.s4 1983009808
    %v947 = vunpack.c.0.s8 %v946
    %v948 = vlaneseq
    %v949 = vshrl.u32 %v948, 7
    %v950 = vsub.s32 %v947, %v949
    %v951 = vrot.slane %v923, %v950
    %v952 = vcombine.low %v930, %v944
    %v953 = vcombine.high %v930, %v944
    %v954 = vcombine.low %v937, %v951
    %v955 = vcombine.high %v937, %v951
    %v956 = vcombine.low %v900, %v902
    %v957 = vcombine.high %v900, %v902
    %v959 = vunpack.c.l.s4 1983009808
    %v960 = vunpack.c.0.s8 %v959
    %v961 = vlaneseq
    %v962 = vshrl.u32 %v961, 7
    %v963 = vsub.s32 %v960, %v962
    %v964 = vrot.slane %v956, %v963
    %v966 = vunpack.c.l.s4 1983009808
    %v967 = vunpack.c.0.s8 %v966
    %v968 = vlaneseq
    %v969 = vshrl.u32 %v968, 7
    %v970 = vsub.s32 %v967, %v969
    %v971 = vrot.slane %v957, %v970
    %v972 = vcombine.high %v964, %v964
    %v973 = vcombine.high %v971, %v971
    %v974 = vcombine.low %v818, %v820
    %v975 = vcombine.high %v818, %v820
    %v976 = vcombine.low %v861, %v863
    %v977 = vcombine.high %v861, %v863
    %v979 = vunpack.c.l.s4 1983009808
    %v980 = vunpack.c.0.s8 %v979
    %v981 = vlaneseq
    %v982 = vshrl.u32 %v981, 7
    %v983 = vsub.s32 %v980, %v982
    %v984 = vrot.slane %v974, %v983
    %v986 = vunpack.c.l.s4 1983009808
    %v987 = vunpack.c.0.s8 %v986
    %v988 = vlaneseq
    %v989 = vshrl.u32 %v988, 7
    %v990 = vsub.s32 %v987, %v989
    %v991 = vrot.slane %v975, %v990
    %v993 = vunpack.c.l.s4 1983009808
    %v994 = vunpack.c.0.s8 %v993
    %v995 = vlaneseq
    %v996 = vshrl.u32 %v995, 7
    %v997 = vsub.s32 %v994, %v996
    %v998 = vrot.slane %v976, %v997
    %v1000 = vunpack.c.l.s4 1983009808
    %v1001 = vunpack.c.0.s8 %v1000
    %v1002 = vlaneseq
    %v1003 = vshrl.u32 %v1002, 7
    %v1004 = vsub.s32 %v1001, %v1003
    %v1005 = vrot.slane %v977, %v1004
    %v1006 = vcombine.low %v984, %v998
    %v1007 = vcombine.high %v984, %v998
    %v1008 = vcombine.low %v991, %v1005
    %v1009 = vcombine.high %v991, %v1005
    %v1010 = vcombine.low %v904, %v906
    %v1011 = vcombine.high %v904, %v906
    %v1013 = vunpack.c.l.s4 1983009808
    %v1014 = vunpack.c.0.s8 %v1013
    %v1015 = vlaneseq
    %v1016 = vshrl.u32 %v1015, 7
    %v1017 = vsub.s32 %v1014, %v1016
    %v1018 = vrot.slane %v1010, %v1017
    %v1020 = vunpack.c.l.s4 1983009808
    %v1021 = vunpack.c.0.s8 %v1020
    %v1022 = vlaneseq
    %v1023 = vshrl.u32 %v1022, 7
    %v1024 = vsub.s32 %v1021, %v1023
    %v1025 = vrot.slane %v1011, %v1024
    %v1026 = vcombine.high %v1018, %v1018
    %v1027 = vcombine.high %v1025, %v1025
    %v1028 = vlaneseq
    %v1029 = vshrl.u32 %v1028, 7
    %v1030 = vlaneseq
    %v1031 = vand.u32 %v1030, 127
    %vm1032 = vcmp.le.s32.totalorder %v1031, %v1029
    %v1033 = vrot.slane %v952, 4
    %v1034 = vrot.slane %v953, 4
    %v1035 = vrot.slane %v954, 4
    %v1036 = vrot.slane %v955, 4
    %v1037 = vrot.slane %v1006, 4
    %v1038 = vrot.slane %v1007, 4
    %v1039 = vrot.slane %v1008, 4
    %v1040 = vrot.slane %v1009, 4
    %v1041 = vlaneseq
    %v1042 = vshrl.u32 %v1041, 7
    %v1043 = vsub.s32 0, %v1042
    %v1044 = vrot.slane %v952, %v1043
    %v1045 = vlaneseq
    %v1046 = vshrl.u32 %v1045, 7
    %v1047 = vsub.s32 0, %v1046
    %v1048 = vrot.slane %v953, %v1047
    %v1049 = vlaneseq
    %v1050 = vshrl.u32 %v1049, 7
    %v1051 = vsub.s32 0, %v1050
    %v1052 = vrot.slane %v954, %v1051
    %v1053 = vlaneseq
    %v1054 = vshrl.u32 %v1053, 7
    %v1055 = vsub.s32 0, %v1054
    %v1056 = vrot.slane %v955, %v1055
    %v1057 = vlaneseq
    %v1058 = vshrl.u32 %v1057, 7
    %v1059 = vsub.s32 0, %v1058
    %v1060 = vrot.slane %v1006, %v1059
    %v1061 = vlaneseq
    %v1062 = vshrl.u32 %v1061, 7
    %v1063 = vsub.s32 0, %v1062
    %v1064 = vrot.slane %v1007, %v1063
    %v1065 = vlaneseq
    %v1066 = vshrl.u32 %v1065, 7
    %v1067 = vsub.s32 0, %v1066
    %v1068 = vrot.slane %v1008, %v1067
    %v1069 = vlaneseq
    %v1070 = vshrl.u32 %v1069, 7
    %v1071 = vsub.s32 0, %v1070
    %v1072 = vrot.slane %v1009, %v1071
    %vm1073 = vcmask 1041409
    %v1074 = vsel %vm1073, %v1048, %v1044
    %vm1075 = vcmask 1042434
    %v1076 = vsel %vm1075, %v1052, %v1074
    %vm1077 = vcmask 1043459
    %v1078 = vsel %vm1077, %v1056, %v1076
    %vm1079 = vcmask 1044484
    %v1080 = vsel %vm1079, %v1060, %v1078
    %vm1081 = vcmask 1045509
    %v1082 = vsel %vm1081, %v1064, %v1080
    %vm1083 = vcmask 1046534
    %v1084 = vsel %vm1083, %v1068, %v1082
    %vm1085 = vcmask 1047559
    %v1086 = vsel %vm1085, %v1072, %v1084
    %v1087 = vlaneseq
    %v1088 = vshrl.u32 %v1087, 7
    %v1089 = vsub.s32 0, %v1088
    %v1090 = vrot.slane %v1033, %v1089
    %v1091 = vlaneseq
    %v1092 = vshrl.u32 %v1091, 7
    %v1093 = vsub.s32 0, %v1092
    %v1094 = vrot.slane %v1034, %v1093
    %v1095 = vlaneseq
    %v1096 = vshrl.u32 %v1095, 7
    %v1097 = vsub.s32 0, %v1096
    %v1098 = vrot.slane %v1035, %v1097
    %v1099 = vlaneseq
    %v1100 = vshrl.u32 %v1099, 7
    %v1101 = vsub.s32 0, %v1100
    %v1102 = vrot.slane %v1036, %v1101
    %v1103 = vlaneseq
    %v1104 = vshrl.u32 %v1103, 7
    %v1105 = vsub.s32 0, %v1104
    %v1106 = vrot.slane %v1037, %v1105
    %v1107 = vlaneseq
    %v1108 = vshrl.u32 %v1107, 7
    %v1109 = vsub.s32 0, %v1108
    %v1110 = vrot.slane %v1038, %v1109
    %v1111 = vlaneseq
    %v1112 = vshrl.u32 %v1111, 7
    %v1113 = vsub.s32 0, %v1112
    %v1114 = vrot.slane %v1039, %v1113
    %v1115 = vlaneseq
    %v1116 = vshrl.u32 %v1115, 7
    %v1117 = vsub.s32 0, %v1116
    %v1118 = vrot.slane %v1040, %v1117
    %v1119 = vsel %vm1073, %v1094, %v1090
    %v1120 = vsel %vm1075, %v1098, %v1119
    %v1121 = vsel %vm1077, %v1102, %v1120
    %v1122 = vsel %vm1079, %v1106, %v1121
    %v1123 = vsel %vm1081, %v1110, %v1122
    %v1124 = vsel %vm1083, %v1114, %v1123
    %v1125 = vsel %vm1085, %v1118, %v1124
    %vm1126 = vcmask 261120
    %v1127 = vsel %vm1126, %v1086, 0
    %v1129 = vsel %vm1126, %v1125, 0
    %1131 = vmatprep.subr.mxu0 0.0
    %1132 = vmatpush1.xpose.msra.mxu0 %v1129
    %1133 = vmatprep.subr.mxu0 0.0
    %1134 = vmatpush1.xpose.msra.mxu0 0.0
    %1135 = vmatprep.subr.mxu0 0.0
    %1136 = vmatpush1.xpose.msra.mxu0 0.0
    %1137 = vmatprep.subr.mxu0 0.0
    %1138 = vmatpush1.xpose.msra.mxu0 0.0
    %1139 = vmatprep.subr.mxu0 0.0
    %1140 = vmatpush1.xpose.msra.mxu0 0.0
    %1141 = vmatprep.subr.mxu0 0.0
    %1142 = vmatpush1.xpose.msra.mxu0 0.0
    %1143 = vmatprep.subr.mxu0 0.0
    %1144 = vmatpush1.xpose.msra.mxu0 0.0
    %1145 = vmatprep.subr.mxu0 0.0
    %1146 = vmatpush1.xpose.msra.mxu0 0.0
    %1147 = vmatprep.subr.mxu0 0.0
    %1148 = vmatpush1.xpose.msra.mxu0 0.0
    %1149 = vmatprep.subr.mxu0 0.0
    %1150 = vmatpush1.xpose.msra.mxu0 0.0
    %1151 = vmatprep.subr.mxu0 0.0
    %1152 = vmatpush1.xpose.msra.mxu0 0.0
    %1153 = vmatprep.subr.mxu0 0.0
    %1154 = vmatpush1.xpose.msra.mxu0 0.0
    %1155 = vmatprep.subr.mxu0 0.0
    %1156 = vmatpush1.xpose.msra.mxu0 0.0
    %1157 = vmatprep.subr.mxu0 0.0
    %1158 = vmatpush1.xpose.msra.mxu0 0.0
    %1159 = vmatprep.subr.mxu0 0.0
    %1160 = vmatpush1.xpose.msra.mxu0 0.0
    %1161 = vmatprep.subr.mxu0 0.0
    %1162 = vmatpush1.xpose.msra.mxu0 0.0
    %1163 = vmatprep.subr.mxu0 0.0
    %1164 = vmatpush1.xpose.msra.mxu0 0.0
    %1165 = vmatprep.subr.mxu0 0.0
    %1166 = vmatpush1.xpose.msra.mxu0 0.0
    %1167 = vmatprep.subr.mxu0 0.0
    %1168 = vmatpush1.xpose.msra.mxu0 0.0
    %1169 = vmatprep.subr.mxu0 0.0
    %1170 = vmatpush1.xpose.msra.mxu0 0.0
    %1171 = vmatprep.subr.mxu0 0.0
    %1172 = vmatpush1.xpose.msra.mxu0 0.0
    %1173 = vmatprep.subr.mxu0 0.0
    %1174 = vmatpush1.xpose.msra.mxu0 0.0
    %1175 = vmatprep.subr.mxu0 0.0
    %1176 = vmatpush1.xpose.msra.mxu0 0.0
    %1177 = vmatprep.subr.mxu0 0.0
    %1178 = vmatpush1.xpose.msra.mxu0 0.0
    %1179 = vmatprep.subr.mxu0 0.0
    %1180 = vmatpush1.xpose.msra.mxu0 0.0
    %1181 = vmatprep.subr.mxu0 0.0
    %1182 = vmatpush1.xpose.msra.mxu0 0.0
    %1183 = vmatprep.subr.mxu0 0.0
    %1184 = vmatpush1.xpose.msra.mxu0 0.0
    %1185 = vmatprep.subr.mxu0 0.0
    %1186 = vmatpush1.xpose.msra.mxu0 0.0
    %1187 = vmatprep.subr.mxu0 0.0
    %1188 = vmatpush1.xpose.msra.mxu0 0.0
    %1189 = vmatprep.subr.mxu0 0.0
    %1190 = vmatpush1.xpose.msra.mxu0 0.0
    %1191 = vmatprep.subr.mxu0 0.0
    %1192 = vmatpush1.xpose.msra.mxu0 0.0
    %1193 = vmatprep.subr.mxu0 0.0
    %1194 = vmatpush1.xpose.msra.mxu0 0.0
    %1195 = vmatprep.mubr.f32.mxu0 0.0
    %1196 = vmatmul.mubr.f32.gmra.mrb[0].mxu0 %v1127
    %v1197 = vpop.f32.mrb[0].mxu0
    %v1198 = vadd.f32 0.0, %v1197
    %v1199 = vpop.f32.mrb[0].mxu0
    %1200 = vdwg.mxu0
    %v1201 = vsel %vm1032, %v1198, -inf
    %vm1202 = vcmask 64512
    %v1203 = vsel %vm1202, %v1201, -inf
    %1204 = vmax.xlane.f32.xlu0 %v1203
    %v1205 = vpop.xlane.xlu0 %1204
    %v1206 = vsub.f32 %v1201, %v1205
    %v1207 = vmul.f32 %v1206, 1.442695
    %v1208 = vpow.pop %v1207
    %v1209 = vsel %vm1202, %v1208, 0.0
    %1210 = vadd.xlane.f32.xlu0 %v1209
    %v1211 = vpop.xlane.xlu0 %1210
    %v1212 = vlaneseq
    %v1213 = vshrl.u32 %v1212, 7
    %v1214 = vsub.s32 0, %v1213
    %v1215 = vrot.slane %v964, %v1214
    %v1216 = vlaneseq
    %v1217 = vshrl.u32 %v1216, 7
    %v1218 = vsub.s32 0, %v1217
    %v1219 = vrot.slane %v972, %v1218
    %v1220 = vlaneseq
    %v1221 = vshrl.u32 %v1220, 7
    %v1222 = vsub.s32 0, %v1221
    %v1223 = vrot.slane %v971, %v1222
    %v1224 = vlaneseq
    %v1225 = vshrl.u32 %v1224, 7
    %v1226 = vsub.s32 0, %v1225
    %v1227 = vrot.slane %v973, %v1226
    %v1228 = vlaneseq
    %v1229 = vshrl.u32 %v1228, 7
    %v1230 = vsub.s32 0, %v1229
    %v1231 = vrot.slane %v1018, %v1230
    %v1232 = vlaneseq
    %v1233 = vshrl.u32 %v1232, 7
    %v1234 = vsub.s32 0, %v1233
    %v1235 = vrot.slane %v1026, %v1234
    %v1236 = vlaneseq
    %v1237 = vshrl.u32 %v1236, 7
    %v1238 = vsub.s32 0, %v1237
    %v1239 = vrot.slane %v1025, %v1238
    %v1240 = vlaneseq
    %v1241 = vshrl.u32 %v1240, 7
    %v1242 = vsub.s32 0, %v1241
    %v1243 = vrot.slane %v1027, %v1242
    %v1244 = vsel %vm1073, %v1219, %v1215
    %v1245 = vsel %vm1075, %v1223, %v1244
    %v1246 = vsel %vm1077, %v1227, %v1245
    %v1247 = vsel %vm1079, %v1231, %v1246
    %v1248 = vsel %vm1081, %v1235, %v1247
    %v1249 = vsel %vm1083, %v1239, %v1248
    %v1250 = vsel %vm1085, %v1243, %v1249
    %v1253 = vsel %vm1202, %v1208, 0
    %1255 = vmatprep.subr.mxu0 0.0
    %1256 = vmatpush1.msra.mxu0 %v1250
    %1257 = vmatprep.subr.mxu0 0.0
    %1258 = vmatpush1.msra.mxu0 0.0
    %1259 = vmatprep.subr.mxu0 0.0
    %1260 = vmatpush1.msra.mxu0 0.0
    %1261 = vmatprep.subr.mxu0 0.0
    %1262 = vmatpush1.msra.mxu0 0.0
    %1263 = vmatprep.subr.mxu0 0.0
    %1264 = vmatpush1.msra.mxu0 0.0
    %1265 = vmatprep.subr.mxu0 0.0
    %1266 = vmatpush1.msra.mxu0 0.0
    %1267 = vmatprep.subr.mxu0 0.0
    %1268 = vmatpush1.msra.mxu0 0.0
    %1269 = vmatprep.subr.mxu0 0.0
    %1270 = vmatpush1.msra.mxu0 0.0
    %1271 = vmatprep.subr.mxu0 0.0
    %1272 = vmatpush1.msra.mxu0 0.0
    %1273 = vmatprep.subr.mxu0 0.0
    %1274 = vmatpush1.msra.mxu0 0.0
    %1275 = vmatprep.subr.mxu0 0.0
    %1276 = vmatpush1.msra.mxu0 0.0
    %1277 = vmatprep.subr.mxu0 0.0
    %1278 = vmatpush1.msra.mxu0 0.0
    %1279 = vmatprep.subr.mxu0 0.0
    %1280 = vmatpush1.msra.mxu0 0.0
    %1281 = vmatprep.subr.mxu0 0.0
    %1282 = vmatpush1.msra.mxu0 0.0
    %1283 = vmatprep.subr.mxu0 0.0
    %1284 = vmatpush1.msra.mxu0 0.0
    %1285 = vmatprep.subr.mxu0 0.0
    %1286 = vmatpush1.msra.mxu0 0.0
    %1287 = vmatprep.subr.mxu0 0.0
    %1288 = vmatpush1.msra.mxu0 0.0
    %1289 = vmatprep.subr.mxu0 0.0
    %1290 = vmatpush1.msra.mxu0 0.0
    %1291 = vmatprep.subr.mxu0 0.0
    %1292 = vmatpush1.msra.mxu0 0.0
    %1293 = vmatprep.subr.mxu0 0.0
    %1294 = vmatpush1.msra.mxu0 0.0
    %1295 = vmatprep.subr.mxu0 0.0
    %1296 = vmatpush1.msra.mxu0 0.0
    %1297 = vmatprep.subr.mxu0 0.0
    %1298 = vmatpush1.msra.mxu0 0.0
    %1299 = vmatprep.subr.mxu0 0.0
    %1300 = vmatpush1.msra.mxu0 0.0
    %1301 = vmatprep.subr.mxu0 0.0
    %1302 = vmatpush1.msra.mxu0 0.0
    %1303 = vmatprep.subr.mxu0 0.0
    %1304 = vmatpush1.msra.mxu0 0.0
    %1305 = vmatprep.subr.mxu0 0.0
    %1306 = vmatpush1.msra.mxu0 0.0
    %1307 = vmatprep.subr.mxu0 0.0
    %1308 = vmatpush1.msra.mxu0 0.0
    %1309 = vmatprep.subr.mxu0 0.0
    %1310 = vmatpush1.msra.mxu0 0.0
    %1311 = vmatprep.subr.mxu0 0.0
    %1312 = vmatpush1.msra.mxu0 0.0
    %1313 = vmatprep.subr.mxu0 0.0
    %1314 = vmatpush1.msra.mxu0 0.0
    %1315 = vmatprep.subr.mxu0 0.0
    %1316 = vmatpush1.msra.mxu0 0.0
    %1317 = vmatprep.subr.mxu0 0.0
    %1318 = vmatpush1.msra.mxu0 0.0
    %1319 = vmatprep.mubr.f32.mxu0 0.0
    %1320 = vmatmul.mubr.f32.gmra.mrb[0].mxu0 %v1253
    %v1321 = vpop.f32.mrb[0].mxu0
    %v1322 = vadd.f32 0.0, %v1321
    %v1323 = vpop.f32.mrb[0].mxu0
    %1324 = vdwg.mxu0
    %v1325 = vrcp.pop %v1211
    %v1326 = vmul.f32 %v1322, %v1325
    %v1328 = vcombine.high %v1326, %v1326
    %v1330 = vunpack.c.l.s4 1966171168
    %v1331 = vunpack.c.0.s8 %v1330
    %v1332 = vlaneseq
    %v1333 = vshrl.u32 %v1332, 7
    %v1334 = vsub.s32 %v1331, %v1333
    %v1335 = vrot.slane %v1326, %v1334
    %v1337 = vunpack.c.l.s4 1966171168
    %v1338 = vunpack.c.0.s8 %v1337
    %v1339 = vlaneseq
    %v1340 = vshrl.u32 %v1339, 7
    %v1341 = vsub.s32 %v1338, %v1340
    %v1342 = vrot.slane %v1328, %v1341
    %v1343 = vcombine.high %v1335, %v1335
    %v1344 = vcombine.high %v1342, %v1342
    %v1346 = vunpack.c.l.s4 1966171168
    %v1347 = vunpack.c.0.s8 %v1346
    %v1348 = vlaneseq
    %v1349 = vshrl.u32 %v1348, 7
    %v1350 = vsub.s32 %v1347, %v1349
    %v1351 = vrot.slane %v1335, %v1350
    %v1353 = vunpack.c.l.s4 1966171168
    %v1354 = vunpack.c.0.s8 %v1353
    %v1355 = vlaneseq
    %v1356 = vshrl.u32 %v1355, 7
    %v1357 = vsub.s32 %v1354, %v1356
    %v1358 = vrot.slane %v1342, %v1357
    %v1360 = vunpack.c.l.s4 1966171168
    %v1361 = vunpack.c.0.s8 %v1360
    %v1362 = vlaneseq
    %v1363 = vshrl.u32 %v1362, 7
    %v1364 = vsub.s32 %v1361, %v1363
    %v1365 = vrot.slane %v1343, %v1364
    %v1367 = vunpack.c.l.s4 1966171168
    %v1368 = vunpack.c.0.s8 %v1367
    %v1369 = vlaneseq
    %v1370 = vshrl.u32 %v1369, 7
    %v1371 = vsub.s32 %v1368, %v1370
    %v1372 = vrot.slane %v1344, %v1371
    %v1373 = vcombine.high %v1351, %v1351
    %v1374 = vcombine.high %v1358, %v1358
    %v1375 = vcombine.high %v1365, %v1365
    %v1376 = vcombine.high %v1372, %v1372
    %vm1385 = vcmask 253952
    %1386 = vst.msk [vmem:[#allocation2] sm:$0x1] %vm1385, %v1351
    %1387 = vst.msk [vmem:[#allocation2 + $0x4] sm:$0x1] %vm1385, %v1365
    %1388 = vst.msk [vmem:[#allocation2 + $0x8] sm:$0x1] %vm1385, %v1373
    %1389 = vst.msk [vmem:[#allocation2 + $0xc] sm:$0x1] %vm1385, %v1375
    %1390 = vst.msk [vmem:[#allocation2 + $0x10] sm:$0x1] %vm1385, %v1358
    %1391 = vst.msk [vmem:[#allocation2 + $0x14] sm:$0x1] %vm1385, %v1372
    %1392 = vst.msk [vmem:[#allocation2 + $0x18] sm:$0x1] %vm1385, %v1374
    %1393 = vst.msk [vmem:[#allocation2 + $0x1c] sm:$0x1] %vm1385, %v1376
    %v1394 = vlaneseq
    %v1395 = vshrl.u32 %v1394, 7
    %v1396 = vsub.s32 1, %v1395
    %v1397 = vrot.slane %v952, %v1396
    %v1398 = vlaneseq
    %v1399 = vshrl.u32 %v1398, 7
    %v1400 = vsub.s32 1, %v1399
    %v1401 = vrot.slane %v953, %v1400
    %v1402 = vlaneseq
    %v1403 = vshrl.u32 %v1402, 7
    %v1404 = vsub.s32 1, %v1403
    %v1405 = vrot.slane %v954, %v1404
    %v1406 = vlaneseq
    %v1407 = vshrl.u32 %v1406, 7
    %v1408 = vsub.s32 1, %v1407
    %v1409 = vrot.slane %v955, %v1408
    %v1410 = vlaneseq
    %v1411 = vshrl.u32 %v1410, 7
    %v1412 = vsub.s32 1, %v1411
    %v1413 = vrot.slane %v1006, %v1412
    %v1414 = vlaneseq
    %v1415 = vshrl.u32 %v1414, 7
    %v1416 = vsub.s32 1, %v1415
    %v1417 = vrot.slane %v1007, %v1416
    %v1418 = vlaneseq
    %v1419 = vshrl.u32 %v1418, 7
    %v1420 = vsub.s32 1, %v1419
    %v1421 = vrot.slane %v1008, %v1420
    %v1422 = vlaneseq
    %v1423 = vshrl.u32 %v1422, 7
    %v1424 = vsub.s32 1, %v1423
    %v1425 = vrot.slane %v1009, %v1424
    %v1426 = vsel %vm1073, %v1401, %v1397
    %v1427 = vsel %vm1075, %v1405, %v1426
    %v1428 = vsel %vm1077, %v1409, %v1427
    %v1429 = vsel %vm1079, %v1413, %v1428
    %v1430 = vsel %vm1081, %v1417, %v1429
    %v1431 = vsel %vm1083, %v1421, %v1430
    %v1432 = vsel %vm1085, %v1425, %v1431
    %v1433 = vlaneseq
    %v1434 = vshrl.u32 %v1433, 7
    %v1435 = vsub.s32 1, %v1434
    %v1436 = vrot.slane %v1033, %v1435
    %v1437 = vlaneseq
    %v1438 = vshrl.u32 %v1437, 7
    %v1439 = vsub.s32 1, %v1438
    %v1440 = vrot.slane %v1034, %v1439
    %v1441 = vlaneseq
    %v1442 = vshrl.u32 %v1441, 7
    %v1443 = vsub.s32 1, %v1442
    %v1444 = vrot.slane %v1035, %v1443
    %v1445 = vlaneseq
    %v1446 = vshrl.u32 %v1445, 7
    %v1447 = vsub.s32 1, %v1446
    %v1448 = vrot.slane %v1036, %v1447
    %v1449 = vlaneseq
    %v1450 = vshrl.u32 %v1449, 7
    %v1451 = vsub.s32 1, %v1450
    %v1452 = vrot.slane %v1037, %v1451
    %v1453 = vlaneseq
    %v1454 = vshrl.u32 %v1453, 7
    %v1455 = vsub.s32 1, %v1454
    %v1456 = vrot.slane %v1038, %v1455
    %v1457 = vlaneseq
    %v1458 = vshrl.u32 %v1457, 7
    %v1459 = vsub.s32 1, %v1458
    %v1460 = vrot.slane %v1039, %v1459
    %v1461 = vlaneseq
    %v1462 = vshrl.u32 %v1461, 7
    %v1463 = vsub.s32 1, %v1462
    %v1464 = vrot.slane %v1040, %v1463
    %v1465 = vsel %vm1073, %v1440, %v1436
    %v1466 = vsel %vm1075, %v1444, %v1465
    %v1467 = vsel %vm1077, %v1448, %v1466
    %v1468 = vsel %vm1079, %v1452, %v1467
    %v1469 = vsel %vm1081, %v1456, %v1468
    %v1470 = vsel %vm1083, %v1460, %v1469
    %v1471 = vsel %vm1085, %v1464, %v1470
    %v1472 = vsel %vm1126, %v1432, 0
    %v1474 = vsel %vm1126, %v1471, 0
    %1476 = vmatprep.subr.mxu0 0.0
    %1477 = vmatpush1.xpose.msra.mxu0 %v1474
    %1478 = vmatprep.subr.mxu0 0.0
    %1479 = vmatpush1.xpose.msra.mxu0 0.0
    %1480 = vmatprep.subr.mxu0 0.0
    %1481 = vmatpush1.xpose.msra.mxu0 0.0
    %1482 = vmatprep.subr.mxu0 0.0
    %1483 = vmatpush1.xpose.msra.mxu0 0.0
    %1484 = vmatprep.subr.mxu0 0.0
    %1485 = vmatpush1.xpose.msra.mxu0 0.0
    %1486 = vmatprep.subr.mxu0 0.0
    %1487 = vmatpush1.xpose.msra.mxu0 0.0
    %1488 = vmatprep.subr.mxu0 0.0
    %1489 = vmatpush1.xpose.msra.mxu0 0.0
    %1490 = vmatprep.subr.mxu0 0.0
    %1491 = vmatpush1.xpose.msra.mxu0 0.0
    %1492 = vmatprep.subr.mxu0 0.0
    %1493 = vmatpush1.xpose.msra.mxu0 0.0
    %1494 = vmatprep.subr.mxu0 0.0
    %1495 = vmatpush1.xpose.msra.mxu0 0.0
    %1496 = vmatprep.subr.mxu0 0.0
    %1497 = vmatpush1.xpose.msra.mxu0 0.0
    %1498 = vmatprep.subr.mxu0 0.0
    %1499 = vmatpush1.xpose.msra.mxu0 0.0
    %1500 = vmatprep.subr.mxu0 0.0
    %1501 = vmatpush1.xpose.msra.mxu0 0.0
    %1502 = vmatprep.subr.mxu0 0.0
    %1503 = vmatpush1.xpose.msra.mxu0 0.0
    %1504 = vmatprep.subr.mxu0 0.0
    %1505 = vmatpush1.xpose.msra.mxu0 0.0
    %1506 = vmatprep.subr.mxu0 0.0
    %1507 = vmatpush1.xpose.msra.mxu0 0.0
    %1508 = vmatprep.subr.mxu0 0.0
    %1509 = vmatpush1.xpose.msra.mxu0 0.0
    %1510 = vmatprep.subr.mxu0 0.0
    %1511 = vmatpush1.xpose.msra.mxu0 0.0
    %1512 = vmatprep.subr.mxu0 0.0
    %1513 = vmatpush1.xpose.msra.mxu0 0.0
    %1514 = vmatprep.subr.mxu0 0.0
    %1515 = vmatpush1.xpose.msra.mxu0 0.0
    %1516 = vmatprep.subr.mxu0 0.0
    %1517 = vmatpush1.xpose.msra.mxu0 0.0
    %1518 = vmatprep.subr.mxu0 0.0
    %1519 = vmatpush1.xpose.msra.mxu0 0.0
    %1520 = vmatprep.subr.mxu0 0.0
    %1521 = vmatpush1.xpose.msra.mxu0 0.0
    %1522 = vmatprep.subr.mxu0 0.0
    %1523 = vmatpush1.xpose.msra.mxu0 0.0
    %1524 = vmatprep.subr.mxu0 0.0
    %1525 = vmatpush1.xpose.msra.mxu0 0.0
    %1526 = vmatprep.subr.mxu0 0.0
    %1527 = vmatpush1.xpose.msra.mxu0 0.0
    %1528 = vmatprep.subr.mxu0 0.0
    %1529 = vmatpush1.xpose.msra.mxu0 0.0
    %1530 = vmatprep.subr.mxu0 0.0
    %1531 = vmatpush1.xpose.msra.mxu0 0.0
    %1532 = vmatprep.subr.mxu0 0.0
    %1533 = vmatpush1.xpose.msra.mxu0 0.0
    %1534 = vmatprep.subr.mxu0 0.0
    %1535 = vmatpush1.xpose.msra.mxu0 0.0
    %1536 = vmatprep.subr.mxu0 0.0
    %1537 = vmatpush1.xpose.msra.mxu0 0.0
    %1538 = vmatprep.subr.mxu0 0.0
    %1539 = vmatpush1.xpose.msra.mxu0 0.0
    %1540 = vmatprep.mubr.f32.mxu0 0.0
    %1541 = vmatmul.mubr.f32.gmra.mrb[0].mxu0 %v1472
    %v1542 = vpop.f32.mrb[0].mxu0
    %v1543 = vadd.f32 0.0, %v1542
    %v1544 = vpop.f32.mrb[0].mxu0
    %1545 = vdwg.mxu0
    %v1546 = vsel %vm1032, %v1543, -inf
    %v1547 = vsel %vm1202, %v1546, -inf
    %1548 = vmax.xlane.f32.xlu0 %v1547
    %v1549 = vpop.xlane.xlu0 %1548
    %v1550 = vsub.f32 %v1546, %v1549
    %v1551 = vmul.f32 %v1550, 1.442695
    %v1552 = vpow.pop %v1551
    %v1553 = vsel %vm1202, %v1552, 0.0
    %1554 = vadd.xlane.f32.xlu0 %v1553
    %v1555 = vpop.xlane.xlu0 %1554
    %v1556 = vlaneseq
    %v1557 = vshrl.u32 %v1556, 7
    %v1558 = vsub.s32 1, %v1557
    %v1559 = vrot.slane %v964, %v1558
    %v1560 = vlaneseq
    %v1561 = vshrl.u32 %v1560, 7
    %v1562 = vsub.s32 1, %v1561
    %v1563 = vrot.slane %v972, %v1562
    %v1564 = vlaneseq
    %v1565 = vshrl.u32 %v1564, 7
    %v1566 = vsub.s32 1, %v1565
    %v1567 = vrot.slane %v971, %v1566
    %v1568 = vlaneseq
    %v1569 = vshrl.u32 %v1568, 7
    %v1570 = vsub.s32 1, %v1569
    %v1571 = vrot.slane %v973, %v1570
    %v1572 = vlaneseq
    %v1573 = vshrl.u32 %v1572, 7
    %v1574 = vsub.s32 1, %v1573
    %v1575 = vrot.slane %v1018, %v1574
    %v1576 = vlaneseq
    %v1577 = vshrl.u32 %v1576, 7
    %v1578 = vsub.s32 1, %v1577
    %v1579 = vrot.slane %v1026, %v1578
    %v1580 = vlaneseq
    %v1581 = vshrl.u32 %v1580, 7
    %v1582 = vsub.s32 1, %v1581
    %v1583 = vrot.slane %v1025, %v1582
    %v1584 = vlaneseq
    %v1585 = vshrl.u32 %v1584, 7
    %v1586 = vsub.s32 1, %v1585
    %v1587 = vrot.slane %v1027, %v1586
    %v1588 = vsel %vm1073, %v1563, %v1559
    %v1589 = vsel %vm1075, %v1567, %v1588
    %v1590 = vsel %vm1077, %v1571, %v1589
    %v1591 = vsel %vm1079, %v1575, %v1590
    %v1592 = vsel %vm1081, %v1579, %v1591
    %v1593 = vsel %vm1083, %v1583, %v1592
    %v1594 = vsel %vm1085, %v1587, %v1593
    %v1597 = vsel %vm1202, %v1552, 0
    %1599 = vmatprep.subr.mxu0 0.0
    %1600 = vmatpush1.msra.mxu0 %v1594
    %1601 = vmatprep.subr.mxu0 0.0
    %1602 = vmatpush1.msra.mxu0 0.0
    %1603 = vmatprep.subr.mxu0 0.0
    %1604 = vmatpush1.msra.mxu0 0.0
    %1605 = vmatprep.subr.mxu0 0.0
    %1606 = vmatpush1.msra.mxu0 0.0
    %1607 = vmatprep.subr.mxu0 0.0
    %1608 = vmatpush1.msra.mxu0 0.0
    %1609 = vmatprep.subr.mxu0 0.0
    %1610 = vmatpush1.msra.mxu0 0.0
    %1611 = vmatprep.subr.mxu0 0.0
    %1612 = vmatpush1.msra.mxu0 0.0
    %1613 = vmatprep.subr.mxu0 0.0
    %1614 = vmatpush1.msra.mxu0 0.0
    %1615 = vmatprep.subr.mxu0 0.0
    %1616 = vmatpush1.msra.mxu0 0.0
    %1617 = vmatprep.subr.mxu0 0.0
    %1618 = vmatpush1.msra.mxu0 0.0
    %1619 = vmatprep.subr.mxu0 0.0
    %1620 = vmatpush1.msra.mxu0 0.0
    %1621 = vmatprep.subr.mxu0 0.0
    %1622 = vmatpush1.msra.mxu0 0.0
    %1623 = vmatprep.subr.mxu0 0.0
    %1624 = vmatpush1.msra.mxu0 0.0
    %1625 = vmatprep.subr.mxu0 0.0
    %1626 = vmatpush1.msra.mxu0 0.0
    %1627 = vmatprep.subr.mxu0 0.0
    %1628 = vmatpush1.msra.mxu0 0.0
    %1629 = vmatprep.subr.mxu0 0.0
    %1630 = vmatpush1.msra.mxu0 0.0
    %1631 = vmatprep.subr.mxu0 0.0
    %1632 = vmatpush1.msra.mxu0 0.0
    %1633 = vmatprep.subr.mxu0 0.0
    %1634 = vmatpush1.msra.mxu0 0.0
    %1635 = vmatprep.subr.mxu0 0.0
    %1636 = vmatpush1.msra.mxu0 0.0
    %1637 = vmatprep.subr.mxu0 0.0
    %1638 = vmatpush1.msra.mxu0 0.0
    %1639 = vmatprep.subr.mxu0 0.0
    %1640 = vmatpush1.msra.mxu0 0.0
    %1641 = vmatprep.subr.mxu0 0.0
    %1642 = vmatpush1.msra.mxu0 0.0
    %1643 = vmatprep.subr.mxu0 0.0
    %1644 = vmatpush1.msra.mxu0 0.0
    %1645 = vmatprep.subr.mxu0 0.0
    %1646 = vmatpush1.msra.mxu0 0.0
    %1647 = vmatprep.subr.mxu0 0.0
    %1648 = vmatpush1.msra.mxu0 0.0
    %1649 = vmatprep.subr.mxu0 0.0
    %1650 = vmatpush1.msra.mxu0 0.0
    %1651 = vmatprep.subr.mxu0 0.0
    %1652 = vmatpush1.msra.mxu0 0.0
    %1653 = vmatprep.subr.mxu0 0.0
    %1654 = vmatpush1.msra.mxu0 0.0
    %1655 = vmatprep.subr.mxu0 0.0
    %1656 = vmatpush1.msra.mxu0 0.0
    %1657 = vmatprep.subr.mxu0 0.0
    %1658 = vmatpush1.msra.mxu0 0.0
    %1659 = vmatprep.subr.mxu0 0.0
    %1660 = vmatpush1.msra.mxu0 0.0
    %1661 = vmatprep.subr.mxu0 0.0
    %1662 = vmatpush1.msra.mxu0 0.0
    %1663 = vmatprep.mubr.f32.mxu0 0.0
    %1664 = vmatmul.mubr.f32.gmra.mrb[0].mxu0 %v1597
    %v1665 = vpop.f32.mrb[0].mxu0
    %v1666 = vadd.f32 0.0, %v1665
    %v1667 = vpop.f32.mrb[0].mxu0
    %1668 = vdwg.mxu0
    %v1669 = vrcp.pop %v1555
    %v1670 = vmul.f32 %v1666, %v1669
    %v1672 = vcombine.high %v1670, %v1670
    %v1674 = vunpack.c.l.s4 1966171168
    %v1675 = vunpack.c.0.s8 %v1674
    %v1676 = vlaneseq
    %v1677 = vshrl.u32 %v1676, 7
    %v1678 = vsub.s32 %v1675, %v1677
    %v1679 = vrot.slane %v1670, %v1678
    %v1681 = vunpack.c.l.s4 1966171168
    %v1682 = vunpack.c.0.s8 %v1681
    %v1683 = vlaneseq
    %v1684 = vshrl.u32 %v1683, 7
    %v1685 = vsub.s32 %v1682, %v1684
    %v1686 = vrot.slane %v1672, %v1685
    %v1687 = vcombine.high %v1679, %v1679
    %v1688 = vcombine.high %v1686, %v1686
    %v1690 = vunpack.c.l.s4 1966171168
    %v1691 = vunpack.c.0.s8 %v1690
    %v1692 = vlaneseq
    %v1693 = vshrl.u32 %v1692, 7
    %v1694 = vsub.s32 %v1691, %v1693
    %v1695 = vrot.slane %v1679, %v1694
    %v1697 = vunpack.c.l.s4 1966171168
    %v1698 = vunpack.c.0.s8 %v1697
    %v1699 = vlaneseq
    %v1700 = vshrl.u32 %v1699, 7
    %v1701 = vsub.s32 %v1698, %v1700
    %v1702 = vrot.slane %v1686, %v1701
    %v1704 = vunpack.c.l.s4 1966171168
    %v1705 = vunpack.c.0.s8 %v1704
    %v1706 = vlaneseq
    %v1707 = vshrl.u32 %v1706, 7
    %v1708 = vsub.s32 %v1705, %v1707
    %v1709 = vrot.slane %v1687, %v1708
    %v1711 = vunpack.c.l.s4 1966171168
    %v1712 = vunpack.c.0.s8 %v1711
    %v1713 = vlaneseq
    %v1714 = vshrl.u32 %v1713, 7
    %v1715 = vsub.s32 %v1712, %v1714
    %v1716 = vrot.slane %v1688, %v1715
    %v1717 = vcombine.high %v1695, %v1695
    %v1718 = vcombine.high %v1702, %v1702
    %v1719 = vcombine.high %v1709, %v1709
    %v1720 = vcombine.high %v1716, %v1716
    %1729 = vst.msk [vmem:[#allocation2 + $0x1] sm:$0x1] %vm1385, %v1695
    %1730 = vst.msk [vmem:[#allocation2 + $0x5] sm:$0x1] %vm1385, %v1709
    %1731 = vst.msk [vmem:[#allocation2 + $0x9] sm:$0x1] %vm1385, %v1717
    %1732 = vst.msk [vmem:[#allocation2 + $0xd] sm:$0x1] %vm1385, %v1719
    %1733 = vst.msk [vmem:[#allocation2 + $0x11] sm:$0x1] %vm1385, %v1702
    %1734 = vst.msk [vmem:[#allocation2 + $0x15] sm:$0x1] %vm1385, %v1716
    %1735 = vst.msk [vmem:[#allocation2 + $0x19] sm:$0x1] %vm1385, %v1718
    %1736 = vst.msk [vmem:[#allocation2 + $0x1d] sm:$0x1] %vm1385, %v1720
    %1737 = vrot.lane.b32.xlu0 %v952, 96
    %v1738 = vpop.permute.xlu0 %1737
    %1739 = vrot.lane.b32.xlu0 %v953, 96
    %v1740 = vpop.permute.xlu0 %1739
    %1741 = vrot.lane.b32.xlu0 %v954, 96
    %v1742 = vpop.permute.xlu0 %1741
    %1743 = vrot.lane.b32.xlu0 %v955, 96
    %v1744 = vpop.permute.xlu0 %1743
    %1745 = vrot.lane.b32.xlu0 %v1006, 96
    %v1746 = vpop.permute.xlu0 %1745
    %1747 = vrot.lane.b32.xlu0 %v1007, 96
    %v1748 = vpop.permute.xlu0 %1747
    %1749 = vrot.lane.b32.xlu0 %v1008, 96
    %v1750 = vpop.permute.xlu0 %1749
    %1751 = vrot.lane.b32.xlu0 %v1009, 96
    %v1752 = vpop.permute.xlu0 %1751
    %v1753 = vrot.slane %v1738, 4
    %v1754 = vrot.slane %v1740, 4
    %v1755 = vrot.slane %v1742, 4
    %v1756 = vrot.slane %v1744, 4
    %v1757 = vrot.slane %v1746, 4
    %v1758 = vrot.slane %v1748, 4
    %v1759 = vrot.slane %v1750, 4
    %v1760 = vrot.slane %v1752, 4
    %1761 = vrot.lane.b32.xlu0 %v1086, 96
    %v1762 = vpop.permute.xlu0 %1761
    %v1763 = vlaneseq
    %v1764 = vshrl.u32 %v1763, 7
    %v1765 = vsub.s32 0, %v1764
    %v1766 = vrot.slane %v1753, %v1765
    %v1767 = vlaneseq
    %v1768 = vshrl.u32 %v1767, 7
    %v1769 = vsub.s32 0, %v1768
    %v1770 = vrot.slane %v1754, %v1769
    %v1771 = vlaneseq
    %v1772 = vshrl.u32 %v1771, 7
    %v1773 = vsub.s32 0, %v1772
    %v1774 = vrot.slane %v1755, %v1773
    %v1775 = vlaneseq
    %v1776 = vshrl.u32 %v1775, 7
    %v1777 = vsub.s32 0, %v1776
    %v1778 = vrot.slane %v1756, %v1777
    %v1779 = vlaneseq
    %v1780 = vshrl.u32 %v1779, 7
    %v1781 = vsub.s32 0, %v1780
    %v1782 = vrot.slane %v1757, %v1781
    %v1783 = vlaneseq
    %v1784 = vshrl.u32 %v1783, 7
    %v1785 = vsub.s32 0, %v1784
    %v1786 = vrot.slane %v1758, %v1785
    %v1787 = vlaneseq
    %v1788 = vshrl.u32 %v1787, 7
    %v1789 = vsub.s32 0, %v1788
    %v1790 = vrot.slane %v1759, %v1789
    %v1791 = vlaneseq
    %v1792 = vshrl.u32 %v1791, 7
    %v1793 = vsub.s32 0, %v1792
    %v1794 = vrot.slane %v1760, %v1793
    %v1795 = vsel %vm1073, %v1770, %v1766
    %v1796 = vsel %vm1075, %v1774, %v1795
    %v1797 = vsel %vm1077, %v1778, %v1796
    %v1798 = vsel %vm1079, %v1782, %v1797
    %v1799 = vsel %vm1081, %v1786, %v1798
    %v1800 = vsel %vm1083, %v1790, %v1799
    %v1801 = vsel %vm1085, %v1794, %v1800
    %v1802 = vsel %vm1126, %v1762, 0
    %v1804 = vsel %vm1126, %v1801, 0
    %1806 = vmatprep.subr.mxu0 0.0
    %1807 = vmatpush1.xpose.msra.mxu0 %v1804
    %1808 = vmatprep.subr.mxu0 0.0
    %1809 = vmatpush1.xpose.msra.mxu0 0.0
    %1810 = vmatprep.subr.mxu0 0.0
    %1811 = vmatpush1.xpose.msra.mxu0 0.0
    %1812 = vmatprep.subr.mxu0 0.0
    %1813 = vmatpush1.xpose.msra.mxu0 0.0
    %1814 = vmatprep.subr.mxu0 0.0
    %1815 = vmatpush1.xpose.msra.mxu0 0.0
    %1816 = vmatprep.subr.mxu0 0.0
    %1817 = vmatpush1.xpose.msra.mxu0 0.0
    %1818 = vmatprep.subr.mxu0 0.0
    %1819 = vmatpush1.xpose.msra.mxu0 0.0
    %1820 = vmatprep.subr.mxu0 0.0
    %1821 = vmatpush1.xpose.msra.mxu0 0.0
    %1822 = vmatprep.subr.mxu0 0.0
    %1823 = vmatpush1.xpose.msra.mxu0 0.0
    %1824 = vmatprep.subr.mxu0 0.0
    %1825 = vmatpush1.xpose.msra.mxu0 0.0
    %1826 = vmatprep.subr.mxu0 0.0
    %1827 = vmatpush1.xpose.msra.mxu0 0.0
    %1828 = vmatprep.subr.mxu0 0.0
    %1829 = vmatpush1.xpose.msra.mxu0 0.0
    %1830 = vmatprep.subr.mxu0 0.0
    %1831 = vmatpush1.xpose.msra.mxu0 0.0
    %1832 = vmatprep.subr.mxu0 0.0
    %1833 = vmatpush1.xpose.msra.mxu0 0.0
    %1834 = vmatprep.subr.mxu0 0.0
    %1835 = vmatpush1.xpose.msra.mxu0 0.0
    %1836 = vmatprep.subr.mxu0 0.0
    %1837 = vmatpush1.xpose.msra.mxu0 0.0
    %1838 = vmatprep.subr.mxu0 0.0
    %1839 = vmatpush1.xpose.msra.mxu0 0.0
    %1840 = vmatprep.subr.mxu0 0.0
    %1841 = vmatpush1.xpose.msra.mxu0 0.0
    %1842 = vmatprep.subr.mxu0 0.0
    %1843 = vmatpush1.xpose.msra.mxu0 0.0
    %1844 = vmatprep.subr.mxu0 0.0
    %1845 = vmatpush1.xpose.msra.mxu0 0.0
    %1846 = vmatprep.subr.mxu0 0.0
    %1847 = vmatpush1.xpose.msra.mxu0 0.0
    %1848 = vmatprep.subr.mxu0 0.0
    %1849 = vmatpush1.xpose.msra.mxu0 0.0
    %1850 = vmatprep.subr.mxu0 0.0
    %1851 = vmatpush1.xpose.msra.mxu0 0.0
    %1852 = vmatprep.subr.mxu0 0.0
    %1853 = vmatpush1.xpose.msra.mxu0 0.0
    %1854 = vmatprep.subr.mxu0 0.0
    %1855 = vmatpush1.xpose.msra.mxu0 0.0
    %1856 = vmatprep.subr.mxu0 0.0
    %1857 = vmatpush1.xpose.msra.mxu0 0.0
    %1858 = vmatprep.subr.mxu0 0.0
    %1859 = vmatpush1.xpose.msra.mxu0 0.0
    %1860 = vmatprep.subr.mxu0 0.0
    %1861 = vmatpush1.xpose.msra.mxu0 0.0
    %1862 = vmatprep.subr.mxu0 0.0
    %1863 = vmatpush1.xpose.msra.mxu0 0.0
    %1864 = vmatprep.subr.mxu0 0.0
    %1865 = vmatpush1.xpose.msra.mxu0 0.0
    %1866 = vmatprep.subr.mxu0 0.0
    %1867 = vmatpush1.xpose.msra.mxu0 0.0
    %1868 = vmatprep.subr.mxu0 0.0
    %1869 = vmatpush1.xpose.msra.mxu0 0.0
    %1870 = vmatprep.mubr.f32.mxu0 0.0
    %1871 = vmatmul.mubr.f32.gmra.mrb[0].mxu0 %v1802
    %v1872 = vpop.f32.mrb[0].mxu0
    %v1873 = vadd.f32 0.0, %v1872
    %v1874 = vpop.f32.mrb[0].mxu0
    %1875 = vdwg.mxu0
    %v1876 = vsel %vm1032, %v1873, -inf
    %v1877 = vsel %vm1202, %v1876, -inf
    %1878 = vmax.xlane.f32.xlu0 %v1877
    %v1879 = vpop.xlane.xlu0 %1878
    %v1880 = vsub.f32 %v1876, %v1879
    %v1881 = vmul.f32 %v1880, 1.442695
    %v1882 = vpow.pop %v1881
    %v1883 = vsel %vm1202, %v1882, 0.0
    %1884 = vadd.xlane.f32.xlu0 %v1883
    %v1885 = vpop.xlane.xlu0 %1884
    %1886 = vrot.lane.b32.xlu0 %v1250, 96
    %v1887 = vpop.permute.xlu0 %1886
    %v1890 = vsel %vm1202, %v1882, 0
    %1892 = vmatprep.subr.mxu0 0.0
    %1893 = vmatpush1.msra.mxu0 %v1887
    %1894 = vmatprep.subr.mxu0 0.0
    %1895 = vmatpush1.msra.mxu0 0.0
    %1896 = vmatprep.subr.mxu0 0.0
    %1897 = vmatpush1.msra.mxu0 0.0
    %1898 = vmatprep.subr.mxu0 0.0
    %1899 = vmatpush1.msra.mxu0 0.0
    %1900 = vmatprep.subr.mxu0 0.0
    %1901 = vmatpush1.msra.mxu0 0.0
    %1902 = vmatprep.subr.mxu0 0.0
    %1903 = vmatpush1.msra.mxu0 0.0
    %1904 = vmatprep.subr.mxu0 0.0
    %1905 = vmatpush1.msra.mxu0 0.0
    %1906 = vmatprep.subr.mxu0 0.0
    %1907 = vmatpush1.msra.mxu0 0.0
    %1908 = vmatprep.subr.mxu0 0.0
    %1909 = vmatpush1.msra.mxu0 0.0
    %1910 = vmatprep.subr.mxu0 0.0
    %1911 = vmatpush1.msra.mxu0 0.0
    %1912 = vmatprep.subr.mxu0 0.0
    %1913 = vmatpush1.msra.mxu0 0.0
    %1914 = vmatprep.subr.mxu0 0.0
    %1915 = vmatpush1.msra.mxu0 0.0
    %1916 = vmatprep.subr.mxu0 0.0
    %1917 = vmatpush1.msra.mxu0 0.0
    %1918 = vmatprep.subr.mxu0 0.0
    %1919 = vmatpush1.msra.mxu0 0.0
    %1920 = vmatprep.subr.mxu0 0.0
    %1921 = vmatpush1.msra.mxu0 0.0
    %1922 = vmatprep.subr.mxu0 0.0
    %1923 = vmatpush1.msra.mxu0 0.0
    %1924 = vmatprep.subr.mxu0 0.0
    %1925 = vmatpush1.msra.mxu0 0.0
    %1926 = vmatprep.subr.mxu0 0.0
    %1927 = vmatpush1.msra.mxu0 0.0
    %1928 = vmatprep.subr.mxu0 0.0
    %1929 = vmatpush1.msra.mxu0 0.0
    %1930 = vmatprep.subr.mxu0 0.0
    %1931 = vmatpush1.msra.mxu0 0.0
    %1932 = vmatprep.subr.mxu0 0.0
    %1933 = vmatpush1.msra.mxu0 0.0
    %1934 = vmatprep.subr.mxu0 0.0
    %1935 = vmatpush1.msra.mxu0 0.0
    %1936 = vmatprep.subr.mxu0 0.0
    %1937 = vmatpush1.msra.mxu0 0.0
    %1938 = vmatprep.subr.mxu0 0.0
    %1939 = vmatpush1.msra.mxu0 0.0
    %1940 = vmatprep.subr.mxu0 0.0
    %1941 = vmatpush1.msra.mxu0 0.0
    %1942 = vmatprep.subr.mxu0 0.0
    %1943 = vmatpush1.msra.mxu0 0.0
    %1944 = vmatprep.subr.mxu0 0.0
    %1945 = vmatpush1.msra.mxu0 0.0
    %1946 = vmatprep.subr.mxu0 0.0
    %1947 = vmatpush1.msra.mxu0 0.0
    %1948 = vmatprep.subr.mxu0 0.0
    %1949 = vmatpush1.msra.mxu0 0.0
    %1950 = vmatprep.subr.mxu0 0.0
    %1951 = vmatpush1.msra.mxu0 0.0
    %1952 = vmatprep.subr.mxu0 0.0
    %1953 = vmatpush1.msra.mxu0 0.0
    %1954 = vmatprep.subr.mxu0 0.0
    %1955 = vmatpush1.msra.mxu0 0.0
    %1956 = vmatprep.mubr.f32.mxu0 0.0
    %1957 = vmatmul.mubr.f32.gmra.mrb[0].mxu0 %v1890
    %v1958 = vpop.f32.mrb[0].mxu0
    %v1959 = vadd.f32 0.0, %v1958
    %v1960 = vpop.f32.mrb[0].mxu0
    %1961 = vdwg.mxu0
    %v1962 = vrcp.pop %v1885
    %v1963 = vmul.f32 %v1959, %v1962
    %v1965 = vcombine.high %v1963, %v1963
    %v1967 = vunpack.c.l.s4 1966171168
    %v1968 = vunpack.c.0.s8 %v1967
    %v1969 = vlaneseq
    %v1970 = vshrl.u32 %v1969, 7
    %v1971 = vsub.s32 %v1968, %v1970
    %v1972 = vrot.slane %v1963, %v1971
    %v1974 = vunpack.c.l.s4 1966171168
    %v1975 = vunpack.c.0.s8 %v1974
    %v1976 = vlaneseq
    %v1977 = vshrl.u32 %v1976, 7
    %v1978 = vsub.s32 %v1975, %v1977
    %v1979 = vrot.slane %v1965, %v1978
    %v1980 = vcombine.high %v1972, %v1972
    %v1981 = vcombine.high %v1979, %v1979
    %v1983 = vunpack.c.l.s4 1966171168
    %v1984 = vunpack.c.0.s8 %v1983
    %v1985 = vlaneseq
    %v1986 = vshrl.u32 %v1985, 7
    %v1987 = vsub.s32 %v1984, %v1986
    %v1988 = vrot.slane %v1972, %v1987
    %v1990 = vunpack.c.l.s4 1966171168
    %v1991 = vunpack.c.0.s8 %v1990
    %v1992 = vlaneseq
    %v1993 = vshrl.u32 %v1992, 7
    %v1994 = vsub.s32 %v1991, %v1993
    %v1995 = vrot.slane %v1979, %v1994
    %v1997 = vunpack.c.l.s4 1966171168
    %v1998 = vunpack.c.0.s8 %v1997
    %v1999 = vlaneseq
    %v2000 = vshrl.u32 %v1999, 7
    %v2001 = vsub.s32 %v1998, %v2000
    %v2002 = vrot.slane %v1980, %v2001
    %v2004 = vunpack.c.l.s4 1966171168
    %v2005 = vunpack.c.0.s8 %v2004
    %v2006 = vlaneseq
    %v2007 = vshrl.u32 %v2006, 7
    %v2008 = vsub.s32 %v2005, %v2007
    %v2009 = vrot.slane %v1981, %v2008
    %v2010 = vcombine.high %v1988, %v1988
    %v2011 = vcombine.high %v1995, %v1995
    %v2012 = vcombine.high %v2002, %v2002
    %v2013 = vcombine.high %v2009, %v2009
    %v2015 = vunpack.c.l.s4 857870592
    %v2016 = vunpack.c.0.s8 %v2015
    %v2017 = vlaneseq
    %v2018 = vshrl.u32 %v2017, 7
    %v2019 = vsub.s32 %v2016, %v2018
    %v2020 = vrot.slane %v1988, %v2019
    %v2022 = vunpack.c.l.s4 857870592
    %v2023 = vunpack.c.0.s8 %v2022
    %v2024 = vlaneseq
    %v2025 = vshrl.u32 %v2024, 7
    %v2026 = vsub.s32 %v2023, %v2025
    %v2027 = vrot.slane %v2002, %v2026
    %v2029 = vunpack.c.l.s4 857870592
    %v2030 = vunpack.c.0.s8 %v2029
    %v2031 = vlaneseq
    %v2032 = vshrl.u32 %v2031, 7
    %v2033 = vsub.s32 %v2030, %v2032
    %v2034 = vrot.slane %v2010, %v2033
    %v2036 = vunpack.c.l.s4 857870592
    %v2037 = vunpack.c.0.s8 %v2036
    %v2038 = vlaneseq
    %v2039 = vshrl.u32 %v2038, 7
    %v2040 = vsub.s32 %v2037, %v2039
    %v2041 = vrot.slane %v2012, %v2040
    %v2043 = vunpack.c.l.s4 857870592
    %v2044 = vunpack.c.0.s8 %v2043
    %v2045 = vlaneseq
    %v2046 = vshrl.u32 %v2045, 7
    %v2047 = vsub.s32 %v2044, %v2046
    %v2048 = vrot.slane %v1995, %v2047
    %v2050 = vunpack.c.l.s4 857870592
    %v2051 = vunpack.c.0.s8 %v2050
    %v2052 = vlaneseq
    %v2053 = vshrl.u32 %v2052, 7
    %v2054 = vsub.s32 %v2051, %v2053
    %v2055 = vrot.slane %v2009, %v2054
    %v2057 = vunpack.c.l.s4 857870592
    %v2058 = vunpack.c.0.s8 %v2057
    %v2059 = vlaneseq
    %v2060 = vshrl.u32 %v2059, 7
    %v2061 = vsub.s32 %v2058, %v2060
    %v2062 = vrot.slane %v2011, %v2061
    %v2064 = vunpack.c.l.s4 857870592
    %v2065 = vunpack.c.0.s8 %v2064
    %v2066 = vlaneseq
    %v2067 = vshrl.u32 %v2066, 7
    %v2068 = vsub.s32 %v2065, %v2067
    %v2069 = vrot.slane %v2013, %v2068
    %2070 = vrot.lane.b32.xlu0 %v2020, 32
    %v2071 = vpop.permute.xlu0 %2070
    %2072 = vrot.lane.b32.xlu0 %v2027, 32
    %v2073 = vpop.permute.xlu0 %2072
    %2074 = vrot.lane.b32.xlu0 %v2034, 32
    %v2075 = vpop.permute.xlu0 %2074
    %2076 = vrot.lane.b32.xlu0 %v2041, 32
    %v2077 = vpop.permute.xlu0 %2076
    %2078 = vrot.lane.b32.xlu0 %v2048, 32
    %v2079 = vpop.permute.xlu0 %2078
    %2080 = vrot.lane.b32.xlu0 %v2055, 32
    %v2081 = vpop.permute.xlu0 %2080
    %2082 = vrot.lane.b32.xlu0 %v2062, 32
    %v2083 = vpop.permute.xlu0 %2082
    %2084 = vrot.lane.b32.xlu0 %v2069, 32
    %v2085 = vpop.permute.xlu0 %2084
    %vm2094 = vcmask 516352
    %2095 = vst.msk [vmem:[#allocation2] sm:$0x1] %vm2094, %v2071
    %2096 = vst.msk [vmem:[#allocation2 + $0x4] sm:$0x1] %vm2094, %v2073
    %2097 = vst.msk [vmem:[#allocation2 + $0x8] sm:$0x1] %vm2094, %v2075
    %2098 = vst.msk [vmem:[#allocation2 + $0xc] sm:$0x1] %vm2094, %v2077
    %2099 = vst.msk [vmem:[#allocation2 + $0x10] sm:$0x1] %vm2094, %v2079
    %2100 = vst.msk [vmem:[#allocation2 + $0x14] sm:$0x1] %vm2094, %v2081
    %2101 = vst.msk [vmem:[#allocation2 + $0x18] sm:$0x1] %vm2094, %v2083
    %2102 = vst.msk [vmem:[#allocation2 + $0x1c] sm:$0x1] %vm2094, %v2085
    %2103 = vrot.lane.b32.xlu0 %v1432, 96
    %v2104 = vpop.permute.xlu0 %2103
    %v2105 = vlaneseq
    %v2106 = vshrl.u32 %v2105, 7
    %v2107 = vsub.s32 1, %v2106
    %v2108 = vrot.slane %v1753, %v2107
    %v2109 = vlaneseq
    %v2110 = vshrl.u32 %v2109, 7
    %v2111 = vsub.s32 1, %v2110
    %v2112 = vrot.slane %v1754, %v2111
    %v2113 = vlaneseq
    %v2114 = vshrl.u32 %v2113, 7
    %v2115 = vsub.s32 1, %v2114
    %v2116 = vrot.slane %v1755, %v2115
    %v2117 = vlaneseq
    %v2118 = vshrl.u32 %v2117, 7
    %v2119 = vsub.s32 1, %v2118
    %v2120 = vrot.slane %v1756, %v2119
    %v2121 = vlaneseq
    %v2122 = vshrl.u32 %v2121, 7
    %v2123 = vsub.s32 1, %v2122
    %v2124 = vrot.slane %v1757, %v2123
    %v2125 = vlaneseq
    %v2126 = vshrl.u32 %v2125, 7
    %v2127 = vsub.s32 1, %v2126
    %v2128 = vrot.slane %v1758, %v2127
    %v2129 = vlaneseq
    %v2130 = vshrl.u32 %v2129, 7
    %v2131 = vsub.s32 1, %v2130
    %v2132 = vrot.slane %v1759, %v2131
    %v2133 = vlaneseq
    %v2134 = vshrl.u32 %v2133, 7
    %v2135 = vsub.s32 1, %v2134
    %v2136 = vrot.slane %v1760, %v2135
    %v2137 = vsel %vm1073, %v2112, %v2108
    %v2138 = vsel %vm1075, %v2116, %v2137
    %v2139 = vsel %vm1077, %v2120, %v2138
    %v2140 = vsel %vm1079, %v2124, %v2139
    %v2141 = vsel %vm1081, %v2128, %v2140
    %v2142 = vsel %vm1083, %v2132, %v2141
    %v2143 = vsel %vm1085, %v2136, %v2142
    %v2144 = vsel %vm1126, %v2104, 0
    %v2146 = vsel %vm1126, %v2143, 0
    %2148 = vmatprep.subr.mxu0 0.0
    %2149 = vmatpush1.xpose.msra.mxu0 %v2146
    %2150 = vmatprep.subr.mxu0 0.0
    %2151 = vmatpush1.xpose.msra.mxu0 0.0
    %2152 = vmatprep.subr.mxu0 0.0
    %2153 = vmatpush1.xpose.msra.mxu0 0.0
    %2154 = vmatprep.subr.mxu0 0.0
    %2155 = vmatpush1.xpose.msra.mxu0 0.0
    %2156 = vmatprep.subr.mxu0 0.0
    %2157 = vmatpush1.xpose.msra.mxu0 0.0
    %2158 = vmatprep.subr.mxu0 0.0
    %2159 = vmatpush1.xpose.msra.mxu0 0.0
    %2160 = vmatprep.subr.mxu0 0.0
    %2161 = vmatpush1.xpose.msra.mxu0 0.0
    %2162 = vmatprep.subr.mxu0 0.0
    %2163 = vmatpush1.xpose.msra.mxu0 0.0
    %2164 = vmatprep.subr.mxu0 0.0
    %2165 = vmatpush1.xpose.msra.mxu0 0.0
    %2166 = vmatprep.subr.mxu0 0.0
    %2167 = vmatpush1.xpose.msra.mxu0 0.0
    %2168 = vmatprep.subr.mxu0 0.0
    %2169 = vmatpush1.xpose.msra.mxu0 0.0
    %2170 = vmatprep.subr.mxu0 0.0
    %2171 = vmatpush1.xpose.msra.mxu0 0.0
    %2172 = vmatprep.subr.mxu0 0.0
    %2173 = vmatpush1.xpose.msra.mxu0 0.0
    %2174 = vmatprep.subr.mxu0 0.0
    %2175 = vmatpush1.xpose.msra.mxu0 0.0
    %2176 = vmatprep.subr.mxu0 0.0
    %2177 = vmatpush1.xpose.msra.mxu0 0.0
    %2178 = vmatprep.subr.mxu0 0.0
    %2179 = vmatpush1.xpose.msra.mxu0 0.0
    %2180 = vmatprep.subr.mxu0 0.0
    %2181 = vmatpush1.xpose.msra.mxu0 0.0
    %2182 = vmatprep.subr.mxu0 0.0
    %2183 = vmatpush1.xpose.msra.mxu0 0.0
    %2184 = vmatprep.subr.mxu0 0.0
    %2185 = vmatpush1.xpose.msra.mxu0 0.0
    %2186 = vmatprep.subr.mxu0 0.0
    %2187 = vmatpush1.xpose.msra.mxu0 0.0
    %2188 = vmatprep.subr.mxu0 0.0
    %2189 = vmatpush1.xpose.msra.mxu0 0.0
    %2190 = vmatprep.subr.mxu0 0.0
    %2191 = vmatpush1.xpose.msra.mxu0 0.0
    %2192 = vmatprep.subr.mxu0 0.0
    %2193 = vmatpush1.xpose.msra.mxu0 0.0
    %2194 = vmatprep.subr.mxu0 0.0
    %2195 = vmatpush1.xpose.msra.mxu0 0.0
    %2196 = vmatprep.subr.mxu0 0.0
    %2197 = vmatpush1.xpose.msra.mxu0 0.0
    %2198 = vmatprep.subr.mxu0 0.0
    %2199 = vmatpush1.xpose.msra.mxu0 0.0
    %2200 = vmatprep.subr.mxu0 0.0
    %2201 = vmatpush1.xpose.msra.mxu0 0.0
    %2202 = vmatprep.subr.mxu0 0.0
    %2203 = vmatpush1.xpose.msra.mxu0 0.0
    %2204 = vmatprep.subr.mxu0 0.0
    %2205 = vmatpush1.xpose.msra.mxu0 0.0
    %2206 = vmatprep.subr.mxu0 0.0
    %2207 = vmatpush1.xpose.msra.mxu0 0.0
    %2208 = vmatprep.subr.mxu0 0.0
    %2209 = vmatpush1.xpose.msra.mxu0 0.0
    %2210 = vmatprep.subr.mxu0 0.0
    %2211 = vmatpush1.xpose.msra.mxu0 0.0
    %2212 = vmatprep.mubr.f32.mxu0 0.0
    %2213 = vmatmul.mubr.f32.gmra.mrb[0].mxu0 %v2144
    %v2214 = vpop.f32.mrb[0].mxu0
    %v2215 = vadd.f32 0.0, %v2214
    %v2216 = vpop.f32.mrb[0].mxu0
    %2217 = vdwg.mxu0
    %v2218 = vsel %vm1032, %v2215, -inf
    %v2219 = vsel %vm1202, %v2218, -inf
    %2220 = vmax.xlane.f32.xlu0 %v2219
    %v2221 = vpop.xlane.xlu0 %2220
    %v2222 = vsub.f32 %v2218, %v2221
    %v2223 = vmul.f32 %v2222, 1.442695
    %v2224 = vpow.pop %v2223
    %v2225 = vsel %vm1202, %v2224, 0.0
    %2226 = vadd.xlane.f32.xlu0 %v2225
    %v2227 = vpop.xlane.xlu0 %2226
    %2228 = vrot.lane.b32.xlu0 %v1594, 96
    %v2229 = vpop.permute.xlu0 %2228
    %v2232 = vsel %vm1202, %v2224, 0
    %2234 = vmatprep.subr.mxu0 0.0
    %2235 = vmatpush1.msra.mxu0 %v2229
    %2236 = vmatprep.subr.mxu0 0.0
    %2237 = vmatpush1.msra.mxu0 0.0
    %2238 = vmatprep.subr.mxu0 0.0
    %2239 = vmatpush1.msra.mxu0 0.0
    %2240 = vmatprep.subr.mxu0 0.0
    %2241 = vmatpush1.msra.mxu0 0.0
    %2242 = vmatprep.subr.mxu0 0.0
    %2243 = vmatpush1.msra.mxu0 0.0
    %2244 = vmatprep.subr.mxu0 0.0
    %2245 = vmatpush1.msra.mxu0 0.0
    %2246 = vmatprep.subr.mxu0 0.0
    %2247 = vmatpush1.msra.mxu0 0.0
    %2248 = vmatprep.subr.mxu0 0.0
    %2249 = vmatpush1.msra.mxu0 0.0
    %2250 = vmatprep.subr.mxu0 0.0
    %2251 = vmatpush1.msra.mxu0 0.0
    %2252 = vmatprep.subr.mxu0 0.0
    %2253 = vmatpush1.msra.mxu0 0.0
    %2254 = vmatprep.subr.mxu0 0.0
    %2255 = vmatpush1.msra.mxu0 0.0
    %2256 = vmatprep.subr.mxu0 0.0
    %2257 = vmatpush1.msra.mxu0 0.0
    %2258 = vmatprep.subr.mxu0 0.0
    %2259 = vmatpush1.msra.mxu0 0.0
    %2260 = vmatprep.subr.mxu0 0.0
    %2261 = vmatpush1.msra.mxu0 0.0
    %2262 = vmatprep.subr.mxu0 0.0
    %2263 = vmatpush1.msra.mxu0 0.0
    %2264 = vmatprep.subr.mxu0 0.0
    %2265 = vmatpush1.msra.mxu0 0.0
    %2266 = vmatprep.subr.mxu0 0.0
    %2267 = vmatpush1.msra.mxu0 0.0
    %2268 = vmatprep.subr.mxu0 0.0
    %2269 = vmatpush1.msra.mxu0 0.0
    %2270 = vmatprep.subr.mxu0 0.0
    %2271 = vmatpush1.msra.mxu0 0.0
    %2272 = vmatprep.subr.mxu0 0.0
    %2273 = vmatpush1.msra.mxu0 0.0
    %2274 = vmatprep.subr.mxu0 0.0
    %2275 = vmatpush1.msra.mxu0 0.0
    %2276 = vmatprep.subr.mxu0 0.0
    %2277 = vmatpush1.msra.mxu0 0.0
    %2278 = vmatprep.subr.mxu0 0.0
    %2279 = vmatpush1.msra.mxu0 0.0
    %2280 = vmatprep.subr.mxu0 0.0
    %2281 = vmatpush1.msra.mxu0 0.0
    %2282 = vmatprep.subr.mxu0 0.0
    %2283 = vmatpush1.msra.mxu0 0.0
    %2284 = vmatprep.subr.mxu0 0.0
    %2285 = vmatpush1.msra.mxu0 0.0
    %2286 = vmatprep.subr.mxu0 0.0
    %2287 = vmatpush1.msra.mxu0 0.0
    %2288 = vmatprep.subr.mxu0 0.0
    %2289 = vmatpush1.msra.mxu0 0.0
    %2290 = vmatprep.subr.mxu0 0.0
    %2291 = vmatpush1.msra.mxu0 0.0
    %2292 = vmatprep.subr.mxu0 0.0
    %2293 = vmatpush1.msra.mxu0 0.0
    %2294 = vmatprep.subr.mxu0 0.0
    %2295 = vmatpush1.msra.mxu0 0.0
    %2296 = vmatprep.subr.mxu0 0.0
    %2297 = vmatpush1.msra.mxu0 0.0
    %2298 = vmatprep.mubr.f32.mxu0 0.0
    %2299 = vmatmul.mubr.f32.gmra.mrb[0].mxu0 %v2232
    %v2300 = vpop.f32.mrb[0].mxu0
    %v2301 = vadd.f32 0.0, %v2300
    %v2302 = vpop.f32.mrb[0].mxu0
    %2303 = vdwg.mxu0
    %v2304 = vrcp.pop %v2227
    %v2305 = vmul.f32 %v2301, %v2304
    %v2307 = vcombine.high %v2305, %v2305
    %v2309 = vunpack.c.l.s4 1966171168
    %v2310 = vunpack.c.0.s8 %v2309
    %v2311 = vlaneseq
    %v2312 = vshrl.u32 %v2311, 7
    %v2313 = vsub.s32 %v2310, %v2312
    %v2314 = vrot.slane %v2305, %v2313
    %v2316 = vunpack.c.l.s4 1966171168
    %v2317 = vunpack.c.0.s8 %v2316
    %v2318 = vlaneseq
    %v2319 = vshrl.u32 %v2318, 7
    %v2320 = vsub.s32 %v2317, %v2319
    %v2321 = vrot.slane %v2307, %v2320
    %v2322 = vcombine.high %v2314, %v2314
    %v2323 = vcombine.high %v2321, %v2321
    %v2325 = vunpack.c.l.s4 1966171168
    %v2326 = vunpack.c.0.s8 %v2325
    %v2327 = vlaneseq
    %v2328 = vshrl.u32 %v2327, 7
    %v2329 = vsub.s32 %v2326, %v2328
    %v2330 = vrot.slane %v2314, %v2329
    %v2332 = vunpack.c.l.s4 1966171168
    %v2333 = vunpack.c.0.s8 %v2332
    %v2334 = vlaneseq
    %v2335 = vshrl.u32 %v2334, 7
    %v2336 = vsub.s32 %v2333, %v2335
    %v2337 = vrot.slane %v2321, %v2336
    %v2339 = vunpack.c.l.s4 1966171168
    %v2340 = vunpack.c.0.s8 %v2339
    %v2341 = vlaneseq
    %v2342 = vshrl.u32 %v2341, 7
    %v2343 = vsub.s32 %v2340, %v2342
    %v2344 = vrot.slane %v2322, %v2343
    %v2346 = vunpack.c.l.s4 1966171168
    %v2347 = vunpack.c.0.s8 %v2346
    %v2348 = vlaneseq
    %v2349 = vshrl.u32 %v2348, 7
    %v2350 = vsub.s32 %v2347, %v2349
    %v2351 = vrot.slane %v2323, %v2350
    %v2352 = vcombine.high %v2330, %v2330
    %v2353 = vcombine.high %v2337, %v2337
    %v2354 = vcombine.high %v2344, %v2344
    %v2355 = vcombine.high %v2351, %v2351
    %v2357 = vunpack.c.l.s4 857870592
    %v2358 = vunpack.c.0.s8 %v2357
    %v2359 = vlaneseq
    %v2360 = vshrl.u32 %v2359, 7
    %v2361 = vsub.s32 %v2358, %v2360
    %v2362 = vrot.slane %v2330, %v2361
    %v2364 = vunpack.c.l.s4 857870592
    %v2365 = vunpack.c.0.s8 %v2364
    %v2366 = vlaneseq
    %v2367 = vshrl.u32 %v2366, 7
    %v2368 = vsub.s32 %v2365, %v2367
    %v2369 = vrot.slane %v2344, %v2368
    %v2371 = vunpack.c.l.s4 857870592
    %v2372 = vunpack.c.0.s8 %v2371
    %v2373 = vlaneseq
    %v2374 = vshrl.u32 %v2373, 7
    %v2375 = vsub.s32 %v2372, %v2374
    %v2376 = vrot.slane %v2352, %v2375
    %v2378 = vunpack.c.l.s4 857870592
    %v2379 = vunpack.c.0.s8 %v2378
    %v2380 = vlaneseq
    %v2381 = vshrl.u32 %v2380, 7
    %v2382 = vsub.s32 %v2379, %v2381
    %v2383 = vrot.slane %v2354, %v2382
    %v2385 = vunpack.c.l.s4 857870592
    %v2386 = vunpack.c.0.s8 %v2385
    %v2387 = vlaneseq
    %v2388 = vshrl.u32 %v2387, 7
    %v2389 = vsub.s32 %v2386, %v2388
    %v2390 = vrot.slane %v2337, %v2389
    %v2392 = vunpack.c.l.s4 857870592
    %v2393 = vunpack.c.0.s8 %v2392
    %v2394 = vlaneseq
    %v2395 = vshrl.u32 %v2394, 7
    %v2396 = vsub.s32 %v2393, %v2395
    %v2397 = vrot.slane %v2351, %v2396
    %v2399 = vunpack.c.l.s4 857870592
    %v2400 = vunpack.c.0.s8 %v2399
    %v2401 = vlaneseq
    %v2402 = vshrl.u32 %v2401, 7
    %v2403 = vsub.s32 %v2400, %v2402
    %v2404 = vrot.slane %v2353, %v2403
    %v2406 = vunpack.c.l.s4 857870592
    %v2407 = vunpack.c.0.s8 %v2406
    %v2408 = vlaneseq
    %v2409 = vshrl.u32 %v2408, 7
    %v2410 = vsub.s32 %v2407, %v2409
    %v2411 = vrot.slane %v2355, %v2410
    %2412 = vrot.lane.b32.xlu0 %v2362, 32
    %v2413 = vpop.permute.xlu0 %2412
    %2414 = vrot.lane.b32.xlu0 %v2369, 32
    %v2415 = vpop.permute.xlu0 %2414
    %2416 = vrot.lane.b32.xlu0 %v2376, 32
    %v2417 = vpop.permute.xlu0 %2416
    %2418 = vrot.lane.b32.xlu0 %v2383, 32
    %v2419 = vpop.permute.xlu0 %2418
    %2420 = vrot.lane.b32.xlu0 %v2390, 32
    %v2421 = vpop.permute.xlu0 %2420
    %2422 = vrot.lane.b32.xlu0 %v2397, 32
    %v2423 = vpop.permute.xlu0 %2422
    %2424 = vrot.lane.b32.xlu0 %v2404, 32
    %v2425 = vpop.permute.xlu0 %2424
    %2426 = vrot.lane.b32.xlu0 %v2411, 32
    %v2427 = vpop.permute.xlu0 %2426
    %2436 = vst.msk [vmem:[#allocation2 + $0x1] sm:$0x1] %vm2094, %v2413
    %2437 = vst.msk [vmem:[#allocation2 + $0x5] sm:$0x1] %vm2094, %v2415
    %2438 = vst.msk [vmem:[#allocation2 + $0x9] sm:$0x1] %vm2094, %v2417
    %2439 = vst.msk [vmem:[#allocation2 + $0xd] sm:$0x1] %vm2094, %v2419
    %2440 = vst.msk [vmem:[#allocation2 + $0x11] sm:$0x1] %vm2094, %v2421
    %2441 = vst.msk [vmem:[#allocation2 + $0x15] sm:$0x1] %vm2094, %v2423
    %2442 = vst.msk [vmem:[#allocation2 + $0x19] sm:$0x1] %vm2094, %v2425
    %2443 = vst.msk [vmem:[#allocation2 + $0x1d] sm:$0x1] %vm2094, %v2427
    %2444 = vrot.lane.b32.xlu0 %v952, 64
    %v2445 = vpop.permute.xlu0 %2444
    %2446 = vrot.lane.b32.xlu0 %v953, 64
    %v2447 = vpop.permute.xlu0 %2446
    %2448 = vrot.lane.b32.xlu0 %v954, 64
    %v2449 = vpop.permute.xlu0 %2448
    %2450 = vrot.lane.b32.xlu0 %v955, 64
    %v2451 = vpop.permute.xlu0 %2450
    %2452 = vrot.lane.b32.xlu0 %v1006, 64
    %v2453 = vpop.permute.xlu0 %2452
    %2454 = vrot.lane.b32.xlu0 %v1007, 64
    %v2455 = vpop.permute.xlu0 %2454
    %2456 = vrot.lane.b32.xlu0 %v1008, 64
    %v2457 = vpop.permute.xlu0 %2456
    %2458 = vrot.lane.b32.xlu0 %v1009, 64
    %v2459 = vpop.permute.xlu0 %2458
    %v2460 = vrot.slane %v2445, 4
    %v2461 = vrot.slane %v2447, 4
    %v2462 = vrot.slane %v2449, 4
    %v2463 = vrot.slane %v2451, 4
    %v2464 = vrot.slane %v2453, 4
    %v2465 = vrot.slane %v2455, 4
    %v2466 = vrot.slane %v2457, 4
    %v2467 = vrot.slane %v2459, 4
    %2468 = vrot.lane.b32.xlu0 %v1086, 64
    %v2469 = vpop.permute.xlu0 %2468
    %v2470 = vlaneseq
    %v2471 = vshrl.u32 %v2470, 7
    %v2472 = vsub.s32 0, %v2471
    %v2473 = vrot.slane %v2460, %v2472
    %v2474 = vlaneseq
    %v2475 = vshrl.u32 %v2474, 7
    %v2476 = vsub.s32 0, %v2475
    %v2477 = vrot.slane %v2461, %v2476
    %v2478 = vlaneseq
    %v2479 = vshrl.u32 %v2478, 7
    %v2480 = vsub.s32 0, %v2479
    %v2481 = vrot.slane %v2462, %v2480
    %v2482 = vlaneseq
    %v2483 = vshrl.u32 %v2482, 7
    %v2484 = vsub.s32 0, %v2483
    %v2485 = vrot.slane %v2463, %v2484
    %v2486 = vlaneseq
    %v2487 = vshrl.u32 %v2486, 7
    %v2488 = vsub.s32 0, %v2487
    %v2489 = vrot.slane %v2464, %v2488
    %v2490 = vlaneseq
    %v2491 = vshrl.u32 %v2490, 7
    %v2492 = vsub.s32 0, %v2491
    %v2493 = vrot.slane %v2465, %v2492
    %v2494 = vlaneseq
    %v2495 = vshrl.u32 %v2494, 7
    %v2496 = vsub.s32 0, %v2495
    %v2497 = vrot.slane %v2466, %v2496
    %v2498 = vlaneseq
    %v2499 = vshrl.u32 %v2498, 7
    %v2500 = vsub.s32 0, %v2499
    %v2501 = vrot.slane %v2467, %v2500
    %v2502 = vsel %vm1073, %v2477, %v2473
    %v2503 = vsel %vm1075, %v2481, %v2502
    %v2504 = vsel %vm1077, %v2485, %v2503
    %v2505 = vsel %vm1079, %v2489, %v2504
    %v2506 = vsel %vm1081, %v2493, %v2505
    %v2507 = vsel %vm1083, %v2497, %v2506
    %v2508 = vsel %vm1085, %v2501, %v2507
    %v2509 = vsel %vm1126, %v2469, 0
    %v2511 = vsel %vm1126, %v2508, 0
    %2513 = vmatprep.subr.mxu0 0.0
    %2514 = vmatpush1.xpose.msra.mxu0 %v2511
    %2515 = vmatprep.subr.mxu0 0.0
    %2516 = vmatpush1.xpose.msra.mxu0 0.0
    %2517 = vmatprep.subr.mxu0 0.0
    %2518 = vmatpush1.xpose.msra.mxu0 0.0
    %2519 = vmatprep.subr.mxu0 0.0
    %2520 = vmatpush1.xpose.msra.mxu0 0.0
    %2521 = vmatprep.subr.mxu0 0.0
    %2522 = vmatpush1.xpose.msra.mxu0 0.0
    %2523 = vmatprep.subr.mxu0 0.0
    %2524 = vmatpush1.xpose.msra.mxu0 0.0
    %2525 = vmatprep.subr.mxu0 0.0
    %2526 = vmatpush1.xpose.msra.mxu0 0.0
    %2527 = vmatprep.subr.mxu0 0.0
    %2528 = vmatpush1.xpose.msra.mxu0 0.0
    %2529 = vmatprep.subr.mxu0 0.0
    %2530 = vmatpush1.xpose.msra.mxu0 0.0
    %2531 = vmatprep.subr.mxu0 0.0
    %2532 = vmatpush1.xpose.msra.mxu0 0.0
    %2533 = vmatprep.subr.mxu0 0.0
    %2534 = vmatpush1.xpose.msra.mxu0 0.0
    %2535 = vmatprep.subr.mxu0 0.0
    %2536 = vmatpush1.xpose.msra.mxu0 0.0
    %2537 = vmatprep.subr.mxu0 0.0
    %2538 = vmatpush1.xpose.msra.mxu0 0.0
    %2539 = vmatprep.subr.mxu0 0.0
    %2540 = vmatpush1.xpose.msra.mxu0 0.0
    %2541 = vmatprep.subr.mxu0 0.0
    %2542 = vmatpush1.xpose.msra.mxu0 0.0
    %2543 = vmatprep.subr.mxu0 0.0
    %2544 = vmatpush1.xpose.msra.mxu0 0.0
    %2545 = vmatprep.subr.mxu0 0.0
    %2546 = vmatpush1.xpose.msra.mxu0 0.0
    %2547 = vmatprep.subr.mxu0 0.0
    %2548 = vmatpush1.xpose.msra.mxu0 0.0
    %2549 = vmatprep.subr.mxu0 0.0
    %2550 = vmatpush1.xpose.msra.mxu0 0.0
    %2551 = vmatprep.subr.mxu0 0.0
    %2552 = vmatpush1.xpose.msra.mxu0 0.0
    %2553 = vmatprep.subr.mxu0 0.0
    %2554 = vmatpush1.xpose.msra.mxu0 0.0
    %2555 = vmatprep.subr.mxu0 0.0
    %2556 = vmatpush1.xpose.msra.mxu0 0.0
    %2557 = vmatprep.subr.mxu0 0.0
    %2558 = vmatpush1.xpose.msra.mxu0 0.0
    %2559 = vmatprep.subr.mxu0 0.0
    %2560 = vmatpush1.xpose.msra.mxu0 0.0
    %2561 = vmatprep.subr.mxu0 0.0
    %2562 = vmatpush1.xpose.msra.mxu0 0.0
    %2563 = vmatprep.subr.mxu0 0.0
    %2564 = vmatpush1.xpose.msra.mxu0 0.0
    %2565 = vmatprep.subr.mxu0 0.0
    %2566 = vmatpush1.xpose.msra.mxu0 0.0
    %2567 = vmatprep.subr.mxu0 0.0
    %2568 = vmatpush1.xpose.msra.mxu0 0.0
    %2569 = vmatprep.subr.mxu0 0.0
    %2570 = vmatpush1.xpose.msra.mxu0 0.0
    %2571 = vmatprep.subr.mxu0 0.0
    %2572 = vmatpush1.xpose.msra.mxu0 0.0
    %2573 = vmatprep.subr.mxu0 0.0
    %2574 = vmatpush1.xpose.msra.mxu0 0.0
    %2575 = vmatprep.subr.mxu0 0.0
    %2576 = vmatpush1.xpose.msra.mxu0 0.0
    %2577 = vmatprep.mubr.f32.mxu0 0.0
    %2578 = vmatmul.mubr.f32.gmra.mrb[0].mxu0 %v2509
    %v2579 = vpop.f32.mrb[0].mxu0
    %v2580 = vadd.f32 0.0, %v2579
    %v2581 = vpop.f32.mrb[0].mxu0
    %2582 = vdwg.mxu0
    %v2583 = vsel %vm1032, %v2580, -inf
    %v2584 = vsel %vm1202, %v2583, -inf
    %2585 = vmax.xlane.f32.xlu0 %v2584
    %v2586 = vpop.xlane.xlu0 %2585
    %v2587 = vsub.f32 %v2583, %v2586
    %v2588 = vmul.f32 %v2587, 1.442695
    %v2589 = vpow.pop %v2588
    %v2590 = vsel %vm1202, %v2589, 0.0
    %2591 = vadd.xlane.f32.xlu0 %v2590
    %v2592 = vpop.xlane.xlu0 %2591
    %2593 = vrot.lane.b32.xlu0 %v1250, 64
    %v2594 = vpop.permute.xlu0 %2593
    %v2597 = vsel %vm1202, %v2589, 0
    %2599 = vmatprep.subr.mxu0 0.0
    %2600 = vmatpush1.msra.mxu0 %v2594
    %2601 = vmatprep.subr.mxu0 0.0
    %2602 = vmatpush1.msra.mxu0 0.0
    %2603 = vmatprep.subr.mxu0 0.0
    %2604 = vmatpush1.msra.mxu0 0.0
    %2605 = vmatprep.subr.mxu0 0.0
    %2606 = vmatpush1.msra.mxu0 0.0
    %2607 = vmatprep.subr.mxu0 0.0
    %2608 = vmatpush1.msra.mxu0 0.0
    %2609 = vmatprep.subr.mxu0 0.0
    %2610 = vmatpush1.msra.mxu0 0.0
    %2611 = vmatprep.subr.mxu0 0.0
    %2612 = vmatpush1.msra.mxu0 0.0
    %2613 = vmatprep.subr.mxu0 0.0
    %2614 = vmatpush1.msra.mxu0 0.0
    %2615 = vmatprep.subr.mxu0 0.0
    %2616 = vmatpush1.msra.mxu0 0.0
    %2617 = vmatprep.subr.mxu0 0.0
    %2618 = vmatpush1.msra.mxu0 0.0
    %2619 = vmatprep.subr.mxu0 0.0
    %2620 = vmatpush1.msra.mxu0 0.0
    %2621 = vmatprep.subr.mxu0 0.0
    %2622 = vmatpush1.msra.mxu0 0.0
    %2623 = vmatprep.subr.mxu0 0.0
    %2624 = vmatpush1.msra.mxu0 0.0
    %2625 = vmatprep.subr.mxu0 0.0
    %2626 = vmatpush1.msra.mxu0 0.0
    %2627 = vmatprep.subr.mxu0 0.0
    %2628 = vmatpush1.msra.mxu0 0.0
    %2629 = vmatprep.subr.mxu0 0.0
    %2630 = vmatpush1.msra.mxu0 0.0
    %2631 = vmatprep.subr.mxu0 0.0
    %2632 = vmatpush1.msra.mxu0 0.0
    %2633 = vmatprep.subr.mxu0 0.0
    %2634 = vmatpush1.msra.mxu0 0.0
    %2635 = vmatprep.subr.mxu0 0.0
    %2636 = vmatpush1.msra.mxu0 0.0
    %2637 = vmatprep.subr.mxu0 0.0
    %2638 = vmatpush1.msra.mxu0 0.0
    %2639 = vmatprep.subr.mxu0 0.0
    %2640 = vmatpush1.msra.mxu0 0.0
    %2641 = vmatprep.subr.mxu0 0.0
    %2642 = vmatpush1.msra.mxu0 0.0
    %2643 = vmatprep.subr.mxu0 0.0
    %2644 = vmatpush1.msra.mxu0 0.0
    %2645 = vmatprep.subr.mxu0 0.0
    %2646 = vmatpush1.msra.mxu0 0.0
    %2647 = vmatprep.subr.mxu0 0.0
    %2648 = vmatpush1.msra.mxu0 0.0
    %2649 = vmatprep.subr.mxu0 0.0
    %2650 = vmatpush1.msra.mxu0 0.0
    %2651 = vmatprep.subr.mxu0 0.0
    %2652 = vmatpush1.msra.mxu0 0.0
    %2653 = vmatprep.subr.mxu0 0.0
    %2654 = vmatpush1.msra.mxu0 0.0
    %2655 = vmatprep.subr.mxu0 0.0
    %2656 = vmatpush1.msra.mxu0 0.0
    %2657 = vmatprep.subr.mxu0 0.0
    %2658 = vmatpush1.msra.mxu0 0.0
    %2659 = vmatprep.subr.mxu0 0.0
    %2660 = vmatpush1.msra.mxu0 0.0
    %2661 = vmatprep.subr.mxu0 0.0
    %2662 = vmatpush1.msra.mxu0 0.0
    %2663 = vmatprep.mubr.f32.mxu0 0.0
    %2664 = vmatmul.mubr.f32.gmra.mrb[0].mxu0 %v2597
    %v2665 = vpop.f32.mrb[0].mxu0
    %v2666 = vadd.f32 0.0, %v2665
    %v2667 = vpop.f32.mrb[0].mxu0
    %2668 = vdwg.mxu0
    %v2669 = vrcp.pop %v2592
    %v2670 = vmul.f32 %v2666, %v2669
    %v2672 = vcombine.high %v2670, %v2670
    %v2674 = vunpack.c.l.s4 1966171168
    %v2675 = vunpack.c.0.s8 %v2674
    %v2676 = vlaneseq
    %v2677 = vshrl.u32 %v2676, 7
    %v2678 = vsub.s32 %v2675, %v2677
    %v2679 = vrot.slane %v2670, %v2678
    %v2681 = vunpack.c.l.s4 1966171168
    %v2682 = vunpack.c.0.s8 %v2681
    %v2683 = vlaneseq
    %v2684 = vshrl.u32 %v2683, 7
    %v2685 = vsub.s32 %v2682, %v2684
    %v2686 = vrot.slane %v2672, %v2685
    %v2687 = vcombine.high %v2679, %v2679
    %v2688 = vcombine.high %v2686, %v2686
    %v2690 = vunpack.c.l.s4 1966171168
    %v2691 = vunpack.c.0.s8 %v2690
    %v2692 = vlaneseq
    %v2693 = vshrl.u32 %v2692, 7
    %v2694 = vsub.s32 %v2691, %v2693
    %v2695 = vrot.slane %v2679, %v2694
    %v2697 = vunpack.c.l.s4 1966171168
    %v2698 = vunpack.c.0.s8 %v2697
    %v2699 = vlaneseq
    %v2700 = vshrl.u32 %v2699, 7
    %v2701 = vsub.s32 %v2698, %v2700
    %v2702 = vrot.slane %v2686, %v2701
    %v2704 = vunpack.c.l.s4 1966171168
    %v2705 = vunpack.c.0.s8 %v2704
    %v2706 = vlaneseq
    %v2707 = vshrl.u32 %v2706, 7
    %v2708 = vsub.s32 %v2705, %v2707
    %v2709 = vrot.slane %v2687, %v2708
    %v2711 = vunpack.c.l.s4 1966171168
    %v2712 = vunpack.c.0.s8 %v2711
    %v2713 = vlaneseq
    %v2714 = vshrl.u32 %v2713, 7
    %v2715 = vsub.s32 %v2712, %v2714
    %v2716 = vrot.slane %v2688, %v2715
    %v2717 = vcombine.high %v2695, %v2695
    %v2718 = vcombine.high %v2702, %v2702
    %v2719 = vcombine.high %v2709, %v2709
    %v2720 = vcombine.high %v2716, %v2716
    %v2722 = vunpack.c.l.s4 857870592
    %v2723 = vunpack.c.0.s8 %v2722
    %v2724 = vlaneseq
    %v2725 = vshrl.u32 %v2724, 7
    %v2726 = vsub.s32 %v2723, %v2725
    %v2727 = vrot.slane %v2695, %v2726
    %v2729 = vunpack.c.l.s4 857870592
    %v2730 = vunpack.c.0.s8 %v2729
    %v2731 = vlaneseq
    %v2732 = vshrl.u32 %v2731, 7
    %v2733 = vsub.s32 %v2730, %v2732
    %v2734 = vrot.slane %v2709, %v2733
    %v2736 = vunpack.c.l.s4 857870592
    %v2737 = vunpack.c.0.s8 %v2736
    %v2738 = vlaneseq
    %v2739 = vshrl.u32 %v2738, 7
    %v2740 = vsub.s32 %v2737, %v2739
    %v2741 = vrot.slane %v2717, %v2740
    %v2743 = vunpack.c.l.s4 857870592
    %v2744 = vunpack.c.0.s8 %v2743
    %v2745 = vlaneseq
    %v2746 = vshrl.u32 %v2745, 7
    %v2747 = vsub.s32 %v2744, %v2746
    %v2748 = vrot.slane %v2719, %v2747
    %v2750 = vunpack.c.l.s4 857870592
    %v2751 = vunpack.c.0.s8 %v2750
    %v2752 = vlaneseq
    %v2753 = vshrl.u32 %v2752, 7
    %v2754 = vsub.s32 %v2751, %v2753
    %v2755 = vrot.slane %v2702, %v2754
    %v2757 = vunpack.c.l.s4 857870592
    %v2758 = vunpack.c.0.s8 %v2757
    %v2759 = vlaneseq
    %v2760 = vshrl.u32 %v2759, 7
    %v2761 = vsub.s32 %v2758, %v2760
    %v2762 = vrot.slane %v2716, %v2761
    %v2764 = vunpack.c.l.s4 857870592
    %v2765 = vunpack.c.0.s8 %v2764
    %v2766 = vlaneseq
    %v2767 = vshrl.u32 %v2766, 7
    %v2768 = vsub.s32 %v2765, %v2767
    %v2769 = vrot.slane %v2718, %v2768
    %v2771 = vunpack.c.l.s4 857870592
    %v2772 = vunpack.c.0.s8 %v2771
    %v2773 = vlaneseq
    %v2774 = vshrl.u32 %v2773, 7
    %v2775 = vsub.s32 %v2772, %v2774
    %v2776 = vrot.slane %v2720, %v2775
    %2777 = vrot.lane.b32.xlu0 %v2727, 64
    %v2778 = vpop.permute.xlu0 %2777
    %2779 = vrot.lane.b32.xlu0 %v2734, 64
    %v2780 = vpop.permute.xlu0 %2779
    %2781 = vrot.lane.b32.xlu0 %v2741, 64
    %v2782 = vpop.permute.xlu0 %2781
    %2783 = vrot.lane.b32.xlu0 %v2748, 64
    %v2784 = vpop.permute.xlu0 %2783
    %2785 = vrot.lane.b32.xlu0 %v2755, 64
    %v2786 = vpop.permute.xlu0 %2785
    %2787 = vrot.lane.b32.xlu0 %v2762, 64
    %v2788 = vpop.permute.xlu0 %2787
    %2789 = vrot.lane.b32.xlu0 %v2769, 64
    %v2790 = vpop.permute.xlu0 %2789
    %2791 = vrot.lane.b32.xlu0 %v2776, 64
    %v2792 = vpop.permute.xlu0 %2791
    %vm2801 = vcmask 778752
    %2802 = vst.msk [vmem:[#allocation2] sm:$0x1] %vm2801, %v2778
    %2803 = vst.msk [vmem:[#allocation2 + $0x4] sm:$0x1] %vm2801, %v2780
    %2804 = vst.msk [vmem:[#allocation2 + $0x8] sm:$0x1] %vm2801, %v2782
    %2805 = vst.msk [vmem:[#allocation2 + $0xc] sm:$0x1] %vm2801, %v2784
    %2806 = vst.msk [vmem:[#allocation2 + $0x10] sm:$0x1] %vm2801, %v2786
    %2807 = vst.msk [vmem:[#allocation2 + $0x14] sm:$0x1] %vm2801, %v2788
    %2808 = vst.msk [vmem:[#allocation2 + $0x18] sm:$0x1] %vm2801, %v2790
    %2809 = vst.msk [vmem:[#allocation2 + $0x1c] sm:$0x1] %vm2801, %v2792
    %2810 = vrot.lane.b32.xlu0 %v1432, 64
    %v2811 = vpop.permute.xlu0 %2810
    %v2812 = vlaneseq
    %v2813 = vshrl.u32 %v2812, 7
    %v2814 = vsub.s32 1, %v2813
    %v2815 = vrot.slane %v2460, %v2814
    %v2816 = vlaneseq
    %v2817 = vshrl.u32 %v2816, 7
    %v2818 = vsub.s32 1, %v2817
    %v2819 = vrot.slane %v2461, %v2818
    %v2820 = vlaneseq
    %v2821 = vshrl.u32 %v2820, 7
    %v2822 = vsub.s32 1, %v2821
    %v2823 = vrot.slane %v2462, %v2822
    %v2824 = vlaneseq
    %v2825 = vshrl.u32 %v2824, 7
    %v2826 = vsub.s32 1, %v2825
    %v2827 = vrot.slane %v2463, %v2826
    %v2828 = vlaneseq
    %v2829 = vshrl.u32 %v2828, 7
    %v2830 = vsub.s32 1, %v2829
    %v2831 = vrot.slane %v2464, %v2830
    %v2832 = vlaneseq
    %v2833 = vshrl.u32 %v2832, 7
    %v2834 = vsub.s32 1, %v2833
    %v2835 = vrot.slane %v2465, %v2834
    %v2836 = vlaneseq
    %v2837 = vshrl.u32 %v2836, 7
    %v2838 = vsub.s32 1, %v2837
    %v2839 = vrot.slane %v2466, %v2838
    %v2840 = vlaneseq
    %v2841 = vshrl.u32 %v2840, 7
    %v2842 = vsub.s32 1, %v2841
    %v2843 = vrot.slane %v2467, %v2842
    %v2844 = vsel %vm1073, %v2819, %v2815
    %v2845 = vsel %vm1075, %v2823, %v2844
    %v2846 = vsel %vm1077, %v2827, %v2845
    %v2847 = vsel %vm1079, %v2831, %v2846
    %v2848 = vsel %vm1081, %v2835, %v2847
    %v2849 = vsel %vm1083, %v2839, %v2848
    %v2850 = vsel %vm1085, %v2843, %v2849
    %v2851 = vsel %vm1126, %v2811, 0
    %v2853 = vsel %vm1126, %v2850, 0
    %2855 = vmatprep.subr.mxu0 0.0
    %2856 = vmatpush1.xpose.msra.mxu0 %v2853
    %2857 = vmatprep.subr.mxu0 0.0
    %2858 = vmatpush1.xpose.msra.mxu0 0.0
    %2859 = vmatprep.subr.mxu0 0.0
    %2860 = vmatpush1.xpose.msra.mxu0 0.0
    %2861 = vmatprep.subr.mxu0 0.0
    %2862 = vmatpush1.xpose.msra.mxu0 0.0
    %2863 = vmatprep.subr.mxu0 0.0
    %2864 = vmatpush1.xpose.msra.mxu0 0.0
    %2865 = vmatprep.subr.mxu0 0.0
    %2866 = vmatpush1.xpose.msra.mxu0 0.0
    %2867 = vmatprep.subr.mxu0 0.0
    %2868 = vmatpush1.xpose.msra.mxu0 0.0
    %2869 = vmatprep.subr.mxu0 0.0
    %2870 = vmatpush1.xpose.msra.mxu0 0.0
    %2871 = vmatprep.subr.mxu0 0.0
    %2872 = vmatpush1.xpose.msra.mxu0 0.0
    %2873 = vmatprep.subr.mxu0 0.0
    %2874 = vmatpush1.xpose.msra.mxu0 0.0
    %2875 = vmatprep.subr.mxu0 0.0
    %2876 = vmatpush1.xpose.msra.mxu0 0.0
    %2877 = vmatprep.subr.mxu0 0.0
    %2878 = vmatpush1.xpose.msra.mxu0 0.0
    %2879 = vmatprep.subr.mxu0 0.0
    %2880 = vmatpush1.xpose.msra.mxu0 0.0
    %2881 = vmatprep.subr.mxu0 0.0
    %2882 = vmatpush1.xpose.msra.mxu0 0.0
    %2883 = vmatprep.subr.mxu0 0.0
    %2884 = vmatpush1.xpose.msra.mxu0 0.0
    %2885 = vmatprep.subr.mxu0 0.0
    %2886 = vmatpush1.xpose.msra.mxu0 0.0
    %2887 = vmatprep.subr.mxu0 0.0
    %2888 = vmatpush1.xpose.msra.mxu0 0.0
    %2889 = vmatprep.subr.mxu0 0.0
    %2890 = vmatpush1.xpose.msra.mxu0 0.0
    %2891 = vmatprep.subr.mxu0 0.0
    %2892 = vmatpush1.xpose.msra.mxu0 0.0
    %2893 = vmatprep.subr.mxu0 0.0
    %2894 = vmatpush1.xpose.msra.mxu0 0.0
    %2895 = vmatprep.subr.mxu0 0.0
    %2896 = vmatpush1.xpose.msra.mxu0 0.0
    %2897 = vmatprep.subr.mxu0 0.0
    %2898 = vmatpush1.xpose.msra.mxu0 0.0
    %2899 = vmatprep.subr.mxu0 0.0
    %2900 = vmatpush1.xpose.msra.mxu0 0.0
    %2901 = vmatprep.subr.mxu0 0.0
    %2902 = vmatpush1.xpose.msra.mxu0 0.0
    %2903 = vmatprep.subr.mxu0 0.0
    %2904 = vmatpush1.xpose.msra.mxu0 0.0
    %2905 = vmatprep.subr.mxu0 0.0
    %2906 = vmatpush1.xpose.msra.mxu0 0.0
    %2907 = vmatprep.subr.mxu0 0.0
    %2908 = vmatpush1.xpose.msra.mxu0 0.0
    %2909 = vmatprep.subr.mxu0 0.0
    %2910 = vmatpush1.xpose.msra.mxu0 0.0
    %2911 = vmatprep.subr.mxu0 0.0
    %2912 = vmatpush1.xpose.msra.mxu0 0.0
    %2913 = vmatprep.subr.mxu0 0.0
    %2914 = vmatpush1.xpose.msra.mxu0 0.0
    %2915 = vmatprep.subr.mxu0 0.0
    %2916 = vmatpush1.xpose.msra.mxu0 0.0
    %2917 = vmatprep.subr.mxu0 0.0
    %2918 = vmatpush1.xpose.msra.mxu0 0.0
    %2919 = vmatprep.mubr.f32.mxu0 0.0
    %2920 = vmatmul.mubr.f32.gmra.mrb[0].mxu0 %v2851
    %v2921 = vpop.f32.mrb[0].mxu0
    %v2922 = vadd.f32 0.0, %v2921
    %v2923 = vpop.f32.mrb[0].mxu0
    %2924 = vdwg.mxu0
    %v2925 = vsel %vm1032, %v2922, -inf
    %v2926 = vsel %vm1202, %v2925, -inf
    %2927 = vmax.xlane.f32.xlu0 %v2926
    %v2928 = vpop.xlane.xlu0 %2927
    %v2929 = vsub.f32 %v2925, %v2928
    %v2930 = vmul.f32 %v2929, 1.442695
    %v2931 = vpow.pop %v2930
    %v2932 = vsel %vm1202, %v2931, 0.0
    %2933 = vadd.xlane.f32.xlu0 %v2932
    %v2934 = vpop.xlane.xlu0 %2933
    %2935 = vrot.lane.b32.xlu0 %v1594, 64
    %v2936 = vpop.permute.xlu0 %2935
    %v2939 = vsel %vm1202, %v2931, 0
    %2941 = vmatprep.subr.mxu0 0.0
    %2942 = vmatpush1.msra.mxu0 %v2936
    %2943 = vmatprep.subr.mxu0 0.0
    %2944 = vmatpush1.msra.mxu0 0.0
    %2945 = vmatprep.subr.mxu0 0.0
    %2946 = vmatpush1.msra.mxu0 0.0
    %2947 = vmatprep.subr.mxu0 0.0
    %2948 = vmatpush1.msra.mxu0 0.0
    %2949 = vmatprep.subr.mxu0 0.0
    %2950 = vmatpush1.msra.mxu0 0.0
    %2951 = vmatprep.subr.mxu0 0.0
    %2952 = vmatpush1.msra.mxu0 0.0
    %2953 = vmatprep.subr.mxu0 0.0
    %2954 = vmatpush1.msra.mxu0 0.0
    %2955 = vmatprep.subr.mxu0 0.0
    %2956 = vmatpush1.msra.mxu0 0.0
    %2957 = vmatprep.subr.mxu0 0.0
    %2958 = vmatpush1.msra.mxu0 0.0
    %2959 = vmatprep.subr.mxu0 0.0
    %2960 = vmatpush1.msra.mxu0 0.0
    %2961 = vmatprep.subr.mxu0 0.0
    %2962 = vmatpush1.msra.mxu0 0.0
    %2963 = vmatprep.subr.mxu0 0.0
    %2964 = vmatpush1.msra.mxu0 0.0
    %2965 = vmatprep.subr.mxu0 0.0
    %2966 = vmatpush1.msra.mxu0 0.0
    %2967 = vmatprep.subr.mxu0 0.0
    %2968 = vmatpush1.msra.mxu0 0.0
    %2969 = vmatprep.subr.mxu0 0.0
    %2970 = vmatpush1.msra.mxu0 0.0
    %2971 = vmatprep.subr.mxu0 0.0
    %2972 = vmatpush1.msra.mxu0 0.0
    %2973 = vmatprep.subr.mxu0 0.0
    %2974 = vmatpush1.msra.mxu0 0.0
    %2975 = vmatprep.subr.mxu0 0.0
    %2976 = vmatpush1.msra.mxu0 0.0
    %2977 = vmatprep.subr.mxu0 0.0
    %2978 = vmatpush1.msra.mxu0 0.0
    %2979 = vmatprep.subr.mxu0 0.0
    %2980 = vmatpush1.msra.mxu0 0.0
    %2981 = vmatprep.subr.mxu0 0.0
    %2982 = vmatpush1.msra.mxu0 0.0
    %2983 = vmatprep.subr.mxu0 0.0
    %2984 = vmatpush1.msra.mxu0 0.0
    %2985 = vmatprep.subr.mxu0 0.0
    %2986 = vmatpush1.msra.mxu0 0.0
    %2987 = vmatprep.subr.mxu0 0.0
    %2988 = vmatpush1.msra.mxu0 0.0
    %2989 = vmatprep.subr.mxu0 0.0
    %2990 = vmatpush1.msra.mxu0 0.0
    %2991 = vmatprep.subr.mxu0 0.0
    %2992 = vmatpush1.msra.mxu0 0.0
    %2993 = vmatprep.subr.mxu0 0.0
    %2994 = vmatpush1.msra.mxu0 0.0
    %2995 = vmatprep.subr.mxu0 0.0
    %2996 = vmatpush1.msra.mxu0 0.0
    %2997 = vmatprep.subr.mxu0 0.0
    %2998 = vmatpush1.msra.mxu0 0.0
    %2999 = vmatprep.subr.mxu0 0.0
    %3000 = vmatpush1.msra.mxu0 0.0
    %3001 = vmatprep.subr.mxu0 0.0
    %3002 = vmatpush1.msra.mxu0 0.0
    %3003 = vmatprep.subr.mxu0 0.0
    %3004 = vmatpush1.msra.mxu0 0.0
    %3005 = vmatprep.mubr.f32.mxu0 0.0
    %3006 = vmatmul.mubr.f32.gmra.mrb[0].mxu0 %v2939
    %v3007 = vpop.f32.mrb[0].mxu0
    %v3008 = vadd.f32 0.0, %v3007
    %v3009 = vpop.f32.mrb[0].mxu0
    %3010 = vdwg.mxu0
    %v3011 = vrcp.pop %v2934
    %v3012 = vmul.f32 %v3008, %v3011
    %v3014 = vcombine.high %v3012, %v3012
    %v3016 = vunpack.c.l.s4 1966171168
    %v3017 = vunpack.c.0.s8 %v3016
    %v3018 = vlaneseq
    %v3019 = vshrl.u32 %v3018, 7
    %v3020 = vsub.s32 %v3017, %v3019
    %v3021 = vrot.slane %v3012, %v3020
    %v3023 = vunpack.c.l.s4 1966171168
    %v3024 = vunpack.c.0.s8 %v3023
    %v3025 = vlaneseq
    %v3026 = vshrl.u32 %v3025, 7
    %v3027 = vsub.s32 %v3024, %v3026
    %v3028 = vrot.slane %v3014, %v3027
    %v3029 = vcombine.high %v3021, %v3021
    %v3030 = vcombine.high %v3028, %v3028
    %v3032 = vunpack.c.l.s4 1966171168
    %v3033 = vunpack.c.0.s8 %v3032
    %v3034 = vlaneseq
    %v3035 = vshrl.u32 %v3034, 7
    %v3036 = vsub.s32 %v3033, %v3035
    %v3037 = vrot.slane %v3021, %v3036
    %v3039 = vunpack.c.l.s4 1966171168
    %v3040 = vunpack.c.0.s8 %v3039
    %v3041 = vlaneseq
    %v3042 = vshrl.u32 %v3041, 7
    %v3043 = vsub.s32 %v3040, %v3042
    %v3044 = vrot.slane %v3028, %v3043
    %v3046 = vunpack.c.l.s4 1966171168
    %v3047 = vunpack.c.0.s8 %v3046
    %v3048 = vlaneseq
    %v3049 = vshrl.u32 %v3048, 7
    %v3050 = vsub.s32 %v3047, %v3049
    %v3051 = vrot.slane %v3029, %v3050
    %v3053 = vunpack.c.l.s4 1966171168
    %v3054 = vunpack.c.0.s8 %v3053
    %v3055 = vlaneseq
    %v3056 = vshrl.u32 %v3055, 7
    %v3057 = vsub.s32 %v3054, %v3056
    %v3058 = vrot.slane %v3030, %v3057
    %v3059 = vcombine.high %v3037, %v3037
    %v3060 = vcombine.high %v3044, %v3044
    %v3061 = vcombine.high %v3051, %v3051
    %v3062 = vcombine.high %v3058, %v3058
    %v3064 = vunpack.c.l.s4 857870592
    %v3065 = vunpack.c.0.s8 %v3064
    %v3066 = vlaneseq
    %v3067 = vshrl.u32 %v3066, 7
    %v3068 = vsub.s32 %v3065, %v3067
    %v3069 = vrot.slane %v3037, %v3068
    %v3071 = vunpack.c.l.s4 857870592
    %v3072 = vunpack.c.0.s8 %v3071
    %v3073 = vlaneseq
    %v3074 = vshrl.u32 %v3073, 7
    %v3075 = vsub.s32 %v3072, %v3074
    %v3076 = vrot.slane %v3051, %v3075
    %v3078 = vunpack.c.l.s4 857870592
    %v3079 = vunpack.c.0.s8 %v3078
    %v3080 = vlaneseq
    %v3081 = vshrl.u32 %v3080, 7
    %v3082 = vsub.s32 %v3079, %v3081
    %v3083 = vrot.slane %v3059, %v3082
    %v3085 = vunpack.c.l.s4 857870592
    %v3086 = vunpack.c.0.s8 %v3085
    %v3087 = vlaneseq
    %v3088 = vshrl.u32 %v3087, 7
    %v3089 = vsub.s32 %v3086, %v3088
    %v3090 = vrot.slane %v3061, %v3089
    %v3092 = vunpack.c.l.s4 857870592
    %v3093 = vunpack.c.0.s8 %v3092
    %v3094 = vlaneseq
    %v3095 = vshrl.u32 %v3094, 7
    %v3096 = vsub.s32 %v3093, %v3095
    %v3097 = vrot.slane %v3044, %v3096
    %v3099 = vunpack.c.l.s4 857870592
    %v3100 = vunpack.c.0.s8 %v3099
    %v3101 = vlaneseq
    %v3102 = vshrl.u32 %v3101, 7
    %v3103 = vsub.s32 %v3100, %v3102
    %v3104 = vrot.slane %v3058, %v3103
    %v3106 = vunpack.c.l.s4 857870592
    %v3107 = vunpack.c.0.s8 %v3106
    %v3108 = vlaneseq
    %v3109 = vshrl.u32 %v3108, 7
    %v3110 = vsub.s32 %v3107, %v3109
    %v3111 = vrot.slane %v3060, %v3110
    %v3113 = vunpack.c.l.s4 857870592
    %v3114 = vunpack.c.0.s8 %v3113
    %v3115 = vlaneseq
    %v3116 = vshrl.u32 %v3115, 7
    %v3117 = vsub.s32 %v3114, %v3116
    %v3118 = vrot.slane %v3062, %v3117
    %3119 = vrot.lane.b32.xlu0 %v3069, 64
    %v3120 = vpop.permute.xlu0 %3119
    %3121 = vrot.lane.b32.xlu0 %v3076, 64
    %v3122 = vpop.permute.xlu0 %3121
    %3123 = vrot.lane.b32.xlu0 %v3083, 64
    %v3124 = vpop.permute.xlu0 %3123
    %3125 = vrot.lane.b32.xlu0 %v3090, 64
    %v3126 = vpop.permute.xlu0 %3125
    %3127 = vrot.lane.b32.xlu0 %v3097, 64
    %v3128 = vpop.permute.xlu0 %3127
    %3129 = vrot.lane.b32.xlu0 %v3104, 64
    %v3130 = vpop.permute.xlu0 %3129
    %3131 = vrot.lane.b32.xlu0 %v3111, 64
    %v3132 = vpop.permute.xlu0 %3131
    %3133 = vrot.lane.b32.xlu0 %v3118, 64
    %v3134 = vpop.permute.xlu0 %3133
    %3143 = vst.msk [vmem:[#allocation2 + $0x1] sm:$0x1] %vm2801, %v3120
    %3144 = vst.msk [vmem:[#allocation2 + $0x5] sm:$0x1] %vm2801, %v3122
    %3145 = vst.msk [vmem:[#allocation2 + $0x9] sm:$0x1] %vm2801, %v3124
    %3146 = vst.msk [vmem:[#allocation2 + $0xd] sm:$0x1] %vm2801, %v3126
    %3147 = vst.msk [vmem:[#allocation2 + $0x11] sm:$0x1] %vm2801, %v3128
    %3148 = vst.msk [vmem:[#allocation2 + $0x15] sm:$0x1] %vm2801, %v3130
    %3149 = vst.msk [vmem:[#allocation2 + $0x19] sm:$0x1] %vm2801, %v3132
    %3150 = vst.msk [vmem:[#allocation2 + $0x1d] sm:$0x1] %vm2801, %v3134
    %3151 = vrot.lane.b32.xlu0 %v952, 32
    %v3152 = vpop.permute.xlu0 %3151
    %3153 = vrot.lane.b32.xlu0 %v953, 32
    %v3154 = vpop.permute.xlu0 %3153
    %3155 = vrot.lane.b32.xlu0 %v954, 32
    %v3156 = vpop.permute.xlu0 %3155
    %3157 = vrot.lane.b32.xlu0 %v955, 32
    %v3158 = vpop.permute.xlu0 %3157
    %3159 = vrot.lane.b32.xlu0 %v1006, 32
    %v3160 = vpop.permute.xlu0 %3159
    %3161 = vrot.lane.b32.xlu0 %v1007, 32
    %v3162 = vpop.permute.xlu0 %3161
    %3163 = vrot.lane.b32.xlu0 %v1008, 32
    %v3164 = vpop.permute.xlu0 %3163
    %3165 = vrot.lane.b32.xlu0 %v1009, 32
    %v3166 = vpop.permute.xlu0 %3165
    %v3167 = vrot.slane %v3152, 4
    %v3168 = vrot.slane %v3154, 4
    %v3169 = vrot.slane %v3156, 4
    %v3170 = vrot.slane %v3158, 4
    %v3171 = vrot.slane %v3160, 4
    %v3172 = vrot.slane %v3162, 4
    %v3173 = vrot.slane %v3164, 4
    %v3174 = vrot.slane %v3166, 4
    %3175 = vrot.lane.b32.xlu0 %v1086, 32
    %v3176 = vpop.permute.xlu0 %3175
    %v3177 = vlaneseq
    %v3178 = vshrl.u32 %v3177, 7
    %v3179 = vsub.s32 0, %v3178
    %v3180 = vrot.slane %v3167, %v3179
    %v3181 = vlaneseq
    %v3182 = vshrl.u32 %v3181, 7
    %v3183 = vsub.s32 0, %v3182
    %v3184 = vrot.slane %v3168, %v3183
    %v3185 = vlaneseq
    %v3186 = vshrl.u32 %v3185, 7
    %v3187 = vsub.s32 0, %v3186
    %v3188 = vrot.slane %v3169, %v3187
    %v3189 = vlaneseq
    %v3190 = vshrl.u32 %v3189, 7
    %v3191 = vsub.s32 0, %v3190
    %v3192 = vrot.slane %v3170, %v3191
    %v3193 = vlaneseq
    %v3194 = vshrl.u32 %v3193, 7
    %v3195 = vsub.s32 0, %v3194
    %v3196 = vrot.slane %v3171, %v3195
    %v3197 = vlaneseq
    %v3198 = vshrl.u32 %v3197, 7
    %v3199 = vsub.s32 0, %v3198
    %v3200 = vrot.slane %v3172, %v3199
    %v3201 = vlaneseq
    %v3202 = vshrl.u32 %v3201, 7
    %v3203 = vsub.s32 0, %v3202
    %v3204 = vrot.slane %v3173, %v3203
    %v3205 = vlaneseq
    %v3206 = vshrl.u32 %v3205, 7
    %v3207 = vsub.s32 0, %v3206
    %v3208 = vrot.slane %v3174, %v3207
    %v3209 = vsel %vm1073, %v3184, %v3180
    %v3210 = vsel %vm1075, %v3188, %v3209
    %v3211 = vsel %vm1077, %v3192, %v3210
    %v3212 = vsel %vm1079, %v3196, %v3211
    %v3213 = vsel %vm1081, %v3200, %v3212
    %v3214 = vsel %vm1083, %v3204, %v3213
    %v3215 = vsel %vm1085, %v3208, %v3214
    %v3216 = vsel %vm1126, %v3176, 0
    %v3218 = vsel %vm1126, %v3215, 0
    %3220 = vmatprep.subr.mxu0 0.0
    %3221 = vmatpush1.xpose.msra.mxu0 %v3218
    %3222 = vmatprep.subr.mxu0 0.0
    %3223 = vmatpush1.xpose.msra.mxu0 0.0
    %3224 = vmatprep.subr.mxu0 0.0
    %3225 = vmatpush1.xpose.msra.mxu0 0.0
    %3226 = vmatprep.subr.mxu0 0.0
    %3227 = vmatpush1.xpose.msra.mxu0 0.0
    %3228 = vmatprep.subr.mxu0 0.0
    %3229 = vmatpush1.xpose.msra.mxu0 0.0
    %3230 = vmatprep.subr.mxu0 0.0
    %3231 = vmatpush1.xpose.msra.mxu0 0.0
    %3232 = vmatprep.subr.mxu0 0.0
    %3233 = vmatpush1.xpose.msra.mxu0 0.0
    %3234 = vmatprep.subr.mxu0 0.0
    %3235 = vmatpush1.xpose.msra.mxu0 0.0
    %3236 = vmatprep.subr.mxu0 0.0
    %3237 = vmatpush1.xpose.msra.mxu0 0.0
    %3238 = vmatprep.subr.mxu0 0.0
    %3239 = vmatpush1.xpose.msra.mxu0 0.0
    %3240 = vmatprep.subr.mxu0 0.0
    %3241 = vmatpush1.xpose.msra.mxu0 0.0
    %3242 = vmatprep.subr.mxu0 0.0
    %3243 = vmatpush1.xpose.msra.mxu0 0.0
    %3244 = vmatprep.subr.mxu0 0.0
    %3245 = vmatpush1.xpose.msra.mxu0 0.0
    %3246 = vmatprep.subr.mxu0 0.0
    %3247 = vmatpush1.xpose.msra.mxu0 0.0
    %3248 = vmatprep.subr.mxu0 0.0
    %3249 = vmatpush1.xpose.msra.mxu0 0.0
    %3250 = vmatprep.subr.mxu0 0.0
    %3251 = vmatpush1.xpose.msra.mxu0 0.0
    %3252 = vmatprep.subr.mxu0 0.0
    %3253 = vmatpush1.xpose.msra.mxu0 0.0
    %3254 = vmatprep.subr.mxu0 0.0
    %3255 = vmatpush1.xpose.msra.mxu0 0.0
    %3256 = vmatprep.subr.mxu0 0.0
    %3257 = vmatpush1.xpose.msra.mxu0 0.0
    %3258 = vmatprep.subr.mxu0 0.0
    %3259 = vmatpush1.xpose.msra.mxu0 0.0
    %3260 = vmatprep.subr.mxu0 0.0
    %3261 = vmatpush1.xpose.msra.mxu0 0.0
    %3262 = vmatprep.subr.mxu0 0.0
    %3263 = vmatpush1.xpose.msra.mxu0 0.0
    %3264 = vmatprep.subr.mxu0 0.0
    %3265 = vmatpush1.xpose.msra.mxu0 0.0
    %3266 = vmatprep.subr.mxu0 0.0
    %3267 = vmatpush1.xpose.msra.mxu0 0.0
    %3268 = vmatprep.subr.mxu0 0.0
    %3269 = vmatpush1.xpose.msra.mxu0 0.0
    %3270 = vmatprep.subr.mxu0 0.0
    %3271 = vmatpush1.xpose.msra.mxu0 0.0
    %3272 = vmatprep.subr.mxu0 0.0
    %3273 = vmatpush1.xpose.msra.mxu0 0.0
    %3274 = vmatprep.subr.mxu0 0.0
    %3275 = vmatpush1.xpose.msra.mxu0 0.0
    %3276 = vmatprep.subr.mxu0 0.0
    %3277 = vmatpush1.xpose.msra.mxu0 0.0
    %3278 = vmatprep.subr.mxu0 0.0
    %3279 = vmatpush1.xpose.msra.mxu0 0.0
    %3280 = vmatprep.subr.mxu0 0.0
    %3281 = vmatpush1.xpose.msra.mxu0 0.0
    %3282 = vmatprep.subr.mxu0 0.0
    %3283 = vmatpush1.xpose.msra.mxu0 0.0
    %3284 = vmatprep.mubr.f32.mxu0 0.0
    %3285 = vmatmul.mubr.f32.gmra.mrb[0].mxu0 %v3216
    %v3286 = vpop.f32.mrb[0].mxu0
    %v3287 = vadd.f32 0.0, %v3286
    %v3288 = vpop.f32.mrb[0].mxu0
    %3289 = vdwg.mxu0
    %v3290 = vsel %vm1032, %v3287, -inf
    %v3291 = vsel %vm1202, %v3290, -inf
    %3292 = vmax.xlane.f32.xlu0 %v3291
    %v3293 = vpop.xlane.xlu0 %3292
    %v3294 = vsub.f32 %v3290, %v3293
    %v3295 = vmul.f32 %v3294, 1.442695
    %v3296 = vpow.pop %v3295
    %v3297 = vsel %vm1202, %v3296, 0.0
    %3298 = vadd.xlane.f32.xlu0 %v3297
    %v3299 = vpop.xlane.xlu0 %3298
    %3300 = vrot.lane.b32.xlu0 %v1250, 32
    %v3301 = vpop.permute.xlu0 %3300
    %v3304 = vsel %vm1202, %v3296, 0
    %3306 = vmatprep.subr.mxu0 0.0
    %3307 = vmatpush1.msra.mxu0 %v3301
    %3308 = vmatprep.subr.mxu0 0.0
    %3309 = vmatpush1.msra.mxu0 0.0
    %3310 = vmatprep.subr.mxu0 0.0
    %3311 = vmatpush1.msra.mxu0 0.0
    %3312 = vmatprep.subr.mxu0 0.0
    %3313 = vmatpush1.msra.mxu0 0.0
    %3314 = vmatprep.subr.mxu0 0.0
    %3315 = vmatpush1.msra.mxu0 0.0
    %3316 = vmatprep.subr.mxu0 0.0
    %3317 = vmatpush1.msra.mxu0 0.0
    %3318 = vmatprep.subr.mxu0 0.0
    %3319 = vmatpush1.msra.mxu0 0.0
    %3320 = vmatprep.subr.mxu0 0.0
    %3321 = vmatpush1.msra.mxu0 0.0
    %3322 = vmatprep.subr.mxu0 0.0
    %3323 = vmatpush1.msra.mxu0 0.0
    %3324 = vmatprep.subr.mxu0 0.0
    %3325 = vmatpush1.msra.mxu0 0.0
    %3326 = vmatprep.subr.mxu0 0.0
    %3327 = vmatpush1.msra.mxu0 0.0
    %3328 = vmatprep.subr.mxu0 0.0
    %3329 = vmatpush1.msra.mxu0 0.0
    %3330 = vmatprep.subr.mxu0 0.0
    %3331 = vmatpush1.msra.mxu0 0.0
    %3332 = vmatprep.subr.mxu0 0.0
    %3333 = vmatpush1.msra.mxu0 0.0
    %3334 = vmatprep.subr.mxu0 0.0
    %3335 = vmatpush1.msra.mxu0 0.0
    %3336 = vmatprep.subr.mxu0 0.0
    %3337 = vmatpush1.msra.mxu0 0.0
    %3338 = vmatprep.subr.mxu0 0.0
    %3339 = vmatpush1.msra.mxu0 0.0
    %3340 = vmatprep.subr.mxu0 0.0
    %3341 = vmatpush1.msra.mxu0 0.0
    %3342 = vmatprep.subr.mxu0 0.0
    %3343 = vmatpush1.msra.mxu0 0.0
    %3344 = vmatprep.subr.mxu0 0.0
    %3345 = vmatpush1.msra.mxu0 0.0
    %3346 = vmatprep.subr.mxu0 0.0
    %3347 = vmatpush1.msra.mxu0 0.0
    %3348 = vmatprep.subr.mxu0 0.0
    %3349 = vmatpush1.msra.mxu0 0.0
    %3350 = vmatprep.subr.mxu0 0.0
    %3351 = vmatpush1.msra.mxu0 0.0
    %3352 = vmatprep.subr.mxu0 0.0
    %3353 = vmatpush1.msra.mxu0 0.0
    %3354 = vmatprep.subr.mxu0 0.0
    %3355 = vmatpush1.msra.mxu0 0.0
    %3356 = vmatprep.subr.mxu0 0.0
    %3357 = vmatpush1.msra.mxu0 0.0
    %3358 = vmatprep.subr.mxu0 0.0
    %3359 = vmatpush1.msra.mxu0 0.0
    %3360 = vmatprep.subr.mxu0 0.0
    %3361 = vmatpush1.msra.mxu0 0.0
    %3362 = vmatprep.subr.mxu0 0.0
    %3363 = vmatpush1.msra.mxu0 0.0
    %3364 = vmatprep.subr.mxu0 0.0
    %3365 = vmatpush1.msra.mxu0 0.0
    %3366 = vmatprep.subr.mxu0 0.0
    %3367 = vmatpush1.msra.mxu0 0.0
    %3368 = vmatprep.subr.mxu0 0.0
    %3369 = vmatpush1.msra.mxu0 0.0
    %3370 = vmatprep.mubr.f32.mxu0 0.0
    %3371 = vmatmul.mubr.f32.gmra.mrb[0].mxu0 %v3304
    %v3372 = vpop.f32.mrb[0].mxu0
    %v3373 = vadd.f32 0.0, %v3372
    %v3374 = vpop.f32.mrb[0].mxu0
    %3375 = vdwg.mxu0
    %v3376 = vrcp.pop %v3299
    %v3377 = vmul.f32 %v3373, %v3376
    %v3379 = vcombine.high %v3377, %v3377
    %v3381 = vunpack.c.l.s4 1966171168
    %v3382 = vunpack.c.0.s8 %v3381
    %v3383 = vlaneseq
    %v3384 = vshrl.u32 %v3383, 7
    %v3385 = vsub.s32 %v3382, %v3384
    %v3386 = vrot.slane %v3377, %v3385
    %v3388 = vunpack.c.l.s4 1966171168
    %v3389 = vunpack.c.0.s8 %v3388
    %v3390 = vlaneseq
    %v3391 = vshrl.u32 %v3390, 7
    %v3392 = vsub.s32 %v3389, %v3391
    %v3393 = vrot.slane %v3379, %v3392
    %v3394 = vcombine.high %v3386, %v3386
    %v3395 = vcombine.high %v3393, %v3393
    %v3397 = vunpack.c.l.s4 1966171168
    %v3398 = vunpack.c.0.s8 %v3397
    %v3399 = vlaneseq
    %v3400 = vshrl.u32 %v3399, 7
    %v3401 = vsub.s32 %v3398, %v3400
    %v3402 = vrot.slane %v3386, %v3401
    %v3404 = vunpack.c.l.s4 1966171168
    %v3405 = vunpack.c.0.s8 %v3404
    %v3406 = vlaneseq
    %v3407 = vshrl.u32 %v3406, 7
    %v3408 = vsub.s32 %v3405, %v3407
    %v3409 = vrot.slane %v3393, %v3408
    %v3411 = vunpack.c.l.s4 1966171168
    %v3412 = vunpack.c.0.s8 %v3411
    %v3413 = vlaneseq
    %v3414 = vshrl.u32 %v3413, 7
    %v3415 = vsub.s32 %v3412, %v3414
    %v3416 = vrot.slane %v3394, %v3415
    %v3418 = vunpack.c.l.s4 1966171168
    %v3419 = vunpack.c.0.s8 %v3418
    %v3420 = vlaneseq
    %v3421 = vshrl.u32 %v3420, 7
    %v3422 = vsub.s32 %v3419, %v3421
    %v3423 = vrot.slane %v3395, %v3422
    %v3424 = vcombine.high %v3402, %v3402
    %v3425 = vcombine.high %v3409, %v3409
    %v3426 = vcombine.high %v3416, %v3416
    %v3427 = vcombine.high %v3423, %v3423
    %v3429 = vunpack.c.l.s4 857870592
    %v3430 = vunpack.c.0.s8 %v3429
    %v3431 = vlaneseq
    %v3432 = vshrl.u32 %v3431, 7
    %v3433 = vsub.s32 %v3430, %v3432
    %v3434 = vrot.slane %v3402, %v3433
    %v3436 = vunpack.c.l.s4 857870592
    %v3437 = vunpack.c.0.s8 %v3436
    %v3438 = vlaneseq
    %v3439 = vshrl.u32 %v3438, 7
    %v3440 = vsub.s32 %v3437, %v3439
    %v3441 = vrot.slane %v3416, %v3440
    %v3443 = vunpack.c.l.s4 857870592
    %v3444 = vunpack.c.0.s8 %v3443
    %v3445 = vlaneseq
    %v3446 = vshrl.u32 %v3445, 7
    %v3447 = vsub.s32 %v3444, %v3446
    %v3448 = vrot.slane %v3424, %v3447
    %v3450 = vunpack.c.l.s4 857870592
    %v3451 = vunpack.c.0.s8 %v3450
    %v3452 = vlaneseq
    %v3453 = vshrl.u32 %v3452, 7
    %v3454 = vsub.s32 %v3451, %v3453
    %v3455 = vrot.slane %v3426, %v3454
    %v3457 = vunpack.c.l.s4 857870592
    %v3458 = vunpack.c.0.s8 %v3457
    %v3459 = vlaneseq
    %v3460 = vshrl.u32 %v3459, 7
    %v3461 = vsub.s32 %v3458, %v3460
    %v3462 = vrot.slane %v3409, %v3461
    %v3464 = vunpack.c.l.s4 857870592
    %v3465 = vunpack.c.0.s8 %v3464
    %v3466 = vlaneseq
    %v3467 = vshrl.u32 %v3466, 7
    %v3468 = vsub.s32 %v3465, %v3467
    %v3469 = vrot.slane %v3423, %v3468
    %v3471 = vunpack.c.l.s4 857870592
    %v3472 = vunpack.c.0.s8 %v3471
    %v3473 = vlaneseq
    %v3474 = vshrl.u32 %v3473, 7
    %v3475 = vsub.s32 %v3472, %v3474
    %v3476 = vrot.slane %v3425, %v3475
    %v3478 = vunpack.c.l.s4 857870592
    %v3479 = vunpack.c.0.s8 %v3478
    %v3480 = vlaneseq
    %v3481 = vshrl.u32 %v3480, 7
    %v3482 = vsub.s32 %v3479, %v3481
    %v3483 = vrot.slane %v3427, %v3482
    %3484 = vrot.lane.b32.xlu0 %v3434, 96
    %v3485 = vpop.permute.xlu0 %3484
    %3486 = vrot.lane.b32.xlu0 %v3441, 96
    %v3487 = vpop.permute.xlu0 %3486
    %3488 = vrot.lane.b32.xlu0 %v3448, 96
    %v3489 = vpop.permute.xlu0 %3488
    %3490 = vrot.lane.b32.xlu0 %v3455, 96
    %v3491 = vpop.permute.xlu0 %3490
    %3492 = vrot.lane.b32.xlu0 %v3462, 96
    %v3493 = vpop.permute.xlu0 %3492
    %3494 = vrot.lane.b32.xlu0 %v3469, 96
    %v3495 = vpop.permute.xlu0 %3494
    %3496 = vrot.lane.b32.xlu0 %v3476, 96
    %v3497 = vpop.permute.xlu0 %3496
    %3498 = vrot.lane.b32.xlu0 %v3483, 96
    %v3499 = vpop.permute.xlu0 %3498
    %vm3508 = vcmask 1041152
    %3509 = vst.msk [vmem:[#allocation2] sm:$0x1] %vm3508, %v3485
    %3510 = vst.msk [vmem:[#allocation2 + $0x4] sm:$0x1] %vm3508, %v3487
    %3511 = vst.msk [vmem:[#allocation2 + $0x8] sm:$0x1] %vm3508, %v3489
    %3512 = vst.msk [vmem:[#allocation2 + $0xc] sm:$0x1] %vm3508, %v3491
    %3513 = vst.msk [vmem:[#allocation2 + $0x10] sm:$0x1] %vm3508, %v3493
    %3514 = vst.msk [vmem:[#allocation2 + $0x14] sm:$0x1] %vm3508, %v3495
    %3515 = vst.msk [vmem:[#allocation2 + $0x18] sm:$0x1] %vm3508, %v3497
    %3516 = vst.msk [vmem:[#allocation2 + $0x1c] sm:$0x1] %vm3508, %v3499
    %3517 = vrot.lane.b32.xlu0 %v1432, 32
    %v3518 = vpop.permute.xlu0 %3517
    %v3519 = vlaneseq
    %v3520 = vshrl.u32 %v3519, 7
    %v3521 = vsub.s32 1, %v3520
    %v3522 = vrot.slane %v3167, %v3521
    %v3523 = vlaneseq
    %v3524 = vshrl.u32 %v3523, 7
    %v3525 = vsub.s32 1, %v3524
    %v3526 = vrot.slane %v3168, %v3525
    %v3527 = vlaneseq
    %v3528 = vshrl.u32 %v3527, 7
    %v3529 = vsub.s32 1, %v3528
    %v3530 = vrot.slane %v3169, %v3529
    %v3531 = vlaneseq
    %v3532 = vshrl.u32 %v3531, 7
    %v3533 = vsub.s32 1, %v3532
    %v3534 = vrot.slane %v3170, %v3533
    %v3535 = vlaneseq
    %v3536 = vshrl.u32 %v3535, 7
    %v3537 = vsub.s32 1, %v3536
    %v3538 = vrot.slane %v3171, %v3537
    %v3539 = vlaneseq
    %v3540 = vshrl.u32 %v3539, 7
    %v3541 = vsub.s32 1, %v3540
    %v3542 = vrot.slane %v3172, %v3541
    %v3543 = vlaneseq
    %v3544 = vshrl.u32 %v3543, 7
    %v3545 = vsub.s32 1, %v3544
    %v3546 = vrot.slane %v3173, %v3545
    %v3547 = vlaneseq
    %v3548 = vshrl.u32 %v3547, 7
    %v3549 = vsub.s32 1, %v3548
    %v3550 = vrot.slane %v3174, %v3549
    %v3551 = vsel %vm1073, %v3526, %v3522
    %v3552 = vsel %vm1075, %v3530, %v3551
    %v3553 = vsel %vm1077, %v3534, %v3552
    %v3554 = vsel %vm1079, %v3538, %v3553
    %v3555 = vsel %vm1081, %v3542, %v3554
    %v3556 = vsel %vm1083, %v3546, %v3555
    %v3557 = vsel %vm1085, %v3550, %v3556
    %v3558 = vsel %vm1126, %v3518, 0
    %v3560 = vsel %vm1126, %v3557, 0
    %3562 = vmatprep.subr.mxu0 0.0
    %3563 = vmatpush1.xpose.msra.mxu0 %v3560
    %3564 = vmatprep.subr.mxu0 0.0
    %3565 = vmatpush1.xpose.msra.mxu0 0.0
    %3566 = vmatprep.subr.mxu0 0.0
    %3567 = vmatpush1.xpose.msra.mxu0 0.0
    %3568 = vmatprep.subr.mxu0 0.0
    %3569 = vmatpush1.xpose.msra.mxu0 0.0
    %3570 = vmatprep.subr.mxu0 0.0
    %3571 = vmatpush1.xpose.msra.mxu0 0.0
    %3572 = vmatprep.subr.mxu0 0.0
    %3573 = vmatpush1.xpose.msra.mxu0 0.0
    %3574 = vmatprep.subr.mxu0 0.0
    %3575 = vmatpush1.xpose.msra.mxu0 0.0
    %3576 = vmatprep.subr.mxu0 0.0
    %3577 = vmatpush1.xpose.msra.mxu0 0.0
    %3578 = vmatprep.subr.mxu0 0.0
    %3579 = vmatpush1.xpose.msra.mxu0 0.0
    %3580 = vmatprep.subr.mxu0 0.0
    %3581 = vmatpush1.xpose.msra.mxu0 0.0
    %3582 = vmatprep.subr.mxu0 0.0
    %3583 = vmatpush1.xpose.msra.mxu0 0.0
    %3584 = vmatprep.subr.mxu0 0.0
    %3585 = vmatpush1.xpose.msra.mxu0 0.0
    %3586 = vmatprep.subr.mxu0 0.0
    %3587 = vmatpush1.xpose.msra.mxu0 0.0
    %3588 = vmatprep.subr.mxu0 0.0
    %3589 = vmatpush1.xpose.msra.mxu0 0.0
    %3590 = vmatprep.subr.mxu0 0.0
    %3591 = vmatpush1.xpose.msra.mxu0 0.0
    %3592 = vmatprep.subr.mxu0 0.0
    %3593 = vmatpush1.xpose.msra.mxu0 0.0
    %3594 = vmatprep.subr.mxu0 0.0
    %3595 = vmatpush1.xpose.msra.mxu0 0.0
    %3596 = vmatprep.subr.mxu0 0.0
    %3597 = vmatpush1.xpose.msra.mxu0 0.0
    %3598 = vmatprep.subr.mxu0 0.0
    %3599 = vmatpush1.xpose.msra.mxu0 0.0
    %3600 = vmatprep.subr.mxu0 0.0
    %3601 = vmatpush1.xpose.msra.mxu0 0.0
    %3602 = vmatprep.subr.mxu0 0.0
    %3603 = vmatpush1.xpose.msra.mxu0 0.0
    %3604 = vmatprep.subr.mxu0 0.0
    %3605 = vmatpush1.xpose.msra.mxu0 0.0
    %3606 = vmatprep.subr.mxu0 0.0
    %3607 = vmatpush1.xpose.msra.mxu0 0.0
    %3608 = vmatprep.subr.mxu0 0.0
    %3609 = vmatpush1.xpose.msra.mxu0 0.0
    %3610 = vmatprep.subr.mxu0 0.0
    %3611 = vmatpush1.xpose.msra.mxu0 0.0
    %3612 = vmatprep.subr.mxu0 0.0
    %3613 = vmatpush1.xpose.msra.mxu0 0.0
    %3614 = vmatprep.subr.mxu0 0.0
    %3615 = vmatpush1.xpose.msra.mxu0 0.0
    %3616 = vmatprep.subr.mxu0 0.0
    %3617 = vmatpush1.xpose.msra.mxu0 0.0
    %3618 = vmatprep.subr.mxu0 0.0
    %3619 = vmatpush1.xpose.msra.mxu0 0.0
    %3620 = vmatprep.subr.mxu0 0.0
    %3621 = vmatpush1.xpose.msra.mxu0 0.0
    %3622 = vmatprep.subr.mxu0 0.0
    %3623 = vmatpush1.xpose.msra.mxu0 0.0
    %3624 = vmatprep.subr.mxu0 0.0
    %3625 = vmatpush1.xpose.msra.mxu0 0.0
    %3626 = vmatprep.mubr.f32.mxu0 0.0
    %3627 = vmatmul.mubr.f32.gmra.mrb[0].mxu0 %v3558
    %v3628 = vpop.f32.mrb[0].mxu0
    %v3629 = vadd.f32 0.0, %v3628
    %v3630 = vpop.f32.mrb[0].mxu0
    %3631 = vdwg.mxu0
    %v3632 = vsel %vm1032, %v3629, -inf
    %v3633 = vsel %vm1202, %v3632, -inf
    %3634 = vmax.xlane.f32.xlu0 %v3633
    %v3635 = vpop.xlane.xlu0 %3634
    %v3636 = vsub.f32 %v3632, %v3635
    %v3637 = vmul.f32 %v3636, 1.442695
    %v3638 = vpow.pop %v3637
    %v3639 = vsel %vm1202, %v3638, 0.0
    %3640 = vadd.xlane.f32.xlu0 %v3639
    %v3641 = vpop.xlane.xlu0 %3640
    %3642 = vrot.lane.b32.xlu0 %v1594, 32
    %v3643 = vpop.permute.xlu0 %3642
    %v3646 = vsel %vm1202, %v3638, 0
    %3648 = vmatprep.subr.mxu0 0.0
    %3649 = vmatpush1.msra.mxu0 %v3643
    %3650 = vmatprep.subr.mxu0 0.0
    %3651 = vmatpush1.msra.mxu0 0.0
    %3652 = vmatprep.subr.mxu0 0.0
    %3653 = vmatpush1.msra.mxu0 0.0
    %3654 = vmatprep.subr.mxu0 0.0
    %3655 = vmatpush1.msra.mxu0 0.0
    %3656 = vmatprep.subr.mxu0 0.0
    %3657 = vmatpush1.msra.mxu0 0.0
    %3658 = vmatprep.subr.mxu0 0.0
    %3659 = vmatpush1.msra.mxu0 0.0
    %3660 = vmatprep.subr.mxu0 0.0
    %3661 = vmatpush1.msra.mxu0 0.0
    %3662 = vmatprep.subr.mxu0 0.0
    %3663 = vmatpush1.msra.mxu0 0.0
    %3664 = vmatprep.subr.mxu0 0.0
    %3665 = vmatpush1.msra.mxu0 0.0
    %3666 = vmatprep.subr.mxu0 0.0
    %3667 = vmatpush1.msra.mxu0 0.0
    %3668 = vmatprep.subr.mxu0 0.0
    %3669 = vmatpush1.msra.mxu0 0.0
    %3670 = vmatprep.subr.mxu0 0.0
    %3671 = vmatpush1.msra.mxu0 0.0
    %3672 = vmatprep.subr.mxu0 0.0
    %3673 = vmatpush1.msra.mxu0 0.0
    %3674 = vmatprep.subr.mxu0 0.0
    %3675 = vmatpush1.msra.mxu0 0.0
    %3676 = vmatprep.subr.mxu0 0.0
    %3677 = vmatpush1.msra.mxu0 0.0
    %3678 = vmatprep.subr.mxu0 0.0
    %3679 = vmatpush1.msra.mxu0 0.0
    %3680 = vmatprep.subr.mxu0 0.0
    %3681 = vmatpush1.msra.mxu0 0.0
    %3682 = vmatprep.subr.mxu0 0.0
    %3683 = vmatpush1.msra.mxu0 0.0
    %3684 = vmatprep.subr.mxu0 0.0
    %3685 = vmatpush1.msra.mxu0 0.0
    %3686 = vmatprep.subr.mxu0 0.0
    %3687 = vmatpush1.msra.mxu0 0.0
    %3688 = vmatprep.subr.mxu0 0.0
    %3689 = vmatpush1.msra.mxu0 0.0
    %3690 = vmatprep.subr.mxu0 0.0
    %3691 = vmatpush1.msra.mxu0 0.0
    %3692 = vmatprep.subr.mxu0 0.0
    %3693 = vmatpush1.msra.mxu0 0.0
    %3694 = vmatprep.subr.mxu0 0.0
    %3695 = vmatpush1.msra.mxu0 0.0
    %3696 = vmatprep.subr.mxu0 0.0
    %3697 = vmatpush1.msra.mxu0 0.0
    %3698 = vmatprep.subr.mxu0 0.0
    %3699 = vmatpush1.msra.mxu0 0.0
    %3700 = vmatprep.subr.mxu0 0.0
    %3701 = vmatpush1.msra.mxu0 0.0
    %3702 = vmatprep.subr.mxu0 0.0
    %3703 = vmatpush1.msra.mxu0 0.0
    %3704 = vmatprep.subr.mxu0 0.0
    %3705 = vmatpush1.msra.mxu0 0.0
    %3706 = vmatprep.subr.mxu0 0.0
    %3707 = vmatpush1.msra.mxu0 0.0
    %3708 = vmatprep.subr.mxu0 0.0
    %3709 = vmatpush1.msra.mxu0 0.0
    %3710 = vmatprep.subr.mxu0 0.0
    %3711 = vmatpush1.msra.mxu0 0.0
    %3712 = vmatprep.mubr.f32.mxu0 0.0
    %3713 = vmatmul.mubr.f32.gmra.mrb[0].mxu0 %v3646
    %v3714 = vpop.f32.mrb[0].mxu0
    %v3715 = vadd.f32 0.0, %v3714
    %v3716 = vpop.f32.mrb[0].mxu0
    %3717 = vdwg.mxu0
    %v3718 = vrcp.pop %v3641
    %v3719 = vmul.f32 %v3715, %v3718
    %v3721 = vcombine.high %v3719, %v3719
    %v3723 = vunpack.c.l.s4 1966171168
    %v3724 = vunpack.c.0.s8 %v3723
    %v3725 = vlaneseq
    %v3726 = vshrl.u32 %v3725, 7
    %v3727 = vsub.s32 %v3724, %v3726
    %v3728 = vrot.slane %v3719, %v3727
    %v3730 = vunpack.c.l.s4 1966171168
    %v3731 = vunpack.c.0.s8 %v3730
    %v3732 = vlaneseq
    %v3733 = vshrl.u32 %v3732, 7
    %v3734 = vsub.s32 %v3731, %v3733
    %v3735 = vrot.slane %v3721, %v3734
    %v3736 = vcombine.high %v3728, %v3728
    %v3737 = vcombine.high %v3735, %v3735
    %v3739 = vunpack.c.l.s4 1966171168
    %v3740 = vunpack.c.0.s8 %v3739
    %v3741 = vlaneseq
    %v3742 = vshrl.u32 %v3741, 7
    %v3743 = vsub.s32 %v3740, %v3742
    %v3744 = vrot.slane %v3728, %v3743
    %v3746 = vunpack.c.l.s4 1966171168
    %v3747 = vunpack.c.0.s8 %v3746
    %v3748 = vlaneseq
    %v3749 = vshrl.u32 %v3748, 7
    %v3750 = vsub.s32 %v3747, %v3749
    %v3751 = vrot.slane %v3735, %v3750
    %v3753 = vunpack.c.l.s4 1966171168
    %v3754 = vunpack.c.0.s8 %v3753
    %v3755 = vlaneseq
    %v3756 = vshrl.u32 %v3755, 7
    %v3757 = vsub.s32 %v3754, %v3756
    %v3758 = vrot.slane %v3736, %v3757
    %v3760 = vunpack.c.l.s4 1966171168
    %v3761 = vunpack.c.0.s8 %v3760
    %v3762 = vlaneseq
    %v3763 = vshrl.u32 %v3762, 7
    %v3764 = vsub.s32 %v3761, %v3763
    %v3765 = vrot.slane %v3737, %v3764
    %v3766 = vcombine.high %v3744, %v3744
    %v3767 = vcombine.high %v3751, %v3751
    %v3768 = vcombine.high %v3758, %v3758
    %v3769 = vcombine.high %v3765, %v3765
    %v3771 = vunpack.c.l.s4 857870592
    %v3772 = vunpack.c.0.s8 %v3771
    %v3773 = vlaneseq
    %v3774 = vshrl.u32 %v3773, 7
    %v3775 = vsub.s32 %v3772, %v3774
    %v3776 = vrot.slane %v3744, %v3775
    %v3778 = vunpack.c.l.s4 857870592
    %v3779 = vunpack.c.0.s8 %v3778
    %v3780 = vlaneseq
    %v3781 = vshrl.u32 %v3780, 7
    %v3782 = vsub.s32 %v3779, %v3781
    %v3783 = vrot.slane %v3758, %v3782
    %v3785 = vunpack.c.l.s4 857870592
    %v3786 = vunpack.c.0.s8 %v3785
    %v3787 = vlaneseq
    %v3788 = vshrl.u32 %v3787, 7
    %v3789 = vsub.s32 %v3786, %v3788
    %v3790 = vrot.slane %v3766, %v3789
    %v3792 = vunpack.c.l.s4 857870592
    %v3793 = vunpack.c.0.s8 %v3792
    %v3794 = vlaneseq
    %v3795 = vshrl.u32 %v3794, 7
    %v3796 = vsub.s32 %v3793, %v3795
    %v3797 = vrot.slane %v3768, %v3796
    %v3799 = vunpack.c.l.s4 857870592
    %v3800 = vunpack.c.0.s8 %v3799
    %v3801 = vlaneseq
    %v3802 = vshrl.u32 %v3801, 7
    %v3803 = vsub.s32 %v3800, %v3802
    %v3804 = vrot.slane %v3751, %v3803
    %v3806 = vunpack.c.l.s4 857870592
    %v3807 = vunpack.c.0.s8 %v3806
    %v3808 = vlaneseq
    %v3809 = vshrl.u32 %v3808, 7
    %v3810 = vsub.s32 %v3807, %v3809
    %v3811 = vrot.slane %v3765, %v3810
    %v3813 = vunpack.c.l.s4 857870592
    %v3814 = vunpack.c.0.s8 %v3813
    %v3815 = vlaneseq
    %v3816 = vshrl.u32 %v3815, 7
    %v3817 = vsub.s32 %v3814, %v3816
    %v3818 = vrot.slane %v3767, %v3817
    %v3820 = vunpack.c.l.s4 857870592
    %v3821 = vunpack.c.0.s8 %v3820
    %v3822 = vlaneseq
    %v3823 = vshrl.u32 %v3822, 7
    %v3824 = vsub.s32 %v3821, %v3823
    %v3825 = vrot.slane %v3769, %v3824
    %3826 = vrot.lane.b32.xlu0 %v3776, 96
    %v3827 = vpop.permute.xlu0 %3826
    %3828 = vrot.lane.b32.xlu0 %v3783, 96
    %v3829 = vpop.permute.xlu0 %3828
    %3830 = vrot.lane.b32.xlu0 %v3790, 96
    %v3831 = vpop.permute.xlu0 %3830
    %3832 = vrot.lane.b32.xlu0 %v3797, 96
    %v3833 = vpop.permute.xlu0 %3832
    %3834 = vrot.lane.b32.xlu0 %v3804, 96
    %v3835 = vpop.permute.xlu0 %3834
    %3836 = vrot.lane.b32.xlu0 %v3811, 96
    %v3837 = vpop.permute.xlu0 %3836
    %3838 = vrot.lane.b32.xlu0 %v3818, 96
    %v3839 = vpop.permute.xlu0 %3838
    %3840 = vrot.lane.b32.xlu0 %v3825, 96
    %v3841 = vpop.permute.xlu0 %3840
    %3850 = vst.msk [vmem:[#allocation2 + $0x1] sm:$0x1] %vm3508, %v3827
    %3851 = vst.msk [vmem:[#allocation2 + $0x5] sm:$0x1] %vm3508, %v3829
    %3852 = vst.msk [vmem:[#allocation2 + $0x9] sm:$0x1] %vm3508, %v3831
    %3853 = vst.msk [vmem:[#allocation2 + $0xd] sm:$0x1] %vm3508, %v3833
    %3854 = vst.msk [vmem:[#allocation2 + $0x11] sm:$0x1] %vm3508, %v3835
    %3855 = vst.msk [vmem:[#allocation2 + $0x15] sm:$0x1] %vm3508, %v3837
    %3856 = vst.msk [vmem:[#allocation2 + $0x19] sm:$0x1] %vm3508, %v3839
    %3857 = vst.msk [vmem:[#allocation2 + $0x1d] sm:$0x1] %vm3508, %v3841
    %v3858 = vrot.slane %v952, 2
    %v3859 = vrot.slane %v953, 2
    %v3860 = vrot.slane %v954, 2
    %v3861 = vrot.slane %v955, 2
    %v3862 = vrot.slane %v1006, 2
    %v3863 = vrot.slane %v1007, 2
    %v3864 = vrot.slane %v1008, 2
    %v3865 = vrot.slane %v1009, 2
    %v3866 = vrot.slane %v952, 6
    %v3867 = vrot.slane %v953, 6
    %v3868 = vrot.slane %v954, 6
    %v3869 = vrot.slane %v955, 6
    %v3870 = vrot.slane %v1006, 6
    %v3871 = vrot.slane %v1007, 6
    %v3872 = vrot.slane %v1008, 6
    %v3873 = vrot.slane %v1009, 6
    %v3874 = vrot.slane %v964, 2
    %v3875 = vrot.slane %v972, 2
    %v3876 = vrot.slane %v971, 2
    %v3877 = vrot.slane %v973, 2
    %v3878 = vrot.slane %v1018, 2
    %v3879 = vrot.slane %v1026, 2
    %v3880 = vrot.slane %v1025, 2
    %v3881 = vrot.slane %v1027, 2
    %v3882 = vlaneseq
    %v3883 = vshrl.u32 %v3882, 7
    %v3884 = vsub.s32 0, %v3883
    %v3885 = vrot.slane %v3858, %v3884
    %v3886 = vlaneseq
    %v3887 = vshrl.u32 %v3886, 7
    %v3888 = vsub.s32 0, %v3887
    %v3889 = vrot.slane %v3859, %v3888
    %v3890 = vlaneseq
    %v3891 = vshrl.u32 %v3890, 7
    %v3892 = vsub.s32 0, %v3891
    %v3893 = vrot.slane %v3860, %v3892
    %v3894 = vlaneseq
    %v3895 = vshrl.u32 %v3894, 7
    %v3896 = vsub.s32 0, %v3895
    %v3897 = vrot.slane %v3861, %v3896
    %v3898 = vlaneseq
    %v3899 = vshrl.u32 %v3898, 7
    %v3900 = vsub.s32 0, %v3899
    %v3901 = vrot.slane %v3862, %v3900
    %v3902 = vlaneseq
    %v3903 = vshrl.u32 %v3902, 7
    %v3904 = vsub.s32 0, %v3903
    %v3905 = vrot.slane %v3863, %v3904
    %v3906 = vlaneseq
    %v3907 = vshrl.u32 %v3906, 7
    %v3908 = vsub.s32 0, %v3907
    %v3909 = vrot.slane %v3864, %v3908
    %v3910 = vlaneseq
    %v3911 = vshrl.u32 %v3910, 7
    %v3912 = vsub.s32 0, %v3911
    %v3913 = vrot.slane %v3865, %v3912
    %v3914 = vsel %vm1073, %v3889, %v3885
    %v3915 = vsel %vm1075, %v3893, %v3914
    %v3916 = vsel %vm1077, %v3897, %v3915
    %v3917 = vsel %vm1079, %v3901, %v3916
    %v3918 = vsel %vm1081, %v3905, %v3917
    %v3919 = vsel %vm1083, %v3909, %v3918
    %v3920 = vsel %vm1085, %v3913, %v3919
    %v3921 = vlaneseq
    %v3922 = vshrl.u32 %v3921, 7
    %v3923 = vsub.s32 0, %v3922
    %v3924 = vrot.slane %v3866, %v3923
    %v3925 = vlaneseq
    %v3926 = vshrl.u32 %v3925, 7
    %v3927 = vsub.s32 0, %v3926
    %v3928 = vrot.slane %v3867, %v3927
    %v3929 = vlaneseq
    %v3930 = vshrl.u32 %v3929, 7
    %v3931 = vsub.s32 0, %v3930
    %v3932 = vrot.slane %v3868, %v3931
    %v3933 = vlaneseq
    %v3934 = vshrl.u32 %v3933, 7
    %v3935 = vsub.s32 0, %v3934
    %v3936 = vrot.slane %v3869, %v3935
    %v3937 = vlaneseq
    %v3938 = vshrl.u32 %v3937, 7
    %v3939 = vsub.s32 0, %v3938
    %v3940 = vrot.slane %v3870, %v3939
    %v3941 = vlaneseq
    %v3942 = vshrl.u32 %v3941, 7
    %v3943 = vsub.s32 0, %v3942
    %v3944 = vrot.slane %v3871, %v3943
    %v3945 = vlaneseq
    %v3946 = vshrl.u32 %v3945, 7
    %v3947 = vsub.s32 0, %v3946
    %v3948 = vrot.slane %v3872, %v3947
    %v3949 = vlaneseq
    %v3950 = vshrl.u32 %v3949, 7
    %v3951 = vsub.s32 0, %v3950
    %v3952 = vrot.slane %v3873, %v3951
    %v3953 = vsel %vm1073, %v3928, %v3924
    %v3954 = vsel %vm1075, %v3932, %v3953
    %v3955 = vsel %vm1077, %v3936, %v3954
    %v3956 = vsel %vm1079, %v3940, %v3955
    %v3957 = vsel %vm1081, %v3944, %v3956
    %v3958 = vsel %vm1083, %v3948, %v3957
    %v3959 = vsel %vm1085, %v3952, %v3958
    %v3960 = vsel %vm1126, %v3920, 0
    %v3962 = vsel %vm1126, %v3959, 0
    %3964 = vmatprep.subr.mxu0 0.0
    %3965 = vmatpush1.xpose.msra.mxu0 %v3962
    %3966 = vmatprep.subr.mxu0 0.0
    %3967 = vmatpush1.xpose.msra.mxu0 0.0
    %3968 = vmatprep.subr.mxu0 0.0
    %3969 = vmatpush1.xpose.msra.mxu0 0.0
    %3970 = vmatprep.subr.mxu0 0.0
    %3971 = vmatpush1.xpose.msra.mxu0 0.0
    %3972 = vmatprep.subr.mxu0 0.0
    %3973 = vmatpush1.xpose.msra.mxu0 0.0
    %3974 = vmatprep.subr.mxu0 0.0
    %3975 = vmatpush1.xpose.msra.mxu0 0.0
    %3976 = vmatprep.subr.mxu0 0.0
    %3977 = vmatpush1.xpose.msra.mxu0 0.0
    %3978 = vmatprep.subr.mxu0 0.0
    %3979 = vmatpush1.xpose.msra.mxu0 0.0
    %3980 = vmatprep.subr.mxu0 0.0
    %3981 = vmatpush1.xpose.msra.mxu0 0.0
    %3982 = vmatprep.subr.mxu0 0.0
    %3983 = vmatpush1.xpose.msra.mxu0 0.0
    %3984 = vmatprep.subr.mxu0 0.0
    %3985 = vmatpush1.xpose.msra.mxu0 0.0
    %3986 = vmatprep.subr.mxu0 0.0
    %3987 = vmatpush1.xpose.msra.mxu0 0.0
    %3988 = vmatprep.subr.mxu0 0.0
    %3989 = vmatpush1.xpose.msra.mxu0 0.0
    %3990 = vmatprep.subr.mxu0 0.0
    %3991 = vmatpush1.xpose.msra.mxu0 0.0
    %3992 = vmatprep.subr.mxu0 0.0
    %3993 = vmatpush1.xpose.msra.mxu0 0.0
    %3994 = vmatprep.subr.mxu0 0.0
    %3995 = vmatpush1.xpose.msra.mxu0 0.0
    %3996 = vmatprep.subr.mxu0 0.0
    %3997 = vmatpush1.xpose.msra.mxu0 0.0
    %3998 = vmatprep.subr.mxu0 0.0
    %3999 = vmatpush1.xpose.msra.mxu0 0.0
    %4000 = vmatprep.subr.mxu0 0.0
    %4001 = vmatpush1.xpose.msra.mxu0 0.0
    %4002 = vmatprep.subr.mxu0 0.0
    %4003 = vmatpush1.xpose.msra.mxu0 0.0
    %4004 = vmatprep.subr.mxu0 0.0
    %4005 = vmatpush1.xpose.msra.mxu0 0.0
    %4006 = vmatprep.subr.mxu0 0.0
    %4007 = vmatpush1.xpose.msra.mxu0 0.0
    %4008 = vmatprep.subr.mxu0 0.0
    %4009 = vmatpush1.xpose.msra.mxu0 0.0
    %4010 = vmatprep.subr.mxu0 0.0
    %4011 = vmatpush1.xpose.msra.mxu0 0.0
    %4012 = vmatprep.subr.mxu0 0.0
    %4013 = vmatpush1.xpose.msra.mxu0 0.0
    %4014 = vmatprep.subr.mxu0 0.0
    %4015 = vmatpush1.xpose.msra.mxu0 0.0
    %4016 = vmatprep.subr.mxu0 0.0
    %4017 = vmatpush1.xpose.msra.mxu0 0.0
    %4018 = vmatprep.subr.mxu0 0.0
    %4019 = vmatpush1.xpose.msra.mxu0 0.0
    %4020 = vmatprep.subr.mxu0 0.0
    %4021 = vmatpush1.xpose.msra.mxu0 0.0
    %4022 = vmatprep.subr.mxu0 0.0
    %4023 = vmatpush1.xpose.msra.mxu0 0.0
    %4024 = vmatprep.subr.mxu0 0.0
    %4025 = vmatpush1.xpose.msra.mxu0 0.0
    %4026 = vmatprep.subr.mxu0 0.0
    %4027 = vmatpush1.xpose.msra.mxu0 0.0
    %4028 = vmatprep.mubr.f32.mxu0 0.0
    %4029 = vmatmul.mubr.f32.gmra.mrb[0].mxu0 %v3960
    %v4030 = vpop.f32.mrb[0].mxu0
    %v4031 = vadd.f32 0.0, %v4030
    %v4032 = vpop.f32.mrb[0].mxu0
    %4033 = vdwg.mxu0
    %v4034 = vsel %vm1032, %v4031, -inf
    %v4035 = vsel %vm1202, %v4034, -inf
    %4036 = vmax.xlane.f32.xlu0 %v4035
    %v4037 = vpop.xlane.xlu0 %4036
    %v4038 = vsub.f32 %v4034, %v4037
    %v4039 = vmul.f32 %v4038, 1.442695
    %v4040 = vpow.pop %v4039
    %v4041 = vsel %vm1202, %v4040, 0.0
    %4042 = vadd.xlane.f32.xlu0 %v4041
    %v4043 = vpop.xlane.xlu0 %4042
    %v4044 = vlaneseq
    %v4045 = vshrl.u32 %v4044, 7
    %v4046 = vsub.s32 0, %v4045
    %v4047 = vrot.slane %v3874, %v4046
    %v4048 = vlaneseq
    %v4049 = vshrl.u32 %v4048, 7
    %v4050 = vsub.s32 0, %v4049
    %v4051 = vrot.slane %v3875, %v4050
    %v4052 = vlaneseq
    %v4053 = vshrl.u32 %v4052, 7
    %v4054 = vsub.s32 0, %v4053
    %v4055 = vrot.slane %v3876, %v4054
    %v4056 = vlaneseq
    %v4057 = vshrl.u32 %v4056, 7
    %v4058 = vsub.s32 0, %v4057
    %v4059 = vrot.slane %v3877, %v4058
    %v4060 = vlaneseq
    %v4061 = vshrl.u32 %v4060, 7
    %v4062 = vsub.s32 0, %v4061
    %v4063 = vrot.slane %v3878, %v4062
    %v4064 = vlaneseq
    %v4065 = vshrl.u32 %v4064, 7
    %v4066 = vsub.s32 0, %v4065
    %v4067 = vrot.slane %v3879, %v4066
    %v4068 = vlaneseq
    %v4069 = vshrl.u32 %v4068, 7
    %v4070 = vsub.s32 0, %v4069
    %v4071 = vrot.slane %v3880, %v4070
    %v4072 = vlaneseq
    %v4073 = vshrl.u32 %v4072, 7
    %v4074 = vsub.s32 0, %v4073
    %v4075 = vrot.slane %v3881, %v4074
    %v4076 = vsel %vm1073, %v4051, %v4047
    %v4077 = vsel %vm1075, %v4055, %v4076
    %v4078 = vsel %vm1077, %v4059, %v4077
    %v4079 = vsel %vm1079, %v4063, %v4078
    %v4080 = vsel %vm1081, %v4067, %v4079
    %v4081 = vsel %vm1083, %v4071, %v4080
    %v4082 = vsel %vm1085, %v4075, %v4081
    %v4085 = vsel %vm1202, %v4040, 0
    %4087 = vmatprep.subr.mxu0 0.0
    %4088 = vmatpush1.msra.mxu0 %v4082
    %4089 = vmatprep.subr.mxu0 0.0
    %4090 = vmatpush1.msra.mxu0 0.0
    %4091 = vmatprep.subr.mxu0 0.0
    %4092 = vmatpush1.msra.mxu0 0.0
    %4093 = vmatprep.subr.mxu0 0.0
    %4094 = vmatpush1.msra.mxu0 0.0
    %4095 = vmatprep.subr.mxu0 0.0
    %4096 = vmatpush1.msra.mxu0 0.0
    %4097 = vmatprep.subr.mxu0 0.0
    %4098 = vmatpush1.msra.mxu0 0.0
    %4099 = vmatprep.subr.mxu0 0.0
    %4100 = vmatpush1.msra.mxu0 0.0
    %4101 = vmatprep.subr.mxu0 0.0
    %4102 = vmatpush1.msra.mxu0 0.0
    %4103 = vmatprep.subr.mxu0 0.0
    %4104 = vmatpush1.msra.mxu0 0.0
    %4105 = vmatprep.subr.mxu0 0.0
    %4106 = vmatpush1.msra.mxu0 0.0
    %4107 = vmatprep.subr.mxu0 0.0
    %4108 = vmatpush1.msra.mxu0 0.0
    %4109 = vmatprep.subr.mxu0 0.0
    %4110 = vmatpush1.msra.mxu0 0.0
    %4111 = vmatprep.subr.mxu0 0.0
    %4112 = vmatpush1.msra.mxu0 0.0
    %4113 = vmatprep.subr.mxu0 0.0
    %4114 = vmatpush1.msra.mxu0 0.0
    %4115 = vmatprep.subr.mxu0 0.0
    %4116 = vmatpush1.msra.mxu0 0.0
    %4117 = vmatprep.subr.mxu0 0.0
    %4118 = vmatpush1.msra.mxu0 0.0
    %4119 = vmatprep.subr.mxu0 0.0
    %4120 = vmatpush1.msra.mxu0 0.0
    %4121 = vmatprep.subr.mxu0 0.0
    %4122 = vmatpush1.msra.mxu0 0.0
    %4123 = vmatprep.subr.mxu0 0.0
    %4124 = vmatpush1.msra.mxu0 0.0
    %4125 = vmatprep.subr.mxu0 0.0
    %4126 = vmatpush1.msra.mxu0 0.0
    %4127 = vmatprep.subr.mxu0 0.0
    %4128 = vmatpush1.msra.mxu0 0.0
    %4129 = vmatprep.subr.mxu0 0.0
    %4130 = vmatpush1.msra.mxu0 0.0
    %4131 = vmatprep.subr.mxu0 0.0
    %4132 = vmatpush1.msra.mxu0 0.0
    %4133 = vmatprep.subr.mxu0 0.0
    %4134 = vmatpush1.msra.mxu0 0.0
    %4135 = vmatprep.subr.mxu0 0.0
    %4136 = vmatpush1.msra.mxu0 0.0
    %4137 = vmatprep.subr.mxu0 0.0
    %4138 = vmatpush1.msra.mxu0 0.0
    %4139 = vmatprep.subr.mxu0 0.0
    %4140 = vmatpush1.msra.mxu0 0.0
    %4141 = vmatprep.subr.mxu0 0.0
    %4142 = vmatpush1.msra.mxu0 0.0
    %4143 = vmatprep.subr.mxu0 0.0
    %4144 = vmatpush1.msra.mxu0 0.0
    %4145 = vmatprep.subr.mxu0 0.0
    %4146 = vmatpush1.msra.mxu0 0.0
    %4147 = vmatprep.subr.mxu0 0.0
    %4148 = vmatpush1.msra.mxu0 0.0
    %4149 = vmatprep.subr.mxu0 0.0
    %4150 = vmatpush1.msra.mxu0 0.0
    %4151 = vmatprep.mubr.f32.mxu0 0.0
    %4152 = vmatmul.mubr.f32.gmra.mrb[0].mxu0 %v4085
    %v4153 = vpop.f32.mrb[0].mxu0
    %v4154 = vadd.f32 0.0, %v4153
    %v4155 = vpop.f32.mrb[0].mxu0
    %4156 = vdwg.mxu0
    %v4157 = vrcp.pop %v4043
    %v4158 = vmul.f32 %v4154, %v4157
    %v4160 = vcombine.high %v4158, %v4158
    %v4162 = vunpack.c.l.s4 1966171168
    %v4163 = vunpack.c.0.s8 %v4162
    %v4164 = vlaneseq
    %v4165 = vshrl.u32 %v4164, 7
    %v4166 = vsub.s32 %v4163, %v4165
    %v4167 = vrot.slane %v4158, %v4166
    %v4169 = vunpack.c.l.s4 1966171168
    %v4170 = vunpack.c.0.s8 %v4169
    %v4171 = vlaneseq
    %v4172 = vshrl.u32 %v4171, 7
    %v4173 = vsub.s32 %v4170, %v4172
    %v4174 = vrot.slane %v4160, %v4173
    %v4175 = vcombine.high %v4167, %v4167
    %v4176 = vcombine.high %v4174, %v4174
    %v4178 = vunpack.c.l.s4 1966171168
    %v4179 = vunpack.c.0.s8 %v4178
    %v4180 = vlaneseq
    %v4181 = vshrl.u32 %v4180, 7
    %v4182 = vsub.s32 %v4179, %v4181
    %v4183 = vrot.slane %v4167, %v4182
    %v4185 = vunpack.c.l.s4 1966171168
    %v4186 = vunpack.c.0.s8 %v4185
    %v4187 = vlaneseq
    %v4188 = vshrl.u32 %v4187, 7
    %v4189 = vsub.s32 %v4186, %v4188
    %v4190 = vrot.slane %v4174, %v4189
    %v4192 = vunpack.c.l.s4 1966171168
    %v4193 = vunpack.c.0.s8 %v4192
    %v4194 = vlaneseq
    %v4195 = vshrl.u32 %v4194, 7
    %v4196 = vsub.s32 %v4193, %v4195
    %v4197 = vrot.slane %v4175, %v4196
    %v4199 = vunpack.c.l.s4 1966171168
    %v4200 = vunpack.c.0.s8 %v4199
    %v4201 = vlaneseq
    %v4202 = vshrl.u32 %v4201, 7
    %v4203 = vsub.s32 %v4200, %v4202
    %v4204 = vrot.slane %v4176, %v4203
    %v4205 = vcombine.high %v4183, %v4183
    %v4206 = vcombine.high %v4190, %v4190
    %v4207 = vcombine.high %v4197, %v4197
    %v4208 = vcombine.high %v4204, %v4204
    %4217 = vst.msk [vmem:[#allocation2 + $0x2] sm:$0x1] %vm1385, %v4183
    %4218 = vst.msk [vmem:[#allocation2 + $0x6] sm:$0x1] %vm1385, %v4197
    %4219 = vst.msk [vmem:[#allocation2 + $0xa] sm:$0x1] %vm1385, %v4205
    %4220 = vst.msk [vmem:[#allocation2 + $0xe] sm:$0x1] %vm1385, %v4207
    %4221 = vst.msk [vmem:[#allocation2 + $0x12] sm:$0x1] %vm1385, %v4190
    %4222 = vst.msk [vmem:[#allocation2 + $0x16] sm:$0x1] %vm1385, %v4204
    %4223 = vst.msk [vmem:[#allocation2 + $0x1a] sm:$0x1] %vm1385, %v4206
    %4224 = vst.msk [vmem:[#allocation2 + $0x1e] sm:$0x1] %vm1385, %v4208
    %v4225 = vlaneseq
    %v4226 = vshrl.u32 %v4225, 7
    %v4227 = vsub.s32 1, %v4226
    %v4228 = vrot.slane %v3858, %v4227
    %v4229 = vlaneseq
    %v4230 = vshrl.u32 %v4229, 7
    %v4231 = vsub.s32 1, %v4230
    %v4232 = vrot.slane %v3859, %v4231
    %v4233 = vlaneseq
    %v4234 = vshrl.u32 %v4233, 7
    %v4235 = vsub.s32 1, %v4234
    %v4236 = vrot.slane %v3860, %v4235
    %v4237 = vlaneseq
    %v4238 = vshrl.u32 %v4237, 7
    %v4239 = vsub.s32 1, %v4238
    %v4240 = vrot.slane %v3861, %v4239
    %v4241 = vlaneseq
    %v4242 = vshrl.u32 %v4241, 7
    %v4243 = vsub.s32 1, %v4242
    %v4244 = vrot.slane %v3862, %v4243
    %v4245 = vlaneseq
    %v4246 = vshrl.u32 %v4245, 7
    %v4247 = vsub.s32 1, %v4246
    %v4248 = vrot.slane %v3863, %v4247
    %v4249 = vlaneseq
    %v4250 = vshrl.u32 %v4249, 7
    %v4251 = vsub.s32 1, %v4250
    %v4252 = vrot.slane %v3864, %v4251
    %v4253 = vlaneseq
    %v4254 = vshrl.u32 %v4253, 7
    %v4255 = vsub.s32 1, %v4254
    %v4256 = vrot.slane %v3865, %v4255
    %v4257 = vsel %vm1073, %v4232, %v4228
    %v4258 = vsel %vm1075, %v4236, %v4257
    %v4259 = vsel %vm1077, %v4240, %v4258
    %v4260 = vsel %vm1079, %v4244, %v4259
    %v4261 = vsel %vm1081, %v4248, %v4260
    %v4262 = vsel %vm1083, %v4252, %v4261
    %v4263 = vsel %vm1085, %v4256, %v4262
    %v4264 = vlaneseq
    %v4265 = vshrl.u32 %v4264, 7
    %v4266 = vsub.s32 1, %v4265
    %v4267 = vrot.slane %v3866, %v4266
    %v4268 = vlaneseq
    %v4269 = vshrl.u32 %v4268, 7
    %v4270 = vsub.s32 1, %v4269
    %v4271 = vrot.slane %v3867, %v4270
    %v4272 = vlaneseq
    %v4273 = vshrl.u32 %v4272, 7
    %v4274 = vsub.s32 1, %v4273
    %v4275 = vrot.slane %v3868, %v4274
    %v4276 = vlaneseq
    %v4277 = vshrl.u32 %v4276, 7
    %v4278 = vsub.s32 1, %v4277
    %v4279 = vrot.slane %v3869, %v4278
    %v4280 = vlaneseq
    %v4281 = vshrl.u32 %v4280, 7
    %v4282 = vsub.s32 1, %v4281
    %v4283 = vrot.slane %v3870, %v4282
    %v4284 = vlaneseq
    %v4285 = vshrl.u32 %v4284, 7
    %v4286 = vsub.s32 1, %v4285
    %v4287 = vrot.slane %v3871, %v4286
    %v4288 = vlaneseq
    %v4289 = vshrl.u32 %v4288, 7
    %v4290 = vsub.s32 1, %v4289
    %v4291 = vrot.slane %v3872, %v4290
    %v4292 = vlaneseq
    %v4293 = vshrl.u32 %v4292, 7
    %v4294 = vsub.s32 1, %v4293
    %v4295 = vrot.slane %v3873, %v4294
    %v4296 = vsel %vm1073, %v4271, %v4267
    %v4297 = vsel %vm1075, %v4275, %v4296
    %v4298 = vsel %vm1077, %v4279, %v4297
    %v4299 = vsel %vm1079, %v4283, %v4298
    %v4300 = vsel %vm1081, %v4287, %v4299
    %v4301 = vsel %vm1083, %v4291, %v4300
    %v4302 = vsel %vm1085, %v4295, %v4301
    %v4303 = vsel %vm1126, %v4263, 0
    %v4305 = vsel %vm1126, %v4302, 0
    %4307 = vmatprep.subr.mxu0 0.0
    %4308 = vmatpush1.xpose.msra.mxu0 %v4305
    %4309 = vmatprep.subr.mxu0 0.0
    %4310 = vmatpush1.xpose.msra.mxu0 0.0
    %4311 = vmatprep.subr.mxu0 0.0
    %4312 = vmatpush1.xpose.msra.mxu0 0.0
    %4313 = vmatprep.subr.mxu0 0.0
    %4314 = vmatpush1.xpose.msra.mxu0 0.0
    %4315 = vmatprep.subr.mxu0 0.0
    %4316 = vmatpush1.xpose.msra.mxu0 0.0
    %4317 = vmatprep.subr.mxu0 0.0
    %4318 = vmatpush1.xpose.msra.mxu0 0.0
    %4319 = vmatprep.subr.mxu0 0.0
    %4320 = vmatpush1.xpose.msra.mxu0 0.0
    %4321 = vmatprep.subr.mxu0 0.0
    %4322 = vmatpush1.xpose.msra.mxu0 0.0
    %4323 = vmatprep.subr.mxu0 0.0
    %4324 = vmatpush1.xpose.msra.mxu0 0.0
    %4325 = vmatprep.subr.mxu0 0.0
    %4326 = vmatpush1.xpose.msra.mxu0 0.0
    %4327 = vmatprep.subr.mxu0 0.0
    %4328 = vmatpush1.xpose.msra.mxu0 0.0
    %4329 = vmatprep.subr.mxu0 0.0
    %4330 = vmatpush1.xpose.msra.mxu0 0.0
    %4331 = vmatprep.subr.mxu0 0.0
    %4332 = vmatpush1.xpose.msra.mxu0 0.0
    %4333 = vmatprep.subr.mxu0 0.0
    %4334 = vmatpush1.xpose.msra.mxu0 0.0
    %4335 = vmatprep.subr.mxu0 0.0
    %4336 = vmatpush1.xpose.msra.mxu0 0.0
    %4337 = vmatprep.subr.mxu0 0.0
    %4338 = vmatpush1.xpose.msra.mxu0 0.0
    %4339 = vmatprep.subr.mxu0 0.0
    %4340 = vmatpush1.xpose.msra.mxu0 0.0
    %4341 = vmatprep.subr.mxu0 0.0
    %4342 = vmatpush1.xpose.msra.mxu0 0.0
    %4343 = vmatprep.subr.mxu0 0.0
    %4344 = vmatpush1.xpose.msra.mxu0 0.0
    %4345 = vmatprep.subr.mxu0 0.0
    %4346 = vmatpush1.xpose.msra.mxu0 0.0
    %4347 = vmatprep.subr.mxu0 0.0
    %4348 = vmatpush1.xpose.msra.mxu0 0.0
    %4349 = vmatprep.subr.mxu0 0.0
    %4350 = vmatpush1.xpose.msra.mxu0 0.0
    %4351 = vmatprep.subr.mxu0 0.0
    %4352 = vmatpush1.xpose.msra.mxu0 0.0
    %4353 = vmatprep.subr.mxu0 0.0
    %4354 = vmatpush1.xpose.msra.mxu0 0.0
    %4355 = vmatprep.subr.mxu0 0.0
    %4356 = vmatpush1.xpose.msra.mxu0 0.0
    %4357 = vmatprep.subr.mxu0 0.0
    %4358 = vmatpush1.xpose.msra.mxu0 0.0
    %4359 = vmatprep.subr.mxu0 0.0
    %4360 = vmatpush1.xpose.msra.mxu0 0.0
    %4361 = vmatprep.subr.mxu0 0.0
    %4362 = vmatpush1.xpose.msra.mxu0 0.0
    %4363 = vmatprep.subr.mxu0 0.0
    %4364 = vmatpush1.xpose.msra.mxu0 0.0
    %4365 = vmatprep.subr.mxu0 0.0
    %4366 = vmatpush1.xpose.msra.mxu0 0.0
    %4367 = vmatprep.subr.mxu0 0.0
    %4368 = vmatpush1.xpose.msra.mxu0 0.0
    %4369 = vmatprep.subr.mxu0 0.0
    %4370 = vmatpush1.xpose.msra.mxu0 0.0
    %4371 = vmatprep.mubr.f32.mxu0 0.0
    %4372 = vmatmul.mubr.f32.gmra.mrb[0].mxu0 %v4303
    %v4373 = vpop.f32.mrb[0].mxu0
    %v4374 = vadd.f32 0.0, %v4373
    %v4375 = vpop.f32.mrb[0].mxu0
    %4376 = vdwg.mxu0
    %v4377 = vsel %vm1032, %v4374, -inf
    %v4378 = vsel %vm1202, %v4377, -inf
    %4379 = vmax.xlane.f32.xlu0 %v4378
    %v4380 = vpop.xlane.xlu0 %4379
    %v4381 = vsub.f32 %v4377, %v4380
    %v4382 = vmul.f32 %v4381, 1.442695
    %v4383 = vpow.pop %v4382
    %v4384 = vsel %vm1202, %v4383, 0.0
    %4385 = vadd.xlane.f32.xlu0 %v4384
    %v4386 = vpop.xlane.xlu0 %4385
    %v4387 = vlaneseq
    %v4388 = vshrl.u32 %v4387, 7
    %v4389 = vsub.s32 1, %v4388
    %v4390 = vrot.slane %v3874, %v4389
    %v4391 = vlaneseq
    %v4392 = vshrl.u32 %v4391, 7
    %v4393 = vsub.s32 1, %v4392
    %v4394 = vrot.slane %v3875, %v4393
    %v4395 = vlaneseq
    %v4396 = vshrl.u32 %v4395, 7
    %v4397 = vsub.s32 1, %v4396
    %v4398 = vrot.slane %v3876, %v4397
    %v4399 = vlaneseq
    %v4400 = vshrl.u32 %v4399, 7
    %v4401 = vsub.s32 1, %v4400
    %v4402 = vrot.slane %v3877, %v4401
    %v4403 = vlaneseq
    %v4404 = vshrl.u32 %v4403, 7
    %v4405 = vsub.s32 1, %v4404
    %v4406 = vrot.slane %v3878, %v4405
    %v4407 = vlaneseq
    %v4408 = vshrl.u32 %v4407, 7
    %v4409 = vsub.s32 1, %v4408
    %v4410 = vrot.slane %v3879, %v4409
    %v4411 = vlaneseq
    %v4412 = vshrl.u32 %v4411, 7
    %v4413 = vsub.s32 1, %v4412
    %v4414 = vrot.slane %v3880, %v4413
    %v4415 = vlaneseq
    %v4416 = vshrl.u32 %v4415, 7
    %v4417 = vsub.s32 1, %v4416
    %v4418 = vrot.slane %v3881, %v4417
    %v4419 = vsel %vm1073, %v4394, %v4390
    %v4420 = vsel %vm1075, %v4398, %v4419
    %v4421 = vsel %vm1077, %v4402, %v4420
    %v4422 = vsel %vm1079, %v4406, %v4421
    %v4423 = vsel %vm1081, %v4410, %v4422
    %v4424 = vsel %vm1083, %v4414, %v4423
    %v4425 = vsel %vm1085, %v4418, %v4424
    %v4428 = vsel %vm1202, %v4383, 0
    %4430 = vmatprep.subr.mxu0 0.0
    %4431 = vmatpush1.msra.mxu0 %v4425
    %4432 = vmatprep.subr.mxu0 0.0
    %4433 = vmatpush1.msra.mxu0 0.0
    %4434 = vmatprep.subr.mxu0 0.0
    %4435 = vmatpush1.msra.mxu0 0.0
    %4436 = vmatprep.subr.mxu0 0.0
    %4437 = vmatpush1.msra.mxu0 0.0
    %4438 = vmatprep.subr.mxu0 0.0
    %4439 = vmatpush1.msra.mxu0 0.0
    %4440 = vmatprep.subr.mxu0 0.0
    %4441 = vmatpush1.msra.mxu0 0.0
    %4442 = vmatprep.subr.mxu0 0.0
    %4443 = vmatpush1.msra.mxu0 0.0
    %4444 = vmatprep.subr.mxu0 0.0
    %4445 = vmatpush1.msra.mxu0 0.0
    %4446 = vmatprep.subr.mxu0 0.0
    %4447 = vmatpush1.msra.mxu0 0.0
    %4448 = vmatprep.subr.mxu0 0.0
    %4449 = vmatpush1.msra.mxu0 0.0
    %4450 = vmatprep.subr.mxu0 0.0
    %4451 = vmatpush1.msra.mxu0 0.0
    %4452 = vmatprep.subr.mxu0 0.0
    %4453 = vmatpush1.msra.mxu0 0.0
    %4454 = vmatprep.subr.mxu0 0.0
    %4455 = vmatpush1.msra.mxu0 0.0
    %4456 = vmatprep.subr.mxu0 0.0
    %4457 = vmatpush1.msra.mxu0 0.0
    %4458 = vmatprep.subr.mxu0 0.0
    %4459 = vmatpush1.msra.mxu0 0.0
    %4460 = vmatprep.subr.mxu0 0.0
    %4461 = vmatpush1.msra.mxu0 0.0
    %4462 = vmatprep.subr.mxu0 0.0
    %4463 = vmatpush1.msra.mxu0 0.0
    %4464 = vmatprep.subr.mxu0 0.0
    %4465 = vmatpush1.msra.mxu0 0.0
    %4466 = vmatprep.subr.mxu0 0.0
    %4467 = vmatpush1.msra.mxu0 0.0
    %4468 = vmatprep.subr.mxu0 0.0
    %4469 = vmatpush1.msra.mxu0 0.0
    %4470 = vmatprep.subr.mxu0 0.0
    %4471 = vmatpush1.msra.mxu0 0.0
    %4472 = vmatprep.subr.mxu0 0.0
    %4473 = vmatpush1.msra.mxu0 0.0
    %4474 = vmatprep.subr.mxu0 0.0
    %4475 = vmatpush1.msra.mxu0 0.0
    %4476 = vmatprep.subr.mxu0 0.0
    %4477 = vmatpush1.msra.mxu0 0.0
    %4478 = vmatprep.subr.mxu0 0.0
    %4479 = vmatpush1.msra.mxu0 0.0
    %4480 = vmatprep.subr.mxu0 0.0
    %4481 = vmatpush1.msra.mxu0 0.0
    %4482 = vmatprep.subr.mxu0 0.0
    %4483 = vmatpush1.msra.mxu0 0.0
    %4484 = vmatprep.subr.mxu0 0.0
    %4485 = vmatpush1.msra.mxu0 0.0
    %4486 = vmatprep.subr.mxu0 0.0
    %4487 = vmatpush1.msra.mxu0 0.0
    %4488 = vmatprep.subr.mxu0 0.0
    %4489 = vmatpush1.msra.mxu0 0.0
    %4490 = vmatprep.subr.mxu0 0.0
    %4491 = vmatpush1.msra.mxu0 0.0
    %4492 = vmatprep.subr.mxu0 0.0
    %4493 = vmatpush1.msra.mxu0 0.0
    %4494 = vmatprep.mubr.f32.mxu0 0.0
    %4495 = vmatmul.mubr.f32.gmra.mrb[0].mxu0 %v4428
    %v4496 = vpop.f32.mrb[0].mxu0
    %v4497 = vadd.f32 0.0, %v4496
    %v4498 = vpop.f32.mrb[0].mxu0
    %4499 = vdwg.mxu0
    %v4500 = vrcp.pop %v4386
    %v4501 = vmul.f32 %v4497, %v4500
    %v4503 = vcombine.high %v4501, %v4501
    %v4505 = vunpack.c.l.s4 1966171168
    %v4506 = vunpack.c.0.s8 %v4505
    %v4507 = vlaneseq
    %v4508 = vshrl.u32 %v4507, 7
    %v4509 = vsub.s32 %v4506, %v4508
    %v4510 = vrot.slane %v4501, %v4509
    %v4512 = vunpack.c.l.s4 1966171168
    %v4513 = vunpack.c.0.s8 %v4512
    %v4514 = vlaneseq
    %v4515 = vshrl.u32 %v4514, 7
    %v4516 = vsub.s32 %v4513, %v4515
    %v4517 = vrot.slane %v4503, %v4516
    %v4518 = vcombine.high %v4510, %v4510
    %v4519 = vcombine.high %v4517, %v4517
    %v4521 = vunpack.c.l.s4 1966171168
    %v4522 = vunpack.c.0.s8 %v4521
    %v4523 = vlaneseq
    %v4524 = vshrl.u32 %v4523, 7
    %v4525 = vsub.s32 %v4522, %v4524
    %v4526 = vrot.slane %v4510, %v4525
    %v4528 = vunpack.c.l.s4 1966171168
    %v4529 = vunpack.c.0.s8 %v4528
    %v4530 = vlaneseq
    %v4531 = vshrl.u32 %v4530, 7
    %v4532 = vsub.s32 %v4529, %v4531
    %v4533 = vrot.slane %v4517, %v4532
    %v4535 = vunpack.c.l.s4 1966171168
    %v4536 = vunpack.c.0.s8 %v4535
    %v4537 = vlaneseq
    %v4538 = vshrl.u32 %v4537, 7
    %v4539 = vsub.s32 %v4536, %v4538
    %v4540 = vrot.slane %v4518, %v4539
    %v4542 = vunpack.c.l.s4 1966171168
    %v4543 = vunpack.c.0.s8 %v4542
    %v4544 = vlaneseq
    %v4545 = vshrl.u32 %v4544, 7
    %v4546 = vsub.s32 %v4543, %v4545
    %v4547 = vrot.slane %v4519, %v4546
    %v4548 = vcombine.high %v4526, %v4526
    %v4549 = vcombine.high %v4533, %v4533
    %v4550 = vcombine.high %v4540, %v4540
    %v4551 = vcombine.high %v4547, %v4547
    %4560 = vst.msk [vmem:[#allocation2 + $0x3] sm:$0x1] %vm1385, %v4526
    %4561 = vst.msk [vmem:[#allocation2 + $0x7] sm:$0x1] %vm1385, %v4540
    %4562 = vst.msk [vmem:[#allocation2 + $0xb] sm:$0x1] %vm1385, %v4548
    %4563 = vst.msk [vmem:[#allocation2 + $0xf] sm:$0x1] %vm1385, %v4550
    %4564 = vst.msk [vmem:[#allocation2 + $0x13] sm:$0x1] %vm1385, %v4533
    %4565 = vst.msk [vmem:[#allocation2 + $0x17] sm:$0x1] %vm1385, %v4547
    %4566 = vst.msk [vmem:[#allocation2 + $0x1b] sm:$0x1] %vm1385, %v4549
    %4567 = vst.msk [vmem:[#allocation2 + $0x1f] sm:$0x1] %vm1385, %v4551
    %v4568 = vrot.slane %v1738, 2
    %v4569 = vrot.slane %v1740, 2
    %v4570 = vrot.slane %v1742, 2
    %v4571 = vrot.slane %v1744, 2
    %v4572 = vrot.slane %v1746, 2
    %v4573 = vrot.slane %v1748, 2
    %v4574 = vrot.slane %v1750, 2
    %v4575 = vrot.slane %v1752, 2
    %v4576 = vrot.slane %v1738, 6
    %v4577 = vrot.slane %v1740, 6
    %v4578 = vrot.slane %v1742, 6
    %v4579 = vrot.slane %v1744, 6
    %v4580 = vrot.slane %v1746, 6
    %v4581 = vrot.slane %v1748, 6
    %v4582 = vrot.slane %v1750, 6
    %v4583 = vrot.slane %v1752, 6
    %4584 = vrot.lane.b32.xlu0 %v964, 96
    %v4585 = vpop.permute.xlu0 %4584
    %4586 = vrot.lane.b32.xlu0 %v972, 96
    %v4587 = vpop.permute.xlu0 %4586
    %4588 = vrot.lane.b32.xlu0 %v971, 96
    %v4589 = vpop.permute.xlu0 %4588
    %4590 = vrot.lane.b32.xlu0 %v973, 96
    %v4591 = vpop.permute.xlu0 %4590
    %4592 = vrot.lane.b32.xlu0 %v1018, 96
    %v4593 = vpop.permute.xlu0 %4592
    %4594 = vrot.lane.b32.xlu0 %v1026, 96
    %v4595 = vpop.permute.xlu0 %4594
    %4596 = vrot.lane.b32.xlu0 %v1025, 96
    %v4597 = vpop.permute.xlu0 %4596
    %4598 = vrot.lane.b32.xlu0 %v1027, 96
    %v4599 = vpop.permute.xlu0 %4598
    %v4600 = vrot.slane %v4585, 2
    %v4601 = vrot.slane %v4587, 2
    %v4602 = vrot.slane %v4589, 2
    %v4603 = vrot.slane %v4591, 2
    %v4604 = vrot.slane %v4593, 2
    %v4605 = vrot.slane %v4595, 2
    %v4606 = vrot.slane %v4597, 2
    %v4607 = vrot.slane %v4599, 2
    %v4608 = vlaneseq
    %v4609 = vshrl.u32 %v4608, 7
    %v4610 = vsub.s32 0, %v4609
    %v4611 = vrot.slane %v4568, %v4610
    %v4612 = vlaneseq
    %v4613 = vshrl.u32 %v4612, 7
    %v4614 = vsub.s32 0, %v4613
    %v4615 = vrot.slane %v4569, %v4614
    %v4616 = vlaneseq
    %v4617 = vshrl.u32 %v4616, 7
    %v4618 = vsub.s32 0, %v4617
    %v4619 = vrot.slane %v4570, %v4618
    %v4620 = vlaneseq
    %v4621 = vshrl.u32 %v4620, 7
    %v4622 = vsub.s32 0, %v4621
    %v4623 = vrot.slane %v4571, %v4622
    %v4624 = vlaneseq
    %v4625 = vshrl.u32 %v4624, 7
    %v4626 = vsub.s32 0, %v4625
    %v4627 = vrot.slane %v4572, %v4626
    %v4628 = vlaneseq
    %v4629 = vshrl.u32 %v4628, 7
    %v4630 = vsub.s32 0, %v4629
    %v4631 = vrot.slane %v4573, %v4630
    %v4632 = vlaneseq
    %v4633 = vshrl.u32 %v4632, 7
    %v4634 = vsub.s32 0, %v4633
    %v4635 = vrot.slane %v4574, %v4634
    %v4636 = vlaneseq
    %v4637 = vshrl.u32 %v4636, 7
    %v4638 = vsub.s32 0, %v4637
    %v4639 = vrot.slane %v4575, %v4638
    %v4640 = vsel %vm1073, %v4615, %v4611
    %v4641 = vsel %vm1075, %v4619, %v4640
    %v4642 = vsel %vm1077, %v4623, %v4641
    %v4643 = vsel %vm1079, %v4627, %v4642
    %v4644 = vsel %vm1081, %v4631, %v4643
    %v4645 = vsel %vm1083, %v4635, %v4644
    %v4646 = vsel %vm1085, %v4639, %v4645
    %v4647 = vlaneseq
    %v4648 = vshrl.u32 %v4647, 7
    %v4649 = vsub.s32 0, %v4648
    %v4650 = vrot.slane %v4576, %v4649
    %v4651 = vlaneseq
    %v4652 = vshrl.u32 %v4651, 7
    %v4653 = vsub.s32 0, %v4652
    %v4654 = vrot.slane %v4577, %v4653
    %v4655 = vlaneseq
    %v4656 = vshrl.u32 %v4655, 7
    %v4657 = vsub.s32 0, %v4656
    %v4658 = vrot.slane %v4578, %v4657
    %v4659 = vlaneseq
    %v4660 = vshrl.u32 %v4659, 7
    %v4661 = vsub.s32 0, %v4660
    %v4662 = vrot.slane %v4579, %v4661
    %v4663 = vlaneseq
    %v4664 = vshrl.u32 %v4663, 7
    %v4665 = vsub.s32 0, %v4664
    %v4666 = vrot.slane %v4580, %v4665
    %v4667 = vlaneseq
    %v4668 = vshrl.u32 %v4667, 7
    %v4669 = vsub.s32 0, %v4668
    %v4670 = vrot.slane %v4581, %v4669
    %v4671 = vlaneseq
    %v4672 = vshrl.u32 %v4671, 7
    %v4673 = vsub.s32 0, %v4672
    %v4674 = vrot.slane %v4582, %v4673
    %v4675 = vlaneseq
    %v4676 = vshrl.u32 %v4675, 7
    %v4677 = vsub.s32 0, %v4676
    %v4678 = vrot.slane %v4583, %v4677
    %v4679 = vsel %vm1073, %v4654, %v4650
    %v4680 = vsel %vm1075, %v4658, %v4679
    %v4681 = vsel %vm1077, %v4662, %v4680
    %v4682 = vsel %vm1079, %v4666, %v4681
    %v4683 = vsel %vm1081, %v4670, %v4682
    %v4684 = vsel %vm1083, %v4674, %v4683
    %v4685 = vsel %vm1085, %v4678, %v4684
    %v4686 = vsel %vm1126, %v4646, 0
    %v4688 = vsel %vm1126, %v4685, 0
    %4690 = vmatprep.subr.mxu0 0.0
    %4691 = vmatpush1.xpose.msra.mxu0 %v4688
    %4692 = vmatprep.subr.mxu0 0.0
    %4693 = vmatpush1.xpose.msra.mxu0 0.0
    %4694 = vmatprep.subr.mxu0 0.0
    %4695 = vmatpush1.xpose.msra.mxu0 0.0
    %4696 = vmatprep.subr.mxu0 0.0
    %4697 = vmatpush1.xpose.msra.mxu0 0.0
    %4698 = vmatprep.subr.mxu0 0.0
    %4699 = vmatpush1.xpose.msra.mxu0 0.0
    %4700 = vmatprep.subr.mxu0 0.0
    %4701 = vmatpush1.xpose.msra.mxu0 0.0
    %4702 = vmatprep.subr.mxu0 0.0
    %4703 = vmatpush1.xpose.msra.mxu0 0.0
    %4704 = vmatprep.subr.mxu0 0.0
    %4705 = vmatpush1.xpose.msra.mxu0 0.0
    %4706 = vmatprep.subr.mxu0 0.0
    %4707 = vmatpush1.xpose.msra.mxu0 0.0
    %4708 = vmatprep.subr.mxu0 0.0
    %4709 = vmatpush1.xpose.msra.mxu0 0.0
    %4710 = vmatprep.subr.mxu0 0.0
    %4711 = vmatpush1.xpose.msra.mxu0 0.0
    %4712 = vmatprep.subr.mxu0 0.0
    %4713 = vmatpush1.xpose.msra.mxu0 0.0
    %4714 = vmatprep.subr.mxu0 0.0
    %4715 = vmatpush1.xpose.msra.mxu0 0.0
    %4716 = vmatprep.subr.mxu0 0.0
    %4717 = vmatpush1.xpose.msra.mxu0 0.0
    %4718 = vmatprep.subr.mxu0 0.0
    %4719 = vmatpush1.xpose.msra.mxu0 0.0
    %4720 = vmatprep.subr.mxu0 0.0
    %4721 = vmatpush1.xpose.msra.mxu0 0.0
    %4722 = vmatprep.subr.mxu0 0.0
    %4723 = vmatpush1.xpose.msra.mxu0 0.0
    %4724 = vmatprep.subr.mxu0 0.0
    %4725 = vmatpush1.xpose.msra.mxu0 0.0
    %4726 = vmatprep.subr.mxu0 0.0
    %4727 = vmatpush1.xpose.msra.mxu0 0.0
    %4728 = vmatprep.subr.mxu0 0.0
    %4729 = vmatpush1.xpose.msra.mxu0 0.0
    %4730 = vmatprep.subr.mxu0 0.0
    %4731 = vmatpush1.xpose.msra.mxu0 0.0
    %4732 = vmatprep.subr.mxu0 0.0
    %4733 = vmatpush1.xpose.msra.mxu0 0.0
    %4734 = vmatprep.subr.mxu0 0.0
    %4735 = vmatpush1.xpose.msra.mxu0 0.0
    %4736 = vmatprep.subr.mxu0 0.0
    %4737 = vmatpush1.xpose.msra.mxu0 0.0
    %4738 = vmatprep.subr.mxu0 0.0
    %4739 = vmatpush1.xpose.msra.mxu0 0.0
    %4740 = vmatprep.subr.mxu0 0.0
    %4741 = vmatpush1.xpose.msra.mxu0 0.0
    %4742 = vmatprep.subr.mxu0 0.0
    %4743 = vmatpush1.xpose.msra.mxu0 0.0
    %4744 = vmatprep.subr.mxu0 0.0
    %4745 = vmatpush1.xpose.msra.mxu0 0.0
    %4746 = vmatprep.subr.mxu0 0.0
    %4747 = vmatpush1.xpose.msra.mxu0 0.0
    %4748 = vmatprep.subr.mxu0 0.0
    %4749 = vmatpush1.xpose.msra.mxu0 0.0
    %4750 = vmatprep.subr.mxu0 0.0
    %4751 = vmatpush1.xpose.msra.mxu0 0.0
    %4752 = vmatprep.subr.mxu0 0.0
    %4753 = vmatpush1.xpose.msra.mxu0 0.0
    %4754 = vmatprep.mubr.f32.mxu0 0.0
    %4755 = vmatmul.mubr.f32.gmra.mrb[0].mxu0 %v4686
    %v4756 = vpop.f32.mrb[0].mxu0
    %v4757 = vadd.f32 0.0, %v4756
    %v4758 = vpop.f32.mrb[0].mxu0
    %4759 = vdwg.mxu0
    %v4760 = vsel %vm1032, %v4757, -inf
    %v4761 = vsel %vm1202, %v4760, -inf
    %4762 = vmax.xlane.f32.xlu0 %v4761
    %v4763 = vpop.xlane.xlu0 %4762
    %v4764 = vsub.f32 %v4760, %v4763
    %v4765 = vmul.f32 %v4764, 1.442695
    %v4766 = vpow.pop %v4765
    %v4767 = vsel %vm1202, %v4766, 0.0
    %4768 = vadd.xlane.f32.xlu0 %v4767
    %v4769 = vpop.xlane.xlu0 %4768
    %v4770 = vlaneseq
    %v4771 = vshrl.u32 %v4770, 7
    %v4772 = vsub.s32 0, %v4771
    %v4773 = vrot.slane %v4600, %v4772
    %v4774 = vlaneseq
    %v4775 = vshrl.u32 %v4774, 7
    %v4776 = vsub.s32 0, %v4775
    %v4777 = vrot.slane %v4601, %v4776
    %v4778 = vlaneseq
    %v4779 = vshrl.u32 %v4778, 7
    %v4780 = vsub.s32 0, %v4779
    %v4781 = vrot.slane %v4602, %v4780
    %v4782 = vlaneseq
    %v4783 = vshrl.u32 %v4782, 7
    %v4784 = vsub.s32 0, %v4783
    %v4785 = vrot.slane %v4603, %v4784
    %v4786 = vlaneseq
    %v4787 = vshrl.u32 %v4786, 7
    %v4788 = vsub.s32 0, %v4787
    %v4789 = vrot.slane %v4604, %v4788
    %v4790 = vlaneseq
    %v4791 = vshrl.u32 %v4790, 7
    %v4792 = vsub.s32 0, %v4791
    %v4793 = vrot.slane %v4605, %v4792
    %v4794 = vlaneseq
    %v4795 = vshrl.u32 %v4794, 7
    %v4796 = vsub.s32 0, %v4795
    %v4797 = vrot.slane %v4606, %v4796
    %v4798 = vlaneseq
    %v4799 = vshrl.u32 %v4798, 7
    %v4800 = vsub.s32 0, %v4799
    %v4801 = vrot.slane %v4607, %v4800
    %v4802 = vsel %vm1073, %v4777, %v4773
    %v4803 = vsel %vm1075, %v4781, %v4802
    %v4804 = vsel %vm1077, %v4785, %v4803
    %v4805 = vsel %vm1079, %v4789, %v4804
    %v4806 = vsel %vm1081, %v4793, %v4805
    %v4807 = vsel %vm1083, %v4797, %v4806
    %v4808 = vsel %vm1085, %v4801, %v4807
    %v4811 = vsel %vm1202, %v4766, 0
    %4813 = vmatprep.subr.mxu0 0.0
    %4814 = vmatpush1.msra.mxu0 %v4808
    %4815 = vmatprep.subr.mxu0 0.0
    %4816 = vmatpush1.msra.mxu0 0.0
    %4817 = vmatprep.subr.mxu0 0.0
    %4818 = vmatpush1.msra.mxu0 0.0
    %4819 = vmatprep.subr.mxu0 0.0
    %4820 = vmatpush1.msra.mxu0 0.0
    %4821 = vmatprep.subr.mxu0 0.0
    %4822 = vmatpush1.msra.mxu0 0.0
    %4823 = vmatprep.subr.mxu0 0.0
    %4824 = vmatpush1.msra.mxu0 0.0
    %4825 = vmatprep.subr.mxu0 0.0
    %4826 = vmatpush1.msra.mxu0 0.0
    %4827 = vmatprep.subr.mxu0 0.0
    %4828 = vmatpush1.msra.mxu0 0.0
    %4829 = vmatprep.subr.mxu0 0.0
    %4830 = vmatpush1.msra.mxu0 0.0
    %4831 = vmatprep.subr.mxu0 0.0
    %4832 = vmatpush1.msra.mxu0 0.0
    %4833 = vmatprep.subr.mxu0 0.0
    %4834 = vmatpush1.msra.mxu0 0.0
    %4835 = vmatprep.subr.mxu0 0.0
    %4836 = vmatpush1.msra.mxu0 0.0
    %4837 = vmatprep.subr.mxu0 0.0
    %4838 = vmatpush1.msra.mxu0 0.0
    %4839 = vmatprep.subr.mxu0 0.0
    %4840 = vmatpush1.msra.mxu0 0.0
    %4841 = vmatprep.subr.mxu0 0.0
    %4842 = vmatpush1.msra.mxu0 0.0
    %4843 = vmatprep.subr.mxu0 0.0
    %4844 = vmatpush1.msra.mxu0 0.0
    %4845 = vmatprep.subr.mxu0 0.0
    %4846 = vmatpush1.msra.mxu0 0.0
    %4847 = vmatprep.subr.mxu0 0.0
    %4848 = vmatpush1.msra.mxu0 0.0
    %4849 = vmatprep.subr.mxu0 0.0
    %4850 = vmatpush1.msra.mxu0 0.0
    %4851 = vmatprep.subr.mxu0 0.0
    %4852 = vmatpush1.msra.mxu0 0.0
    %4853 = vmatprep.subr.mxu0 0.0
    %4854 = vmatpush1.msra.mxu0 0.0
    %4855 = vmatprep.subr.mxu0 0.0
    %4856 = vmatpush1.msra.mxu0 0.0
    %4857 = vmatprep.subr.mxu0 0.0
    %4858 = vmatpush1.msra.mxu0 0.0
    %4859 = vmatprep.subr.mxu0 0.0
    %4860 = vmatpush1.msra.mxu0 0.0
    %4861 = vmatprep.subr.mxu0 0.0
    %4862 = vmatpush1.msra.mxu0 0.0
    %4863 = vmatprep.subr.mxu0 0.0
    %4864 = vmatpush1.msra.mxu0 0.0
    %4865 = vmatprep.subr.mxu0 0.0
    %4866 = vmatpush1.msra.mxu0 0.0
    %4867 = vmatprep.subr.mxu0 0.0
    %4868 = vmatpush1.msra.mxu0 0.0
    %4869 = vmatprep.subr.mxu0 0.0
    %4870 = vmatpush1.msra.mxu0 0.0
    %4871 = vmatprep.subr.mxu0 0.0
    %4872 = vmatpush1.msra.mxu0 0.0
    %4873 = vmatprep.subr.mxu0 0.0
    %4874 = vmatpush1.msra.mxu0 0.0
    %4875 = vmatprep.subr.mxu0 0.0
    %4876 = vmatpush1.msra.mxu0 0.0
    %4877 = vmatprep.mubr.f32.mxu0 0.0
    %4878 = vmatmul.mubr.f32.gmra.mrb[0].mxu0 %v4811
    %v4879 = vpop.f32.mrb[0].mxu0
    %v4880 = vadd.f32 0.0, %v4879
    %v4881 = vpop.f32.mrb[0].mxu0
    %4882 = vdwg.mxu0
    %v4883 = vrcp.pop %v4769
    %v4884 = vmul.f32 %v4880, %v4883
    %v4886 = vcombine.high %v4884, %v4884
    %v4888 = vunpack.c.l.s4 1966171168
    %v4889 = vunpack.c.0.s8 %v4888
    %v4890 = vlaneseq
    %v4891 = vshrl.u32 %v4890, 7
    %v4892 = vsub.s32 %v4889, %v4891
    %v4893 = vrot.slane %v4884, %v4892
    %v4895 = vunpack.c.l.s4 1966171168
    %v4896 = vunpack.c.0.s8 %v4895
    %v4897 = vlaneseq
    %v4898 = vshrl.u32 %v4897, 7
    %v4899 = vsub.s32 %v4896, %v4898
    %v4900 = vrot.slane %v4886, %v4899
    %v4901 = vcombine.high %v4893, %v4893
    %v4902 = vcombine.high %v4900, %v4900
    %v4904 = vunpack.c.l.s4 1966171168
    %v4905 = vunpack.c.0.s8 %v4904
    %v4906 = vlaneseq
    %v4907 = vshrl.u32 %v4906, 7
    %v4908 = vsub.s32 %v4905, %v4907
    %v4909 = vrot.slane %v4893, %v4908
    %v4911 = vunpack.c.l.s4 1966171168
    %v4912 = vunpack.c.0.s8 %v4911
    %v4913 = vlaneseq
    %v4914 = vshrl.u32 %v4913, 7
    %v4915 = vsub.s32 %v4912, %v4914
    %v4916 = vrot.slane %v4900, %v4915
    %v4918 = vunpack.c.l.s4 1966171168
    %v4919 = vunpack.c.0.s8 %v4918
    %v4920 = vlaneseq
    %v4921 = vshrl.u32 %v4920, 7
    %v4922 = vsub.s32 %v4919, %v4921
    %v4923 = vrot.slane %v4901, %v4922
    %v4925 = vunpack.c.l.s4 1966171168
    %v4926 = vunpack.c.0.s8 %v4925
    %v4927 = vlaneseq
    %v4928 = vshrl.u32 %v4927, 7
    %v4929 = vsub.s32 %v4926, %v4928
    %v4930 = vrot.slane %v4902, %v4929
    %v4931 = vcombine.high %v4909, %v4909
    %v4932 = vcombine.high %v4916, %v4916
    %v4933 = vcombine.high %v4923, %v4923
    %v4934 = vcombine.high %v4930, %v4930
    %v4936 = vunpack.c.l.s4 857870592
    %v4937 = vunpack.c.0.s8 %v4936
    %v4938 = vlaneseq
    %v4939 = vshrl.u32 %v4938, 7
    %v4940 = vsub.s32 %v4937, %v4939
    %v4941 = vrot.slane %v4909, %v4940
    %v4943 = vunpack.c.l.s4 857870592
    %v4944 = vunpack.c.0.s8 %v4943
    %v4945 = vlaneseq
    %v4946 = vshrl.u32 %v4945, 7
    %v4947 = vsub.s32 %v4944, %v4946
    %v4948 = vrot.slane %v4923, %v4947
    %v4950 = vunpack.c.l.s4 857870592
    %v4951 = vunpack.c.0.s8 %v4950
    %v4952 = vlaneseq
    %v4953 = vshrl.u32 %v4952, 7
    %v4954 = vsub.s32 %v4951, %v4953
    %v4955 = vrot.slane %v4931, %v4954
    %v4957 = vunpack.c.l.s4 857870592
    %v4958 = vunpack.c.0.s8 %v4957
    %v4959 = vlaneseq
    %v4960 = vshrl.u32 %v4959, 7
    %v4961 = vsub.s32 %v4958, %v4960
    %v4962 = vrot.slane %v4933, %v4961
    %v4964 = vunpack.c.l.s4 857870592
    %v4965 = vunpack.c.0.s8 %v4964
    %v4966 = vlaneseq
    %v4967 = vshrl.u32 %v4966, 7
    %v4968 = vsub.s32 %v4965, %v4967
    %v4969 = vrot.slane %v4916, %v4968
    %v4971 = vunpack.c.l.s4 857870592
    %v4972 = vunpack.c.0.s8 %v4971
    %v4973 = vlaneseq
    %v4974 = vshrl.u32 %v4973, 7
    %v4975 = vsub.s32 %v4972, %v4974
    %v4976 = vrot.slane %v4930, %v4975
    %v4978 = vunpack.c.l.s4 857870592
    %v4979 = vunpack.c.0.s8 %v4978
    %v4980 = vlaneseq
    %v4981 = vshrl.u32 %v4980, 7
    %v4982 = vsub.s32 %v4979, %v4981
    %v4983 = vrot.slane %v4932, %v4982
    %v4985 = vunpack.c.l.s4 857870592
    %v4986 = vunpack.c.0.s8 %v4985
    %v4987 = vlaneseq
    %v4988 = vshrl.u32 %v4987, 7
    %v4989 = vsub.s32 %v4986, %v4988
    %v4990 = vrot.slane %v4934, %v4989
    %4991 = vrot.lane.b32.xlu0 %v4941, 32
    %v4992 = vpop.permute.xlu0 %4991
    %4993 = vrot.lane.b32.xlu0 %v4948, 32
    %v4994 = vpop.permute.xlu0 %4993
    %4995 = vrot.lane.b32.xlu0 %v4955, 32
    %v4996 = vpop.permute.xlu0 %4995
    %4997 = vrot.lane.b32.xlu0 %v4962, 32
    %v4998 = vpop.permute.xlu0 %4997
    %4999 = vrot.lane.b32.xlu0 %v4969, 32
    %v5000 = vpop.permute.xlu0 %4999
    %5001 = vrot.lane.b32.xlu0 %v4976, 32
    %v5002 = vpop.permute.xlu0 %5001
    %5003 = vrot.lane.b32.xlu0 %v4983, 32
    %v5004 = vpop.permute.xlu0 %5003
    %5005 = vrot.lane.b32.xlu0 %v4990, 32
    %v5006 = vpop.permute.xlu0 %5005
    %5015 = vst.msk [vmem:[#allocation2 + $0x2] sm:$0x1] %vm2094, %v4992
    %5016 = vst.msk [vmem:[#allocation2 + $0x6] sm:$0x1] %vm2094, %v4994
    %5017 = vst.msk [vmem:[#allocation2 + $0xa] sm:$0x1] %vm2094, %v4996
    %5018 = vst.msk [vmem:[#allocation2 + $0xe] sm:$0x1] %vm2094, %v4998
    %5019 = vst.msk [vmem:[#allocation2 + $0x12] sm:$0x1] %vm2094, %v5000
    %5020 = vst.msk [vmem:[#allocation2 + $0x16] sm:$0x1] %vm2094, %v5002
    %5021 = vst.msk [vmem:[#allocation2 + $0x1a] sm:$0x1] %vm2094, %v5004
    %5022 = vst.msk [vmem:[#allocation2 + $0x1e] sm:$0x1] %vm2094, %v5006
    %v5023 = vlaneseq
    %v5024 = vshrl.u32 %v5023, 7
    %v5025 = vsub.s32 1, %v5024
    %v5026 = vrot.slane %v4568, %v5025
    %v5027 = vlaneseq
    %v5028 = vshrl.u32 %v5027, 7
    %v5029 = vsub.s32 1, %v5028
    %v5030 = vrot.slane %v4569, %v5029
    %v5031 = vlaneseq
    %v5032 = vshrl.u32 %v5031, 7
    %v5033 = vsub.s32 1, %v5032
    %v5034 = vrot.slane %v4570, %v5033
    %v5035 = vlaneseq
    %v5036 = vshrl.u32 %v5035, 7
    %v5037 = vsub.s32 1, %v5036
    %v5038 = vrot.slane %v4571, %v5037
    %v5039 = vlaneseq
    %v5040 = vshrl.u32 %v5039, 7
    %v5041 = vsub.s32 1, %v5040
    %v5042 = vrot.slane %v4572, %v5041
    %v5043 = vlaneseq
    %v5044 = vshrl.u32 %v5043, 7
    %v5045 = vsub.s32 1, %v5044
    %v5046 = vrot.slane %v4573, %v5045
    %v5047 = vlaneseq
    %v5048 = vshrl.u32 %v5047, 7
    %v5049 = vsub.s32 1, %v5048
    %v5050 = vrot.slane %v4574, %v5049
    %v5051 = vlaneseq
    %v5052 = vshrl.u32 %v5051, 7
    %v5053 = vsub.s32 1, %v5052
    %v5054 = vrot.slane %v4575, %v5053
    %v5055 = vsel %vm1073, %v5030, %v5026
    %v5056 = vsel %vm1075, %v5034, %v5055
    %v5057 = vsel %vm1077, %v5038, %v5056
    %v5058 = vsel %vm1079, %v5042, %v5057
    %v5059 = vsel %vm1081, %v5046, %v5058
    %v5060 = vsel %vm1083, %v5050, %v5059
    %v5061 = vsel %vm1085, %v5054, %v5060
    %v5062 = vlaneseq
    %v5063 = vshrl.u32 %v5062, 7
    %v5064 = vsub.s32 1, %v5063
    %v5065 = vrot.slane %v4576, %v5064
    %v5066 = vlaneseq
    %v5067 = vshrl.u32 %v5066, 7
    %v5068 = vsub.s32 1, %v5067
    %v5069 = vrot.slane %v4577, %v5068
    %v5070 = vlaneseq
    %v5071 = vshrl.u32 %v5070, 7
    %v5072 = vsub.s32 1, %v5071
    %v5073 = vrot.slane %v4578, %v5072
    %v5074 = vlaneseq
    %v5075 = vshrl.u32 %v5074, 7
    %v5076 = vsub.s32 1, %v5075
    %v5077 = vrot.slane %v4579, %v5076
    %v5078 = vlaneseq
    %v5079 = vshrl.u32 %v5078, 7
    %v5080 = vsub.s32 1, %v5079
    %v5081 = vrot.slane %v4580, %v5080
    %v5082 = vlaneseq
    %v5083 = vshrl.u32 %v5082, 7
    %v5084 = vsub.s32 1, %v5083
    %v5085 = vrot.slane %v4581, %v5084
    %v5086 = vlaneseq
    %v5087 = vshrl.u32 %v5086, 7
    %v5088 = vsub.s32 1, %v5087
    %v5089 = vrot.slane %v4582, %v5088
    %v5090 = vlaneseq
    %v5091 = vshrl.u32 %v5090, 7
    %v5092 = vsub.s32 1, %v5091
    %v5093 = vrot.slane %v4583, %v5092
    %v5094 = vsel %vm1073, %v5069, %v5065
    %v5095 = vsel %vm1075, %v5073, %v5094
    %v5096 = vsel %vm1077, %v5077, %v5095
    %v5097 = vsel %vm1079, %v5081, %v5096
    %v5098 = vsel %vm1081, %v5085, %v5097
    %v5099 = vsel %vm1083, %v5089, %v5098
    %v5100 = vsel %vm1085, %v5093, %v5099
    %v5101 = vsel %vm1126, %v5061, 0
    %v5103 = vsel %vm1126, %v5100, 0
    %5105 = vmatprep.subr.mxu0 0.0
    %5106 = vmatpush1.xpose.msra.mxu0 %v5103
    %5107 = vmatprep.subr.mxu0 0.0
    %5108 = vmatpush1.xpose.msra.mxu0 0.0
    %5109 = vmatprep.subr.mxu0 0.0
    %5110 = vmatpush1.xpose.msra.mxu0 0.0
    %5111 = vmatprep.subr.mxu0 0.0
    %5112 = vmatpush1.xpose.msra.mxu0 0.0
    %5113 = vmatprep.subr.mxu0 0.0
    %5114 = vmatpush1.xpose.msra.mxu0 0.0
    %5115 = vmatprep.subr.mxu0 0.0
    %5116 = vmatpush1.xpose.msra.mxu0 0.0
    %5117 = vmatprep.subr.mxu0 0.0
    %5118 = vmatpush1.xpose.msra.mxu0 0.0
    %5119 = vmatprep.subr.mxu0 0.0
    %5120 = vmatpush1.xpose.msra.mxu0 0.0
    %5121 = vmatprep.subr.mxu0 0.0
    %5122 = vmatpush1.xpose.msra.mxu0 0.0
    %5123 = vmatprep.subr.mxu0 0.0
    %5124 = vmatpush1.xpose.msra.mxu0 0.0
    %5125 = vmatprep.subr.mxu0 0.0
    %5126 = vmatpush1.xpose.msra.mxu0 0.0
    %5127 = vmatprep.subr.mxu0 0.0
    %5128 = vmatpush1.xpose.msra.mxu0 0.0
    %5129 = vmatprep.subr.mxu0 0.0
    %5130 = vmatpush1.xpose.msra.mxu0 0.0
    %5131 = vmatprep.subr.mxu0 0.0
    %5132 = vmatpush1.xpose.msra.mxu0 0.0
    %5133 = vmatprep.subr.mxu0 0.0
    %5134 = vmatpush1.xpose.msra.mxu0 0.0
    %5135 = vmatprep.subr.mxu0 0.0
    %5136 = vmatpush1.xpose.msra.mxu0 0.0
    %5137 = vmatprep.subr.mxu0 0.0
    %5138 = vmatpush1.xpose.msra.mxu0 0.0
    %5139 = vmatprep.subr.mxu0 0.0
    %5140 = vmatpush1.xpose.msra.mxu0 0.0
    %5141 = vmatprep.subr.mxu0 0.0
    %5142 = vmatpush1.xpose.msra.mxu0 0.0
    %5143 = vmatprep.subr.mxu0 0.0
    %5144 = vmatpush1.xpose.msra.mxu0 0.0
    %5145 = vmatprep.subr.mxu0 0.0
    %5146 = vmatpush1.xpose.msra.mxu0 0.0
    %5147 = vmatprep.subr.mxu0 0.0
    %5148 = vmatpush1.xpose.msra.mxu0 0.0
    %5149 = vmatprep.subr.mxu0 0.0
    %5150 = vmatpush1.xpose.msra.mxu0 0.0
    %5151 = vmatprep.subr.mxu0 0.0
    %5152 = vmatpush1.xpose.msra.mxu0 0.0
    %5153 = vmatprep.subr.mxu0 0.0
    %5154 = vmatpush1.xpose.msra.mxu0 0.0
    %5155 = vmatprep.subr.mxu0 0.0
    %5156 = vmatpush1.xpose.msra.mxu0 0.0
    %5157 = vmatprep.subr.mxu0 0.0
    %5158 = vmatpush1.xpose.msra.mxu0 0.0
    %5159 = vmatprep.subr.mxu0 0.0
    %5160 = vmatpush1.xpose.msra.mxu0 0.0
    %5161 = vmatprep.subr.mxu0 0.0
    %5162 = vmatpush1.xpose.msra.mxu0 0.0
    %5163 = vmatprep.subr.mxu0 0.0
    %5164 = vmatpush1.xpose.msra.mxu0 0.0
    %5165 = vmatprep.subr.mxu0 0.0
    %5166 = vmatpush1.xpose.msra.mxu0 0.0
    %5167 = vmatprep.subr.mxu0 0.0
    %5168 = vmatpush1.xpose.msra.mxu0 0.0
    %5169 = vmatprep.mubr.f32.mxu0 0.0
    %5170 = vmatmul.mubr.f32.gmra.mrb[0].mxu0 %v5101
    %v5171 = vpop.f32.mrb[0].mxu0
    %v5172 = vadd.f32 0.0, %v5171
    %v5173 = vpop.f32.mrb[0].mxu0
    %5174 = vdwg.mxu0
    %v5175 = vsel %vm1032, %v5172, -inf
    %v5176 = vsel %vm1202, %v5175, -inf
    %5177 = vmax.xlane.f32.xlu0 %v5176
    %v5178 = vpop.xlane.xlu0 %5177
    %v5179 = vsub.f32 %v5175, %v5178
    %v5180 = vmul.f32 %v5179, 1.442695
    %v5181 = vpow.pop %v5180
    %v5182 = vsel %vm1202, %v5181, 0.0
    %5183 = vadd.xlane.f32.xlu0 %v5182
    %v5184 = vpop.xlane.xlu0 %5183
    %v5185 = vlaneseq
    %v5186 = vshrl.u32 %v5185, 7
    %v5187 = vsub.s32 1, %v5186
    %v5188 = vrot.slane %v4600, %v5187
    %v5189 = vlaneseq
    %v5190 = vshrl.u32 %v5189, 7
    %v5191 = vsub.s32 1, %v5190
    %v5192 = vrot.slane %v4601, %v5191
    %v5193 = vlaneseq
    %v5194 = vshrl.u32 %v5193, 7
    %v5195 = vsub.s32 1, %v5194
    %v5196 = vrot.slane %v4602, %v5195
    %v5197 = vlaneseq
    %v5198 = vshrl.u32 %v5197, 7
    %v5199 = vsub.s32 1, %v5198
    %v5200 = vrot.slane %v4603, %v5199
    %v5201 = vlaneseq
    %v5202 = vshrl.u32 %v5201, 7
    %v5203 = vsub.s32 1, %v5202
    %v5204 = vrot.slane %v4604, %v5203
    %v5205 = vlaneseq
    %v5206 = vshrl.u32 %v5205, 7
    %v5207 = vsub.s32 1, %v5206
    %v5208 = vrot.slane %v4605, %v5207
    %v5209 = vlaneseq
    %v5210 = vshrl.u32 %v5209, 7
    %v5211 = vsub.s32 1, %v5210
    %v5212 = vrot.slane %v4606, %v5211
    %v5213 = vlaneseq
    %v5214 = vshrl.u32 %v5213, 7
    %v5215 = vsub.s32 1, %v5214
    %v5216 = vrot.slane %v4607, %v5215
    %v5217 = vsel %vm1073, %v5192, %v5188
    %v5218 = vsel %vm1075, %v5196, %v5217
    %v5219 = vsel %vm1077, %v5200, %v5218
    %v5220 = vsel %vm1079, %v5204, %v5219
    %v5221 = vsel %vm1081, %v5208, %v5220
    %v5222 = vsel %vm1083, %v5212, %v5221
    %v5223 = vsel %vm1085, %v5216, %v5222
    %v5226 = vsel %vm1202, %v5181, 0
    %5228 = vmatprep.subr.mxu0 0.0
    %5229 = vmatpush1.msra.mxu0 %v5223
    %5230 = vmatprep.subr.mxu0 0.0
    %5231 = vmatpush1.msra.mxu0 0.0
    %5232 = vmatprep.subr.mxu0 0.0
    %5233 = vmatpush1.msra.mxu0 0.0
    %5234 = vmatprep.subr.mxu0 0.0
    %5235 = vmatpush1.msra.mxu0 0.0
    %5236 = vmatprep.subr.mxu0 0.0
    %5237 = vmatpush1.msra.mxu0 0.0
    %5238 = vmatprep.subr.mxu0 0.0
    %5239 = vmatpush1.msra.mxu0 0.0
    %5240 = vmatprep.subr.mxu0 0.0
    %5241 = vmatpush1.msra.mxu0 0.0
    %5242 = vmatprep.subr.mxu0 0.0
    %5243 = vmatpush1.msra.mxu0 0.0
    %5244 = vmatprep.subr.mxu0 0.0
    %5245 = vmatpush1.msra.mxu0 0.0
    %5246 = vmatprep.subr.mxu0 0.0
    %5247 = vmatpush1.msra.mxu0 0.0
    %5248 = vmatprep.subr.mxu0 0.0
    %5249 = vmatpush1.msra.mxu0 0.0
    %5250 = vmatprep.subr.mxu0 0.0
    %5251 = vmatpush1.msra.mxu0 0.0
    %5252 = vmatprep.subr.mxu0 0.0
    %5253 = vmatpush1.msra.mxu0 0.0
    %5254 = vmatprep.subr.mxu0 0.0
    %5255 = vmatpush1.msra.mxu0 0.0
    %5256 = vmatprep.subr.mxu0 0.0
    %5257 = vmatpush1.msra.mxu0 0.0
    %5258 = vmatprep.subr.mxu0 0.0
    %5259 = vmatpush1.msra.mxu0 0.0
    %5260 = vmatprep.subr.mxu0 0.0
    %5261 = vmatpush1.msra.mxu0 0.0
    %5262 = vmatprep.subr.mxu0 0.0
    %5263 = vmatpush1.msra.mxu0 0.0
    %5264 = vmatprep.subr.mxu0 0.0
    %5265 = vmatpush1.msra.mxu0 0.0
    %5266 = vmatprep.subr.mxu0 0.0
    %5267 = vmatpush1.msra.mxu0 0.0
    %5268 = vmatprep.subr.mxu0 0.0
    %5269 = vmatpush1.msra.mxu0 0.0
    %5270 = vmatprep.subr.mxu0 0.0
    %5271 = vmatpush1.msra.mxu0 0.0
    %5272 = vmatprep.subr.mxu0 0.0
    %5273 = vmatpush1.msra.mxu0 0.0
    %5274 = vmatprep.subr.mxu0 0.0
    %5275 = vmatpush1.msra.mxu0 0.0
    %5276 = vmatprep.subr.mxu0 0.0
    %5277 = vmatpush1.msra.mxu0 0.0
    %5278 = vmatprep.subr.mxu0 0.0
    %5279 = vmatpush1.msra.mxu0 0.0
    %5280 = vmatprep.subr.mxu0 0.0
    %5281 = vmatpush1.msra.mxu0 0.0
    %5282 = vmatprep.subr.mxu0 0.0
    %5283 = vmatpush1.msra.mxu0 0.0
    %5284 = vmatprep.subr.mxu0 0.0
    %5285 = vmatpush1.msra.mxu0 0.0
    %5286 = vmatprep.subr.mxu0 0.0
    %5287 = vmatpush1.msra.mxu0 0.0
    %5288 = vmatprep.subr.mxu0 0.0
    %5289 = vmatpush1.msra.mxu0 0.0
    %5290 = vmatprep.subr.mxu0 0.0
    %5291 = vmatpush1.msra.mxu0 0.0
    %5292 = vmatprep.mubr.f32.mxu0 0.0
    %5293 = vmatmul.mubr.f32.gmra.mrb[0].mxu0 %v5226
    %v5294 = vpop.f32.mrb[0].mxu0
    %v5295 = vadd.f32 0.0, %v5294
    %v5296 = vpop.f32.mrb[0].mxu0
    %5297 = vdwg.mxu0
    %v5298 = vrcp.pop %v5184
    %v5299 = vmul.f32 %v5295, %v5298
    %v5301 = vcombine.high %v5299, %v5299
    %v5303 = vunpack.c.l.s4 1966171168
    %v5304 = vunpack.c.0.s8 %v5303
    %v5305 = vlaneseq
    %v5306 = vshrl.u32 %v5305, 7
    %v5307 = vsub.s32 %v5304, %v5306
    %v5308 = vrot.slane %v5299, %v5307
    %v5310 = vunpack.c.l.s4 1966171168
    %v5311 = vunpack.c.0.s8 %v5310
    %v5312 = vlaneseq
    %v5313 = vshrl.u32 %v5312, 7
    %v5314 = vsub.s32 %v5311, %v5313
    %v5315 = vrot.slane %v5301, %v5314
    %v5316 = vcombine.high %v5308, %v5308
    %v5317 = vcombine.high %v5315, %v5315
    %v5319 = vunpack.c.l.s4 1966171168
    %v5320 = vunpack.c.0.s8 %v5319
    %v5321 = vlaneseq
    %v5322 = vshrl.u32 %v5321, 7
    %v5323 = vsub.s32 %v5320, %v5322
    %v5324 = vrot.slane %v5308, %v5323
    %v5326 = vunpack.c.l.s4 1966171168
    %v5327 = vunpack.c.0.s8 %v5326
    %v5328 = vlaneseq
    %v5329 = vshrl.u32 %v5328, 7
    %v5330 = vsub.s32 %v5327, %v5329
    %v5331 = vrot.slane %v5315, %v5330
    %v5333 = vunpack.c.l.s4 1966171168
    %v5334 = vunpack.c.0.s8 %v5333
    %v5335 = vlaneseq
    %v5336 = vshrl.u32 %v5335, 7
    %v5337 = vsub.s32 %v5334, %v5336
    %v5338 = vrot.slane %v5316, %v5337
    %v5340 = vunpack.c.l.s4 1966171168
    %v5341 = vunpack.c.0.s8 %v5340
    %v5342 = vlaneseq
    %v5343 = vshrl.u32 %v5342, 7
    %v5344 = vsub.s32 %v5341, %v5343
    %v5345 = vrot.slane %v5317, %v5344
    %v5346 = vcombine.high %v5324, %v5324
    %v5347 = vcombine.high %v5331, %v5331
    %v5348 = vcombine.high %v5338, %v5338
    %v5349 = vcombine.high %v5345, %v5345
    %v5351 = vunpack.c.l.s4 857870592
    %v5352 = vunpack.c.0.s8 %v5351
    %v5353 = vlaneseq
    %v5354 = vshrl.u32 %v5353, 7
    %v5355 = vsub.s32 %v5352, %v5354
    %v5356 = vrot.slane %v5324, %v5355
    %v5358 = vunpack.c.l.s4 857870592
    %v5359 = vunpack.c.0.s8 %v5358
    %v5360 = vlaneseq
    %v5361 = vshrl.u32 %v5360, 7
    %v5362 = vsub.s32 %v5359, %v5361
    %v5363 = vrot.slane %v5338, %v5362
    %v5365 = vunpack.c.l.s4 857870592
    %v5366 = vunpack.c.0.s8 %v5365
    %v5367 = vlaneseq
    %v5368 = vshrl.u32 %v5367, 7
    %v5369 = vsub.s32 %v5366, %v5368
    %v5370 = vrot.slane %v5346, %v5369
    %v5372 = vunpack.c.l.s4 857870592
    %v5373 = vunpack.c.0.s8 %v5372
    %v5374 = vlaneseq
    %v5375 = vshrl.u32 %v5374, 7
    %v5376 = vsub.s32 %v5373, %v5375
    %v5377 = vrot.slane %v5348, %v5376
    %v5379 = vunpack.c.l.s4 857870592
    %v5380 = vunpack.c.0.s8 %v5379
    %v5381 = vlaneseq
    %v5382 = vshrl.u32 %v5381, 7
    %v5383 = vsub.s32 %v5380, %v5382
    %v5384 = vrot.slane %v5331, %v5383
    %v5386 = vunpack.c.l.s4 857870592
    %v5387 = vunpack.c.0.s8 %v5386
    %v5388 = vlaneseq
    %v5389 = vshrl.u32 %v5388, 7
    %v5390 = vsub.s32 %v5387, %v5389
    %v5391 = vrot.slane %v5345, %v5390
    %v5393 = vunpack.c.l.s4 857870592
    %v5394 = vunpack.c.0.s8 %v5393
    %v5395 = vlaneseq
    %v5396 = vshrl.u32 %v5395, 7
    %v5397 = vsub.s32 %v5394, %v5396
    %v5398 = vrot.slane %v5347, %v5397
    %v5400 = vunpack.c.l.s4 857870592
    %v5401 = vunpack.c.0.s8 %v5400
    %v5402 = vlaneseq
    %v5403 = vshrl.u32 %v5402, 7
    %v5404 = vsub.s32 %v5401, %v5403
    %v5405 = vrot.slane %v5349, %v5404
    %5406 = vrot.lane.b32.xlu0 %v5356, 32
    %v5407 = vpop.permute.xlu0 %5406
    %5408 = vrot.lane.b32.xlu0 %v5363, 32
    %v5409 = vpop.permute.xlu0 %5408
    %5410 = vrot.lane.b32.xlu0 %v5370, 32
    %v5411 = vpop.permute.xlu0 %5410
    %5412 = vrot.lane.b32.xlu0 %v5377, 32
    %v5413 = vpop.permute.xlu0 %5412
    %5414 = vrot.lane.b32.xlu0 %v5384, 32
    %v5415 = vpop.permute.xlu0 %5414
    %5416 = vrot.lane.b32.xlu0 %v5391, 32
    %v5417 = vpop.permute.xlu0 %5416
    %5418 = vrot.lane.b32.xlu0 %v5398, 32
    %v5419 = vpop.permute.xlu0 %5418
    %5420 = vrot.lane.b32.xlu0 %v5405, 32
    %v5421 = vpop.permute.xlu0 %5420
    %5430 = vst.msk [vmem:[#allocation2 + $0x3] sm:$0x1] %vm2094, %v5407
    %5431 = vst.msk [vmem:[#allocation2 + $0x7] sm:$0x1] %vm2094, %v5409
    %5432 = vst.msk [vmem:[#allocation2 + $0xb] sm:$0x1] %vm2094, %v5411
    %5433 = vst.msk [vmem:[#allocation2 + $0xf] sm:$0x1] %vm2094, %v5413
    %5434 = vst.msk [vmem:[#allocation2 + $0x13] sm:$0x1] %vm2094, %v5415
    %5435 = vst.msk [vmem:[#allocation2 + $0x17] sm:$0x1] %vm2094, %v5417
    %5436 = vst.msk [vmem:[#allocation2 + $0x1b] sm:$0x1] %vm2094, %v5419
    %5437 = vst.msk [vmem:[#allocation2 + $0x1f] sm:$0x1] %vm2094, %v5421
    %v5438 = vrot.slane %v2445, 2
    %v5439 = vrot.slane %v2447, 2
    %v5440 = vrot.slane %v2449, 2
    %v5441 = vrot.slane %v2451, 2
    %v5442 = vrot.slane %v2453, 2
    %v5443 = vrot.slane %v2455, 2
    %v5444 = vrot.slane %v2457, 2
    %v5445 = vrot.slane %v2459, 2
    %v5446 = vrot.slane %v2445, 6
    %v5447 = vrot.slane %v2447, 6
    %v5448 = vrot.slane %v2449, 6
    %v5449 = vrot.slane %v2451, 6
    %v5450 = vrot.slane %v2453, 6
    %v5451 = vrot.slane %v2455, 6
    %v5452 = vrot.slane %v2457, 6
    %v5453 = vrot.slane %v2459, 6
    %5454 = vrot.lane.b32.xlu0 %v964, 64
    %v5455 = vpop.permute.xlu0 %5454
    %5456 = vrot.lane.b32.xlu0 %v972, 64
    %v5457 = vpop.permute.xlu0 %5456
    %5458 = vrot.lane.b32.xlu0 %v971, 64
    %v5459 = vpop.permute.xlu0 %5458
    %5460 = vrot.lane.b32.xlu0 %v973, 64
    %v5461 = vpop.permute.xlu0 %5460
    %5462 = vrot.lane.b32.xlu0 %v1018, 64
    %v5463 = vpop.permute.xlu0 %5462
    %5464 = vrot.lane.b32.xlu0 %v1026, 64
    %v5465 = vpop.permute.xlu0 %5464
    %5466 = vrot.lane.b32.xlu0 %v1025, 64
    %v5467 = vpop.permute.xlu0 %5466
    %5468 = vrot.lane.b32.xlu0 %v1027, 64
    %v5469 = vpop.permute.xlu0 %5468
    %v5470 = vrot.slane %v5455, 2
    %v5471 = vrot.slane %v5457, 2
    %v5472 = vrot.slane %v5459, 2
    %v5473 = vrot.slane %v5461, 2
    %v5474 = vrot.slane %v5463, 2
    %v5475 = vrot.slane %v5465, 2
    %v5476 = vrot.slane %v5467, 2
    %v5477 = vrot.slane %v5469, 2
    %v5478 = vlaneseq
    %v5479 = vshrl.u32 %v5478, 7
    %v5480 = vsub.s32 0, %v5479
    %v5481 = vrot.slane %v5438, %v5480
    %v5482 = vlaneseq
    %v5483 = vshrl.u32 %v5482, 7
    %v5484 = vsub.s32 0, %v5483
    %v5485 = vrot.slane %v5439, %v5484
    %v5486 = vlaneseq
    %v5487 = vshrl.u32 %v5486, 7
    %v5488 = vsub.s32 0, %v5487
    %v5489 = vrot.slane %v5440, %v5488
    %v5490 = vlaneseq
    %v5491 = vshrl.u32 %v5490, 7
    %v5492 = vsub.s32 0, %v5491
    %v5493 = vrot.slane %v5441, %v5492
    %v5494 = vlaneseq
    %v5495 = vshrl.u32 %v5494, 7
    %v5496 = vsub.s32 0, %v5495
    %v5497 = vrot.slane %v5442, %v5496
    %v5498 = vlaneseq
    %v5499 = vshrl.u32 %v5498, 7
    %v5500 = vsub.s32 0, %v5499
    %v5501 = vrot.slane %v5443, %v5500
    %v5502 = vlaneseq
    %v5503 = vshrl.u32 %v5502, 7
    %v5504 = vsub.s32 0, %v5503
    %v5505 = vrot.slane %v5444, %v5504
    %v5506 = vlaneseq
    %v5507 = vshrl.u32 %v5506, 7
    %v5508 = vsub.s32 0, %v5507
    %v5509 = vrot.slane %v5445, %v5508
    %v5510 = vsel %vm1073, %v5485, %v5481
    %v5511 = vsel %vm1075, %v5489, %v5510
    %v5512 = vsel %vm1077, %v5493, %v5511
    %v5513 = vsel %vm1079, %v5497, %v5512
    %v5514 = vsel %vm1081, %v5501, %v5513
    %v5515 = vsel %vm1083, %v5505, %v5514
    %v5516 = vsel %vm1085, %v5509, %v5515
    %v5517 = vlaneseq
    %v5518 = vshrl.u32 %v5517, 7
    %v5519 = vsub.s32 0, %v5518
    %v5520 = vrot.slane %v5446, %v5519
    %v5521 = vlaneseq
    %v5522 = vshrl.u32 %v5521, 7
    %v5523 = vsub.s32 0, %v5522
    %v5524 = vrot.slane %v5447, %v5523
    %v5525 = vlaneseq
    %v5526 = vshrl.u32 %v5525, 7
    %v5527 = vsub.s32 0, %v5526
    %v5528 = vrot.slane %v5448, %v5527
    %v5529 = vlaneseq
    %v5530 = vshrl.u32 %v5529, 7
    %v5531 = vsub.s32 0, %v5530
    %v5532 = vrot.slane %v5449, %v5531
    %v5533 = vlaneseq
    %v5534 = vshrl.u32 %v5533, 7
    %v5535 = vsub.s32 0, %v5534
    %v5536 = vrot.slane %v5450, %v5535
    %v5537 = vlaneseq
    %v5538 = vshrl.u32 %v5537, 7
    %v5539 = vsub.s32 0, %v5538
    %v5540 = vrot.slane %v5451, %v5539
    %v5541 = vlaneseq
    %v5542 = vshrl.u32 %v5541, 7
    %v5543 = vsub.s32 0, %v5542
    %v5544 = vrot.slane %v5452, %v5543
    %v5545 = vlaneseq
    %v5546 = vshrl.u32 %v5545, 7
    %v5547 = vsub.s32 0, %v5546
    %v5548 = vrot.slane %v5453, %v5547
    %v5549 = vsel %vm1073, %v5524, %v5520
    %v5550 = vsel %vm1075, %v5528, %v5549
    %v5551 = vsel %vm1077, %v5532, %v5550
    %v5552 = vsel %vm1079, %v5536, %v5551
    %v5553 = vsel %vm1081, %v5540, %v5552
    %v5554 = vsel %vm1083, %v5544, %v5553
    %v5555 = vsel %vm1085, %v5548, %v5554
    %v5556 = vsel %vm1126, %v5516, 0
    %v5558 = vsel %vm1126, %v5555, 0
    %5560 = vmatprep.subr.mxu0 0.0
    %5561 = vmatpush1.xpose.msra.mxu0 %v5558
    %5562 = vmatprep.subr.mxu0 0.0
    %5563 = vmatpush1.xpose.msra.mxu0 0.0
    %5564 = vmatprep.subr.mxu0 0.0
    %5565 = vmatpush1.xpose.msra.mxu0 0.0
    %5566 = vmatprep.subr.mxu0 0.0
    %5567 = vmatpush1.xpose.msra.mxu0 0.0
    %5568 = vmatprep.subr.mxu0 0.0
    %5569 = vmatpush1.xpose.msra.mxu0 0.0
    %5570 = vmatprep.subr.mxu0 0.0
    %5571 = vmatpush1.xpose.msra.mxu0 0.0
    %5572 = vmatprep.subr.mxu0 0.0
    %5573 = vmatpush1.xpose.msra.mxu0 0.0
    %5574 = vmatprep.subr.mxu0 0.0
    %5575 = vmatpush1.xpose.msra.mxu0 0.0
    %5576 = vmatprep.subr.mxu0 0.0
    %5577 = vmatpush1.xpose.msra.mxu0 0.0
    %5578 = vmatprep.subr.mxu0 0.0
    %5579 = vmatpush1.xpose.msra.mxu0 0.0
    %5580 = vmatprep.subr.mxu0 0.0
    %5581 = vmatpush1.xpose.msra.mxu0 0.0
    %5582 = vmatprep.subr.mxu0 0.0
    %5583 = vmatpush1.xpose.msra.mxu0 0.0
    %5584 = vmatprep.subr.mxu0 0.0
    %5585 = vmatpush1.xpose.msra.mxu0 0.0
    %5586 = vmatprep.subr.mxu0 0.0
    %5587 = vmatpush1.xpose.msra.mxu0 0.0
    %5588 = vmatprep.subr.mxu0 0.0
    %5589 = vmatpush1.xpose.msra.mxu0 0.0
    %5590 = vmatprep.subr.mxu0 0.0
    %5591 = vmatpush1.xpose.msra.mxu0 0.0
    %5592 = vmatprep.subr.mxu0 0.0
    %5593 = vmatpush1.xpose.msra.mxu0 0.0
    %5594 = vmatprep.subr.mxu0 0.0
    %5595 = vmatpush1.xpose.msra.mxu0 0.0
    %5596 = vmatprep.subr.mxu0 0.0
    %5597 = vmatpush1.xpose.msra.mxu0 0.0
    %5598 = vmatprep.subr.mxu0 0.0
    %5599 = vmatpush1.xpose.msra.mxu0 0.0
    %5600 = vmatprep.subr.mxu0 0.0
    %5601 = vmatpush1.xpose.msra.mxu0 0.0
    %5602 = vmatprep.subr.mxu0 0.0
    %5603 = vmatpush1.xpose.msra.mxu0 0.0
    %5604 = vmatprep.subr.mxu0 0.0
    %5605 = vmatpush1.xpose.msra.mxu0 0.0
    %5606 = vmatprep.subr.mxu0 0.0
    %5607 = vmatpush1.xpose.msra.mxu0 0.0
    %5608 = vmatprep.subr.mxu0 0.0
    %5609 = vmatpush1.xpose.msra.mxu0 0.0
    %5610 = vmatprep.subr.mxu0 0.0
    %5611 = vmatpush1.xpose.msra.mxu0 0.0
    %5612 = vmatprep.subr.mxu0 0.0
    %5613 = vmatpush1.xpose.msra.mxu0 0.0
    %5614 = vmatprep.subr.mxu0 0.0
    %5615 = vmatpush1.xpose.msra.mxu0 0.0
    %5616 = vmatprep.subr.mxu0 0.0
    %5617 = vmatpush1.xpose.msra.mxu0 0.0
    %5618 = vmatprep.subr.mxu0 0.0
    %5619 = vmatpush1.xpose.msra.mxu0 0.0
    %5620 = vmatprep.subr.mxu0 0.0
    %5621 = vmatpush1.xpose.msra.mxu0 0.0
    %5622 = vmatprep.subr.mxu0 0.0
    %5623 = vmatpush1.xpose.msra.mxu0 0.0
    %5624 = vmatprep.mubr.f32.mxu0 0.0
    %5625 = vmatmul.mubr.f32.gmra.mrb[0].mxu0 %v5556
    %v5626 = vpop.f32.mrb[0].mxu0
    %v5627 = vadd.f32 0.0, %v5626
    %v5628 = vpop.f32.mrb[0].mxu0
    %5629 = vdwg.mxu0
    %v5630 = vsel %vm1032, %v5627, -inf
    %v5631 = vsel %vm1202, %v5630, -inf
    %5632 = vmax.xlane.f32.xlu0 %v5631
    %v5633 = vpop.xlane.xlu0 %5632
    %v5634 = vsub.f32 %v5630, %v5633
    %v5635 = vmul.f32 %v5634, 1.442695
    %v5636 = vpow.pop %v5635
    %v5637 = vsel %vm1202, %v5636, 0.0
    %5638 = vadd.xlane.f32.xlu0 %v5637
    %v5639 = vpop.xlane.xlu0 %5638
    %v5640 = vlaneseq
    %v5641 = vshrl.u32 %v5640, 7
    %v5642 = vsub.s32 0, %v5641
    %v5643 = vrot.slane %v5470, %v5642
    %v5644 = vlaneseq
    %v5645 = vshrl.u32 %v5644, 7
    %v5646 = vsub.s32 0, %v5645
    %v5647 = vrot.slane %v5471, %v5646
    %v5648 = vlaneseq
    %v5649 = vshrl.u32 %v5648, 7
    %v5650 = vsub.s32 0, %v5649
    %v5651 = vrot.slane %v5472, %v5650
    %v5652 = vlaneseq
    %v5653 = vshrl.u32 %v5652, 7
    %v5654 = vsub.s32 0, %v5653
    %v5655 = vrot.slane %v5473, %v5654
    %v5656 = vlaneseq
    %v5657 = vshrl.u32 %v5656, 7
    %v5658 = vsub.s32 0, %v5657
    %v5659 = vrot.slane %v5474, %v5658
    %v5660 = vlaneseq
    %v5661 = vshrl.u32 %v5660, 7
    %v5662 = vsub.s32 0, %v5661
    %v5663 = vrot.slane %v5475, %v5662
    %v5664 = vlaneseq
    %v5665 = vshrl.u32 %v5664, 7
    %v5666 = vsub.s32 0, %v5665
    %v5667 = vrot.slane %v5476, %v5666
    %v5668 = vlaneseq
    %v5669 = vshrl.u32 %v5668, 7
    %v5670 = vsub.s32 0, %v5669
    %v5671 = vrot.slane %v5477, %v5670
    %v5672 = vsel %vm1073, %v5647, %v5643
    %v5673 = vsel %vm1075, %v5651, %v5672
    %v5674 = vsel %vm1077, %v5655, %v5673
    %v5675 = vsel %vm1079, %v5659, %v5674
    %v5676 = vsel %vm1081, %v5663, %v5675
    %v5677 = vsel %vm1083, %v5667, %v5676
    %v5678 = vsel %vm1085, %v5671, %v5677
    %v5681 = vsel %vm1202, %v5636, 0
    %5683 = vmatprep.subr.mxu0 0.0
    %5684 = vmatpush1.msra.mxu0 %v5678
    %5685 = vmatprep.subr.mxu0 0.0
    %5686 = vmatpush1.msra.mxu0 0.0
    %5687 = vmatprep.subr.mxu0 0.0
    %5688 = vmatpush1.msra.mxu0 0.0
    %5689 = vmatprep.subr.mxu0 0.0
    %5690 = vmatpush1.msra.mxu0 0.0
    %5691 = vmatprep.subr.mxu0 0.0
    %5692 = vmatpush1.msra.mxu0 0.0
    %5693 = vmatprep.subr.mxu0 0.0
    %5694 = vmatpush1.msra.mxu0 0.0
    %5695 = vmatprep.subr.mxu0 0.0
    %5696 = vmatpush1.msra.mxu0 0.0
    %5697 = vmatprep.subr.mxu0 0.0
    %5698 = vmatpush1.msra.mxu0 0.0
    %5699 = vmatprep.subr.mxu0 0.0
    %5700 = vmatpush1.msra.mxu0 0.0
    %5701 = vmatprep.subr.mxu0 0.0
    %5702 = vmatpush1.msra.mxu0 0.0
    %5703 = vmatprep.subr.mxu0 0.0
    %5704 = vmatpush1.msra.mxu0 0.0
    %5705 = vmatprep.subr.mxu0 0.0
    %5706 = vmatpush1.msra.mxu0 0.0
    %5707 = vmatprep.subr.mxu0 0.0
    %5708 = vmatpush1.msra.mxu0 0.0
    %5709 = vmatprep.subr.mxu0 0.0
    %5710 = vmatpush1.msra.mxu0 0.0
    %5711 = vmatprep.subr.mxu0 0.0
    %5712 = vmatpush1.msra.mxu0 0.0
    %5713 = vmatprep.subr.mxu0 0.0
    %5714 = vmatpush1.msra.mxu0 0.0
    %5715 = vmatprep.subr.mxu0 0.0
    %5716 = vmatpush1.msra.mxu0 0.0
    %5717 = vmatprep.subr.mxu0 0.0
    %5718 = vmatpush1.msra.mxu0 0.0
    %5719 = vmatprep.subr.mxu0 0.0
    %5720 = vmatpush1.msra.mxu0 0.0
    %5721 = vmatprep.subr.mxu0 0.0
    %5722 = vmatpush1.msra.mxu0 0.0
    %5723 = vmatprep.subr.mxu0 0.0
    %5724 = vmatpush1.msra.mxu0 0.0
    %5725 = vmatprep.subr.mxu0 0.0
    %5726 = vmatpush1.msra.mxu0 0.0
    %5727 = vmatprep.subr.mxu0 0.0
    %5728 = vmatpush1.msra.mxu0 0.0
    %5729 = vmatprep.subr.mxu0 0.0
    %5730 = vmatpush1.msra.mxu0 0.0
    %5731 = vmatprep.subr.mxu0 0.0
    %5732 = vmatpush1.msra.mxu0 0.0
    %5733 = vmatprep.subr.mxu0 0.0
    %5734 = vmatpush1.msra.mxu0 0.0
    %5735 = vmatprep.subr.mxu0 0.0
    %5736 = vmatpush1.msra.mxu0 0.0
    %5737 = vmatprep.subr.mxu0 0.0
    %5738 = vmatpush1.msra.mxu0 0.0
    %5739 = vmatprep.subr.mxu0 0.0
    %5740 = vmatpush1.msra.mxu0 0.0
    %5741 = vmatprep.subr.mxu0 0.0
    %5742 = vmatpush1.msra.mxu0 0.0
    %5743 = vmatprep.subr.mxu0 0.0
    %5744 = vmatpush1.msra.mxu0 0.0
    %5745 = vmatprep.subr.mxu0 0.0
    %5746 = vmatpush1.msra.mxu0 0.0
    %5747 = vmatprep.mubr.f32.mxu0 0.0
    %5748 = vmatmul.mubr.f32.gmra.mrb[0].mxu0 %v5681
    %v5749 = vpop.f32.mrb[0].mxu0
    %v5750 = vadd.f32 0.0, %v5749
    %v5751 = vpop.f32.mrb[0].mxu0
    %5752 = vdwg.mxu0
    %v5753 = vrcp.pop %v5639
    %v5754 = vmul.f32 %v5750, %v5753
    %v5756 = vcombine.high %v5754, %v5754
    %v5758 = vunpack.c.l.s4 1966171168
    %v5759 = vunpack.c.0.s8 %v5758
    %v5760 = vlaneseq
    %v5761 = vshrl.u32 %v5760, 7
    %v5762 = vsub.s32 %v5759, %v5761
    %v5763 = vrot.slane %v5754, %v5762
    %v5765 = vunpack.c.l.s4 1966171168
    %v5766 = vunpack.c.0.s8 %v5765
    %v5767 = vlaneseq
    %v5768 = vshrl.u32 %v5767, 7
    %v5769 = vsub.s32 %v5766, %v5768
    %v5770 = vrot.slane %v5756, %v5769
    %v5771 = vcombine.high %v5763, %v5763
    %v5772 = vcombine.high %v5770, %v5770
    %v5774 = vunpack.c.l.s4 1966171168
    %v5775 = vunpack.c.0.s8 %v5774
    %v5776 = vlaneseq
    %v5777 = vshrl.u32 %v5776, 7
    %v5778 = vsub.s32 %v5775, %v5777
    %v5779 = vrot.slane %v5763, %v5778
    %v5781 = vunpack.c.l.s4 1966171168
    %v5782 = vunpack.c.0.s8 %v5781
    %v5783 = vlaneseq
    %v5784 = vshrl.u32 %v5783, 7
    %v5785 = vsub.s32 %v5782, %v5784
    %v5786 = vrot.slane %v5770, %v5785
    %v5788 = vunpack.c.l.s4 1966171168
    %v5789 = vunpack.c.0.s8 %v5788
    %v5790 = vlaneseq
    %v5791 = vshrl.u32 %v5790, 7
    %v5792 = vsub.s32 %v5789, %v5791
    %v5793 = vrot.slane %v5771, %v5792
    %v5795 = vunpack.c.l.s4 1966171168
    %v5796 = vunpack.c.0.s8 %v5795
    %v5797 = vlaneseq
    %v5798 = vshrl.u32 %v5797, 7
    %v5799 = vsub.s32 %v5796, %v5798
    %v5800 = vrot.slane %v5772, %v5799
    %v5801 = vcombine.high %v5779, %v5779
    %v5802 = vcombine.high %v5786, %v5786
    %v5803 = vcombine.high %v5793, %v5793
    %v5804 = vcombine.high %v5800, %v5800
    %v5806 = vunpack.c.l.s4 857870592
    %v5807 = vunpack.c.0.s8 %v5806
    %v5808 = vlaneseq
    %v5809 = vshrl.u32 %v5808, 7
    %v5810 = vsub.s32 %v5807, %v5809
    %v5811 = vrot.slane %v5779, %v5810
    %v5813 = vunpack.c.l.s4 857870592
    %v5814 = vunpack.c.0.s8 %v5813
    %v5815 = vlaneseq
    %v5816 = vshrl.u32 %v5815, 7
    %v5817 = vsub.s32 %v5814, %v5816
    %v5818 = vrot.slane %v5793, %v5817
    %v5820 = vunpack.c.l.s4 857870592
    %v5821 = vunpack.c.0.s8 %v5820
    %v5822 = vlaneseq
    %v5823 = vshrl.u32 %v5822, 7
    %v5824 = vsub.s32 %v5821, %v5823
    %v5825 = vrot.slane %v5801, %v5824
    %v5827 = vunpack.c.l.s4 857870592
    %v5828 = vunpack.c.0.s8 %v5827
    %v5829 = vlaneseq
    %v5830 = vshrl.u32 %v5829, 7
    %v5831 = vsub.s32 %v5828, %v5830
    %v5832 = vrot.slane %v5803, %v5831
    %v5834 = vunpack.c.l.s4 857870592
    %v5835 = vunpack.c.0.s8 %v5834
    %v5836 = vlaneseq
    %v5837 = vshrl.u32 %v5836, 7
    %v5838 = vsub.s32 %v5835, %v5837
    %v5839 = vrot.slane %v5786, %v5838
    %v5841 = vunpack.c.l.s4 857870592
    %v5842 = vunpack.c.0.s8 %v5841
    %v5843 = vlaneseq
    %v5844 = vshrl.u32 %v5843, 7
    %v5845 = vsub.s32 %v5842, %v5844
    %v5846 = vrot.slane %v5800, %v5845
    %v5848 = vunpack.c.l.s4 857870592
    %v5849 = vunpack.c.0.s8 %v5848
    %v5850 = vlaneseq
    %v5851 = vshrl.u32 %v5850, 7
    %v5852 = vsub.s32 %v5849, %v5851
    %v5853 = vrot.slane %v5802, %v5852
    %v5855 = vunpack.c.l.s4 857870592
    %v5856 = vunpack.c.0.s8 %v5855
    %v5857 = vlaneseq
    %v5858 = vshrl.u32 %v5857, 7
    %v5859 = vsub.s32 %v5856, %v5858
    %v5860 = vrot.slane %v5804, %v5859
    %5861 = vrot.lane.b32.xlu0 %v5811, 64
    %v5862 = vpop.permute.xlu0 %5861
    %5863 = vrot.lane.b32.xlu0 %v5818, 64
    %v5864 = vpop.permute.xlu0 %5863
    %5865 = vrot.lane.b32.xlu0 %v5825, 64
    %v5866 = vpop.permute.xlu0 %5865
    %5867 = vrot.lane.b32.xlu0 %v5832, 64
    %v5868 = vpop.permute.xlu0 %5867
    %5869 = vrot.lane.b32.xlu0 %v5839, 64
    %v5870 = vpop.permute.xlu0 %5869
    %5871 = vrot.lane.b32.xlu0 %v5846, 64
    %v5872 = vpop.permute.xlu0 %5871
    %5873 = vrot.lane.b32.xlu0 %v5853, 64
    %v5874 = vpop.permute.xlu0 %5873
    %5875 = vrot.lane.b32.xlu0 %v5860, 64
    %v5876 = vpop.permute.xlu0 %5875
    %5885 = vst.msk [vmem:[#allocation2 + $0x2] sm:$0x1] %vm2801, %v5862
    %5886 = vst.msk [vmem:[#allocation2 + $0x6] sm:$0x1] %vm2801, %v5864
    %5887 = vst.msk [vmem:[#allocation2 + $0xa] sm:$0x1] %vm2801, %v5866
    %5888 = vst.msk [vmem:[#allocation2 + $0xe] sm:$0x1] %vm2801, %v5868
    %5889 = vst.msk [vmem:[#allocation2 + $0x12] sm:$0x1] %vm2801, %v5870
    %5890 = vst.msk [vmem:[#allocation2 + $0x16] sm:$0x1] %vm2801, %v5872
    %5891 = vst.msk [vmem:[#allocation2 + $0x1a] sm:$0x1] %vm2801, %v5874
    %5892 = vst.msk [vmem:[#allocation2 + $0x1e] sm:$0x1] %vm2801, %v5876
    %v5893 = vlaneseq
    %v5894 = vshrl.u32 %v5893, 7
    %v5895 = vsub.s32 1, %v5894
    %v5896 = vrot.slane %v5438, %v5895
    %v5897 = vlaneseq
    %v5898 = vshrl.u32 %v5897, 7
    %v5899 = vsub.s32 1, %v5898
    %v5900 = vrot.slane %v5439, %v5899
    %v5901 = vlaneseq
    %v5902 = vshrl.u32 %v5901, 7
    %v5903 = vsub.s32 1, %v5902
    %v5904 = vrot.slane %v5440, %v5903
    %v5905 = vlaneseq
    %v5906 = vshrl.u32 %v5905, 7
    %v5907 = vsub.s32 1, %v5906
    %v5908 = vrot.slane %v5441, %v5907
    %v5909 = vlaneseq
    %v5910 = vshrl.u32 %v5909, 7
    %v5911 = vsub.s32 1, %v5910
    %v5912 = vrot.slane %v5442, %v5911
    %v5913 = vlaneseq
    %v5914 = vshrl.u32 %v5913, 7
    %v5915 = vsub.s32 1, %v5914
    %v5916 = vrot.slane %v5443, %v5915
    %v5917 = vlaneseq
    %v5918 = vshrl.u32 %v5917, 7
    %v5919 = vsub.s32 1, %v5918
    %v5920 = vrot.slane %v5444, %v5919
    %v5921 = vlaneseq
    %v5922 = vshrl.u32 %v5921, 7
    %v5923 = vsub.s32 1, %v5922
    %v5924 = vrot.slane %v5445, %v5923
    %v5925 = vsel %vm1073, %v5900, %v5896
    %v5926 = vsel %vm1075, %v5904, %v5925
    %v5927 = vsel %vm1077, %v5908, %v5926
    %v5928 = vsel %vm1079, %v5912, %v5927
    %v5929 = vsel %vm1081, %v5916, %v5928
    %v5930 = vsel %vm1083, %v5920, %v5929
    %v5931 = vsel %vm1085, %v5924, %v5930
    %v5932 = vlaneseq
    %v5933 = vshrl.u32 %v5932, 7
    %v5934 = vsub.s32 1, %v5933
    %v5935 = vrot.slane %v5446, %v5934
    %v5936 = vlaneseq
    %v5937 = vshrl.u32 %v5936, 7
    %v5938 = vsub.s32 1, %v5937
    %v5939 = vrot.slane %v5447, %v5938
    %v5940 = vlaneseq
    %v5941 = vshrl.u32 %v5940, 7
    %v5942 = vsub.s32 1, %v5941
    %v5943 = vrot.slane %v5448, %v5942
    %v5944 = vlaneseq
    %v5945 = vshrl.u32 %v5944, 7
    %v5946 = vsub.s32 1, %v5945
    %v5947 = vrot.slane %v5449, %v5946
    %v5948 = vlaneseq
    %v5949 = vshrl.u32 %v5948, 7
    %v5950 = vsub.s32 1, %v5949
    %v5951 = vrot.slane %v5450, %v5950
    %v5952 = vlaneseq
    %v5953 = vshrl.u32 %v5952, 7
    %v5954 = vsub.s32 1, %v5953
    %v5955 = vrot.slane %v5451, %v5954
    %v5956 = vlaneseq
    %v5957 = vshrl.u32 %v5956, 7
    %v5958 = vsub.s32 1, %v5957
    %v5959 = vrot.slane %v5452, %v5958
    %v5960 = vlaneseq
    %v5961 = vshrl.u32 %v5960, 7
    %v5962 = vsub.s32 1, %v5961
    %v5963 = vrot.slane %v5453, %v5962
    %v5964 = vsel %vm1073, %v5939, %v5935
    %v5965 = vsel %vm1075, %v5943, %v5964
    %v5966 = vsel %vm1077, %v5947, %v5965
    %v5967 = vsel %vm1079, %v5951, %v5966
    %v5968 = vsel %vm1081, %v5955, %v5967
    %v5969 = vsel %vm1083, %v5959, %v5968
    %v5970 = vsel %vm1085, %v5963, %v5969
    %v5971 = vsel %vm1126, %v5931, 0
    %v5973 = vsel %vm1126, %v5970, 0
    %5975 = vmatprep.subr.mxu0 0.0
    %5976 = vmatpush1.xpose.msra.mxu0 %v5973
    %5977 = vmatprep.subr.mxu0 0.0
    %5978 = vmatpush1.xpose.msra.mxu0 0.0
    %5979 = vmatprep.subr.mxu0 0.0
    %5980 = vmatpush1.xpose.msra.mxu0 0.0
    %5981 = vmatprep.subr.mxu0 0.0
    %5982 = vmatpush1.xpose.msra.mxu0 0.0
    %5983 = vmatprep.subr.mxu0 0.0
    %5984 = vmatpush1.xpose.msra.mxu0 0.0
    %5985 = vmatprep.subr.mxu0 0.0
    %5986 = vmatpush1.xpose.msra.mxu0 0.0
    %5987 = vmatprep.subr.mxu0 0.0
    %5988 = vmatpush1.xpose.msra.mxu0 0.0
    %5989 = vmatprep.subr.mxu0 0.0
    %5990 = vmatpush1.xpose.msra.mxu0 0.0
    %5991 = vmatprep.subr.mxu0 0.0
    %5992 = vmatpush1.xpose.msra.mxu0 0.0
    %5993 = vmatprep.subr.mxu0 0.0
    %5994 = vmatpush1.xpose.msra.mxu0 0.0
    %5995 = vmatprep.subr.mxu0 0.0
    %5996 = vmatpush1.xpose.msra.mxu0 0.0
    %5997 = vmatprep.subr.mxu0 0.0
    %5998 = vmatpush1.xpose.msra.mxu0 0.0
    %5999 = vmatprep.subr.mxu0 0.0
    %6000 = vmatpush1.xpose.msra.mxu0 0.0
    %6001 = vmatprep.subr.mxu0 0.0
    %6002 = vmatpush1.xpose.msra.mxu0 0.0
    %6003 = vmatprep.subr.mxu0 0.0
    %6004 = vmatpush1.xpose.msra.mxu0 0.0
    %6005 = vmatprep.subr.mxu0 0.0
    %6006 = vmatpush1.xpose.msra.mxu0 0.0
    %6007 = vmatprep.subr.mxu0 0.0
    %6008 = vmatpush1.xpose.msra.mxu0 0.0
    %6009 = vmatprep.subr.mxu0 0.0
    %6010 = vmatpush1.xpose.msra.mxu0 0.0
    %6011 = vmatprep.subr.mxu0 0.0
    %6012 = vmatpush1.xpose.msra.mxu0 0.0
    %6013 = vmatprep.subr.mxu0 0.0
    %6014 = vmatpush1.xpose.msra.mxu0 0.0
    %6015 = vmatprep.subr.mxu0 0.0
    %6016 = vmatpush1.xpose.msra.mxu0 0.0
    %6017 = vmatprep.subr.mxu0 0.0
    %6018 = vmatpush1.xpose.msra.mxu0 0.0
    %6019 = vmatprep.subr.mxu0 0.0
    %6020 = vmatpush1.xpose.msra.mxu0 0.0
    %6021 = vmatprep.subr.mxu0 0.0
    %6022 = vmatpush1.xpose.msra.mxu0 0.0
    %6023 = vmatprep.subr.mxu0 0.0
    %6024 = vmatpush1.xpose.msra.mxu0 0.0
    %6025 = vmatprep.subr.mxu0 0.0
    %6026 = vmatpush1.xpose.msra.mxu0 0.0
    %6027 = vmatprep.subr.mxu0 0.0
    %6028 = vmatpush1.xpose.msra.mxu0 0.0
    %6029 = vmatprep.subr.mxu0 0.0
    %6030 = vmatpush1.xpose.msra.mxu0 0.0
    %6031 = vmatprep.subr.mxu0 0.0
    %6032 = vmatpush1.xpose.msra.mxu0 0.0
    %6033 = vmatprep.subr.mxu0 0.0
    %6034 = vmatpush1.xpose.msra.mxu0 0.0
    %6035 = vmatprep.subr.mxu0 0.0
    %6036 = vmatpush1.xpose.msra.mxu0 0.0
    %6037 = vmatprep.subr.mxu0 0.0
    %6038 = vmatpush1.xpose.msra.mxu0 0.0
    %6039 = vmatprep.mubr.f32.mxu0 0.0
    %6040 = vmatmul.mubr.f32.gmra.mrb[0].mxu0 %v5971
    %v6041 = vpop.f32.mrb[0].mxu0
    %v6042 = vadd.f32 0.0, %v6041
    %v6043 = vpop.f32.mrb[0].mxu0
    %6044 = vdwg.mxu0
    %v6045 = vsel %vm1032, %v6042, -inf
    %v6046 = vsel %vm1202, %v6045, -inf
    %6047 = vmax.xlane.f32.xlu0 %v6046
    %v6048 = vpop.xlane.xlu0 %6047
    %v6049 = vsub.f32 %v6045, %v6048
    %v6050 = vmul.f32 %v6049, 1.442695
    %v6051 = vpow.pop %v6050
    %v6052 = vsel %vm1202, %v6051, 0.0
    %6053 = vadd.xlane.f32.xlu0 %v6052
    %v6054 = vpop.xlane.xlu0 %6053
    %v6055 = vlaneseq
    %v6056 = vshrl.u32 %v6055, 7
    %v6057 = vsub.s32 1, %v6056
    %v6058 = vrot.slane %v5470, %v6057
    %v6059 = vlaneseq
    %v6060 = vshrl.u32 %v6059, 7
    %v6061 = vsub.s32 1, %v6060
    %v6062 = vrot.slane %v5471, %v6061
    %v6063 = vlaneseq
    %v6064 = vshrl.u32 %v6063, 7
    %v6065 = vsub.s32 1, %v6064
    %v6066 = vrot.slane %v5472, %v6065
    %v6067 = vlaneseq
    %v6068 = vshrl.u32 %v6067, 7
    %v6069 = vsub.s32 1, %v6068
    %v6070 = vrot.slane %v5473, %v6069
    %v6071 = vlaneseq
    %v6072 = vshrl.u32 %v6071, 7
    %v6073 = vsub.s32 1, %v6072
    %v6074 = vrot.slane %v5474, %v6073
    %v6075 = vlaneseq
    %v6076 = vshrl.u32 %v6075, 7
    %v6077 = vsub.s32 1, %v6076
    %v6078 = vrot.slane %v5475, %v6077
    %v6079 = vlaneseq
    %v6080 = vshrl.u32 %v6079, 7
    %v6081 = vsub.s32 1, %v6080
    %v6082 = vrot.slane %v5476, %v6081
    %v6083 = vlaneseq
    %v6084 = vshrl.u32 %v6083, 7
    %v6085 = vsub.s32 1, %v6084
    %v6086 = vrot.slane %v5477, %v6085
    %v6087 = vsel %vm1073, %v6062, %v6058
    %v6088 = vsel %vm1075, %v6066, %v6087
    %v6089 = vsel %vm1077, %v6070, %v6088
    %v6090 = vsel %vm1079, %v6074, %v6089
    %v6091 = vsel %vm1081, %v6078, %v6090
    %v6092 = vsel %vm1083, %v6082, %v6091
    %v6093 = vsel %vm1085, %v6086, %v6092
    %v6096 = vsel %vm1202, %v6051, 0
    %6098 = vmatprep.subr.mxu0 0.0
    %6099 = vmatpush1.msra.mxu0 %v6093
    %6100 = vmatprep.subr.mxu0 0.0
    %6101 = vmatpush1.msra.mxu0 0.0
    %6102 = vmatprep.subr.mxu0 0.0
    %6103 = vmatpush1.msra.mxu0 0.0
    %6104 = vmatprep.subr.mxu0 0.0
    %6105 = vmatpush1.msra.mxu0 0.0
    %6106 = vmatprep.subr.mxu0 0.0
    %6107 = vmatpush1.msra.mxu0 0.0
    %6108 = vmatprep.subr.mxu0 0.0
    %6109 = vmatpush1.msra.mxu0 0.0
    %6110 = vmatprep.subr.mxu0 0.0
    %6111 = vmatpush1.msra.mxu0 0.0
    %6112 = vmatprep.subr.mxu0 0.0
    %6113 = vmatpush1.msra.mxu0 0.0
    %6114 = vmatprep.subr.mxu0 0.0
    %6115 = vmatpush1.msra.mxu0 0.0
    %6116 = vmatprep.subr.mxu0 0.0
    %6117 = vmatpush1.msra.mxu0 0.0
    %6118 = vmatprep.subr.mxu0 0.0
    %6119 = vmatpush1.msra.mxu0 0.0
    %6120 = vmatprep.subr.mxu0 0.0
    %6121 = vmatpush1.msra.mxu0 0.0
    %6122 = vmatprep.subr.mxu0 0.0
    %6123 = vmatpush1.msra.mxu0 0.0
    %6124 = vmatprep.subr.mxu0 0.0
    %6125 = vmatpush1.msra.mxu0 0.0
    %6126 = vmatprep.subr.mxu0 0.0
    %6127 = vmatpush1.msra.mxu0 0.0
    %6128 = vmatprep.subr.mxu0 0.0
    %6129 = vmatpush1.msra.mxu0 0.0
    %6130 = vmatprep.subr.mxu0 0.0
    %6131 = vmatpush1.msra.mxu0 0.0
    %6132 = vmatprep.subr.mxu0 0.0
    %6133 = vmatpush1.msra.mxu0 0.0
    %6134 = vmatprep.subr.mxu0 0.0
    %6135 = vmatpush1.msra.mxu0 0.0
    %6136 = vmatprep.subr.mxu0 0.0
    %6137 = vmatpush1.msra.mxu0 0.0
    %6138 = vmatprep.subr.mxu0 0.0
    %6139 = vmatpush1.msra.mxu0 0.0
    %6140 = vmatprep.subr.mxu0 0.0
    %6141 = vmatpush1.msra.mxu0 0.0
    %6142 = vmatprep.subr.mxu0 0.0
    %6143 = vmatpush1.msra.mxu0 0.0
    %6144 = vmatprep.subr.mxu0 0.0
    %6145 = vmatpush1.msra.mxu0 0.0
    %6146 = vmatprep.subr.mxu0 0.0
    %6147 = vmatpush1.msra.mxu0 0.0
    %6148 = vmatprep.subr.mxu0 0.0
    %6149 = vmatpush1.msra.mxu0 0.0
    %6150 = vmatprep.subr.mxu0 0.0
    %6151 = vmatpush1.msra.mxu0 0.0
    %6152 = vmatprep.subr.mxu0 0.0
    %6153 = vmatpush1.msra.mxu0 0.0
    %6154 = vmatprep.subr.mxu0 0.0
    %6155 = vmatpush1.msra.mxu0 0.0
    %6156 = vmatprep.subr.mxu0 0.0
    %6157 = vmatpush1.msra.mxu0 0.0
    %6158 = vmatprep.subr.mxu0 0.0
    %6159 = vmatpush1.msra.mxu0 0.0
    %6160 = vmatprep.subr.mxu0 0.0
    %6161 = vmatpush1.msra.mxu0 0.0
    %6162 = vmatprep.mubr.f32.mxu0 0.0
    %6163 = vmatmul.mubr.f32.gmra.mrb[0].mxu0 %v6096
    %v6164 = vpop.f32.mrb[0].mxu0
    %v6165 = vadd.f32 0.0, %v6164
    %v6166 = vpop.f32.mrb[0].mxu0
    %6167 = vdwg.mxu0
    %v6168 = vrcp.pop %v6054
    %v6169 = vmul.f32 %v6165, %v6168
    %v6171 = vcombine.high %v6169, %v6169
    %v6173 = vunpack.c.l.s4 1966171168
    %v6174 = vunpack.c.0.s8 %v6173
    %v6175 = vlaneseq
    %v6176 = vshrl.u32 %v6175, 7
    %v6177 = vsub.s32 %v6174, %v6176
    %v6178 = vrot.slane %v6169, %v6177
    %v6180 = vunpack.c.l.s4 1966171168
    %v6181 = vunpack.c.0.s8 %v6180
    %v6182 = vlaneseq
    %v6183 = vshrl.u32 %v6182, 7
    %v6184 = vsub.s32 %v6181, %v6183
    %v6185 = vrot.slane %v6171, %v6184
    %v6186 = vcombine.high %v6178, %v6178
    %v6187 = vcombine.high %v6185, %v6185
    %v6189 = vunpack.c.l.s4 1966171168
    %v6190 = vunpack.c.0.s8 %v6189
    %v6191 = vlaneseq
    %v6192 = vshrl.u32 %v6191, 7
    %v6193 = vsub.s32 %v6190, %v6192
    %v6194 = vrot.slane %v6178, %v6193
    %v6196 = vunpack.c.l.s4 1966171168
    %v6197 = vunpack.c.0.s8 %v6196
    %v6198 = vlaneseq
    %v6199 = vshrl.u32 %v6198, 7
    %v6200 = vsub.s32 %v6197, %v6199
    %v6201 = vrot.slane %v6185, %v6200
    %v6203 = vunpack.c.l.s4 1966171168
    %v6204 = vunpack.c.0.s8 %v6203
    %v6205 = vlaneseq
    %v6206 = vshrl.u32 %v6205, 7
    %v6207 = vsub.s32 %v6204, %v6206
    %v6208 = vrot.slane %v6186, %v6207
    %v6210 = vunpack.c.l.s4 1966171168
    %v6211 = vunpack.c.0.s8 %v6210
    %v6212 = vlaneseq
    %v6213 = vshrl.u32 %v6212, 7
    %v6214 = vsub.s32 %v6211, %v6213
    %v6215 = vrot.slane %v6187, %v6214
    %v6216 = vcombine.high %v6194, %v6194
    %v6217 = vcombine.high %v6201, %v6201
    %v6218 = vcombine.high %v6208, %v6208
    %v6219 = vcombine.high %v6215, %v6215
    %v6221 = vunpack.c.l.s4 857870592
    %v6222 = vunpack.c.0.s8 %v6221
    %v6223 = vlaneseq
    %v6224 = vshrl.u32 %v6223, 7
    %v6225 = vsub.s32 %v6222, %v6224
    %v6226 = vrot.slane %v6194, %v6225
    %v6228 = vunpack.c.l.s4 857870592
    %v6229 = vunpack.c.0.s8 %v6228
    %v6230 = vlaneseq
    %v6231 = vshrl.u32 %v6230, 7
    %v6232 = vsub.s32 %v6229, %v6231
    %v6233 = vrot.slane %v6208, %v6232
    %v6235 = vunpack.c.l.s4 857870592
    %v6236 = vunpack.c.0.s8 %v6235
    %v6237 = vlaneseq
    %v6238 = vshrl.u32 %v6237, 7
    %v6239 = vsub.s32 %v6236, %v6238
    %v6240 = vrot.slane %v6216, %v6239
    %v6242 = vunpack.c.l.s4 857870592
    %v6243 = vunpack.c.0.s8 %v6242
    %v6244 = vlaneseq
    %v6245 = vshrl.u32 %v6244, 7
    %v6246 = vsub.s32 %v6243, %v6245
    %v6247 = vrot.slane %v6218, %v6246
    %v6249 = vunpack.c.l.s4 857870592
    %v6250 = vunpack.c.0.s8 %v6249
    %v6251 = vlaneseq
    %v6252 = vshrl.u32 %v6251, 7
    %v6253 = vsub.s32 %v6250, %v6252
    %v6254 = vrot.slane %v6201, %v6253
    %v6256 = vunpack.c.l.s4 857870592
    %v6257 = vunpack.c.0.s8 %v6256
    %v6258 = vlaneseq
    %v6259 = vshrl.u32 %v6258, 7
    %v6260 = vsub.s32 %v6257, %v6259
    %v6261 = vrot.slane %v6215, %v6260
    %v6263 = vunpack.c.l.s4 857870592
    %v6264 = vunpack.c.0.s8 %v6263
    %v6265 = vlaneseq
    %v6266 = vshrl.u32 %v6265, 7
    %v6267 = vsub.s32 %v6264, %v6266
    %v6268 = vrot.slane %v6217, %v6267
    %v6270 = vunpack.c.l.s4 857870592
    %v6271 = vunpack.c.0.s8 %v6270
    %v6272 = vlaneseq
    %v6273 = vshrl.u32 %v6272, 7
    %v6274 = vsub.s32 %v6271, %v6273
    %v6275 = vrot.slane %v6219, %v6274
    %6276 = vrot.lane.b32.xlu0 %v6226, 64
    %v6277 = vpop.permute.xlu0 %6276
    %6278 = vrot.lane.b32.xlu0 %v6233, 64
    %v6279 = vpop.permute.xlu0 %6278
    %6280 = vrot.lane.b32.xlu0 %v6240, 64
    %v6281 = vpop.permute.xlu0 %6280
    %6282 = vrot.lane.b32.xlu0 %v6247, 64
    %v6283 = vpop.permute.xlu0 %6282
    %6284 = vrot.lane.b32.xlu0 %v6254, 64
    %v6285 = vpop.permute.xlu0 %6284
    %6286 = vrot.lane.b32.xlu0 %v6261, 64
    %v6287 = vpop.permute.xlu0 %6286
    %6288 = vrot.lane.b32.xlu0 %v6268, 64
    %v6289 = vpop.permute.xlu0 %6288
    %6290 = vrot.lane.b32.xlu0 %v6275, 64
    %v6291 = vpop.permute.xlu0 %6290
    %6300 = vst.msk [vmem:[#allocation2 + $0x3] sm:$0x1] %vm2801, %v6277
    %6301 = vst.msk [vmem:[#allocation2 + $0x7] sm:$0x1] %vm2801, %v6279
    %6302 = vst.msk [vmem:[#allocation2 + $0xb] sm:$0x1] %vm2801, %v6281
    %6303 = vst.msk [vmem:[#allocation2 + $0xf] sm:$0x1] %vm2801, %v6283
    %6304 = vst.msk [vmem:[#allocation2 + $0x13] sm:$0x1] %vm2801, %v6285
    %6305 = vst.msk [vmem:[#allocation2 + $0x17] sm:$0x1] %vm2801, %v6287
    %6306 = vst.msk [vmem:[#allocation2 + $0x1b] sm:$0x1] %vm2801, %v6289
    %6307 = vst.msk [vmem:[#allocation2 + $0x1f] sm:$0x1] %vm2801, %v6291
    %v6308 = vrot.slane %v3152, 2
    %v6309 = vrot.slane %v3154, 2
    %v6310 = vrot.slane %v3156, 2
    %v6311 = vrot.slane %v3158, 2
    %v6312 = vrot.slane %v3160, 2
    %v6313 = vrot.slane %v3162, 2
    %v6314 = vrot.slane %v3164, 2
    %v6315 = vrot.slane %v3166, 2
    %v6316 = vrot.slane %v3152, 6
    %v6317 = vrot.slane %v3154, 6
    %v6318 = vrot.slane %v3156, 6
    %v6319 = vrot.slane %v3158, 6
    %v6320 = vrot.slane %v3160, 6
    %v6321 = vrot.slane %v3162, 6
    %v6322 = vrot.slane %v3164, 6
    %v6323 = vrot.slane %v3166, 6
    %6324 = vrot.lane.b32.xlu0 %v964, 32
    %v6325 = vpop.permute.xlu0 %6324
    %6326 = vrot.lane.b32.xlu0 %v972, 32
    %v6327 = vpop.permute.xlu0 %6326
    %6328 = vrot.lane.b32.xlu0 %v971, 32
    %v6329 = vpop.permute.xlu0 %6328
    %6330 = vrot.lane.b32.xlu0 %v973, 32
    %v6331 = vpop.permute.xlu0 %6330
    %6332 = vrot.lane.b32.xlu0 %v1018, 32
    %v6333 = vpop.permute.xlu0 %6332
    %6334 = vrot.lane.b32.xlu0 %v1026, 32
    %v6335 = vpop.permute.xlu0 %6334
    %6336 = vrot.lane.b32.xlu0 %v1025, 32
    %v6337 = vpop.permute.xlu0 %6336
    %6338 = vrot.lane.b32.xlu0 %v1027, 32
    %v6339 = vpop.permute.xlu0 %6338
    %v6340 = vrot.slane %v6325, 2
    %v6341 = vrot.slane %v6327, 2
    %v6342 = vrot.slane %v6329, 2
    %v6343 = vrot.slane %v6331, 2
    %v6344 = vrot.slane %v6333, 2
    %v6345 = vrot.slane %v6335, 2
    %v6346 = vrot.slane %v6337, 2
    %v6347 = vrot.slane %v6339, 2
    %v6348 = vlaneseq
    %v6349 = vshrl.u32 %v6348, 7
    %v6350 = vsub.s32 0, %v6349
    %v6351 = vrot.slane %v6308, %v6350
    %v6352 = vlaneseq
    %v6353 = vshrl.u32 %v6352, 7
    %v6354 = vsub.s32 0, %v6353
    %v6355 = vrot.slane %v6309, %v6354
    %v6356 = vlaneseq
    %v6357 = vshrl.u32 %v6356, 7
    %v6358 = vsub.s32 0, %v6357
    %v6359 = vrot.slane %v6310, %v6358
    %v6360 = vlaneseq
    %v6361 = vshrl.u32 %v6360, 7
    %v6362 = vsub.s32 0, %v6361
    %v6363 = vrot.slane %v6311, %v6362
    %v6364 = vlaneseq
    %v6365 = vshrl.u32 %v6364, 7
    %v6366 = vsub.s32 0, %v6365
    %v6367 = vrot.slane %v6312, %v6366
    %v6368 = vlaneseq
    %v6369 = vshrl.u32 %v6368, 7
    %v6370 = vsub.s32 0, %v6369
    %v6371 = vrot.slane %v6313, %v6370
    %v6372 = vlaneseq
    %v6373 = vshrl.u32 %v6372, 7
    %v6374 = vsub.s32 0, %v6373
    %v6375 = vrot.slane %v6314, %v6374
    %v6376 = vlaneseq
    %v6377 = vshrl.u32 %v6376, 7
    %v6378 = vsub.s32 0, %v6377
    %v6379 = vrot.slane %v6315, %v6378
    %v6380 = vsel %vm1073, %v6355, %v6351
    %v6381 = vsel %vm1075, %v6359, %v6380
    %v6382 = vsel %vm1077, %v6363, %v6381
    %v6383 = vsel %vm1079, %v6367, %v6382
    %v6384 = vsel %vm1081, %v6371, %v6383
    %v6385 = vsel %vm1083, %v6375, %v6384
    %v6386 = vsel %vm1085, %v6379, %v6385
    %v6387 = vlaneseq
    %v6388 = vshrl.u32 %v6387, 7
    %v6389 = vsub.s32 0, %v6388
    %v6390 = vrot.slane %v6316, %v6389
    %v6391 = vlaneseq
    %v6392 = vshrl.u32 %v6391, 7
    %v6393 = vsub.s32 0, %v6392
    %v6394 = vrot.slane %v6317, %v6393
    %v6395 = vlaneseq
    %v6396 = vshrl.u32 %v6395, 7
    %v6397 = vsub.s32 0, %v6396
    %v6398 = vrot.slane %v6318, %v6397
    %v6399 = vlaneseq
    %v6400 = vshrl.u32 %v6399, 7
    %v6401 = vsub.s32 0, %v6400
    %v6402 = vrot.slane %v6319, %v6401
    %v6403 = vlaneseq
    %v6404 = vshrl.u32 %v6403, 7
    %v6405 = vsub.s32 0, %v6404
    %v6406 = vrot.slane %v6320, %v6405
    %v6407 = vlaneseq
    %v6408 = vshrl.u32 %v6407, 7
    %v6409 = vsub.s32 0, %v6408
    %v6410 = vrot.slane %v6321, %v6409
    %v6411 = vlaneseq
    %v6412 = vshrl.u32 %v6411, 7
    %v6413 = vsub.s32 0, %v6412
    %v6414 = vrot.slane %v6322, %v6413
    %v6415 = vlaneseq
    %v6416 = vshrl.u32 %v6415, 7
    %v6417 = vsub.s32 0, %v6416
    %v6418 = vrot.slane %v6323, %v6417
    %v6419 = vsel %vm1073, %v6394, %v6390
    %v6420 = vsel %vm1075, %v6398, %v6419
    %v6421 = vsel %vm1077, %v6402, %v6420
    %v6422 = vsel %vm1079, %v6406, %v6421
    %v6423 = vsel %vm1081, %v6410, %v6422
    %v6424 = vsel %vm1083, %v6414, %v6423
    %v6425 = vsel %vm1085, %v6418, %v6424
    %v6426 = vsel %vm1126, %v6386, 0
    %v6428 = vsel %vm1126, %v6425, 0
    %6430 = vmatprep.subr.mxu0 0.0
    %6431 = vmatpush1.xpose.msra.mxu0 %v6428
    %6432 = vmatprep.subr.mxu0 0.0
    %6433 = vmatpush1.xpose.msra.mxu0 0.0
    %6434 = vmatprep.subr.mxu0 0.0
    %6435 = vmatpush1.xpose.msra.mxu0 0.0
    %6436 = vmatprep.subr.mxu0 0.0
    %6437 = vmatpush1.xpose.msra.mxu0 0.0
    %6438 = vmatprep.subr.mxu0 0.0
    %6439 = vmatpush1.xpose.msra.mxu0 0.0
    %6440 = vmatprep.subr.mxu0 0.0
    %6441 = vmatpush1.xpose.msra.mxu0 0.0
    %6442 = vmatprep.subr.mxu0 0.0
    %6443 = vmatpush1.xpose.msra.mxu0 0.0
    %6444 = vmatprep.subr.mxu0 0.0
    %6445 = vmatpush1.xpose.msra.mxu0 0.0
    %6446 = vmatprep.subr.mxu0 0.0
    %6447 = vmatpush1.xpose.msra.mxu0 0.0
    %6448 = vmatprep.subr.mxu0 0.0
    %6449 = vmatpush1.xpose.msra.mxu0 0.0
    %6450 = vmatprep.subr.mxu0 0.0
    %6451 = vmatpush1.xpose.msra.mxu0 0.0
    %6452 = vmatprep.subr.mxu0 0.0
    %6453 = vmatpush1.xpose.msra.mxu0 0.0
    %6454 = vmatprep.subr.mxu0 0.0
    %6455 = vmatpush1.xpose.msra.mxu0 0.0
    %6456 = vmatprep.subr.mxu0 0.0
    %6457 = vmatpush1.xpose.msra.mxu0 0.0
    %6458 = vmatprep.subr.mxu0 0.0
    %6459 = vmatpush1.xpose.msra.mxu0 0.0
    %6460 = vmatprep.subr.mxu0 0.0
    %6461 = vmatpush1.xpose.msra.mxu0 0.0
    %6462 = vmatprep.subr.mxu0 0.0
    %6463 = vmatpush1.xpose.msra.mxu0 0.0
    %6464 = vmatprep.subr.mxu0 0.0
    %6465 = vmatpush1.xpose.msra.mxu0 0.0
    %6466 = vmatprep.subr.mxu0 0.0
    %6467 = vmatpush1.xpose.msra.mxu0 0.0
    %6468 = vmatprep.subr.mxu0 0.0
    %6469 = vmatpush1.xpose.msra.mxu0 0.0
    %6470 = vmatprep.subr.mxu0 0.0
    %6471 = vmatpush1.xpose.msra.mxu0 0.0
    %6472 = vmatprep.subr.mxu0 0.0
    %6473 = vmatpush1.xpose.msra.mxu0 0.0
    %6474 = vmatprep.subr.mxu0 0.0
    %6475 = vmatpush1.xpose.msra.mxu0 0.0
    %6476 = vmatprep.subr.mxu0 0.0
    %6477 = vmatpush1.xpose.msra.mxu0 0.0
    %6478 = vmatprep.subr.mxu0 0.0
    %6479 = vmatpush1.xpose.msra.mxu0 0.0
    %6480 = vmatprep.subr.mxu0 0.0
    %6481 = vmatpush1.xpose.msra.mxu0 0.0
    %6482 = vmatprep.subr.mxu0 0.0
    %6483 = vmatpush1.xpose.msra.mxu0 0.0
    %6484 = vmatprep.subr.mxu0 0.0
    %6485 = vmatpush1.xpose.msra.mxu0 0.0
    %6486 = vmatprep.subr.mxu0 0.0
    %6487 = vmatpush1.xpose.msra.mxu0 0.0
    %6488 = vmatprep.subr.mxu0 0.0
    %6489 = vmatpush1.xpose.msra.mxu0 0.0
    %6490 = vmatprep.subr.mxu0 0.0
    %6491 = vmatpush1.xpose.msra.mxu0 0.0
    %6492 = vmatprep.subr.mxu0 0.0
    %6493 = vmatpush1.xpose.msra.mxu0 0.0
    %6494 = vmatprep.mubr.f32.mxu0 0.0
    %6495 = vmatmul.mubr.f32.gmra.mrb[0].mxu0 %v6426
    %v6496 = vpop.f32.mrb[0].mxu0
    %v6497 = vadd.f32 0.0, %v6496
    %v6498 = vpop.f32.mrb[0].mxu0
    %6499 = vdwg.mxu0
    %v6500 = vsel %vm1032, %v6497, -inf
    %v6501 = vsel %vm1202, %v6500, -inf
    %6502 = vmax.xlane.f32.xlu0 %v6501
    %v6503 = vpop.xlane.xlu0 %6502
    %v6504 = vsub.f32 %v6500, %v6503
    %v6505 = vmul.f32 %v6504, 1.442695
    %v6506 = vpow.pop %v6505
    %v6507 = vsel %vm1202, %v6506, 0.0
    %6508 = vadd.xlane.f32.xlu0 %v6507
    %v6509 = vpop.xlane.xlu0 %6508
    %v6510 = vlaneseq
    %v6511 = vshrl.u32 %v6510, 7
    %v6512 = vsub.s32 0, %v6511
    %v6513 = vrot.slane %v6340, %v6512
    %v6514 = vlaneseq
    %v6515 = vshrl.u32 %v6514, 7
    %v6516 = vsub.s32 0, %v6515
    %v6517 = vrot.slane %v6341, %v6516
    %v6518 = vlaneseq
    %v6519 = vshrl.u32 %v6518, 7
    %v6520 = vsub.s32 0, %v6519
    %v6521 = vrot.slane %v6342, %v6520
    %v6522 = vlaneseq
    %v6523 = vshrl.u32 %v6522, 7
    %v6524 = vsub.s32 0, %v6523
    %v6525 = vrot.slane %v6343, %v6524
    %v6526 = vlaneseq
    %v6527 = vshrl.u32 %v6526, 7
    %v6528 = vsub.s32 0, %v6527
    %v6529 = vrot.slane %v6344, %v6528
    %v6530 = vlaneseq
    %v6531 = vshrl.u32 %v6530, 7
    %v6532 = vsub.s32 0, %v6531
    %v6533 = vrot.slane %v6345, %v6532
    %v6534 = vlaneseq
    %v6535 = vshrl.u32 %v6534, 7
    %v6536 = vsub.s32 0, %v6535
    %v6537 = vrot.slane %v6346, %v6536
    %v6538 = vlaneseq
    %v6539 = vshrl.u32 %v6538, 7
    %v6540 = vsub.s32 0, %v6539
    %v6541 = vrot.slane %v6347, %v6540
    %v6542 = vsel %vm1073, %v6517, %v6513
    %v6543 = vsel %vm1075, %v6521, %v6542
    %v6544 = vsel %vm1077, %v6525, %v6543
    %v6545 = vsel %vm1079, %v6529, %v6544
    %v6546 = vsel %vm1081, %v6533, %v6545
    %v6547 = vsel %vm1083, %v6537, %v6546
    %v6548 = vsel %vm1085, %v6541, %v6547
    %v6551 = vsel %vm1202, %v6506, 0
    %6553 = vmatprep.subr.mxu0 0.0
    %6554 = vmatpush1.msra.mxu0 %v6548
    %6555 = vmatprep.subr.mxu0 0.0
    %6556 = vmatpush1.msra.mxu0 0.0
    %6557 = vmatprep.subr.mxu0 0.0
    %6558 = vmatpush1.msra.mxu0 0.0
    %6559 = vmatprep.subr.mxu0 0.0
    %6560 = vmatpush1.msra.mxu0 0.0
    %6561 = vmatprep.subr.mxu0 0.0
    %6562 = vmatpush1.msra.mxu0 0.0
    %6563 = vmatprep.subr.mxu0 0.0
    %6564 = vmatpush1.msra.mxu0 0.0
    %6565 = vmatprep.subr.mxu0 0.0
    %6566 = vmatpush1.msra.mxu0 0.0
    %6567 = vmatprep.subr.mxu0 0.0
    %6568 = vmatpush1.msra.mxu0 0.0
    %6569 = vmatprep.subr.mxu0 0.0
    %6570 = vmatpush1.msra.mxu0 0.0
    %6571 = vmatprep.subr.mxu0 0.0
    %6572 = vmatpush1.msra.mxu0 0.0
    %6573 = vmatprep.subr.mxu0 0.0
    %6574 = vmatpush1.msra.mxu0 0.0
    %6575 = vmatprep.subr.mxu0 0.0
    %6576 = vmatpush1.msra.mxu0 0.0
    %6577 = vmatprep.subr.mxu0 0.0
    %6578 = vmatpush1.msra.mxu0 0.0
    %6579 = vmatprep.subr.mxu0 0.0
    %6580 = vmatpush1.msra.mxu0 0.0
    %6581 = vmatprep.subr.mxu0 0.0
    %6582 = vmatpush1.msra.mxu0 0.0
    %6583 = vmatprep.subr.mxu0 0.0
    %6584 = vmatpush1.msra.mxu0 0.0
    %6585 = vmatprep.subr.mxu0 0.0
    %6586 = vmatpush1.msra.mxu0 0.0
    %6587 = vmatprep.subr.mxu0 0.0
    %6588 = vmatpush1.msra.mxu0 0.0
    %6589 = vmatprep.subr.mxu0 0.0
    %6590 = vmatpush1.msra.mxu0 0.0
    %6591 = vmatprep.subr.mxu0 0.0
    %6592 = vmatpush1.msra.mxu0 0.0
    %6593 = vmatprep.subr.mxu0 0.0
    %6594 = vmatpush1.msra.mxu0 0.0
    %6595 = vmatprep.subr.mxu0 0.0
    %6596 = vmatpush1.msra.mxu0 0.0
    %6597 = vmatprep.subr.mxu0 0.0
    %6598 = vmatpush1.msra.mxu0 0.0
    %6599 = vmatprep.subr.mxu0 0.0
    %6600 = vmatpush1.msra.mxu0 0.0
    %6601 = vmatprep.subr.mxu0 0.0
    %6602 = vmatpush1.msra.mxu0 0.0
    %6603 = vmatprep.subr.mxu0 0.0
    %6604 = vmatpush1.msra.mxu0 0.0
    %6605 = vmatprep.subr.mxu0 0.0
    %6606 = vmatpush1.msra.mxu0 0.0
    %6607 = vmatprep.subr.mxu0 0.0
    %6608 = vmatpush1.msra.mxu0 0.0
    %6609 = vmatprep.subr.mxu0 0.0
    %6610 = vmatpush1.msra.mxu0 0.0
    %6611 = vmatprep.subr.mxu0 0.0
    %6612 = vmatpush1.msra.mxu0 0.0
    %6613 = vmatprep.subr.mxu0 0.0
    %6614 = vmatpush1.msra.mxu0 0.0
    %6615 = vmatprep.subr.mxu0 0.0
    %6616 = vmatpush1.msra.mxu0 0.0
    %6617 = vmatprep.mubr.f32.mxu0 0.0
    %6618 = vmatmul.mubr.f32.gmra.mrb[0].mxu0 %v6551
    %v6619 = vpop.f32.mrb[0].mxu0
    %v6620 = vadd.f32 0.0, %v6619
    %v6621 = vpop.f32.mrb[0].mxu0
    %6622 = vdwg.mxu0
    %v6623 = vrcp.pop %v6509
    %v6624 = vmul.f32 %v6620, %v6623
    %v6626 = vcombine.high %v6624, %v6624
    %v6628 = vunpack.c.l.s4 1966171168
    %v6629 = vunpack.c.0.s8 %v6628
    %v6630 = vlaneseq
    %v6631 = vshrl.u32 %v6630, 7
    %v6632 = vsub.s32 %v6629, %v6631
    %v6633 = vrot.slane %v6624, %v6632
    %v6635 = vunpack.c.l.s4 1966171168
    %v6636 = vunpack.c.0.s8 %v6635
    %v6637 = vlaneseq
    %v6638 = vshrl.u32 %v6637, 7
    %v6639 = vsub.s32 %v6636, %v6638
    %v6640 = vrot.slane %v6626, %v6639
    %v6641 = vcombine.high %v6633, %v6633
    %v6642 = vcombine.high %v6640, %v6640
    %v6644 = vunpack.c.l.s4 1966171168
    %v6645 = vunpack.c.0.s8 %v6644
    %v6646 = vlaneseq
    %v6647 = vshrl.u32 %v6646, 7
    %v6648 = vsub.s32 %v6645, %v6647
    %v6649 = vrot.slane %v6633, %v6648
    %v6651 = vunpack.c.l.s4 1966171168
    %v6652 = vunpack.c.0.s8 %v6651
    %v6653 = vlaneseq
    %v6654 = vshrl.u32 %v6653, 7
    %v6655 = vsub.s32 %v6652, %v6654
    %v6656 = vrot.slane %v6640, %v6655
    %v6658 = vunpack.c.l.s4 1966171168
    %v6659 = vunpack.c.0.s8 %v6658
    %v6660 = vlaneseq
    %v6661 = vshrl.u32 %v6660, 7
    %v6662 = vsub.s32 %v6659, %v6661
    %v6663 = vrot.slane %v6641, %v6662
    %v6665 = vunpack.c.l.s4 1966171168
    %v6666 = vunpack.c.0.s8 %v6665
    %v6667 = vlaneseq
    %v6668 = vshrl.u32 %v6667, 7
    %v6669 = vsub.s32 %v6666, %v6668
    %v6670 = vrot.slane %v6642, %v6669
    %v6671 = vcombine.high %v6649, %v6649
    %v6672 = vcombine.high %v6656, %v6656
    %v6673 = vcombine.high %v6663, %v6663
    %v6674 = vcombine.high %v6670, %v6670
    %v6676 = vunpack.c.l.s4 857870592
    %v6677 = vunpack.c.0.s8 %v6676
    %v6678 = vlaneseq
    %v6679 = vshrl.u32 %v6678, 7
    %v6680 = vsub.s32 %v6677, %v6679
    %v6681 = vrot.slane %v6649, %v6680
    %v6683 = vunpack.c.l.s4 857870592
    %v6684 = vunpack.c.0.s8 %v6683
    %v6685 = vlaneseq
    %v6686 = vshrl.u32 %v6685, 7
    %v6687 = vsub.s32 %v6684, %v6686
    %v6688 = vrot.slane %v6663, %v6687
    %v6690 = vunpack.c.l.s4 857870592
    %v6691 = vunpack.c.0.s8 %v6690
    %v6692 = vlaneseq
    %v6693 = vshrl.u32 %v6692, 7
    %v6694 = vsub.s32 %v6691, %v6693
    %v6695 = vrot.slane %v6671, %v6694
    %v6697 = vunpack.c.l.s4 857870592
    %v6698 = vunpack.c.0.s8 %v6697
    %v6699 = vlaneseq
    %v6700 = vshrl.u32 %v6699, 7
    %v6701 = vsub.s32 %v6698, %v6700
    %v6702 = vrot.slane %v6673, %v6701
    %v6704 = vunpack.c.l.s4 857870592
    %v6705 = vunpack.c.0.s8 %v6704
    %v6706 = vlaneseq
    %v6707 = vshrl.u32 %v6706, 7
    %v6708 = vsub.s32 %v6705, %v6707
    %v6709 = vrot.slane %v6656, %v6708
    %v6711 = vunpack.c.l.s4 857870592
    %v6712 = vunpack.c.0.s8 %v6711
    %v6713 = vlaneseq
    %v6714 = vshrl.u32 %v6713, 7
    %v6715 = vsub.s32 %v6712, %v6714
    %v6716 = vrot.slane %v6670, %v6715
    %v6718 = vunpack.c.l.s4 857870592
    %v6719 = vunpack.c.0.s8 %v6718
    %v6720 = vlaneseq
    %v6721 = vshrl.u32 %v6720, 7
    %v6722 = vsub.s32 %v6719, %v6721
    %v6723 = vrot.slane %v6672, %v6722
    %v6725 = vunpack.c.l.s4 857870592
    %v6726 = vunpack.c.0.s8 %v6725
    %v6727 = vlaneseq
    %v6728 = vshrl.u32 %v6727, 7
    %v6729 = vsub.s32 %v6726, %v6728
    %v6730 = vrot.slane %v6674, %v6729
    %6731 = vrot.lane.b32.xlu0 %v6681, 96
    %v6732 = vpop.permute.xlu0 %6731
    %6733 = vrot.lane.b32.xlu0 %v6688, 96
    %v6734 = vpop.permute.xlu0 %6733
    %6735 = vrot.lane.b32.xlu0 %v6695, 96
    %v6736 = vpop.permute.xlu0 %6735
    %6737 = vrot.lane.b32.xlu0 %v6702, 96
    %v6738 = vpop.permute.xlu0 %6737
    %6739 = vrot.lane.b32.xlu0 %v6709, 96
    %v6740 = vpop.permute.xlu0 %6739
    %6741 = vrot.lane.b32.xlu0 %v6716, 96
    %v6742 = vpop.permute.xlu0 %6741
    %6743 = vrot.lane.b32.xlu0 %v6723, 96
    %v6744 = vpop.permute.xlu0 %6743
    %6745 = vrot.lane.b32.xlu0 %v6730, 96
    %v6746 = vpop.permute.xlu0 %6745
    %6755 = vst.msk [vmem:[#allocation2 + $0x2] sm:$0x1] %vm3508, %v6732
    %6756 = vst.msk [vmem:[#allocation2 + $0x6] sm:$0x1] %vm3508, %v6734
    %6757 = vst.msk [vmem:[#allocation2 + $0xa] sm:$0x1] %vm3508, %v6736
    %6758 = vst.msk [vmem:[#allocation2 + $0xe] sm:$0x1] %vm3508, %v6738
    %6759 = vst.msk [vmem:[#allocation2 + $0x12] sm:$0x1] %vm3508, %v6740
    %6760 = vst.msk [vmem:[#allocation2 + $0x16] sm:$0x1] %vm3508, %v6742
    %6761 = vst.msk [vmem:[#allocation2 + $0x1a] sm:$0x1] %vm3508, %v6744
    %6762 = vst.msk [vmem:[#allocation2 + $0x1e] sm:$0x1] %vm3508, %v6746
    %v6763 = vlaneseq
    %v6764 = vshrl.u32 %v6763, 7
    %v6765 = vsub.s32 1, %v6764
    %v6766 = vrot.slane %v6308, %v6765
    %v6767 = vlaneseq
    %v6768 = vshrl.u32 %v6767, 7
    %v6769 = vsub.s32 1, %v6768
    %v6770 = vrot.slane %v6309, %v6769
    %v6771 = vlaneseq
    %v6772 = vshrl.u32 %v6771, 7
    %v6773 = vsub.s32 1, %v6772
    %v6774 = vrot.slane %v6310, %v6773
    %v6775 = vlaneseq
    %v6776 = vshrl.u32 %v6775, 7
    %v6777 = vsub.s32 1, %v6776
    %v6778 = vrot.slane %v6311, %v6777
    %v6779 = vlaneseq
    %v6780 = vshrl.u32 %v6779, 7
    %v6781 = vsub.s32 1, %v6780
    %v6782 = vrot.slane %v6312, %v6781
    %v6783 = vlaneseq
    %v6784 = vshrl.u32 %v6783, 7
    %v6785 = vsub.s32 1, %v6784
    %v6786 = vrot.slane %v6313, %v6785
    %v6787 = vlaneseq
    %v6788 = vshrl.u32 %v6787, 7
    %v6789 = vsub.s32 1, %v6788
    %v6790 = vrot.slane %v6314, %v6789
    %v6791 = vlaneseq
    %v6792 = vshrl.u32 %v6791, 7
    %v6793 = vsub.s32 1, %v6792
    %v6794 = vrot.slane %v6315, %v6793
    %v6795 = vsel %vm1073, %v6770, %v6766
    %v6796 = vsel %vm1075, %v6774, %v6795
    %v6797 = vsel %vm1077, %v6778, %v6796
    %v6798 = vsel %vm1079, %v6782, %v6797
    %v6799 = vsel %vm1081, %v6786, %v6798
    %v6800 = vsel %vm1083, %v6790, %v6799
    %v6801 = vsel %vm1085, %v6794, %v6800
    %v6802 = vlaneseq
    %v6803 = vshrl.u32 %v6802, 7
    %v6804 = vsub.s32 1, %v6803
    %v6805 = vrot.slane %v6316, %v6804
    %v6806 = vlaneseq
    %v6807 = vshrl.u32 %v6806, 7
    %v6808 = vsub.s32 1, %v6807
    %v6809 = vrot.slane %v6317, %v6808
    %v6810 = vlaneseq
    %v6811 = vshrl.u32 %v6810, 7
    %v6812 = vsub.s32 1, %v6811
    %v6813 = vrot.slane %v6318, %v6812
    %v6814 = vlaneseq
    %v6815 = vshrl.u32 %v6814, 7
    %v6816 = vsub.s32 1, %v6815
    %v6817 = vrot.slane %v6319, %v6816
    %v6818 = vlaneseq
    %v6819 = vshrl.u32 %v6818, 7
    %v6820 = vsub.s32 1, %v6819
    %v6821 = vrot.slane %v6320, %v6820
    %v6822 = vlaneseq
    %v6823 = vshrl.u32 %v6822, 7
    %v6824 = vsub.s32 1, %v6823
    %v6825 = vrot.slane %v6321, %v6824
    %v6826 = vlaneseq
    %v6827 = vshrl.u32 %v6826, 7
    %v6828 = vsub.s32 1, %v6827
    %v6829 = vrot.slane %v6322, %v6828
    %v6830 = vlaneseq
    %v6831 = vshrl.u32 %v6830, 7
    %v6832 = vsub.s32 1, %v6831
    %v6833 = vrot.slane %v6323, %v6832
    %v6834 = vsel %vm1073, %v6809, %v6805
    %v6835 = vsel %vm1075, %v6813, %v6834
    %v6836 = vsel %vm1077, %v6817, %v6835
    %v6837 = vsel %vm1079, %v6821, %v6836
    %v6838 = vsel %vm1081, %v6825, %v6837
    %v6839 = vsel %vm1083, %v6829, %v6838
    %v6840 = vsel %vm1085, %v6833, %v6839
    %v6841 = vsel %vm1126, %v6801, 0
    %v6843 = vsel %vm1126, %v6840, 0
    %6845 = vmatprep.subr.mxu0 0.0
    %6846 = vmatpush1.xpose.msra.mxu0 %v6843
    %6847 = vmatprep.subr.mxu0 0.0
    %6848 = vmatpush1.xpose.msra.mxu0 0.0
    %6849 = vmatprep.subr.mxu0 0.0
    %6850 = vmatpush1.xpose.msra.mxu0 0.0
    %6851 = vmatprep.subr.mxu0 0.0
    %6852 = vmatpush1.xpose.msra.mxu0 0.0
    %6853 = vmatprep.subr.mxu0 0.0
    %6854 = vmatpush1.xpose.msra.mxu0 0.0
    %6855 = vmatprep.subr.mxu0 0.0
    %6856 = vmatpush1.xpose.msra.mxu0 0.0
    %6857 = vmatprep.subr.mxu0 0.0
    %6858 = vmatpush1.xpose.msra.mxu0 0.0
    %6859 = vmatprep.subr.mxu0 0.0
    %6860 = vmatpush1.xpose.msra.mxu0 0.0
    %6861 = vmatprep.subr.mxu0 0.0
    %6862 = vmatpush1.xpose.msra.mxu0 0.0
    %6863 = vmatprep.subr.mxu0 0.0
    %6864 = vmatpush1.xpose.msra.mxu0 0.0
    %6865 = vmatprep.subr.mxu0 0.0
    %6866 = vmatpush1.xpose.msra.mxu0 0.0
    %6867 = vmatprep.subr.mxu0 0.0
    %6868 = vmatpush1.xpose.msra.mxu0 0.0
    %6869 = vmatprep.subr.mxu0 0.0
    %6870 = vmatpush1.xpose.msra.mxu0 0.0
    %6871 = vmatprep.subr.mxu0 0.0
    %6872 = vmatpush1.xpose.msra.mxu0 0.0
    %6873 = vmatprep.subr.mxu0 0.0
    %6874 = vmatpush1.xpose.msra.mxu0 0.0
    %6875 = vmatprep.subr.mxu0 0.0
    %6876 = vmatpush1.xpose.msra.mxu0 0.0
    %6877 = vmatprep.subr.mxu0 0.0
    %6878 = vmatpush1.xpose.msra.mxu0 0.0
    %6879 = vmatprep.subr.mxu0 0.0
    %6880 = vmatpush1.xpose.msra.mxu0 0.0
    %6881 = vmatprep.subr.mxu0 0.0
    %6882 = vmatpush1.xpose.msra.mxu0 0.0
    %6883 = vmatprep.subr.mxu0 0.0
    %6884 = vmatpush1.xpose.msra.mxu0 0.0
    %6885 = vmatprep.subr.mxu0 0.0
    %6886 = vmatpush1.xpose.msra.mxu0 0.0
    %6887 = vmatprep.subr.mxu0 0.0
    %6888 = vmatpush1.xpose.msra.mxu0 0.0
    %6889 = vmatprep.subr.mxu0 0.0
    %6890 = vmatpush1.xpose.msra.mxu0 0.0
    %6891 = vmatprep.subr.mxu0 0.0
    %6892 = vmatpush1.xpose.msra.mxu0 0.0
    %6893 = vmatprep.subr.mxu0 0.0
    %6894 = vmatpush1.xpose.msra.mxu0 0.0
    %6895 = vmatprep.subr.mxu0 0.0
    %6896 = vmatpush1.xpose.msra.mxu0 0.0
    %6897 = vmatprep.subr.mxu0 0.0
    %6898 = vmatpush1.xpose.msra.mxu0 0.0
    %6899 = vmatprep.subr.mxu0 0.0
    %6900 = vmatpush1.xpose.msra.mxu0 0.0
    %6901 = vmatprep.subr.mxu0 0.0
    %6902 = vmatpush1.xpose.msra.mxu0 0.0
    %6903 = vmatprep.subr.mxu0 0.0
    %6904 = vmatpush1.xpose.msra.mxu0 0.0
    %6905 = vmatprep.subr.mxu0 0.0
    %6906 = vmatpush1.xpose.msra.mxu0 0.0
    %6907 = vmatprep.subr.mxu0 0.0
    %6908 = vmatpush1.xpose.msra.mxu0 0.0
    %6909 = vmatprep.mubr.f32.mxu0 0.0
    %6910 = vmatmul.mubr.f32.gmra.mrb[0].mxu0 %v6841
    %v6911 = vpop.f32.mrb[0].mxu0
    %v6912 = vadd.f32 0.0, %v6911
    %v6913 = vpop.f32.mrb[0].mxu0
    %6914 = vdwg.mxu0
    %v6915 = vsel %vm1032, %v6912, -inf
    %v6916 = vsel %vm1202, %v6915, -inf
    %6917 = vmax.xlane.f32.xlu0 %v6916
    %v6918 = vpop.xlane.xlu0 %6917
    %v6919 = vsub.f32 %v6915, %v6918
    %v6920 = vmul.f32 %v6919, 1.442695
    %v6921 = vpow.pop %v6920
    %v6922 = vsel %vm1202, %v6921, 0.0
    %6923 = vadd.xlane.f32.xlu0 %v6922
    %v6924 = vpop.xlane.xlu0 %6923
    %v6925 = vlaneseq
    %v6926 = vshrl.u32 %v6925, 7
    %v6927 = vsub.s32 1, %v6926
    %v6928 = vrot.slane %v6340, %v6927
    %v6929 = vlaneseq
    %v6930 = vshrl.u32 %v6929, 7
    %v6931 = vsub.s32 1, %v6930
    %v6932 = vrot.slane %v6341, %v6931
    %v6933 = vlaneseq
    %v6934 = vshrl.u32 %v6933, 7
    %v6935 = vsub.s32 1, %v6934
    %v6936 = vrot.slane %v6342, %v6935
    %v6937 = vlaneseq
    %v6938 = vshrl.u32 %v6937, 7
    %v6939 = vsub.s32 1, %v6938
    %v6940 = vrot.slane %v6343, %v6939
    %v6941 = vlaneseq
    %v6942 = vshrl.u32 %v6941, 7
    %v6943 = vsub.s32 1, %v6942
    %v6944 = vrot.slane %v6344, %v6943
    %v6945 = vlaneseq
    %v6946 = vshrl.u32 %v6945, 7
    %v6947 = vsub.s32 1, %v6946
    %v6948 = vrot.slane %v6345, %v6947
    %v6949 = vlaneseq
    %v6950 = vshrl.u32 %v6949, 7
    %v6951 = vsub.s32 1, %v6950
    %v6952 = vrot.slane %v6346, %v6951
    %v6953 = vlaneseq
    %v6954 = vshrl.u32 %v6953, 7
    %v6955 = vsub.s32 1, %v6954
    %v6956 = vrot.slane %v6347, %v6955
    %v6957 = vsel %vm1073, %v6932, %v6928
    %v6958 = vsel %vm1075, %v6936, %v6957
    %v6959 = vsel %vm1077, %v6940, %v6958
    %v6960 = vsel %vm1079, %v6944, %v6959
    %v6961 = vsel %vm1081, %v6948, %v6960
    %v6962 = vsel %vm1083, %v6952, %v6961
    %v6963 = vsel %vm1085, %v6956, %v6962
    %v6966 = vsel %vm1202, %v6921, 0
    %6968 = vmatprep.subr.mxu0 0.0
    %6969 = vmatpush1.msra.mxu0 %v6963
    %6970 = vmatprep.subr.mxu0 0.0
    %6971 = vmatpush1.msra.mxu0 0.0
    %6972 = vmatprep.subr.mxu0 0.0
    %6973 = vmatpush1.msra.mxu0 0.0
    %6974 = vmatprep.subr.mxu0 0.0
    %6975 = vmatpush1.msra.mxu0 0.0
    %6976 = vmatprep.subr.mxu0 0.0
    %6977 = vmatpush1.msra.mxu0 0.0
    %6978 = vmatprep.subr.mxu0 0.0
    %6979 = vmatpush1.msra.mxu0 0.0
    %6980 = vmatprep.subr.mxu0 0.0
    %6981 = vmatpush1.msra.mxu0 0.0
    %6982 = vmatprep.subr.mxu0 0.0
    %6983 = vmatpush1.msra.mxu0 0.0
    %6984 = vmatprep.subr.mxu0 0.0
    %6985 = vmatpush1.msra.mxu0 0.0
    %6986 = vmatprep.subr.mxu0 0.0
    %6987 = vmatpush1.msra.mxu0 0.0
    %6988 = vmatprep.subr.mxu0 0.0
    %6989 = vmatpush1.msra.mxu0 0.0
    %6990 = vmatprep.subr.mxu0 0.0
    %6991 = vmatpush1.msra.mxu0 0.0
    %6992 = vmatprep.subr.mxu0 0.0
    %6993 = vmatpush1.msra.mxu0 0.0
    %6994 = vmatprep.subr.mxu0 0.0
    %6995 = vmatpush1.msra.mxu0 0.0
    %6996 = vmatprep.subr.mxu0 0.0
    %6997 = vmatpush1.msra.mxu0 0.0
    %6998 = vmatprep.subr.mxu0 0.0
    %6999 = vmatpush1.msra.mxu0 0.0
    %7000 = vmatprep.subr.mxu0 0.0
    %7001 = vmatpush1.msra.mxu0 0.0
    %7002 = vmatprep.subr.mxu0 0.0
    %7003 = vmatpush1.msra.mxu0 0.0
    %7004 = vmatprep.subr.mxu0 0.0
    %7005 = vmatpush1.msra.mxu0 0.0
    %7006 = vmatprep.subr.mxu0 0.0
    %7007 = vmatpush1.msra.mxu0 0.0
    %7008 = vmatprep.subr.mxu0 0.0
    %7009 = vmatpush1.msra.mxu0 0.0
    %7010 = vmatprep.subr.mxu0 0.0
    %7011 = vmatpush1.msra.mxu0 0.0
    %7012 = vmatprep.subr.mxu0 0.0
    %7013 = vmatpush1.msra.mxu0 0.0
    %7014 = vmatprep.subr.mxu0 0.0
    %7015 = vmatpush1.msra.mxu0 0.0
    %7016 = vmatprep.subr.mxu0 0.0
    %7017 = vmatpush1.msra.mxu0 0.0
    %7018 = vmatprep.subr.mxu0 0.0
    %7019 = vmatpush1.msra.mxu0 0.0
    %7020 = vmatprep.subr.mxu0 0.0
    %7021 = vmatpush1.msra.mxu0 0.0
    %7022 = vmatprep.subr.mxu0 0.0
    %7023 = vmatpush1.msra.mxu0 0.0
    %7024 = vmatprep.subr.mxu0 0.0
    %7025 = vmatpush1.msra.mxu0 0.0
    %7026 = vmatprep.subr.mxu0 0.0
    %7027 = vmatpush1.msra.mxu0 0.0
    %7028 = vmatprep.subr.mxu0 0.0
    %7029 = vmatpush1.msra.mxu0 0.0
    %7030 = vmatprep.subr.mxu0 0.0
    %7031 = vmatpush1.msra.mxu0 0.0
    %7032 = vmatprep.mubr.f32.mxu0 0.0
    %7033 = vmatmul.mubr.f32.gmra.mrb[0].mxu0 %v6966
    %v7034 = vpop.f32.mrb[0].mxu0
    %v7035 = vadd.f32 0.0, %v7034
    %v7036 = vpop.f32.mrb[0].mxu0
    %7037 = vdwg.mxu0
    %v7038 = vrcp.pop %v6924
    %v7039 = vmul.f32 %v7035, %v7038
    %v7041 = vcombine.high %v7039, %v7039
    %v7043 = vunpack.c.l.s4 1966171168
    %v7044 = vunpack.c.0.s8 %v7043
    %v7045 = vlaneseq
    %v7046 = vshrl.u32 %v7045, 7
    %v7047 = vsub.s32 %v7044, %v7046
    %v7048 = vrot.slane %v7039, %v7047
    %v7050 = vunpack.c.l.s4 1966171168
    %v7051 = vunpack.c.0.s8 %v7050
    %v7052 = vlaneseq
    %v7053 = vshrl.u32 %v7052, 7
    %v7054 = vsub.s32 %v7051, %v7053
    %v7055 = vrot.slane %v7041, %v7054
    %v7056 = vcombine.high %v7048, %v7048
    %v7057 = vcombine.high %v7055, %v7055
    %v7059 = vunpack.c.l.s4 1966171168
    %v7060 = vunpack.c.0.s8 %v7059
    %v7061 = vlaneseq
    %v7062 = vshrl.u32 %v7061, 7
    %v7063 = vsub.s32 %v7060, %v7062
    %v7064 = vrot.slane %v7048, %v7063
    %v7066 = vunpack.c.l.s4 1966171168
    %v7067 = vunpack.c.0.s8 %v7066
    %v7068 = vlaneseq
    %v7069 = vshrl.u32 %v7068, 7
    %v7070 = vsub.s32 %v7067, %v7069
    %v7071 = vrot.slane %v7055, %v7070
    %v7073 = vunpack.c.l.s4 1966171168
    %v7074 = vunpack.c.0.s8 %v7073
    %v7075 = vlaneseq
    %v7076 = vshrl.u32 %v7075, 7
    %v7077 = vsub.s32 %v7074, %v7076
    %v7078 = vrot.slane %v7056, %v7077
    %v7080 = vunpack.c.l.s4 1966171168
    %v7081 = vunpack.c.0.s8 %v7080
    %v7082 = vlaneseq
    %v7083 = vshrl.u32 %v7082, 7
    %v7084 = vsub.s32 %v7081, %v7083
    %v7085 = vrot.slane %v7057, %v7084
    %v7086 = vcombine.high %v7064, %v7064
    %v7087 = vcombine.high %v7071, %v7071
    %v7088 = vcombine.high %v7078, %v7078
    %v7089 = vcombine.high %v7085, %v7085
    %v7091 = vunpack.c.l.s4 857870592
    %v7092 = vunpack.c.0.s8 %v7091
    %v7093 = vlaneseq
    %v7094 = vshrl.u32 %v7093, 7
    %v7095 = vsub.s32 %v7092, %v7094
    %v7096 = vrot.slane %v7064, %v7095
    %v7098 = vunpack.c.l.s4 857870592
    %v7099 = vunpack.c.0.s8 %v7098
    %v7100 = vlaneseq
    %v7101 = vshrl.u32 %v7100, 7
    %v7102 = vsub.s32 %v7099, %v7101
    %v7103 = vrot.slane %v7078, %v7102
    %v7105 = vunpack.c.l.s4 857870592
    %v7106 = vunpack.c.0.s8 %v7105
    %v7107 = vlaneseq
    %v7108 = vshrl.u32 %v7107, 7
    %v7109 = vsub.s32 %v7106, %v7108
    %v7110 = vrot.slane %v7086, %v7109
    %v7112 = vunpack.c.l.s4 857870592
    %v7113 = vunpack.c.0.s8 %v7112
    %v7114 = vlaneseq
    %v7115 = vshrl.u32 %v7114, 7
    %v7116 = vsub.s32 %v7113, %v7115
    %v7117 = vrot.slane %v7088, %v7116
    %v7119 = vunpack.c.l.s4 857870592
    %v7120 = vunpack.c.0.s8 %v7119
    %v7121 = vlaneseq
    %v7122 = vshrl.u32 %v7121, 7
    %v7123 = vsub.s32 %v7120, %v7122
    %v7124 = vrot.slane %v7071, %v7123
    %v7126 = vunpack.c.l.s4 857870592
    %v7127 = vunpack.c.0.s8 %v7126
    %v7128 = vlaneseq
    %v7129 = vshrl.u32 %v7128, 7
    %v7130 = vsub.s32 %v7127, %v7129
    %v7131 = vrot.slane %v7085, %v7130
    %v7133 = vunpack.c.l.s4 857870592
    %v7134 = vunpack.c.0.s8 %v7133
    %v7135 = vlaneseq
    %v7136 = vshrl.u32 %v7135, 7
    %v7137 = vsub.s32 %v7134, %v7136
    %v7138 = vrot.slane %v7087, %v7137
    %v7140 = vunpack.c.l.s4 857870592
    %v7141 = vunpack.c.0.s8 %v7140
    %v7142 = vlaneseq
    %v7143 = vshrl.u32 %v7142, 7
    %v7144 = vsub.s32 %v7141, %v7143
    %v7145 = vrot.slane %v7089, %v7144
    %7146 = vrot.lane.b32.xlu0 %v7096, 96
    %v7147 = vpop.permute.xlu0 %7146
    %7148 = vrot.lane.b32.xlu0 %v7103, 96
    %v7149 = vpop.permute.xlu0 %7148
    %7150 = vrot.lane.b32.xlu0 %v7110, 96
    %v7151 = vpop.permute.xlu0 %7150
    %7152 = vrot.lane.b32.xlu0 %v7117, 96
    %v7153 = vpop.permute.xlu0 %7152
    %7154 = vrot.lane.b32.xlu0 %v7124, 96
    %v7155 = vpop.permute.xlu0 %7154
    %7156 = vrot.lane.b32.xlu0 %v7131, 96
    %v7157 = vpop.permute.xlu0 %7156
    %7158 = vrot.lane.b32.xlu0 %v7138, 96
    %v7159 = vpop.permute.xlu0 %7158
    %7160 = vrot.lane.b32.xlu0 %v7145, 96
    %v7161 = vpop.permute.xlu0 %7160
    %7170 = vst.msk [vmem:[#allocation2 + $0x3] sm:$0x1] %vm3508, %v7147
    %7171 = vst.msk [vmem:[#allocation2 + $0x7] sm:$0x1] %vm3508, %v7149
    %7172 = vst.msk [vmem:[#allocation2 + $0xb] sm:$0x1] %vm3508, %v7151
    %7173 = vst.msk [vmem:[#allocation2 + $0xf] sm:$0x1] %vm3508, %v7153
    %7174 = vst.msk [vmem:[#allocation2 + $0x13] sm:$0x1] %vm3508, %v7155
    %7175 = vst.msk [vmem:[#allocation2 + $0x17] sm:$0x1] %vm3508, %v7157
    %7176 = vst.msk [vmem:[#allocation2 + $0x1b] sm:$0x1] %vm3508, %v7159
    %7177 = vst.msk [vmem:[#allocation2 + $0x1f] sm:$0x1] %vm3508, %v7161
    %v7178 = vld [vmem:[#allocation2] sm:$0xf]
    %v7179 = vld [vmem:[#allocation2 + $0x4] sm:$0xf]
    %v7180 = vld [vmem:[#allocation2 + $0x8] sm:$0xf]
    %v7181 = vld [vmem:[#allocation2 + $0xc] sm:$0xf]
    %v7182 = vld [vmem:[#allocation2 + $0x10] sm:$0xf]
    %v7183 = vld [vmem:[#allocation2 + $0x14] sm:$0xf]
    %v7184 = vld [vmem:[#allocation2 + $0x18] sm:$0xf]
    %v7185 = vld [vmem:[#allocation2 + $0x1c] sm:$0xf]
    %v7194 = vcombine.low %v7178, %v7179
    %v7195 = vcombine.low %v7180, %v7181
    %v7197 = vunpack.c.l.s4 1983009808
    %v7198 = vunpack.c.0.s8 %v7197
    %v7199 = vlaneseq
    %v7200 = vshrl.u32 %v7199, 7
    %v7201 = vsub.s32 %v7198, %v7200
    %v7202 = vrot.slane %v7194, %v7201
    %v7204 = vunpack.c.l.s4 1983009808
    %v7205 = vunpack.c.0.s8 %v7204
    %v7206 = vlaneseq
    %v7207 = vshrl.u32 %v7206, 7
    %v7208 = vsub.s32 %v7205, %v7207
    %v7209 = vrot.slane %v7195, %v7208
    %v7210 = vcombine.low %v7202, %v7209
    %v7211 = vcombine.high %v7202, %v7209
    %v7212 = vcombine.low %v7182, %v7183
    %v7213 = vcombine.low %v7184, %v7185
    %v7215 = vunpack.c.l.s4 1983009808
    %v7216 = vunpack.c.0.s8 %v7215
    %v7217 = vlaneseq
    %v7218 = vshrl.u32 %v7217, 7
    %v7219 = vsub.s32 %v7216, %v7218
    %v7220 = vrot.slane %v7212, %v7219
    %v7222 = vunpack.c.l.s4 1983009808
    %v7223 = vunpack.c.0.s8 %v7222
    %v7224 = vlaneseq
    %v7225 = vshrl.u32 %v7224, 7
    %v7226 = vsub.s32 %v7223, %v7225
    %v7227 = vrot.slane %v7213, %v7226
    %v7228 = vcombine.low %v7220, %v7227
    %v7229 = vcombine.high %v7220, %v7227
    %v7234 = vpack.c.bf16 %v7228, %v7210
    %v7235 = vpack.c.bf16 %v7229, %v7211
    %v7236 = vld [vmem:[#allocation8] sm:$0xff]
    %v7237 = vld [vmem:[#allocation8 + $0x8] sm:$0xff]
    %v7238 = vld [vmem:[#allocation8 + $0x10] sm:$0xff]
    %v7239 = vld [vmem:[#allocation8 + $0x18] sm:$0xff]
    %v7240 = vld [vmem:[#allocation8 + $0x20] sm:$0xff]
    %v7241 = vld [vmem:[#allocation8 + $0x28] sm:$0xff]
    %v7242 = vld [vmem:[#allocation8 + $0x30] sm:$0xff]
    %v7243 = vld [vmem:[#allocation8 + $0x38] sm:$0xff]
    %v7244 = vld [vmem:[#allocation8 + $0x40] sm:$0xff]
    %v7245 = vld [vmem:[#allocation8 + $0x48] sm:$0xff]
    %v7246 = vld [vmem:[#allocation8 + $0x50] sm:$0xff]
    %v7247 = vld [vmem:[#allocation8 + $0x58] sm:$0xff]
    %v7248 = vld [vmem:[#allocation8 + $0x60] sm:$0xff]
    %v7249 = vld [vmem:[#allocation8 + $0x68] sm:$0xff]
    %v7250 = vld [vmem:[#allocation8 + $0x70] sm:$0xff]
    %v7251 = vld [vmem:[#allocation8 + $0x78] sm:$0xff]
    %v7252 = vld [vmem:[#allocation8 + $0x80] sm:$0xff]
    %v7253 = vld [vmem:[#allocation8 + $0x88] sm:$0xff]
    %v7254 = vld [vmem:[#allocation8 + $0x90] sm:$0xff]
    %v7255 = vld [vmem:[#allocation8 + $0x98] sm:$0xff]
    %v7256 = vld [vmem:[#allocation8 + $0xa0] sm:$0xff]
    %v7257 = vld [vmem:[#allocation8 + $0xa8] sm:$0xff]
    %v7258 = vld [vmem:[#allocation8 + $0xb0] sm:$0xff]
    %v7259 = vld [vmem:[#allocation8 + $0xb8] sm:$0xff]
    %v7260 = vld [vmem:[#allocation8 + $0xc0] sm:$0xff]
    %v7261 = vld [vmem:[#allocation8 + $0xc8] sm:$0xff]
    %v7262 = vld [vmem:[#allocation8 + $0xd0] sm:$0xff]
    %v7263 = vld [vmem:[#allocation8 + $0xd8] sm:$0xff]
    %v7264 = vld [vmem:[#allocation8 + $0xe0] sm:$0xff]
    %v7265 = vld [vmem:[#allocation8 + $0xe8] sm:$0xff]
    %v7266 = vld [vmem:[#allocation8 + $0xf0] sm:$0xff]
    %v7267 = vld [vmem:[#allocation8 + $0xf8] sm:$0xff]
    %v7268 = vld [vmem:[%s4] sm:$0x3]
    %v7270 = vlaneseq
    %v7271 = vshrl.u32 %v7270, 7
    %v7272 = vsub.s32 0, %v7271
    %v7273 = vrot.slane %v7268, %v7272
    %v7274 = vlaneseq
    %v7275 = vshrl.u32 %v7274, 7
    %v7276 = vsub.s32 1, %v7275
    %v7277 = vrot.slane %v7268, %v7276
    %v7312 = vunpack.c.l.b16 %v7236
    %v7313 = vunpack.c.h.b16 %v7236
    %v7314 = vunpack.c.l.b16 %v7237
    %v7315 = vunpack.c.h.b16 %v7237
    %v7316 = vunpack.c.l.b16 %v7238
    %v7317 = vunpack.c.h.b16 %v7238
    %v7318 = vunpack.c.l.b16 %v7239
    %v7319 = vunpack.c.h.b16 %v7239
    %v7320 = vunpack.c.l.b16 %v7240
    %v7321 = vunpack.c.h.b16 %v7240
    %v7322 = vunpack.c.l.b16 %v7241
    %v7323 = vunpack.c.h.b16 %v7241
    %v7324 = vunpack.c.l.b16 %v7242
    %v7325 = vunpack.c.h.b16 %v7242
    %v7326 = vunpack.c.l.b16 %v7243
    %v7327 = vunpack.c.h.b16 %v7243
    %v7328 = vunpack.c.l.b16 %v7244
    %v7329 = vunpack.c.h.b16 %v7244
    %v7330 = vunpack.c.l.b16 %v7245
    %v7331 = vunpack.c.h.b16 %v7245
    %v7332 = vunpack.c.l.b16 %v7246
    %v7333 = vunpack.c.h.b16 %v7246
    %v7334 = vunpack.c.l.b16 %v7247
    %v7335 = vunpack.c.h.b16 %v7247
    %v7336 = vunpack.c.l.b16 %v7248
    %v7337 = vunpack.c.h.b16 %v7248
    %v7338 = vunpack.c.l.b16 %v7249
    %v7339 = vunpack.c.h.b16 %v7249
    %v7340 = vunpack.c.l.b16 %v7250
    %v7341 = vunpack.c.h.b16 %v7250
    %v7342 = vunpack.c.l.b16 %v7251
    %v7343 = vunpack.c.h.b16 %v7251
    %v7344 = vunpack.c.l.b16 %v7252
    %v7345 = vunpack.c.h.b16 %v7252
    %v7346 = vunpack.c.l.b16 %v7253
    %v7347 = vunpack.c.h.b16 %v7253
    %v7348 = vunpack.c.l.b16 %v7254
    %v7349 = vunpack.c.h.b16 %v7254
    %v7350 = vunpack.c.l.b16 %v7255
    %v7351 = vunpack.c.h.b16 %v7255
    %v7352 = vunpack.c.l.b16 %v7256
    %v7353 = vunpack.c.h.b16 %v7256
    %v7354 = vunpack.c.l.b16 %v7257
    %v7355 = vunpack.c.h.b16 %v7257
    %v7356 = vunpack.c.l.b16 %v7258
    %v7357 = vunpack.c.h.b16 %v7258
    %v7358 = vunpack.c.l.b16 %v7259
    %v7359 = vunpack.c.h.b16 %v7259
    %v7360 = vunpack.c.l.b16 %v7260
    %v7361 = vunpack.c.h.b16 %v7260
    %v7362 = vunpack.c.l.b16 %v7261
    %v7363 = vunpack.c.h.b16 %v7261
    %v7364 = vunpack.c.l.b16 %v7262
    %v7365 = vunpack.c.h.b16 %v7262
    %v7366 = vunpack.c.l.b16 %v7263
    %v7367 = vunpack.c.h.b16 %v7263
    %v7368 = vunpack.c.l.b16 %v7264
    %v7369 = vunpack.c.h.b16 %v7264
    %v7370 = vunpack.c.l.b16 %v7265
    %v7371 = vunpack.c.h.b16 %v7265
    %v7372 = vunpack.c.l.b16 %v7266
    %v7373 = vunpack.c.h.b16 %v7266
    %v7374 = vunpack.c.l.b16 %v7267
    %v7375 = vunpack.c.h.b16 %v7267
    %v7376 = vpack.c.b16 %v7314, %v7312
    %v7377 = vpack.c.b16 %v7315, %v7313
    %v7378 = vpack.c.b16 %v7318, %v7316
    %v7379 = vpack.c.b16 %v7319, %v7317
    %v7380 = vpack.c.b16 %v7322, %v7320
    %v7381 = vpack.c.b16 %v7323, %v7321
    %v7382 = vpack.c.b16 %v7326, %v7324
    %v7383 = vpack.c.b16 %v7327, %v7325
    %v7384 = vpack.c.b16 %v7330, %v7328
    %v7385 = vpack.c.b16 %v7331, %v7329
    %v7386 = vpack.c.b16 %v7334, %v7332
    %v7387 = vpack.c.b16 %v7335, %v7333
    %v7388 = vpack.c.b16 %v7338, %v7336
    %v7389 = vpack.c.b16 %v7339, %v7337
    %v7390 = vpack.c.b16 %v7342, %v7340
    %v7391 = vpack.c.b16 %v7343, %v7341
    %v7392 = vpack.c.b16 %v7346, %v7344
    %v7393 = vpack.c.b16 %v7347, %v7345
    %v7394 = vpack.c.b16 %v7350, %v7348
    %v7395 = vpack.c.b16 %v7351, %v7349
    %v7396 = vpack.c.b16 %v7354, %v7352
    %v7397 = vpack.c.b16 %v7355, %v7353
    %v7398 = vpack.c.b16 %v7358, %v7356
    %v7399 = vpack.c.b16 %v7359, %v7357
    %v7400 = vpack.c.b16 %v7362, %v7360
    %v7401 = vpack.c.b16 %v7363, %v7361
    %v7402 = vpack.c.b16 %v7366, %v7364
    %v7403 = vpack.c.b16 %v7367, %v7365
    %v7404 = vpack.c.b16 %v7370, %v7368
    %v7405 = vpack.c.b16 %v7371, %v7369
    %v7406 = vpack.c.b16 %v7374, %v7372
    %v7407 = vpack.c.b16 %v7375, %v7373
    %7440 = vmatprep.subr.bf16.mxu0 %v7377
    %7441 = vmatpush1.bf16.msra.mxu0 %v7376
    %7442 = vmatprep.subr.bf16.mxu0 %v7379
    %7443 = vmatpush1.bf16.msra.mxu0 %v7378
    %7444 = vmatprep.subr.bf16.mxu0 %v7381
    %7445 = vmatpush1.bf16.msra.mxu0 %v7380
    %7446 = vmatprep.subr.bf16.mxu0 %v7383
    %7447 = vmatpush1.bf16.msra.mxu0 %v7382
    %7448 = vmatprep.subr.bf16.mxu0 %v7385
    %7449 = vmatpush1.bf16.msra.mxu0 %v7384
    %7450 = vmatprep.subr.bf16.mxu0 %v7387
    %7451 = vmatpush1.bf16.msra.mxu0 %v7386
    %7452 = vmatprep.subr.bf16.mxu0 %v7389
    %7453 = vmatpush1.bf16.msra.mxu0 %v7388
    %7454 = vmatprep.subr.bf16.mxu0 %v7391
    %7455 = vmatpush1.bf16.msra.mxu0 %v7390
    %7456 = vmatprep.subr.bf16.mxu0 %v7393
    %7457 = vmatpush1.bf16.msra.mxu0 %v7392
    %7458 = vmatprep.subr.bf16.mxu0 %v7395
    %7459 = vmatpush1.bf16.msra.mxu0 %v7394
    %7460 = vmatprep.subr.bf16.mxu0 %v7397
    %7461 = vmatpush1.bf16.msra.mxu0 %v7396
    %7462 = vmatprep.subr.bf16.mxu0 %v7399
    %7463 = vmatpush1.bf16.msra.mxu0 %v7398
    %7464 = vmatprep.subr.bf16.mxu0 %v7401
    %7465 = vmatpush1.bf16.msra.mxu0 %v7400
    %7466 = vmatprep.subr.bf16.mxu0 %v7403
    %7467 = vmatpush1.bf16.msra.mxu0 %v7402
    %7468 = vmatprep.subr.bf16.mxu0 %v7405
    %7469 = vmatpush1.bf16.msra.mxu0 %v7404
    %7470 = vmatprep.subr.bf16.mxu0 %v7407
    %7471 = vmatpush1.bf16.msra.mxu0 %v7406
    %7472 = vmatprep.mubr.bf16.mxu0 %v7235
    %7473 = vmatmul.mubr.bf16.gmra.mrb[0].mxu0 %v7234
    %v7474 = vpop.f32.mrb[0].mxu0
    %v7475 = vadd.f32 %v7273, %v7474
    %v7476 = vpop.f32.mrb[0].mxu0
    %v7477 = vadd.f32 %v7277, %v7476
    %v7478 = vpop.f32.mrb[0].mxu0
    %v7479 = vadd.f32 %v7273, %v7478
    %v7480 = vpop.f32.mrb[0].mxu0
    %v7481 = vadd.f32 %v7277, %v7480
    %7482 = vdwg.mxu0
    %v7487 = vcombine.low %v7475, %v7477
    %v7488 = vcombine.high %v7475, %v7477
    %v7490 = vunpack.c.l.s4 1983009808
    %v7491 = vunpack.c.0.s8 %v7490
    %v7492 = vlaneseq
    %v7493 = vshrl.u32 %v7492, 7
    %v7494 = vsub.s32 %v7491, %v7493
    %v7495 = vrot.slane %v7487, %v7494
    %v7497 = vunpack.c.l.s4 1983009808
    %v7498 = vunpack.c.0.s8 %v7497
    %v7499 = vlaneseq
    %v7500 = vshrl.u32 %v7499, 7
    %v7501 = vsub.s32 %v7498, %v7500
    %v7502 = vrot.slane %v7488, %v7501
    %v7503 = vcombine.high %v7495, %v7495
    %v7504 = vcombine.high %v7502, %v7502
    %v7505 = vcombine.low %v7479, %v7481
    %v7506 = vcombine.high %v7479, %v7481
    %v7508 = vunpack.c.l.s4 1983009808
    %v7509 = vunpack.c.0.s8 %v7508
    %v7510 = vlaneseq
    %v7511 = vshrl.u32 %v7510, 7
    %v7512 = vsub.s32 %v7509, %v7511
    %v7513 = vrot.slane %v7505, %v7512
    %v7515 = vunpack.c.l.s4 1983009808
    %v7516 = vunpack.c.0.s8 %v7515
    %v7517 = vlaneseq
    %v7518 = vshrl.u32 %v7517, 7
    %v7519 = vsub.s32 %v7516, %v7518
    %v7520 = vrot.slane %v7506, %v7519
    %v7521 = vcombine.high %v7513, %v7513
    %v7522 = vcombine.high %v7520, %v7520
    %v7531 = vadd.f32 %v113, %v7495
    %v7532 = vadd.f32 %v114, %v7503
    %v7533 = vadd.f32 %v115, %v7502
    %v7534 = vadd.f32 %v116, %v7504
    %v7535 = vadd.f32 %v117, %v7513
    %v7536 = vadd.f32 %v118, %v7521
    %v7537 = vadd.f32 %v119, %v7520
    %v7538 = vadd.f32 %v120, %v7522
    %v7539 = vld [vmem:[%s5] sm:$0x3]
    %v7540 = vld [vmem:[%s6] sm:$0x3]
    %v7549 = vcombine.low %v7531, %v7532
    %v7550 = vcombine.low %v7533, %v7534
    %v7552 = vunpack.c.l.s4 1983009808
    %v7553 = vunpack.c.0.s8 %v7552
    %v7554 = vlaneseq
    %v7555 = vshrl.u32 %v7554, 7
    %v7556 = vsub.s32 %v7553, %v7555
    %v7557 = vrot.slane %v7549, %v7556
    %v7559 = vunpack.c.l.s4 1983009808
    %v7560 = vunpack.c.0.s8 %v7559
    %v7561 = vlaneseq
    %v7562 = vshrl.u32 %v7561, 7
    %v7563 = vsub.s32 %v7560, %v7562
    %v7564 = vrot.slane %v7550, %v7563
    %v7565 = vcombine.low %v7557, %v7564
    %v7566 = vcombine.high %v7557, %v7564
    %v7567 = vcombine.low %v7535, %v7536
    %v7568 = vcombine.low %v7537, %v7538
    %v7570 = vunpack.c.l.s4 1983009808
    %v7571 = vunpack.c.0.s8 %v7570
    %v7572 = vlaneseq
    %v7573 = vshrl.u32 %v7572, 7
    %v7574 = vsub.s32 %v7571, %v7573
    %v7575 = vrot.slane %v7567, %v7574
    %v7577 = vunpack.c.l.s4 1983009808
    %v7578 = vunpack.c.0.s8 %v7577
    %v7579 = vlaneseq
    %v7580 = vshrl.u32 %v7579, 7
    %v7581 = vsub.s32 %v7578, %v7580
    %v7582 = vrot.slane %v7568, %v7581
    %v7583 = vcombine.low %v7575, %v7582
    %v7584 = vcombine.high %v7575, %v7582
    %v7589 = vadd.f32 %v7565, %v7566
    %7590 = vadd.xlane.f32.xlu0 %v7589
    %v7591 = vpop.xlane.xlu0 %7590
    %v7592 = vadd.f32 %v7583, %v7584
    %7593 = vadd.xlane.f32.xlu0 %v7592
    %v7594 = vpop.xlane.xlu0 %7593
    %v7595 = vrcp.pop 256.0
    %v7596 = vmul.f32 %v7591, %v7595
    %v7597 = vmul.f32 %v7594, %v7595
    %v7601 = vunpack.c.l.s4 269488144
    %v7602 = vunpack.c.0.s8 %v7601
    %v7603 = vlaneseq
    %v7604 = vshrl.u32 %v7603, 7
    %v7605 = vsub.s32 %v7602, %v7604
    %v7606 = vrot.slane %v7596, %v7605
    %v7608 = vunpack.c.l.s4 842150450
    %v7609 = vunpack.c.0.s8 %v7608
    %v7610 = vlaneseq
    %v7611 = vshrl.u32 %v7610, 7
    %v7612 = vsub.s32 %v7609, %v7611
    %v7613 = vrot.slane %v7596, %v7612
    %v7615 = vunpack.c.l.s4 1414812756
    %v7616 = vunpack.c.0.s8 %v7615
    %v7617 = vlaneseq
    %v7618 = vshrl.u32 %v7617, 7
    %v7619 = vsub.s32 %v7616, %v7618
    %v7620 = vrot.slane %v7596, %v7619
    %v7622 = vunpack.c.l.s4 1987475062
    %v7623 = vunpack.c.0.s8 %v7622
    %v7624 = vlaneseq
    %v7625 = vshrl.u32 %v7624, 7
    %v7626 = vsub.s32 %v7623, %v7625
    %v7627 = vrot.slane %v7596, %v7626
    %v7629 = vunpack.c.l.s4 269488144
    %v7630 = vunpack.c.0.s8 %v7629
    %v7631 = vlaneseq
    %v7632 = vshrl.u32 %v7631, 7
    %v7633 = vsub.s32 %v7630, %v7632
    %v7634 = vrot.slane %v7597, %v7633
    %v7636 = vunpack.c.l.s4 842150450
    %v7637 = vunpack.c.0.s8 %v7636
    %v7638 = vlaneseq
    %v7639 = vshrl.u32 %v7638, 7
    %v7640 = vsub.s32 %v7637, %v7639
    %v7641 = vrot.slane %v7597, %v7640
    %v7643 = vunpack.c.l.s4 1414812756
    %v7644 = vunpack.c.0.s8 %v7643
    %v7645 = vlaneseq
    %v7646 = vshrl.u32 %v7645, 7
    %v7647 = vsub.s32 %v7644, %v7646
    %v7648 = vrot.slane %v7597, %v7647
    %v7650 = vunpack.c.l.s4 1987475062
    %v7651 = vunpack.c.0.s8 %v7650
    %v7652 = vlaneseq
    %v7653 = vshrl.u32 %v7652, 7
    %v7654 = vsub.s32 %v7651, %v7653
    %v7655 = vrot.slane %v7597, %v7654
    %v7664 = vsub.f32 %v7531, %v7606
    %v7665 = vsub.f32 %v7532, %v7613
    %v7666 = vsub.f32 %v7533, %v7620
    %v7667 = vsub.f32 %v7534, %v7627
    %v7668 = vsub.f32 %v7535, %v7634
    %v7669 = vsub.f32 %v7536, %v7641
    %v7670 = vsub.f32 %v7537, %v7648
    %v7671 = vsub.f32 %v7538, %v7655
    %v7672 = vmul.f32 %v7664, %v7664
    %v7673 = vmul.f32 %v7665, %v7665
    %v7674 = vmul.f32 %v7666, %v7666
    %v7675 = vmul.f32 %v7667, %v7667
    %v7676 = vmul.f32 %v7668, %v7668
    %v7677 = vmul.f32 %v7669, %v7669
    %v7678 = vmul.f32 %v7670, %v7670
    %v7679 = vmul.f32 %v7671, %v7671
    %v7688 = vcombine.low %v7672, %v7673
    %v7689 = vcombine.low %v7674, %v7675
    %v7691 = vunpack.c.l.s4 1983009808
    %v7692 = vunpack.c.0.s8 %v7691
    %v7693 = vlaneseq
    %v7694 = vshrl.u32 %v7693, 7
    %v7695 = vsub.s32 %v7692, %v7694
    %v7696 = vrot.slane %v7688, %v7695
    %v7698 = vunpack.c.l.s4 1983009808
    %v7699 = vunpack.c.0.s8 %v7698
    %v7700 = vlaneseq
    %v7701 = vshrl.u32 %v7700, 7
    %v7702 = vsub.s32 %v7699, %v7701
    %v7703 = vrot.slane %v7689, %v7702
    %v7704 = vcombine.low %v7696, %v7703
    %v7705 = vcombine.high %v7696, %v7703
    %v7706 = vcombine.low %v7676, %v7677
    %v7707 = vcombine.low %v7678, %v7679
    %v7709 = vunpack.c.l.s4 1983009808
    %v7710 = vunpack.c.0.s8 %v7709
    %v7711 = vlaneseq
    %v7712 = vshrl.u32 %v7711, 7
    %v7713 = vsub.s32 %v7710, %v7712
    %v7714 = vrot.slane %v7706, %v7713
    %v7716 = vunpack.c.l.s4 1983009808
    %v7717 = vunpack.c.0.s8 %v7716
    %v7718 = vlaneseq
    %v7719 = vshrl.u32 %v7718, 7
    %v7720 = vsub.s32 %v7717, %v7719
    %v7721 = vrot.slane %v7707, %v7720
    %v7722 = vcombine.low %v7714, %v7721
    %v7723 = vcombine.high %v7714, %v7721
    %v7728 = vadd.f32 %v7704, %v7705
    %7729 = vadd.xlane.f32.xlu0 %v7728
    %v7730 = vpop.xlane.xlu0 %7729
    %v7731 = vadd.f32 %v7722, %v7723
    %7732 = vadd.xlane.f32.xlu0 %v7731
    %v7733 = vpop.xlane.xlu0 %7732
    %v7734 = vmul.f32 %v7730, %v7595
    %v7735 = vmul.f32 %v7733, %v7595
    %v7736 = vadd.f32 %v7734, 1e-05
    %v7737 = vadd.f32 %v7735, 1e-05
    %v7738 = vrsqrt.pop %v7736
    %v7739 = vrsqrt.pop %v7737
    %v7743 = vunpack.c.l.s4 269488144
    %v7744 = vunpack.c.0.s8 %v7743
    %v7745 = vlaneseq
    %v7746 = vshrl.u32 %v7745, 7
    %v7747 = vsub.s32 %v7744, %v7746
    %v7748 = vrot.slane %v7738, %v7747
    %v7750 = vunpack.c.l.s4 842150450
    %v7751 = vunpack.c.0.s8 %v7750
    %v7752 = vlaneseq
    %v7753 = vshrl.u32 %v7752, 7
    %v7754 = vsub.s32 %v7751, %v7753
    %v7755 = vrot.slane %v7738, %v7754
    %v7757 = vunpack.c.l.s4 1414812756
    %v7758 = vunpack.c.0.s8 %v7757
    %v7759 = vlaneseq
    %v7760 = vshrl.u32 %v7759, 7
    %v7761 = vsub.s32 %v7758, %v7760
    %v7762 = vrot.slane %v7738, %v7761
    %v7764 = vunpack.c.l.s4 1987475062
    %v7765 = vunpack.c.0.s8 %v7764
    %v7766 = vlaneseq
    %v7767 = vshrl.u32 %v7766, 7
    %v7768 = vsub.s32 %v7765, %v7767
    %v7769 = vrot.slane %v7738, %v7768
    %v7771 = vunpack.c.l.s4 269488144
    %v7772 = vunpack.c.0.s8 %v7771
    %v7773 = vlaneseq
    %v7774 = vshrl.u32 %v7773, 7
    %v7775 = vsub.s32 %v7772, %v7774
    %v7776 = vrot.slane %v7739, %v7775
    %v7778 = vunpack.c.l.s4 842150450
    %v7779 = vunpack.c.0.s8 %v7778
    %v7780 = vlaneseq
    %v7781 = vshrl.u32 %v7780, 7
    %v7782 = vsub.s32 %v7779, %v7781
    %v7783 = vrot.slane %v7739, %v7782
    %v7785 = vunpack.c.l.s4 1414812756
    %v7786 = vunpack.c.0.s8 %v7785
    %v7787 = vlaneseq
    %v7788 = vshrl.u32 %v7787, 7
    %v7789 = vsub.s32 %v7786, %v7788
    %v7790 = vrot.slane %v7739, %v7789
    %v7792 = vunpack.c.l.s4 1987475062
    %v7793 = vunpack.c.0.s8 %v7792
    %v7794 = vlaneseq
    %v7795 = vshrl.u32 %v7794, 7
    %v7796 = vsub.s32 %v7793, %v7795
    %v7797 = vrot.slane %v7739, %v7796
    %v7806 = vmul.f32 %v7664, %v7748
    %v7807 = vmul.f32 %v7665, %v7755
    %v7808 = vmul.f32 %v7666, %v7762
    %v7809 = vmul.f32 %v7667, %v7769
    %v7810 = vmul.f32 %v7668, %v7776
    %v7811 = vmul.f32 %v7669, %v7783
    %v7812 = vmul.f32 %v7670, %v7790
    %v7813 = vmul.f32 %v7671, %v7797
    %v7815 = vlaneseq
    %v7816 = vshrl.u32 %v7815, 7
    %v7817 = vsub.s32 0, %v7816
    %v7818 = vrot.slane %v7539, %v7817
    %v7819 = vlaneseq
    %v7820 = vshrl.u32 %v7819, 7
    %v7821 = vsub.s32 1, %v7820
    %v7822 = vrot.slane %v7539, %v7821
    %v7823 = vcombine.low %v7818, %v7822
    %v7824 = vcombine.high %v7818, %v7822
    %v7826 = vunpack.c.l.s4 1983009808
    %v7827 = vunpack.c.0.s8 %v7826
    %v7828 = vlaneseq
    %v7829 = vshrl.u32 %v7828, 7
    %v7830 = vsub.s32 %v7827, %v7829
    %v7831 = vrot.slane %v7823, %v7830
    %v7833 = vunpack.c.l.s4 1983009808
    %v7834 = vunpack.c.0.s8 %v7833
    %v7835 = vlaneseq
    %v7836 = vshrl.u32 %v7835, 7
    %v7837 = vsub.s32 %v7834, %v7836
    %v7838 = vrot.slane %v7824, %v7837
    %v7839 = vcombine.high %v7831, %v7831
    %v7840 = vcombine.high %v7838, %v7838
    %v7845 = vmul.f32 %v7806, %v7831
    %v7846 = vmul.f32 %v7807, %v7839
    %v7847 = vmul.f32 %v7808, %v7838
    %v7848 = vmul.f32 %v7809, %v7840
    %v7849 = vmul.f32 %v7810, %v7831
    %v7850 = vmul.f32 %v7811, %v7839
    %v7851 = vmul.f32 %v7812, %v7838
    %v7852 = vmul.f32 %v7813, %v7840
    %v7854 = vlaneseq
    %v7855 = vshrl.u32 %v7854, 7
    %v7856 = vsub.s32 0, %v7855
    %v7857 = vrot.slane %v7540, %v7856
    %v7858 = vlaneseq
    %v7859 = vshrl.u32 %v7858, 7
    %v7860 = vsub.s32 1, %v7859
    %v7861 = vrot.slane %v7540, %v7860
    %v7862 = vcombine.low %v7857, %v7861
    %v7863 = vcombine.high %v7857, %v7861
    %v7865 = vunpack.c.l.s4 1983009808
    %v7866 = vunpack.c.0.s8 %v7865
    %v7867 = vlaneseq
    %v7868 = vshrl.u32 %v7867, 7
    %v7869 = vsub.s32 %v7866, %v7868
    %v7870 = vrot.slane %v7862, %v7869
    %v7872 = vunpack.c.l.s4 1983009808
    %v7873 = vunpack.c.0.s8 %v7872
    %v7874 = vlaneseq
    %v7875 = vshrl.u32 %v7874, 7
    %v7876 = vsub.s32 %v7873, %v7875
    %v7877 = vrot.slane %v7863, %v7876
    %v7878 = vcombine.high %v7870, %v7870
    %v7879 = vcombine.high %v7877, %v7877
    %v7884 = vadd.f32 %v7845, %v7870
    %v7885 = vadd.f32 %v7846, %v7878
    %v7886 = vadd.f32 %v7847, %v7877
    %v7887 = vadd.f32 %v7848, %v7879
    %v7888 = vadd.f32 %v7849, %v7870
    %v7889 = vadd.f32 %v7850, %v7878
    %v7890 = vadd.f32 %v7851, %v7877
    %v7891 = vadd.f32 %v7852, %v7879
    %v7900 = vcombine.low %v7884, %v7885
    %v7901 = vcombine.low %v7886, %v7887
    %v7903 = vunpack.c.l.s4 1983009808
    %v7904 = vunpack.c.0.s8 %v7903
    %v7905 = vlaneseq
    %v7906 = vshrl.u32 %v7905, 7
    %v7907 = vsub.s32 %v7904, %v7906
    %v7908 = vrot.slane %v7900, %v7907
    %v7910 = vunpack.c.l.s4 1983009808
    %v7911 = vunpack.c.0.s8 %v7910
    %v7912 = vlaneseq
    %v7913 = vshrl.u32 %v7912, 7
    %v7914 = vsub.s32 %v7911, %v7913
    %v7915 = vrot.slane %v7901, %v7914
    %v7916 = vcombine.low %v7908, %v7915
    %v7917 = vcombine.high %v7908, %v7915
    %v7918 = vcombine.low %v7888, %v7889
    %v7919 = vcombine.low %v7890, %v7891
    %v7921 = vunpack.c.l.s4 1983009808
    %v7922 = vunpack.c.0.s8 %v7921
    %v7923 = vlaneseq
    %v7924 = vshrl.u32 %v7923, 7
    %v7925 = vsub.s32 %v7922, %v7924
    %v7926 = vrot.slane %v7918, %v7925
    %v7928 = vunpack.c.l.s4 1983009808
    %v7929 = vunpack.c.0.s8 %v7928
    %v7930 = vlaneseq
    %v7931 = vshrl.u32 %v7930, 7
    %v7932 = vsub.s32 %v7929, %v7931
    %v7933 = vrot.slane %v7919, %v7932
    %v7934 = vcombine.low %v7926, %v7933
    %v7935 = vcombine.high %v7926, %v7933
    %v7940 = vpack.c.bf16 %v7934, %v7916
    %v7941 = vpack.c.bf16 %v7935, %v7917
    %v7942 = vld [vmem:[#allocation9] sm:$0xff]
    %v7943 = vld [vmem:[#allocation9 + $0x8] sm:$0xff]
    %v7944 = vld [vmem:[#allocation9 + $0x10] sm:$0xff]
    %v7945 = vld [vmem:[#allocation9 + $0x18] sm:$0xff]
    %v7946 = vld [vmem:[#allocation9 + $0x20] sm:$0xff]
    %v7947 = vld [vmem:[#allocation9 + $0x28] sm:$0xff]
    %v7948 = vld [vmem:[#allocation9 + $0x30] sm:$0xff]
    %v7949 = vld [vmem:[#allocation9 + $0x38] sm:$0xff]
    %v7950 = vld [vmem:[#allocation9 + $0x40] sm:$0xff]
    %v7951 = vld [vmem:[#allocation9 + $0x48] sm:$0xff]
    %v7952 = vld [vmem:[#allocation9 + $0x50] sm:$0xff]
    %v7953 = vld [vmem:[#allocation9 + $0x58] sm:$0xff]
    %v7954 = vld [vmem:[#allocation9 + $0x60] sm:$0xff]
    %v7955 = vld [vmem:[#allocation9 + $0x68] sm:$0xff]
    %v7956 = vld [vmem:[#allocation9 + $0x70] sm:$0xff]
    %v7957 = vld [vmem:[#allocation9 + $0x78] sm:$0xff]
    %v7958 = vld [vmem:[#allocation9 + $0x80] sm:$0xff]
    %v7959 = vld [vmem:[#allocation9 + $0x88] sm:$0xff]
    %v7960 = vld [vmem:[#allocation9 + $0x90] sm:$0xff]
    %v7961 = vld [vmem:[#allocation9 + $0x98] sm:$0xff]
    %v7962 = vld [vmem:[#allocation9 + $0xa0] sm:$0xff]
    %v7963 = vld [vmem:[#allocation9 + $0xa8] sm:$0xff]
    %v7964 = vld [vmem:[#allocation9 + $0xb0] sm:$0xff]
    %v7965 = vld [vmem:[#allocation9 + $0xb8] sm:$0xff]
    %v7966 = vld [vmem:[#allocation9 + $0xc0] sm:$0xff]
    %v7967 = vld [vmem:[#allocation9 + $0xc8] sm:$0xff]
    %v7968 = vld [vmem:[#allocation9 + $0xd0] sm:$0xff]
    %v7969 = vld [vmem:[#allocation9 + $0xd8] sm:$0xff]
    %v7970 = vld [vmem:[#allocation9 + $0xe0] sm:$0xff]
    %v7971 = vld [vmem:[#allocation9 + $0xe8] sm:$0xff]
    %v7972 = vld [vmem:[#allocation9 + $0xf0] sm:$0xff]
    %v7973 = vld [vmem:[#allocation9 + $0xf8] sm:$0xff]
    %v7974 = vld [vmem:[#allocation9 + $0x100] sm:$0xff]
    %v7975 = vld [vmem:[#allocation9 + $0x108] sm:$0xff]
    %v7976 = vld [vmem:[#allocation9 + $0x110] sm:$0xff]
    %v7977 = vld [vmem:[#allocation9 + $0x118] sm:$0xff]
    %v7978 = vld [vmem:[#allocation9 + $0x120] sm:$0xff]
    %v7979 = vld [vmem:[#allocation9 + $0x128] sm:$0xff]
    %v7980 = vld [vmem:[#allocation9 + $0x130] sm:$0xff]
    %v7981 = vld [vmem:[#allocation9 + $0x138] sm:$0xff]
    %v7982 = vld [vmem:[#allocation9 + $0x140] sm:$0xff]
    %v7983 = vld [vmem:[#allocation9 + $0x148] sm:$0xff]
    %v7984 = vld [vmem:[#allocation9 + $0x150] sm:$0xff]
    %v7985 = vld [vmem:[#allocation9 + $0x158] sm:$0xff]
    %v7986 = vld [vmem:[#allocation9 + $0x160] sm:$0xff]
    %v7987 = vld [vmem:[#allocation9 + $0x168] sm:$0xff]
    %v7988 = vld [vmem:[#allocation9 + $0x170] sm:$0xff]
    %v7989 = vld [vmem:[#allocation9 + $0x178] sm:$0xff]
    %v7990 = vld [vmem:[#allocation9 + $0x180] sm:$0xff]
    %v7991 = vld [vmem:[#allocation9 + $0x188] sm:$0xff]
    %v7992 = vld [vmem:[#allocation9 + $0x190] sm:$0xff]
    %v7993 = vld [vmem:[#allocation9 + $0x198] sm:$0xff]
    %v7994 = vld [vmem:[#allocation9 + $0x1a0] sm:$0xff]
    %v7995 = vld [vmem:[#allocation9 + $0x1a8] sm:$0xff]
    %v7996 = vld [vmem:[#allocation9 + $0x1b0] sm:$0xff]
    %v7997 = vld [vmem:[#allocation9 + $0x1b8] sm:$0xff]
    %v7998 = vld [vmem:[#allocation9 + $0x1c0] sm:$0xff]
    %v7999 = vld [vmem:[#allocation9 + $0x1c8] sm:$0xff]
    %v8000 = vld [vmem:[#allocation9 + $0x1d0] sm:$0xff]
    %v8001 = vld [vmem:[#allocation9 + $0x1d8] sm:$0xff]
    %v8002 = vld [vmem:[#allocation9 + $0x1e0] sm:$0xff]
    %v8003 = vld [vmem:[#allocation9 + $0x1e8] sm:$0xff]
    %v8004 = vld [vmem:[#allocation9 + $0x1f0] sm:$0xff]
    %v8005 = vld [vmem:[#allocation9 + $0x1f8] sm:$0xff]
    %v8006 = vld [vmem:[%s8] sm:$0xf]
    %v8008 = vlaneseq
    %v8009 = vshrl.u32 %v8008, 7
    %v8010 = vsub.s32 0, %v8009
    %v8011 = vrot.slane %v8006, %v8010
    %v8012 = vlaneseq
    %v8013 = vshrl.u32 %v8012, 7
    %v8014 = vsub.s32 1, %v8013
    %v8015 = vrot.slane %v8006, %v8014
    %v8016 = vlaneseq
    %v8017 = vshrl.u32 %v8016, 7
    %v8018 = vsub.s32 2, %v8017
    %v8019 = vrot.slane %v8006, %v8018
    %v8020 = vlaneseq
    %v8021 = vshrl.u32 %v8020, 7
    %v8022 = vsub.s32 3, %v8021
    %v8023 = vrot.slane %v8006, %v8022
    %v8092 = vunpack.c.l.b16 %v7942
    %v8093 = vunpack.c.h.b16 %v7942
    %v8094 = vunpack.c.l.b16 %v7943
    %v8095 = vunpack.c.h.b16 %v7943
    %v8096 = vunpack.c.l.b16 %v7944
    %v8097 = vunpack.c.h.b16 %v7944
    %v8098 = vunpack.c.l.b16 %v7945
    %v8099 = vunpack.c.h.b16 %v7945
    %v8100 = vunpack.c.l.b16 %v7946
    %v8101 = vunpack.c.h.b16 %v7946
    %v8102 = vunpack.c.l.b16 %v7947
    %v8103 = vunpack.c.h.b16 %v7947
    %v8104 = vunpack.c.l.b16 %v7948
    %v8105 = vunpack.c.h.b16 %v7948
    %v8106 = vunpack.c.l.b16 %v7949
    %v8107 = vunpack.c.h.b16 %v7949
    %v8108 = vunpack.c.l.b16 %v7950
    %v8109 = vunpack.c.h.b16 %v7950
    %v8110 = vunpack.c.l.b16 %v7951
    %v8111 = vunpack.c.h.b16 %v7951
    %v8112 = vunpack.c.l.b16 %v7952
    %v8113 = vunpack.c.h.b16 %v7952
    %v8114 = vunpack.c.l.b16 %v7953
    %v8115 = vunpack.c.h.b16 %v7953
    %v8116 = vunpack.c.l.b16 %v7954
    %v8117 = vunpack.c.h.b16 %v7954
    %v8118 = vunpack.c.l.b16 %v7955
    %v8119 = vunpack.c.h.b16 %v7955
    %v8120 = vunpack.c.l.b16 %v7956
    %v8121 = vunpack.c.h.b16 %v7956
    %v8122 = vunpack.c.l.b16 %v7957
    %v8123 = vunpack.c.h.b16 %v7957
    %v8124 = vunpack.c.l.b16 %v7958
    %v8125 = vunpack.c.h.b16 %v7958
    %v8126 = vunpack.c.l.b16 %v7959
    %v8127 = vunpack.c.h.b16 %v7959
    %v8128 = vunpack.c.l.b16 %v7960
    %v8129 = vunpack.c.h.b16 %v7960
    %v8130 = vunpack.c.l.b16 %v7961
    %v8131 = vunpack.c.h.b16 %v7961
    %v8132 = vunpack.c.l.b16 %v7962
    %v8133 = vunpack.c.h.b16 %v7962
    %v8134 = vunpack.c.l.b16 %v7963
    %v8135 = vunpack.c.h.b16 %v7963
    %v8136 = vunpack.c.l.b16 %v7964
    %v8137 = vunpack.c.h.b16 %v7964
    %v8138 = vunpack.c.l.b16 %v7965
    %v8139 = vunpack.c.h.b16 %v7965
    %v8140 = vunpack.c.l.b16 %v7966
    %v8141 = vunpack.c.h.b16 %v7966
    %v8142 = vunpack.c.l.b16 %v7967
    %v8143 = vunpack.c.h.b16 %v7967
    %v8144 = vunpack.c.l.b16 %v7968
    %v8145 = vunpack.c.h.b16 %v7968
    %v8146 = vunpack.c.l.b16 %v7969
    %v8147 = vunpack.c.h.b16 %v7969
    %v8148 = vunpack.c.l.b16 %v7970
    %v8149 = vunpack.c.h.b16 %v7970
    %v8150 = vunpack.c.l.b16 %v7971
    %v8151 = vunpack.c.h.b16 %v7971
    %v8152 = vunpack.c.l.b16 %v7972
    %v8153 = vunpack.c.h.b16 %v7972
    %v8154 = vunpack.c.l.b16 %v7973
    %v8155 = vunpack.c.h.b16 %v7973
    %v8156 = vunpack.c.l.b16 %v7974
    %v8157 = vunpack.c.h.b16 %v7974
    %v8158 = vunpack.c.l.b16 %v7975
    %v8159 = vunpack.c.h.b16 %v7975
    %v8160 = vunpack.c.l.b16 %v7976
    %v8161 = vunpack.c.h.b16 %v7976
    %v8162 = vunpack.c.l.b16 %v7977
    %v8163 = vunpack.c.h.b16 %v7977
    %v8164 = vunpack.c.l.b16 %v7978
    %v8165 = vunpack.c.h.b16 %v7978
    %v8166 = vunpack.c.l.b16 %v7979
    %v8167 = vunpack.c.h.b16 %v7979
    %v8168 = vunpack.c.l.b16 %v7980
    %v8169 = vunpack.c.h.b16 %v7980
    %v8170 = vunpack.c.l.b16 %v7981
    %v8171 = vunpack.c.h.b16 %v7981
    %v8172 = vunpack.c.l.b16 %v7982
    %v8173 = vunpack.c.h.b16 %v7982
    %v8174 = vunpack.c.l.b16 %v7983
    %v8175 = vunpack.c.h.b16 %v7983
    %v8176 = vunpack.c.l.b16 %v7984
    %v8177 = vunpack.c.h.b16 %v7984
    %v8178 = vunpack.c.l.b16 %v7985
    %v8179 = vunpack.c.h.b16 %v7985
    %v8180 = vunpack.c.l.b16 %v7986
    %v8181 = vunpack.c.h.b16 %v7986
    %v8182 = vunpack.c.l.b16 %v7987
    %v8183 = vunpack.c.h.b16 %v7987
    %v8184 = vunpack.c.l.b16 %v7988
    %v8185 = vunpack.c.h.b16 %v7988
    %v8186 = vunpack.c.l.b16 %v7989
    %v8187 = vunpack.c.h.b16 %v7989
    %v8188 = vunpack.c.l.b16 %v7990
    %v8189 = vunpack.c.h.b16 %v7990
    %v8190 = vunpack.c.l.b16 %v7991
    %v8191 = vunpack.c.h.b16 %v7991
    %v8192 = vunpack.c.l.b16 %v7992
    %v8193 = vunpack.c.h.b16 %v7992
    %v8194 = vunpack.c.l.b16 %v7993
    %v8195 = vunpack.c.h.b16 %v7993
    %v8196 = vunpack.c.l.b16 %v7994
    %v8197 = vunpack.c.h.b16 %v7994
    %v8198 = vunpack.c.l.b16 %v7995
    %v8199 = vunpack.c.h.b16 %v7995
    %v8200 = vunpack.c.l.b16 %v7996
    %v8201 = vunpack.c.h.b16 %v7996
    %v8202 = vunpack.c.l.b16 %v7997
    %v8203 = vunpack.c.h.b16 %v7997
    %v8204 = vunpack.c.l.b16 %v7998
    %v8205 = vunpack.c.h.b16 %v7998
    %v8206 = vunpack.c.l.b16 %v7999
    %v8207 = vunpack.c.h.b16 %v7999
    %v8208 = vunpack.c.l.b16 %v8000
    %v8209 = vunpack.c.h.b16 %v8000
    %v8210 = vunpack.c.l.b16 %v8001
    %v8211 = vunpack.c.h.b16 %v8001
    %v8212 = vunpack.c.l.b16 %v8002
    %v8213 = vunpack.c.h.b16 %v8002
    %v8214 = vunpack.c.l.b16 %v8003
    %v8215 = vunpack.c.h.b16 %v8003
    %v8216 = vunpack.c.l.b16 %v8004
    %v8217 = vunpack.c.h.b16 %v8004
    %v8218 = vunpack.c.l.b16 %v8005
    %v8219 = vunpack.c.h.b16 %v8005
    %v8220 = vpack.c.b16 %v8096, %v8092
    %v8221 = vpack.c.b16 %v8097, %v8093
    %v8222 = vpack.c.b16 %v8098, %v8094
    %v8223 = vpack.c.b16 %v8099, %v8095
    %v8224 = vpack.c.b16 %v8104, %v8100
    %v8225 = vpack.c.b16 %v8105, %v8101
    %v8226 = vpack.c.b16 %v8106, %v8102
    %v8227 = vpack.c.b16 %v8107, %v8103
    %v8228 = vpack.c.b16 %v8112, %v8108
    %v8229 = vpack.c.b16 %v8113, %v8109
    %v8230 = vpack.c.b16 %v8114, %v8110
    %v8231 = vpack.c.b16 %v8115, %v8111
    %v8232 = vpack.c.b16 %v8120, %v8116
    %v8233 = vpack.c.b16 %v8121, %v8117
    %v8234 = vpack.c.b16 %v8122, %v8118
    %v8235 = vpack.c.b16 %v8123, %v8119
    %v8236 = vpack.c.b16 %v8128, %v8124
    %v8237 = vpack.c.b16 %v8129, %v8125
    %v8238 = vpack.c.b16 %v8130, %v8126
    %v8239 = vpack.c.b16 %v8131, %v8127
    %v8240 = vpack.c.b16 %v8136, %v8132
    %v8241 = vpack.c.b16 %v8137, %v8133
    %v8242 = vpack.c.b16 %v8138, %v8134
    %v8243 = vpack.c.b16 %v8139, %v8135
    %v8244 = vpack.c.b16 %v8144, %v8140
    %v8245 = vpack.c.b16 %v8145, %v8141
    %v8246 = vpack.c.b16 %v8146, %v8142
    %v8247 = vpack.c.b16 %v8147, %v8143
    %v8248 = vpack.c.b16 %v8152, %v8148
    %v8249 = vpack.c.b16 %v8153, %v8149
    %v8250 = vpack.c.b16 %v8154, %v8150
    %v8251 = vpack.c.b16 %v8155, %v8151
    %v8252 = vpack.c.b16 %v8160, %v8156
    %v8253 = vpack.c.b16 %v8161, %v8157
    %v8254 = vpack.c.b16 %v8162, %v8158
    %v8255 = vpack.c.b16 %v8163, %v8159
    %v8256 = vpack.c.b16 %v8168, %v8164
    %v8257 = vpack.c.b16 %v8169, %v8165
    %v8258 = vpack.c.b16 %v8170, %v8166
    %v8259 = vpack.c.b16 %v8171, %v8167
    %v8260 = vpack.c.b16 %v8176, %v8172
    %v8261 = vpack.c.b16 %v8177, %v8173
    %v8262 = vpack.c.b16 %v8178, %v8174
    %v8263 = vpack.c.b16 %v8179, %v8175
    %v8264 = vpack.c.b16 %v8184, %v8180
    %v8265 = vpack.c.b16 %v8185, %v8181
    %v8266 = vpack.c.b16 %v8186, %v8182
    %v8267 = vpack.c.b16 %v8187, %v8183
    %v8268 = vpack.c.b16 %v8192, %v8188
    %v8269 = vpack.c.b16 %v8193, %v8189
    %v8270 = vpack.c.b16 %v8194, %v8190
    %v8271 = vpack.c.b16 %v8195, %v8191
    %v8272 = vpack.c.b16 %v8200, %v8196
    %v8273 = vpack.c.b16 %v8201, %v8197
    %v8274 = vpack.c.b16 %v8202, %v8198
    %v8275 = vpack.c.b16 %v8203, %v8199
    %v8276 = vpack.c.b16 %v8208, %v8204
    %v8277 = vpack.c.b16 %v8209, %v8205
    %v8278 = vpack.c.b16 %v8210, %v8206
    %v8279 = vpack.c.b16 %v8211, %v8207
    %v8280 = vpack.c.b16 %v8216, %v8212
    %v8281 = vpack.c.b16 %v8217, %v8213
    %v8282 = vpack.c.b16 %v8218, %v8214
    %v8283 = vpack.c.b16 %v8219, %v8215
    %8348 = vmatprep.subr.bf16.mxu0 %v8221
    %8349 = vmatpush1.bf16.msra.mxu0 %v8220
    %8350 = vmatprep.subr.bf16.mxu0 %v8225
    %8351 = vmatpush1.bf16.msra.mxu0 %v8224
    %8352 = vmatprep.subr.bf16.mxu0 %v8229
    %8353 = vmatpush1.bf16.msra.mxu0 %v8228
    %8354 = vmatprep.subr.bf16.mxu0 %v8233
    %8355 = vmatpush1.bf16.msra.mxu0 %v8232
    %8356 = vmatprep.subr.bf16.mxu0 %v8237
    %8357 = vmatpush1.bf16.msra.mxu0 %v8236
    %8358 = vmatprep.subr.bf16.mxu0 %v8241
    %8359 = vmatpush1.bf16.msra.mxu0 %v8240
    %8360 = vmatprep.subr.bf16.mxu0 %v8245
    %8361 = vmatpush1.bf16.msra.mxu0 %v8244
    %8362 = vmatprep.subr.bf16.mxu0 %v8249
    %8363 = vmatpush1.bf16.msra.mxu0 %v8248
    %8364 = vmatprep.subr.bf16.mxu0 %v8253
    %8365 = vmatpush1.bf16.msra.mxu0 %v8252
    %8366 = vmatprep.subr.bf16.mxu0 %v8257
    %8367 = vmatpush1.bf16.msra.mxu0 %v8256
    %8368 = vmatprep.subr.bf16.mxu0 %v8261
    %8369 = vmatpush1.bf16.msra.mxu0 %v8260
    %8370 = vmatprep.subr.bf16.mxu0 %v8265
    %8371 = vmatpush1.bf16.msra.mxu0 %v8264
    %8372 = vmatprep.subr.bf16.mxu0 %v8269
    %8373 = vmatpush1.bf16.msra.mxu0 %v8268
    %8374 = vmatprep.subr.bf16.mxu0 %v8273
    %8375 = vmatpush1.bf16.msra.mxu0 %v8272
    %8376 = vmatprep.subr.bf16.mxu0 %v8277
    %8377 = vmatpush1.bf16.msra.mxu0 %v8276
    %8378 = vmatprep.subr.bf16.mxu0 %v8281
    %8379 = vmatpush1.bf16.msra.mxu0 %v8280
    %8380 = vmatprep.mubr.bf16.mxu0 %v7941
    %8381 = vmatmul.mubr.bf16.gmra.mrb[0].mxu0 %v7940
    %v8382 = vpop.f32.mrb[0].mxu0
    %v8383 = vadd.f32 %v8011, %v8382
    %v8384 = vpop.f32.mrb[0].mxu0
    %v8385 = vadd.f32 %v8015, %v8384
    %v8386 = vpop.f32.mrb[0].mxu0
    %v8387 = vadd.f32 %v8011, %v8386
    %v8388 = vpop.f32.mrb[0].mxu0
    %v8389 = vadd.f32 %v8015, %v8388
    %8390 = vdwg.mxu0
    %8391 = vmatprep.subr.bf16.mxu0 %v8223
    %8392 = vmatpush1.bf16.msra.mxu0 %v8222
    %8393 = vmatprep.subr.bf16.mxu0 %v8227
    %8394 = vmatpush1.bf16.msra.mxu0 %v8226
    %8395 = vmatprep.subr.bf16.mxu0 %v8231
    %8396 = vmatpush1.bf16.msra.mxu0 %v8230
    %8397 = vmatprep.subr.bf16.mxu0 %v8235
    %8398 = vmatpush1.bf16.msra.mxu0 %v8234
    %8399 = vmatprep.subr.bf16.mxu0 %v8239
    %8400 = vmatpush1.bf16.msra.mxu0 %v8238
    %8401 = vmatprep.subr.bf16.mxu0 %v8243
    %8402 = vmatpush1.bf16.msra.mxu0 %v8242
    %8403 = vmatprep.subr.bf16.mxu0 %v8247
    %8404 = vmatpush1.bf16.msra.mxu0 %v8246
    %8405 = vmatprep.subr.bf16.mxu0 %v8251
    %8406 = vmatpush1.bf16.msra.mxu0 %v8250
    %8407 = vmatprep.subr.bf16.mxu0 %v8255
    %8408 = vmatpush1.bf16.msra.mxu0 %v8254
    %8409 = vmatprep.subr.bf16.mxu0 %v8259
    %8410 = vmatpush1.bf16.msra.mxu0 %v8258
    %8411 = vmatprep.subr.bf16.mxu0 %v8263
    %8412 = vmatpush1.bf16.msra.mxu0 %v8262
    %8413 = vmatprep.subr.bf16.mxu0 %v8267
    %8414 = vmatpush1.bf16.msra.mxu0 %v8266
    %8415 = vmatprep.subr.bf16.mxu0 %v8271
    %8416 = vmatpush1.bf16.msra.mxu0 %v8270
    %8417 = vmatprep.subr.bf16.mxu0 %v8275
    %8418 = vmatpush1.bf16.msra.mxu0 %v8274
    %8419 = vmatprep.subr.bf16.mxu0 %v8279
    %8420 = vmatpush1.bf16.msra.mxu0 %v8278
    %8421 = vmatprep.subr.bf16.mxu0 %v8283
    %8422 = vmatpush1.bf16.msra.mxu0 %v8282
    %8423 = vmatprep.mubr.bf16.mxu0 %v7941
    %8424 = vmatmul.mubr.bf16.gmra.mrb[0].mxu0 %v7940
    %v8425 = vpop.f32.mrb[0].mxu0
    %v8426 = vadd.f32 %v8019, %v8425
    %v8427 = vpop.f32.mrb[0].mxu0
    %v8428 = vadd.f32 %v8023, %v8427
    %v8429 = vpop.f32.mrb[0].mxu0
    %v8430 = vadd.f32 %v8019, %v8429
    %v8431 = vpop.f32.mrb[0].mxu0
    %v8432 = vadd.f32 %v8023, %v8431
    %8433 = vdwg.mxu0
    %v8434 = vmax.f32 %v8383, 0.0
    %v8435 = vmax.f32 %v8385, 0.0
    %v8436 = vmax.f32 %v8426, 0.0
    %v8437 = vmax.f32 %v8428, 0.0
    %v8438 = vmax.f32 %v8387, 0.0
    %v8439 = vmax.f32 %v8389, 0.0
    %v8440 = vmax.f32 %v8430, 0.0
    %v8441 = vmax.f32 %v8432, 0.0
    %v8442 = vpack.c.bf16 %v8438, %v8434
    %v8443 = vpack.c.bf16 %v8439, %v8435
    %v8444 = vpack.c.bf16 %v8440, %v8436
    %v8445 = vpack.c.bf16 %v8441, %v8437
    %v8446 = vld [vmem:[#allocation11] sm:$0xff]
    %v8447 = vld [vmem:[#allocation11 + $0x8] sm:$0xff]
    %v8448 = vld [vmem:[#allocation11 + $0x10] sm:$0xff]
    %v8449 = vld [vmem:[#allocation11 + $0x18] sm:$0xff]
    %v8450 = vld [vmem:[#allocation11 + $0x20] sm:$0xff]
    %v8451 = vld [vmem:[#allocation11 + $0x28] sm:$0xff]
    %v8452 = vld [vmem:[#allocation11 + $0x30] sm:$0xff]
    %v8453 = vld [vmem:[#allocation11 + $0x38] sm:$0xff]
    %v8454 = vld [vmem:[#allocation11 + $0x40] sm:$0xff]
    %v8455 = vld [vmem:[#allocation11 + $0x48] sm:$0xff]
    %v8456 = vld [vmem:[#allocation11 + $0x50] sm:$0xff]
    %v8457 = vld [vmem:[#allocation11 + $0x58] sm:$0xff]
    %v8458 = vld [vmem:[#allocation11 + $0x60] sm:$0xff]
    %v8459 = vld [vmem:[#allocation11 + $0x68] sm:$0xff]
    %v8460 = vld [vmem:[#allocation11 + $0x70] sm:$0xff]
    %v8461 = vld [vmem:[#allocation11 + $0x78] sm:$0xff]
    %v8462 = vld [vmem:[#allocation11 + $0x80] sm:$0xff]
    %v8463 = vld [vmem:[#allocation11 + $0x88] sm:$0xff]
    %v8464 = vld [vmem:[#allocation11 + $0x90] sm:$0xff]
    %v8465 = vld [vmem:[#allocation11 + $0x98] sm:$0xff]
    %v8466 = vld [vmem:[#allocation11 + $0xa0] sm:$0xff]
    %v8467 = vld [vmem:[#allocation11 + $0xa8] sm:$0xff]
    %v8468 = vld [vmem:[#allocation11 + $0xb0] sm:$0xff]
    %v8469 = vld [vmem:[#allocation11 + $0xb8] sm:$0xff]
    %v8470 = vld [vmem:[#allocation11 + $0xc0] sm:$0xff]
    %v8471 = vld [vmem:[#allocation11 + $0xc8] sm:$0xff]
    %v8472 = vld [vmem:[#allocation11 + $0xd0] sm:$0xff]
    %v8473 = vld [vmem:[#allocation11 + $0xd8] sm:$0xff]
    %v8474 = vld [vmem:[#allocation11 + $0xe0] sm:$0xff]
    %v8475 = vld [vmem:[#allocation11 + $0xe8] sm:$0xff]
    %v8476 = vld [vmem:[#allocation11 + $0xf0] sm:$0xff]
    %v8477 = vld [vmem:[#allocation11 + $0xf8] sm:$0xff]
    %v8478 = vld [vmem:[#allocation11 + $0x100] sm:$0xff]
    %v8479 = vld [vmem:[#allocation11 + $0x108] sm:$0xff]
    %v8480 = vld [vmem:[#allocation11 + $0x110] sm:$0xff]
    %v8481 = vld [vmem:[#allocation11 + $0x118] sm:$0xff]
    %v8482 = vld [vmem:[#allocation11 + $0x120] sm:$0xff]
    %v8483 = vld [vmem:[#allocation11 + $0x128] sm:$0xff]
    %v8484 = vld [vmem:[#allocation11 + $0x130] sm:$0xff]
    %v8485 = vld [vmem:[#allocation11 + $0x138] sm:$0xff]
    %v8486 = vld [vmem:[#allocation11 + $0x140] sm:$0xff]
    %v8487 = vld [vmem:[#allocation11 + $0x148] sm:$0xff]
    %v8488 = vld [vmem:[#allocation11 + $0x150] sm:$0xff]
    %v8489 = vld [vmem:[#allocation11 + $0x158] sm:$0xff]
    %v8490 = vld [vmem:[#allocation11 + $0x160] sm:$0xff]
    %v8491 = vld [vmem:[#allocation11 + $0x168] sm:$0xff]
    %v8492 = vld [vmem:[#allocation11 + $0x170] sm:$0xff]
    %v8493 = vld [vmem:[#allocation11 + $0x178] sm:$0xff]
    %v8494 = vld [vmem:[#allocation11 + $0x180] sm:$0xff]
    %v8495 = vld [vmem:[#allocation11 + $0x188] sm:$0xff]
    %v8496 = vld [vmem:[#allocation11 + $0x190] sm:$0xff]
    %v8497 = vld [vmem:[#allocation11 + $0x198] sm:$0xff]
    %v8498 = vld [vmem:[#allocation11 + $0x1a0] sm:$0xff]
    %v8499 = vld [vmem:[#allocation11 + $0x1a8] sm:$0xff]
    %v8500 = vld [vmem:[#allocation11 + $0x1b0] sm:$0xff]
    %v8501 = vld [vmem:[#allocation11 + $0x1b8] sm:$0xff]
    %v8502 = vld [vmem:[#allocation11 + $0x1c0] sm:$0xff]
    %v8503 = vld [vmem:[#allocation11 + $0x1c8] sm:$0xff]
    %v8504 = vld [vmem:[#allocation11 + $0x1d0] sm:$0xff]
    %v8505 = vld [vmem:[#allocation11 + $0x1d8] sm:$0xff]
    %v8506 = vld [vmem:[#allocation11 + $0x1e0] sm:$0xff]
    %v8507 = vld [vmem:[#allocation11 + $0x1e8] sm:$0xff]
    %v8508 = vld [vmem:[#allocation11 + $0x1f0] sm:$0xff]
    %v8509 = vld [vmem:[#allocation11 + $0x1f8] sm:$0xff]
    %v8510 = vld [vmem:[%s10] sm:$0x3]
    %v8512 = vlaneseq
    %v8513 = vshrl.u32 %v8512, 7
    %v8514 = vsub.s32 0, %v8513
    %v8515 = vrot.slane %v8510, %v8514
    %v8516 = vlaneseq
    %v8517 = vshrl.u32 %v8516, 7
    %v8518 = vsub.s32 1, %v8517
    %v8519 = vrot.slane %v8510, %v8518
    %v8586 = vunpack.c.l.b16 %v8446
    %v8587 = vunpack.c.h.b16 %v8446
    %v8588 = vunpack.c.l.b16 %v8447
    %v8589 = vunpack.c.h.b16 %v8447
    %v8590 = vunpack.c.l.b16 %v8448
    %v8591 = vunpack.c.h.b16 %v8448
    %v8592 = vunpack.c.l.b16 %v8449
    %v8593 = vunpack.c.h.b16 %v8449
    %v8594 = vunpack.c.l.b16 %v8450
    %v8595 = vunpack.c.h.b16 %v8450
    %v8596 = vunpack.c.l.b16 %v8451
    %v8597 = vunpack.c.h.b16 %v8451
    %v8598 = vunpack.c.l.b16 %v8452
    %v8599 = vunpack.c.h.b16 %v8452
    %v8600 = vunpack.c.l.b16 %v8453
    %v8601 = vunpack.c.h.b16 %v8453
    %v8602 = vunpack.c.l.b16 %v8454
    %v8603 = vunpack.c.h.b16 %v8454
    %v8604 = vunpack.c.l.b16 %v8455
    %v8605 = vunpack.c.h.b16 %v8455
    %v8606 = vunpack.c.l.b16 %v8456
    %v8607 = vunpack.c.h.b16 %v8456
    %v8608 = vunpack.c.l.b16 %v8457
    %v8609 = vunpack.c.h.b16 %v8457
    %v8610 = vunpack.c.l.b16 %v8458
    %v8611 = vunpack.c.h.b16 %v8458
    %v8612 = vunpack.c.l.b16 %v8459
    %v8613 = vunpack.c.h.b16 %v8459
    %v8614 = vunpack.c.l.b16 %v8460
    %v8615 = vunpack.c.h.b16 %v8460
    %v8616 = vunpack.c.l.b16 %v8461
    %v8617 = vunpack.c.h.b16 %v8461
    %v8618 = vunpack.c.l.b16 %v8462
    %v8619 = vunpack.c.h.b16 %v8462
    %v8620 = vunpack.c.l.b16 %v8463
    %v8621 = vunpack.c.h.b16 %v8463
    %v8622 = vunpack.c.l.b16 %v8464
    %v8623 = vunpack.c.h.b16 %v8464
    %v8624 = vunpack.c.l.b16 %v8465
    %v8625 = vunpack.c.h.b16 %v8465
    %v8626 = vunpack.c.l.b16 %v8466
    %v8627 = vunpack.c.h.b16 %v8466
    %v8628 = vunpack.c.l.b16 %v8467
    %v8629 = vunpack.c.h.b16 %v8467
    %v8630 = vunpack.c.l.b16 %v8468
    %v8631 = vunpack.c.h.b16 %v8468
    %v8632 = vunpack.c.l.b16 %v8469
    %v8633 = vunpack.c.h.b16 %v8469
    %v8634 = vunpack.c.l.b16 %v8470
    %v8635 = vunpack.c.h.b16 %v8470
    %v8636 = vunpack.c.l.b16 %v8471
    %v8637 = vunpack.c.h.b16 %v8471
    %v8638 = vunpack.c.l.b16 %v8472
    %v8639 = vunpack.c.h.b16 %v8472
    %v8640 = vunpack.c.l.b16 %v8473
    %v8641 = vunpack.c.h.b16 %v8473
    %v8642 = vunpack.c.l.b16 %v8474
    %v8643 = vunpack.c.h.b16 %v8474
    %v8644 = vunpack.c.l.b16 %v8475
    %v8645 = vunpack.c.h.b16 %v8475
    %v8646 = vunpack.c.l.b16 %v8476
    %v8647 = vunpack.c.h.b16 %v8476
    %v8648 = vunpack.c.l.b16 %v8477
    %v8649 = vunpack.c.h.b16 %v8477
    %v8650 = vunpack.c.l.b16 %v8478
    %v8651 = vunpack.c.h.b16 %v8478
    %v8652 = vunpack.c.l.b16 %v8479
    %v8653 = vunpack.c.h.b16 %v8479
    %v8654 = vunpack.c.l.b16 %v8480
    %v8655 = vunpack.c.h.b16 %v8480
    %v8656 = vunpack.c.l.b16 %v8481
    %v8657 = vunpack.c.h.b16 %v8481
    %v8658 = vunpack.c.l.b16 %v8482
    %v8659 = vunpack.c.h.b16 %v8482
    %v8660 = vunpack.c.l.b16 %v8483
    %v8661 = vunpack.c.h.b16 %v8483
    %v8662 = vunpack.c.l.b16 %v8484
    %v8663 = vunpack.c.h.b16 %v8484
    %v8664 = vunpack.c.l.b16 %v8485
    %v8665 = vunpack.c.h.b16 %v8485
    %v8666 = vunpack.c.l.b16 %v8486
    %v8667 = vunpack.c.h.b16 %v8486
    %v8668 = vunpack.c.l.b16 %v8487
    %v8669 = vunpack.c.h.b16 %v8487
    %v8670 = vunpack.c.l.b16 %v8488
    %v8671 = vunpack.c.h.b16 %v8488
    %v8672 = vunpack.c.l.b16 %v8489
    %v8673 = vunpack.c.h.b16 %v8489
    %v8674 = vunpack.c.l.b16 %v8490
    %v8675 = vunpack.c.h.b16 %v8490
    %v8676 = vunpack.c.l.b16 %v8491
    %v8677 = vunpack.c.h.b16 %v8491
    %v8678 = vunpack.c.l.b16 %v8492
    %v8679 = vunpack.c.h.b16 %v8492
    %v8680 = vunpack.c.l.b16 %v8493
    %v8681 = vunpack.c.h.b16 %v8493
    %v8682 = vunpack.c.l.b16 %v8494
    %v8683 = vunpack.c.h.b16 %v8494
    %v8684 = vunpack.c.l.b16 %v8495
    %v8685 = vunpack.c.h.b16 %v8495
    %v8686 = vunpack.c.l.b16 %v8496
    %v8687 = vunpack.c.h.b16 %v8496
    %v8688 = vunpack.c.l.b16 %v8497
    %v8689 = vunpack.c.h.b16 %v8497
    %v8690 = vunpack.c.l.b16 %v8498
    %v8691 = vunpack.c.h.b16 %v8498
    %v8692 = vunpack.c.l.b16 %v8499
    %v8693 = vunpack.c.h.b16 %v8499
    %v8694 = vunpack.c.l.b16 %v8500
    %v8695 = vunpack.c.h.b16 %v8500
    %v8696 = vunpack.c.l.b16 %v8501
    %v8697 = vunpack.c.h.b16 %v8501
    %v8698 = vunpack.c.l.b16 %v8502
    %v8699 = vunpack.c.h.b16 %v8502
    %v8700 = vunpack.c.l.b16 %v8503
    %v8701 = vunpack.c.h.b16 %v8503
    %v8702 = vunpack.c.l.b16 %v8504
    %v8703 = vunpack.c.h.b16 %v8504
    %v8704 = vunpack.c.l.b16 %v8505
    %v8705 = vunpack.c.h.b16 %v8505
    %v8706 = vunpack.c.l.b16 %v8506
    %v8707 = vunpack.c.h.b16 %v8506
    %v8708 = vunpack.c.l.b16 %v8507
    %v8709 = vunpack.c.h.b16 %v8507
    %v8710 = vunpack.c.l.b16 %v8508
    %v8711 = vunpack.c.h.b16 %v8508
    %v8712 = vunpack.c.l.b16 %v8509
    %v8713 = vunpack.c.h.b16 %v8509
    %v8714 = vpack.c.b16 %v8588, %v8586
    %v8715 = vpack.c.b16 %v8589, %v8587
    %v8716 = vpack.c.b16 %v8592, %v8590
    %v8717 = vpack.c.b16 %v8593, %v8591
    %v8718 = vpack.c.b16 %v8596, %v8594
    %v8719 = vpack.c.b16 %v8597, %v8595
    %v8720 = vpack.c.b16 %v8600, %v8598
    %v8721 = vpack.c.b16 %v8601, %v8599
    %v8722 = vpack.c.b16 %v8604, %v8602
    %v8723 = vpack.c.b16 %v8605, %v8603
    %v8724 = vpack.c.b16 %v8608, %v8606
    %v8725 = vpack.c.b16 %v8609, %v8607
    %v8726 = vpack.c.b16 %v8612, %v8610
    %v8727 = vpack.c.b16 %v8613, %v8611
    %v8728 = vpack.c.b16 %v8616, %v8614
    %v8729 = vpack.c.b16 %v8617, %v8615
    %v8730 = vpack.c.b16 %v8620, %v8618
    %v8731 = vpack.c.b16 %v8621, %v8619
    %v8732 = vpack.c.b16 %v8624, %v8622
    %v8733 = vpack.c.b16 %v8625, %v8623
    %v8734 = vpack.c.b16 %v8628, %v8626
    %v8735 = vpack.c.b16 %v8629, %v8627
    %v8736 = vpack.c.b16 %v8632, %v8630
    %v8737 = vpack.c.b16 %v8633, %v8631
    %v8738 = vpack.c.b16 %v8636, %v8634
    %v8739 = vpack.c.b16 %v8637, %v8635
    %v8740 = vpack.c.b16 %v8640, %v8638
    %v8741 = vpack.c.b16 %v8641, %v8639
    %v8742 = vpack.c.b16 %v8644, %v8642
    %v8743 = vpack.c.b16 %v8645, %v8643
    %v8744 = vpack.c.b16 %v8648, %v8646
    %v8745 = vpack.c.b16 %v8649, %v8647
    %v8746 = vpack.c.b16 %v8652, %v8650
    %v8747 = vpack.c.b16 %v8653, %v8651
    %v8748 = vpack.c.b16 %v8656, %v8654
    %v8749 = vpack.c.b16 %v8657, %v8655
    %v8750 = vpack.c.b16 %v8660, %v8658
    %v8751 = vpack.c.b16 %v8661, %v8659
    %v8752 = vpack.c.b16 %v8664, %v8662
    %v8753 = vpack.c.b16 %v8665, %v8663
    %v8754 = vpack.c.b16 %v8668, %v8666
    %v8755 = vpack.c.b16 %v8669, %v8667
    %v8756 = vpack.c.b16 %v8672, %v8670
    %v8757 = vpack.c.b16 %v8673, %v8671
    %v8758 = vpack.c.b16 %v8676, %v8674
    %v8759 = vpack.c.b16 %v8677, %v8675
    %v8760 = vpack.c.b16 %v8680, %v8678
    %v8761 = vpack.c.b16 %v8681, %v8679
    %v8762 = vpack.c.b16 %v8684, %v8682
    %v8763 = vpack.c.b16 %v8685, %v8683
    %v8764 = vpack.c.b16 %v8688, %v8686
    %v8765 = vpack.c.b16 %v8689, %v8687
    %v8766 = vpack.c.b16 %v8692, %v8690
    %v8767 = vpack.c.b16 %v8693, %v8691
    %v8768 = vpack.c.b16 %v8696, %v8694
    %v8769 = vpack.c.b16 %v8697, %v8695
    %v8770 = vpack.c.b16 %v8700, %v8698
    %v8771 = vpack.c.b16 %v8701, %v8699
    %v8772 = vpack.c.b16 %v8704, %v8702
    %v8773 = vpack.c.b16 %v8705, %v8703
    %v8774 = vpack.c.b16 %v8708, %v8706
    %v8775 = vpack.c.b16 %v8709, %v8707
    %v8776 = vpack.c.b16 %v8712, %v8710
    %v8777 = vpack.c.b16 %v8713, %v8711
    %8842 = vmatprep.subr.bf16.mxu0 %v8715
    %8843 = vmatpush1.bf16.msra.mxu0 %v8714
    %8844 = vmatprep.subr.bf16.mxu0 %v8717
    %8845 = vmatpush1.bf16.msra.mxu0 %v8716
    %8846 = vmatprep.subr.bf16.mxu0 %v8719
    %8847 = vmatpush1.bf16.msra.mxu0 %v8718
    %8848 = vmatprep.subr.bf16.mxu0 %v8721
    %8849 = vmatpush1.bf16.msra.mxu0 %v8720
    %8850 = vmatprep.subr.bf16.mxu0 %v8723
    %8851 = vmatpush1.bf16.msra.mxu0 %v8722
    %8852 = vmatprep.subr.bf16.mxu0 %v8725
    %8853 = vmatpush1.bf16.msra.mxu0 %v8724
    %8854 = vmatprep.subr.bf16.mxu0 %v8727
    %8855 = vmatpush1.bf16.msra.mxu0 %v8726
    %8856 = vmatprep.subr.bf16.mxu0 %v8729
    %8857 = vmatpush1.bf16.msra.mxu0 %v8728
    %8858 = vmatprep.subr.bf16.mxu0 %v8731
    %8859 = vmatpush1.bf16.msra.mxu0 %v8730
    %8860 = vmatprep.subr.bf16.mxu0 %v8733
    %8861 = vmatpush1.bf16.msra.mxu0 %v8732
    %8862 = vmatprep.subr.bf16.mxu0 %v8735
    %8863 = vmatpush1.bf16.msra.mxu0 %v8734
    %8864 = vmatprep.subr.bf16.mxu0 %v8737
    %8865 = vmatpush1.bf16.msra.mxu0 %v8736
    %8866 = vmatprep.subr.bf16.mxu0 %v8739
    %8867 = vmatpush1.bf16.msra.mxu0 %v8738
    %8868 = vmatprep.subr.bf16.mxu0 %v8741
    %8869 = vmatpush1.bf16.msra.mxu0 %v8740
    %8870 = vmatprep.subr.bf16.mxu0 %v8743
    %8871 = vmatpush1.bf16.msra.mxu0 %v8742
    %8872 = vmatprep.subr.bf16.mxu0 %v8745
    %8873 = vmatpush1.bf16.msra.mxu0 %v8744
    %8874 = vmatprep.mubr.bf16.mxu0 %v8443
    %8875 = vmatmul.mubr.bf16.gmra.mrb[0].mxu0 %v8442
    %v8876 = vpop.f32.mrb[0].mxu0
    %v8877 = vadd.f32 %v8515, %v8876
    %v8878 = vpop.f32.mrb[0].mxu0
    %v8879 = vadd.f32 %v8519, %v8878
    %v8880 = vpop.f32.mrb[0].mxu0
    %v8881 = vadd.f32 %v8515, %v8880
    %v8882 = vpop.f32.mrb[0].mxu0
    %v8883 = vadd.f32 %v8519, %v8882
    %8884 = vdwg.mxu0
    %8885 = vmatprep.subr.bf16.mxu0 %v8747
    %8886 = vmatpush1.bf16.msra.mxu0 %v8746
    %8887 = vmatprep.subr.bf16.mxu0 %v8749
    %8888 = vmatpush1.bf16.msra.mxu0 %v8748
    %8889 = vmatprep.subr.bf16.mxu0 %v8751
    %8890 = vmatpush1.bf16.msra.mxu0 %v8750
    %8891 = vmatprep.subr.bf16.mxu0 %v8753
    %8892 = vmatpush1.bf16.msra.mxu0 %v8752
    %8893 = vmatprep.subr.bf16.mxu0 %v8755
    %8894 = vmatpush1.bf16.msra.mxu0 %v8754
    %8895 = vmatprep.subr.bf16.mxu0 %v8757
    %8896 = vmatpush1.bf16.msra.mxu0 %v8756
    %8897 = vmatprep.subr.bf16.mxu0 %v8759
    %8898 = vmatpush1.bf16.msra.mxu0 %v8758
    %8899 = vmatprep.subr.bf16.mxu0 %v8761
    %8900 = vmatpush1.bf16.msra.mxu0 %v8760
    %8901 = vmatprep.subr.bf16.mxu0 %v8763
    %8902 = vmatpush1.bf16.msra.mxu0 %v8762
    %8903 = vmatprep.subr.bf16.mxu0 %v8765
    %8904 = vmatpush1.bf16.msra.mxu0 %v8764
    %8905 = vmatprep.subr.bf16.mxu0 %v8767
    %8906 = vmatpush1.bf16.msra.mxu0 %v8766
    %8907 = vmatprep.subr.bf16.mxu0 %v8769
    %8908 = vmatpush1.bf16.msra.mxu0 %v8768
    %8909 = vmatprep.subr.bf16.mxu0 %v8771
    %8910 = vmatpush1.bf16.msra.mxu0 %v8770
    %8911 = vmatprep.subr.bf16.mxu0 %v8773
    %8912 = vmatpush1.bf16.msra.mxu0 %v8772
    %8913 = vmatprep.subr.bf16.mxu0 %v8775
    %8914 = vmatpush1.bf16.msra.mxu0 %v8774
    %8915 = vmatprep.subr.bf16.mxu0 %v8777
    %8916 = vmatpush1.bf16.msra.mxu0 %v8776
    %8917 = vmatprep.mubr.bf16.mxu0 %v8445
    %8918 = vmatmul.mubr.bf16.gmra.mrb[0].mxu0 %v8444
    %v8919 = vpop.f32.mrb[0].mxu0
    %v8920 = vadd.f32 %v8877, %v8919
    %v8921 = vpop.f32.mrb[0].mxu0
    %v8922 = vadd.f32 %v8879, %v8921
    %v8923 = vpop.f32.mrb[0].mxu0
    %v8924 = vadd.f32 %v8881, %v8923
    %v8925 = vpop.f32.mrb[0].mxu0
    %v8926 = vadd.f32 %v8883, %v8925
    %8927 = vdwg.mxu0
    %v8932 = vcombine.low %v8920, %v8922
    %v8933 = vcombine.high %v8920, %v8922
    %v8935 = vunpack.c.l.s4 1983009808
    %v8936 = vunpack.c.0.s8 %v8935
    %v8937 = vlaneseq
    %v8938 = vshrl.u32 %v8937, 7
    %v8939 = vsub.s32 %v8936, %v8938
    %v8940 = vrot.slane %v8932, %v8939
    %v8942 = vunpack.c.l.s4 1983009808
    %v8943 = vunpack.c.0.s8 %v8942
    %v8944 = vlaneseq
    %v8945 = vshrl.u32 %v8944, 7
    %v8946 = vsub.s32 %v8943, %v8945
    %v8947 = vrot.slane %v8933, %v8946
    %v8948 = vcombine.high %v8940, %v8940
    %v8949 = vcombine.high %v8947, %v8947
    %v8950 = vcombine.low %v8924, %v8926
    %v8951 = vcombine.high %v8924, %v8926
    %v8953 = vunpack.c.l.s4 1983009808
    %v8954 = vunpack.c.0.s8 %v8953
    %v8955 = vlaneseq
    %v8956 = vshrl.u32 %v8955, 7
    %v8957 = vsub.s32 %v8954, %v8956
    %v8958 = vrot.slane %v8950, %v8957
    %v8960 = vunpack.c.l.s4 1983009808
    %v8961 = vunpack.c.0.s8 %v8960
    %v8962 = vlaneseq
    %v8963 = vshrl.u32 %v8962, 7
    %v8964 = vsub.s32 %v8961, %v8963
    %v8965 = vrot.slane %v8951, %v8964
    %v8966 = vcombine.high %v8958, %v8958
    %v8967 = vcombine.high %v8965, %v8965
    %v8976 = vadd.f32 %v7884, %v8940
    %v8977 = vadd.f32 %v7885, %v8948
    %v8978 = vadd.f32 %v7886, %v8947
    %v8979 = vadd.f32 %v7887, %v8949
    %v8980 = vadd.f32 %v7888, %v8958
    %v8981 = vadd.f32 %v7889, %v8966
    %v8982 = vadd.f32 %v7890, %v8965
    %v8983 = vadd.f32 %v7891, %v8967
    %v8984 = vld [vmem:[%s11] sm:$0x3]
    %v8985 = vld [vmem:[%s12] sm:$0x3]
    %v8994 = vcombine.low %v8976, %v8977
    %v8995 = vcombine.low %v8978, %v8979
    %v8997 = vunpack.c.l.s4 1983009808
    %v8998 = vunpack.c.0.s8 %v8997
    %v8999 = vlaneseq
    %v9000 = vshrl.u32 %v8999, 7
    %v9001 = vsub.s32 %v8998, %v9000
    %v9002 = vrot.slane %v8994, %v9001
    %v9004 = vunpack.c.l.s4 1983009808
    %v9005 = vunpack.c.0.s8 %v9004
    %v9006 = vlaneseq
    %v9007 = vshrl.u32 %v9006, 7
    %v9008 = vsub.s32 %v9005, %v9007
    %v9009 = vrot.slane %v8995, %v9008
    %v9010 = vcombine.low %v9002, %v9009
    %v9011 = vcombine.high %v9002, %v9009
    %v9012 = vcombine.low %v8980, %v8981
    %v9013 = vcombine.low %v8982, %v8983
    %v9015 = vunpack.c.l.s4 1983009808
    %v9016 = vunpack.c.0.s8 %v9015
    %v9017 = vlaneseq
    %v9018 = vshrl.u32 %v9017, 7
    %v9019 = vsub.s32 %v9016, %v9018
    %v9020 = vrot.slane %v9012, %v9019
    %v9022 = vunpack.c.l.s4 1983009808
    %v9023 = vunpack.c.0.s8 %v9022
    %v9024 = vlaneseq
    %v9025 = vshrl.u32 %v9024, 7
    %v9026 = vsub.s32 %v9023, %v9025
    %v9027 = vrot.slane %v9013, %v9026
    %v9028 = vcombine.low %v9020, %v9027
    %v9029 = vcombine.high %v9020, %v9027
    %v9034 = vadd.f32 %v9010, %v9011
    %9035 = vadd.xlane.f32.xlu0 %v9034
    %v9036 = vpop.xlane.xlu0 %9035
    %v9037 = vadd.f32 %v9028, %v9029
    %9038 = vadd.xlane.f32.xlu0 %v9037
    %v9039 = vpop.xlane.xlu0 %9038
    %v9040 = vmul.f32 %v9036, %v7595
    %v9041 = vmul.f32 %v9039, %v7595
    %v9045 = vunpack.c.l.s4 269488144
    %v9046 = vunpack.c.0.s8 %v9045
    %v9047 = vlaneseq
    %v9048 = vshrl.u32 %v9047, 7
    %v9049 = vsub.s32 %v9046, %v9048
    %v9050 = vrot.slane %v9040, %v9049
    %v9052 = vunpack.c.l.s4 842150450
    %v9053 = vunpack.c.0.s8 %v9052
    %v9054 = vlaneseq
    %v9055 = vshrl.u32 %v9054, 7
    %v9056 = vsub.s32 %v9053, %v9055
    %v9057 = vrot.slane %v9040, %v9056
    %v9059 = vunpack.c.l.s4 1414812756
    %v9060 = vunpack.c.0.s8 %v9059
    %v9061 = vlaneseq
    %v9062 = vshrl.u32 %v9061, 7
    %v9063 = vsub.s32 %v9060, %v9062
    %v9064 = vrot.slane %v9040, %v9063
    %v9066 = vunpack.c.l.s4 1987475062
    %v9067 = vunpack.c.0.s8 %v9066
    %v9068 = vlaneseq
    %v9069 = vshrl.u32 %v9068, 7
    %v9070 = vsub.s32 %v9067, %v9069
    %v9071 = vrot.slane %v9040, %v9070
    %v9073 = vunpack.c.l.s4 269488144
    %v9074 = vunpack.c.0.s8 %v9073
    %v9075 = vlaneseq
    %v9076 = vshrl.u32 %v9075, 7
    %v9077 = vsub.s32 %v9074, %v9076
    %v9078 = vrot.slane %v9041, %v9077
    %v9080 = vunpack.c.l.s4 842150450
    %v9081 = vunpack.c.0.s8 %v9080
    %v9082 = vlaneseq
    %v9083 = vshrl.u32 %v9082, 7
    %v9084 = vsub.s32 %v9081, %v9083
    %v9085 = vrot.slane %v9041, %v9084
    %v9087 = vunpack.c.l.s4 1414812756
    %v9088 = vunpack.c.0.s8 %v9087
    %v9089 = vlaneseq
    %v9090 = vshrl.u32 %v9089, 7
    %v9091 = vsub.s32 %v9088, %v9090
    %v9092 = vrot.slane %v9041, %v9091
    %v9094 = vunpack.c.l.s4 1987475062
    %v9095 = vunpack.c.0.s8 %v9094
    %v9096 = vlaneseq
    %v9097 = vshrl.u32 %v9096, 7
    %v9098 = vsub.s32 %v9095, %v9097
    %v9099 = vrot.slane %v9041, %v9098
    %v9108 = vsub.f32 %v8976, %v9050
    %v9109 = vsub.f32 %v8977, %v9057
    %v9110 = vsub.f32 %v8978, %v9064
    %v9111 = vsub.f32 %v8979, %v9071
    %v9112 = vsub.f32 %v8980, %v9078
    %v9113 = vsub.f32 %v8981, %v9085
    %v9114 = vsub.f32 %v8982, %v9092
    %v9115 = vsub.f32 %v8983, %v9099
    %v9116 = vmul.f32 %v9108, %v9108
    %v9117 = vmul.f32 %v9109, %v9109
    %v9118 = vmul.f32 %v9110, %v9110
    %v9119 = vmul.f32 %v9111, %v9111
    %v9120 = vmul.f32 %v9112, %v9112
    %v9121 = vmul.f32 %v9113, %v9113
    %v9122 = vmul.f32 %v9114, %v9114
    %v9123 = vmul.f32 %v9115, %v9115
    %v9132 = vcombine.low %v9116, %v9117
    %v9133 = vcombine.low %v9118, %v9119
    %v9135 = vunpack.c.l.s4 1983009808
    %v9136 = vunpack.c.0.s8 %v9135
    %v9137 = vlaneseq
    %v9138 = vshrl.u32 %v9137, 7
    %v9139 = vsub.s32 %v9136, %v9138
    %v9140 = vrot.slane %v9132, %v9139
    %v9142 = vunpack.c.l.s4 1983009808
    %v9143 = vunpack.c.0.s8 %v9142
    %v9144 = vlaneseq
    %v9145 = vshrl.u32 %v9144, 7
    %v9146 = vsub.s32 %v9143, %v9145
    %v9147 = vrot.slane %v9133, %v9146
    %v9148 = vcombine.low %v9140, %v9147
    %v9149 = vcombine.high %v9140, %v9147
    %v9150 = vcombine.low %v9120, %v9121
    %v9151 = vcombine.low %v9122, %v9123
    %v9153 = vunpack.c.l.s4 1983009808
    %v9154 = vunpack.c.0.s8 %v9153
    %v9155 = vlaneseq
    %v9156 = vshrl.u32 %v9155, 7
    %v9157 = vsub.s32 %v9154, %v9156
    %v9158 = vrot.slane %v9150, %v9157
    %v9160 = vunpack.c.l.s4 1983009808
    %v9161 = vunpack.c.0.s8 %v9160
    %v9162 = vlaneseq
    %v9163 = vshrl.u32 %v9162, 7
    %v9164 = vsub.s32 %v9161, %v9163
    %v9165 = vrot.slane %v9151, %v9164
    %v9166 = vcombine.low %v9158, %v9165
    %v9167 = vcombine.high %v9158, %v9165
    %v9172 = vadd.f32 %v9148, %v9149
    %9173 = vadd.xlane.f32.xlu0 %v9172
    %v9174 = vpop.xlane.xlu0 %9173
    %v9175 = vadd.f32 %v9166, %v9167
    %9176 = vadd.xlane.f32.xlu0 %v9175
    %v9177 = vpop.xlane.xlu0 %9176
    %v9178 = vmul.f32 %v9174, %v7595
    %v9179 = vmul.f32 %v9177, %v7595
    %v9180 = vadd.f32 %v9178, 1e-05
    %v9181 = vadd.f32 %v9179, 1e-05
    %v9182 = vrsqrt.pop %v9180
    %v9183 = vrsqrt.pop %v9181
    %v9187 = vunpack.c.l.s4 269488144
    %v9188 = vunpack.c.0.s8 %v9187
    %v9189 = vlaneseq
    %v9190 = vshrl.u32 %v9189, 7
    %v9191 = vsub.s32 %v9188, %v9190
    %v9192 = vrot.slane %v9182, %v9191
    %v9194 = vunpack.c.l.s4 842150450
    %v9195 = vunpack.c.0.s8 %v9194
    %v9196 = vlaneseq
    %v9197 = vshrl.u32 %v9196, 7
    %v9198 = vsub.s32 %v9195, %v9197
    %v9199 = vrot.slane %v9182, %v9198
    %v9201 = vunpack.c.l.s4 1414812756
    %v9202 = vunpack.c.0.s8 %v9201
    %v9203 = vlaneseq
    %v9204 = vshrl.u32 %v9203, 7
    %v9205 = vsub.s32 %v9202, %v9204
    %v9206 = vrot.slane %v9182, %v9205
    %v9208 = vunpack.c.l.s4 1987475062
    %v9209 = vunpack.c.0.s8 %v9208
    %v9210 = vlaneseq
    %v9211 = vshrl.u32 %v9210, 7
    %v9212 = vsub.s32 %v9209, %v9211
    %v9213 = vrot.slane %v9182, %v9212
    %v9215 = vunpack.c.l.s4 269488144
    %v9216 = vunpack.c.0.s8 %v9215
    %v9217 = vlaneseq
    %v9218 = vshrl.u32 %v9217, 7
    %v9219 = vsub.s32 %v9216, %v9218
    %v9220 = vrot.slane %v9183, %v9219
    %v9222 = vunpack.c.l.s4 842150450
    %v9223 = vunpack.c.0.s8 %v9222
    %v9224 = vlaneseq
    %v9225 = vshrl.u32 %v9224, 7
    %v9226 = vsub.s32 %v9223, %v9225
    %v9227 = vrot.slane %v9183, %v9226
    %v9229 = vunpack.c.l.s4 1414812756
    %v9230 = vunpack.c.0.s8 %v9229
    %v9231 = vlaneseq
    %v9232 = vshrl.u32 %v9231, 7
    %v9233 = vsub.s32 %v9230, %v9232
    %v9234 = vrot.slane %v9183, %v9233
    %v9236 = vunpack.c.l.s4 1987475062
    %v9237 = vunpack.c.0.s8 %v9236
    %v9238 = vlaneseq
    %v9239 = vshrl.u32 %v9238, 7
    %v9240 = vsub.s32 %v9237, %v9239
    %v9241 = vrot.slane %v9183, %v9240
    %v9250 = vmul.f32 %v9108, %v9192
    %v9251 = vmul.f32 %v9109, %v9199
    %v9252 = vmul.f32 %v9110, %v9206
    %v9253 = vmul.f32 %v9111, %v9213
    %v9254 = vmul.f32 %v9112, %v9220
    %v9255 = vmul.f32 %v9113, %v9227
    %v9256 = vmul.f32 %v9114, %v9234
    %v9257 = vmul.f32 %v9115, %v9241
    %v9259 = vlaneseq
    %v9260 = vshrl.u32 %v9259, 7
    %v9261 = vsub.s32 0, %v9260
    %v9262 = vrot.slane %v8984, %v9261
    %v9263 = vlaneseq
    %v9264 = vshrl.u32 %v9263, 7
    %v9265 = vsub.s32 1, %v9264
    %v9266 = vrot.slane %v8984, %v9265
    %v9267 = vcombine.low %v9262, %v9266
    %v9268 = vcombine.high %v9262, %v9266
    %v9270 = vunpack.c.l.s4 1983009808
    %v9271 = vunpack.c.0.s8 %v9270
    %v9272 = vlaneseq
    %v9273 = vshrl.u32 %v9272, 7
    %v9274 = vsub.s32 %v9271, %v9273
    %v9275 = vrot.slane %v9267, %v9274
    %v9277 = vunpack.c.l.s4 1983009808
    %v9278 = vunpack.c.0.s8 %v9277
    %v9279 = vlaneseq
    %v9280 = vshrl.u32 %v9279, 7
    %v9281 = vsub.s32 %v9278, %v9280
    %v9282 = vrot.slane %v9268, %v9281
    %v9283 = vcombine.high %v9275, %v9275
    %v9284 = vcombine.high %v9282, %v9282
    %v9289 = vmul.f32 %v9250, %v9275
    %v9290 = vmul.f32 %v9251, %v9283
    %v9291 = vmul.f32 %v9252, %v9282
    %v9292 = vmul.f32 %v9253, %v9284
    %v9293 = vmul.f32 %v9254, %v9275
    %v9294 = vmul.f32 %v9255, %v9283
    %v9295 = vmul.f32 %v9256, %v9282
    %v9296 = vmul.f32 %v9257, %v9284
    %v9298 = vlaneseq
    %v9299 = vshrl.u32 %v9298, 7
    %v9300 = vsub.s32 0, %v9299
    %v9301 = vrot.slane %v8985, %v9300
    %v9302 = vlaneseq
    %v9303 = vshrl.u32 %v9302, 7
    %v9304 = vsub.s32 1, %v9303
    %v9305 = vrot.slane %v8985, %v9304
    %v9306 = vcombine.low %v9301, %v9305
    %v9307 = vcombine.high %v9301, %v9305
    %v9309 = vunpack.c.l.s4 1983009808
    %v9310 = vunpack.c.0.s8 %v9309
    %v9311 = vlaneseq
    %v9312 = vshrl.u32 %v9311, 7
    %v9313 = vsub.s32 %v9310, %v9312
    %v9314 = vrot.slane %v9306, %v9313
    %v9316 = vunpack.c.l.s4 1983009808
    %v9317 = vunpack.c.0.s8 %v9316
    %v9318 = vlaneseq
    %v9319 = vshrl.u32 %v9318, 7
    %v9320 = vsub.s32 %v9317, %v9319
    %v9321 = vrot.slane %v9307, %v9320
    %v9322 = vcombine.high %v9314, %v9314
    %v9323 = vcombine.high %v9321, %v9321
    %v9328 = vadd.f32 %v9289, %v9314
    %v9329 = vadd.f32 %v9290, %v9322
    %v9330 = vadd.f32 %v9291, %v9321
    %v9331 = vadd.f32 %v9292, %v9323
    %v9332 = vadd.f32 %v9293, %v9314
    %v9333 = vadd.f32 %v9294, %v9322
    %v9334 = vadd.f32 %v9295, %v9321
    %v9335 = vadd.f32 %v9296, %v9323
    %9336 = vst [vmem:[#allocation12] sm:$0xf] %v9328
    %9337 = vst [vmem:[#allocation12 + $0x4] sm:$0xf] %v9329
    %9338 = vst [vmem:[#allocation12 + $0x8] sm:$0xf] %v9330
    %9339 = vst [vmem:[#allocation12 + $0xc] sm:$0xf] %v9331
    %9340 = vst [vmem:[#allocation12 + $0x10] sm:$0xf] %v9332
    %9341 = vst [vmem:[#allocation12 + $0x14] sm:$0xf] %v9333
    %9342 = vst [vmem:[#allocation12 + $0x18] sm:$0xf] %v9334
    %9343 = vst [vmem:[#allocation12 + $0x1c] sm:$0xf] %v9335
    // Predicated region
    $region74: #{transformer_block.1} parent=1 // pred_check
      _
    $region75: #{transformer_block.1} parent=1 // pred_check_branch
      %9345 = sbr.rel (0) target = $region77
    $region76: #{transformer_block.1} parent=1 // pred_region
      %s9347 = ssub.s32 512, 512
      %9348 = vsyncadd [#allocation5], %s9347
      %s9349 = sshll.u32 [#allocation12], 4
      %s9350 = int_to_ptr.vmem [resolvable:$true] %s9349
      %9355 = dma.vmem_to_hbm [thread:$0]  %s9350, 512, %s13, [#allocation5], 64, 64, 4
    $region77: #{transformer_block.1} parent=1 // pred_fallthru
      _
    // Predicated region
    $region78: #{transformer_block.1} parent=1 // pred_check
      _
    $region79: #{transformer_block.1} parent=1 // pred_check_branch
      %9357 = sbr.rel (0) target = $region81
    $region80: #{transformer_block.1} parent=1 // pred_region
      %9358 = dma.done [#allocation5], 512
    $region81: #{transformer_block.1} parent=1 // pred_fallthru
      _
    %9359 = vsyncpa [#allocation4], 1
    %9360 = vsyncpa [#allocation7], 1
    %9361 = vsyncpa [#allocation10], 1
    %9362 = vsyncpa [#allocation5], 1

</llo_original>
